<compile_context>
chip_gen: v7x
topology: tpu7x:2x2x1
jax: 0.10.0
libtpu: 0.0.40
codegen_flags: <defaults>
</compile_context>

<pallas_src>
import math
import numpy as np

import jax
import jax.numpy as jnp
from jax.experimental import pallas as pl
from jax.experimental.pallas import tpu as pltpu

BN_EPS = 1e-5
# eval BatchNorm2d(affine=False) with fresh running stats (mean=0, var=1)
BN_SCALE_NOAFFINE = 1.0 / math.sqrt(1.0 + BN_EPS)

# Standard DARTS primitive set (num_ops = 8)
PRIMITIVES = ('none', 'max_pool_3x3', 'avg_pool_3x3', 'skip_connect',
              'sep_conv_3x3', 'sep_conv_5x5', 'dil_conv_3x3', 'dil_conv_5x5')

MAX_SHIFT = 4   # largest |H-offset| of any tap (dil_conv_5x5: dil*(K-1)//2 = 4)


# --------------------------------------------------------------------------
# Parameter init (deterministic, mirrors the eval-mode PyTorch module)
# --------------------------------------------------------------------------

def init_params(key, C_in, C_out, num_nodes=4, num_ops=8):
    num_edges = sum(range(2, 2 + num_nodes))          # 14 for num_nodes=4
    k_arch, k_pre0, k_pre1, k_edges, k_out = jax.random.split(key, 5)

    params = {}
    # BatchedArchitectureUpdate.arch_params = randn(num_edges, num_ops) * 0.1
    arch_params = jax.random.normal(k_arch, (num_edges, num_ops), jnp.float32) * 0.1
    params['arch_params'] = arch_params
    # eval: arch_weights = softmax(logits); FastMixedOp(eval) only uses its argmax.
    # NOTE: baked in at init (stale if arch_params change later — eval-only scope).
    params['edge_sel'] = [int(i) for i in np.argmax(np.asarray(arch_params), axis=-1)]

    def bn_affine(k, C):
        k1, k2, k3, k4 = jax.random.split(k, 4)
        gamma = jax.random.uniform(k1, (C,), jnp.float32, 0.5, 1.5)
        beta = jax.random.normal(k2, (C,), jnp.float32) * 0.1
        mean = jax.random.normal(k3, (C,), jnp.float32) * 0.1
        var = jax.random.uniform(k4, (C,), jnp.float32, 0.5, 1.5)
        scale = gamma / jnp.sqrt(var + BN_EPS)
        return scale, beta - mean * scale

    def preprocess_params(k):
        kc, kb = jax.random.split(k)
        p = {}
        if C_in != C_out:
            p['conv_w'] = jax.random.normal(kc, (C_in, C_out), jnp.float32) / np.sqrt(C_in)
        p['bn_scale'], p['bn_shift'] = bn_affine(kb, C_out)
        return p

    params['pre0'] = preprocess_params(k_pre0)
    params['pre1'] = preprocess_params(k_pre1)

    edges = []
    for e in range(num_edges):
        name = PRIMITIVES[params['edge_sel'][e]]
        ek = jax.random.fold_in(k_edges, e)
        p = {}
        if name in ('sep_conv_3x3', 'sep_conv_5x5'):
            K = 3 if name == 'sep_conv_3x3' else 5
            k1, k2, k3, k4 = jax.random.split(ek, 4)
            p['dw1'] = jax.random.normal(k1, (K, K, C_out), jnp.float32) / K
            p['pw1'] = jax.random.normal(k2, (C_out, C_out), jnp.float32) / np.sqrt(C_out)
            p['dw2'] = jax.random.normal(k3, (K, K, C_out), jnp.float32) / K
            p['pw2'] = jax.random.normal(k4, (C_out, C_out), jnp.float32) / np.sqrt(C_out)
        elif name in ('dil_conv_3x3', 'dil_conv_5x5'):
            K = 3 if name == 'dil_conv_3x3' else 5
            k1, k2 = jax.random.split(ek)
            p['dw'] = jax.random.normal(k1, (K, K, C_out), jnp.float32) / K
            p['pw'] = jax.random.normal(k2, (C_out, C_out), jnp.float32) / np.sqrt(C_out)
        edges.append(p)
    params['edges'] = edges

    ko_w, ko_bn = jax.random.split(k_out)
    params['out_conv_w'] = (jax.random.normal(ko_w, (num_nodes * C_out, C_out), jnp.float32)
                            / np.sqrt(num_nodes * C_out))
    params['out_bn_scale'], params['out_bn_shift'] = bn_affine(ko_bn, C_out)
    return params


# --------------------------------------------------------------------------
# Host-side matrix packing (all constants folded at trace time)
# --------------------------------------------------------------------------

def _blockdiag(blk, W):
    """blockdiag over W spatial columns of a (Ci, Co) channel-mixing matrix."""
    Ci, Co = blk.shape
    m = np.zeros((W * Ci, W * Co), np.float32)
    for w in range(W):
        m[w * Ci:(w + 1) * Ci, w * Co:(w + 1) * Co] = blk
    return m


def _hshift_mats(H, max_shift):
    """(2*max_shift+1, H, H) zero-fill row-shift matrices: (S_dh @ x)[h] = x[h+dh]."""
    mats = np.zeros((2 * max_shift + 1, H, H), np.float32)
    for idx, dh in enumerate(range(-max_shift, max_shift + 1)):
        for h in range(H):
            if 0 <= h + dh < H:
                mats[idx, h, h + dh] = 1.0
    return mats


def _wshift_mat(dw, W, C):
    """(W*C, W*C) zero-fill packed-lane W-shift: (x @ S)[:, w*C+c] = x[:, (w+dw)*C+c]."""
    m = np.zeros((W * C, W * C), np.float32)
    eye = np.eye(C, dtype=np.float32)
    for ow in range(W):
        iw = ow + dw
        if 0 <= iw < W:
            m[iw * C:(iw + 1) * C, ow * C:(ow + 1) * C] = eye
    return m


def _avg_w_mat(W, C):
    """(W*C, W*C) per-channel 3-wide W-window sum (zero padding)."""
    m = np.zeros((W * C, W * C), np.float32)
    eye = np.eye(C, dtype=np.float32)
    for ow in range(W):
        for dw in (-1, 0, 1):
            iw = ow + dw
            if 0 <= iw < W:
                m[iw * C:(iw + 1) * C, ow * C:(ow + 1) * C] += eye
    return m


def _avg_inv_map(H, W, C, scale):
    """(H, W*C) map: BN scale / valid-window-count (count_include_pad=False, DARTS)."""
    inv = np.zeros((H, W * C), np.float32)
    for h in range(H):
        kh = min(h + 1, H - 1) - max(h - 1, 0) + 1
        for w in range(W):
            kw = min(w + 1, W - 1) - max(w - 1, 0) + 1
            inv[h, w * C:(w + 1) * C] = scale / (kh * kw)
    return inv


def _stage_mats(dw_w, pw_w, bn_scale, K, dil, W, C):
    """Fuse one (ReLU ->) depthwise KxK (dilation dil) -> pointwise 1x1 -> BN-scale
    stage into K banded (W*C, W*C) matrices, one per H-tap:
        Y = sum_a (S_{a*dil-pad} @ relu(X)) @ mats[a]
    mats[a][iw*C+ci, ow*C+co] = sum_b [iw == ow + b*dil - pad] * dw[a,b,ci] * pw[ci,co] * s[co]
    """
    pad = dil * (K - 1) // 2
    dw_w = np.asarray(dw_w, np.float32)                       # (K, K, C)
    pw_s = np.asarray(pw_w, np.float32) * np.asarray(bn_scale, np.float32)[None, :]  # (C, C)
    mats = np.zeros((K, W * C, W * C), np.float32)
    for a in range(K):
        for b in range(K):
            off_w = b * dil - pad
            blk = dw_w[a, b, :][:, None] * pw_s               # (C_in, C_out)
            for ow in range(W):
                iw = ow + off_w
                if 0 <= iw < W:
                    mats[a, iw * C:(iw + 1) * C, ow * C:(ow + 1) * C] += blk
    return mats


# --------------------------------------------------------------------------
# Fused cell forward: one pallas_call for the whole cell
# --------------------------------------------------------------------------

def memory_efficient_cell_forward(s0_nchw, s1_nchw, params, num_nodes=4):
    N, C_in, H, W = s0_nchw.shape
    C = params['out_conv_w'].shape[-1]
    WC, WCin = W * C, W * C_in
    # NOTE: H must be a multiple of 8 for the (H, W*C) activation blocks; W*C a
    # multiple of 128 gives fully lane-dense vregs (exact in the example below).

    edge_names = [PRIMITIVES[i] for i in params['edge_sel']]
    has_pre_conv = 'conv_w' in params['pre0']

    # NCHW (PyTorch) -> lane-dense packed rows: row = (n, h), lane = w*C + c.
    # (Boundary-fidelity transposes; callers holding NHWC can skip them.)
    def pack(x):
        return jnp.transpose(x, (0, 2, 3, 1)).astype(jnp.float32).reshape(N * H, -1)
    s0p, s1p = pack(s0_nchw), pack(s1_nchw)

    # affine=False BNs folded per-channel (fresh running stats -> constant vector).
    bn_vec = np.full((C,), BN_SCALE_NOAFFINE, np.float32)

    # ---- build the stacked (W*C, W*C) weight matrices + per-edge static plan ----
    mat_list = []

    def add_mat(m):
        mat_list.append(np.asarray(m, np.float32))
        return len(mat_list) - 1

    avg_idx = swp_idx = swm_idx = None
    edge_plan = []
    for e, name in enumerate(edge_names):
        p = params['edges'][e]
        if name == 'none':
            edge_plan.append(('none',))
        elif name == 'skip_connect':
            edge_plan.append(('skip',))
        elif name == 'max_pool_3x3':
            if swp_idx is None:
                swp_idx = add_mat(_wshift_mat(+1, W, C))
                swm_idx = add_mat(_wshift_mat(-1, W, C))
            edge_plan.append(('max', swp_idx, swm_idx))
        elif name == 'avg_pool_3x3':
            if avg_idx is None:
                avg_idx = add_mat(_avg_w_mat(W, C))
            edge_plan.append(('avg', avg_idx))
        elif name.startswith('sep_conv'):
            K = 3 if name.endswith('3x3') else 5
            i1 = len(mat_list)
            for m in _stage_mats(p['dw1'], p['pw1'], bn_vec, K, 1, W, C):
                add_mat(m)
            i2 = len(mat_list)
            for m in _stage_mats(p['dw2'], p['pw2'], bn_vec, K, 1, W, C):
                add_mat(m)
            edge_plan.append(('sep', K, i1, i2))
        elif name.startswith('dil_conv'):
            K = 3 if name.endswith('3x3') else 5
            i1 = len(mat_list)
            for m in _stage_mats(p['dw'], p['pw'], bn_vec, K, 2, W, C):
                add_mat(m)
            edge_plan.append(('dil', K, i1))
        else:
            raise ValueError(name)

    # ---- pack kernel inputs ----
    in_names, in_arrays, in_specs = [], [], []

    def add_weight(name, arr):                      # resident across grid steps
        arr = jnp.asarray(arr, dtype=jnp.float32)
        in_names.append(name)
        in_arrays.append(arr)
        nd = arr.ndim
        in_specs.append(pl.BlockSpec(arr.shape, lambda n, _nd=nd: (0,) * _nd))

    def add_state(name, arr, last):                 # blocked over the batch grid
        in_names.append(name)
        in_arrays.append(arr)
        in_specs.append(pl.BlockSpec((H, last), lambda n: (n, 0)))

    add_state('s0', s0p, WCin)
    add_state('s1', s1p, WCin)

    if has_pre_conv:
        pm = np.stack([
            _blockdiag(np.asarray(params['pre0']['conv_w'], np.float32)
                       * np.asarray(params['pre0']['bn_scale'], np.float32)[None, :], W),
            _blockdiag(np.asarray(params['pre1']['conv_w'], np.float32)
                       * np.asarray(params['pre1']['bn_scale'], np.float32)[None, :], W)])
        add_weight('pre_mat', pm)                                  # (2, W*C_in, W*C)
    else:
        ps = np.stack([np.tile(np.asarray(params['pre0']['bn_scale'], np.float32), W),
                       np.tile(np.asarray(params['pre1']['bn_scale'], np.float32), W)])
        add_weight('pre_scale', ps)                                # (2, W*C)

    # all remaining additive shifts stacked into one input (fewer DMA descriptors)
    shifts = np.stack([np.tile(np.asarray(params['pre0']['bn_shift'], np.float32), W),
                       np.tile(np.asarray(params['pre1']['bn_shift'], np.float32), W),
                       np.tile(np.asarray(params['out_bn_shift'], np.float32), W)])
    add_weight('shifts', shifts)                                   # (3, W*C)
    add_weight('hshift', _hshift_mats(H, MAX_SHIFT))               # (9, H, H)
    if mat_list:
        add_weight('mats', np.stack(mat_list))                     # (n_mats, W*C, W*C)
    if avg_idx is not None:
        add_weight('avg_inv', _avg_inv_map(H, W, C, BN_SCALE_NOAFFINE))   # (H, W*C)

    # output 1x1 conv over concat(nodes) with the affine BN scale folded in
    ow_np = np.asarray(params['out_conv_w'], np.float32)           # (num_nodes*C, C)
    osc = np.asarray(params['out_bn_scale'], np.float32)
    out_big = np.zeros((num_nodes * WC, WC), np.float32)
    for i in range(num_nodes):
        out_big[i * WC:(i + 1) * WC, :] = _blockdiag(ow_np[i * C:(i + 1) * C, :] * osc[None, :], W)
    add_weight('out_mat', out_big)                                 # (num_nodes*W*C, W*C)

    n_in = len(in_arrays)
    lane_aligned = (WC % 128 == 0)

    # ---- the fused kernel: one grid step == one image, everything lane-dense ----
    def kernel(*refs):
        ins = dict(zip(in_names, refs[:n_in]))
        o_ref = refs[n_in]
        mats = ins.get('mats')
        sh = ins['hshift']

        def hshift(x, dh):                      # zero-fill H shift via (H,H) matmul
            if dh == 0:
                return x
            return jnp.dot(sh[dh + MAX_SHIFT], x, preferred_element_type=jnp.float32)

        def stage(x, K, dil, m0):               # relu -> dwconv -> pwconv -> BN-scale
            xr = jnp.maximum(x, 0.0)
            pad = dil * (K - 1) // 2
            acc = None
            for a in range(K):
                t = jnp.dot(hshift(xr, a * dil - pad), mats[m0 + a],
                            preferred_element_type=jnp.float32)
                acc = t if acc is None else acc + t
            return acc

        def maxpool(x, ip, im):
            # shift-to-nonnegative so zero-filled (boundary) shifts never win the max
            mn = jnp.min(x, axis=(0, 1), keepdims=True)
            y = x - mn
            r = jnp.maximum(jnp.maximum(y, hshift(y, 1)), hshift(y, -1))
            c = jnp.maximum(
                jnp.maximum(r, jnp.dot(r, mats[ip], preferred_element_type=jnp.float32)),
                jnp.dot(r, mats[im], preferred_element_type=jnp.float32))
            return (c + mn) * BN_SCALE_NOAFFINE

        def avgpool(x, ia):
            s = x + hshift(x, 1) + hshift(x, -1)
            y = jnp.dot(s, mats[ia], preferred_element_type=jnp.float32)
            return y * ins['avg_inv'][...]       # divisor & BN scale precomputed host-side

        def apply_edge(plan, x):
            kind = plan[0]
            if kind == 'none':
                return None                      # Zero op: contributes nothing
            if kind == 'skip':
                return x                         # Identity (stride=1)
            if kind == 'max':
                return maxpool(x, plan[1], plan[2])
            if kind == 'avg':
                return avgpool(x, plan[1])
            if kind == 'sep':
                K, i1, i2 = plan[1:]
                return stage(stage(x, K, 1, i1), K, 1, i2)
            K, i1 = plan[1:]                     # 'dil'
            return stage(x, K, 2, i1)

        def preprocess(sname, idx):
            x = jnp.maximum(ins[sname][...], 0.0)
            if has_pre_conv:
                x = jnp.dot(x, ins['pre_mat'][idx], preferred_element_type=jnp.float32)
            else:
                x = x * ins['pre_scale'][idx:idx + 1, :]
            return x + ins['shifts'][idx:idx + 1, :]

        states = [preprocess('s0', 0), preprocess('s1', 1)]
        op_idx = 0
        for _ in range(num_nodes):
            acc = None
            for j, st in enumerate(states):
                y = apply_edge(edge_plan[op_idx + j], st)
                if y is not None:
                    acc = y if acc is None else acc + y
            states.append(acc if acc is not None else jnp.zeros((H, WC), jnp.float32))
            op_idx += len(states) - 1

        nodes = states[2:2 + num_nodes]
        out_w = ins['out_mat']
        if lane_aligned:
            # single deep-K matmul over the lane-concatenated node states
            cat = jnp.concatenate(nodes, axis=-1)                  # (H, num_nodes*W*C)
            out = jnp.dot(cat, out_w[...], preferred_element_type=jnp.float32)
        else:
            out = None
            for i, nd in enumerate(nodes):
                t = jnp.dot(nd, out_w[i * WC:(i + 1) * WC, :],
                            preferred_element_type=jnp.float32)
                out = t if out is None else out + t
        o_ref[...] = out + ins['shifts'][2:3, :]

    out_packed = pl.pallas_call(
        kernel,
        out_shape=jax.ShapeDtypeStruct((N * H, WC), jnp.float32),
        grid=(N,),
        in_specs=in_specs,
        out_specs=pl.BlockSpec((H, WC), lambda n: (n, 0)),
        compiler_params=pltpu.CompilerParams(
            dimension_semantics=("parallel",),
            vmem_limit_bytes=48 * 1024 * 1024),
    )(*in_arrays)

    # packed lane-dense rows -> NCHW (PyTorch layout)
    return jnp.transpose(out_packed.reshape(N, H, W, C), (0, 3, 1, 2))


# --------------------------------------------------------------------------

if __name__ == "__main__":
    key = jax.random.PRNGKey(0)
    N, C_in, C_out, H, W = 2, 8, 16, 8, 8        # W*C_out = 128: lane-dense slabs

    k_s0, k_s1, k_par = jax.random.split(key, 3)
    s0 = jax.random.normal(k_s0, (N, C_in, H, W), jnp.float32)
    s1 = jax.random.normal(k_s1, (N, C_in, H, W), jnp.float32)

    params = init_params(k_par, C_in, C_out, num_nodes=4, num_ops=8)

    fwd = jax.jit(lambda a, b: memory_efficient_cell_forward(a, b, params))
    out = fwd(s0, s1)
    jax.block_until_ready(out)

    assert out.shape == (N, C_out, H, W), out.shape
    assert out.dtype == jnp.float32
    assert bool(jnp.all(jnp.isfinite(out)))
    print("KERNEL_OK")
</pallas_src>

<mosaic_0001>
module attributes {stable_mosaic.version = 11 : i64} {
  func.func @kernel(%arg0: i32, %arg1: memref<8x64xf32, #tpu.memory_space<vmem>>, %arg2: memref<8x64xf32, #tpu.memory_space<vmem>>, %arg3: memref<2x64x128xf32, #tpu.memory_space<vmem>>, %arg4: memref<3x128xf32, #tpu.memory_space<vmem>>, %arg5: memref<9x8x8xf32, #tpu.memory_space<vmem>>, %arg6: memref<64x128x128xf32, #tpu.memory_space<vmem>>, %arg7: memref<8x128xf32, #tpu.memory_space<vmem>>, %arg8: memref<512x128xf32, #tpu.memory_space<vmem>>, %arg9: memref<8x128xf32, #tpu.memory_space<vmem>>) attributes {dimension_semantics = [#tpu.dimension_semantics<parallel>], iteration_bounds = array<i64: 2>, scalar_prefetch = 0 : i64, scratch_operands = 0 : i64, tpu.core_type = #tpu.core_type<tc>, window_params = [{transform_indices = @transform_0, window_bounds = array<i64: 8, 64>}, {transform_indices = @transform_1, window_bounds = array<i64: 8, 64>}, {pipeline_mode = #tpu.pipeline_mode<synchronous>, transform_indices = @transform_2, window_bounds = array<i64: 2, 64, 128>}, {pipeline_mode = #tpu.pipeline_mode<synchronous>, transform_indices = @transform_3, window_bounds = array<i64: 3, 128>}, {pipeline_mode = #tpu.pipeline_mode<synchronous>, transform_indices = @transform_4, window_bounds = array<i64: 9, 8, 8>}, {pipeline_mode = #tpu.pipeline_mode<synchronous>, transform_indices = @transform_5, window_bounds = array<i64: 64, 128, 128>}, {pipeline_mode = #tpu.pipeline_mode<synchronous>, transform_indices = @transform_6, window_bounds = array<i64: 8, 128>}, {pipeline_mode = #tpu.pipeline_mode<synchronous>, transform_indices = @transform_7, window_bounds = array<i64: 512, 128>}, {transform_indices = @transform_8, window_bounds = array<i64: 8, 128>}]} {
    %c0 = arith.constant 0 : index
    %c0_0 = arith.constant 0 : index
    %0 = vector.load %arg1[%c0, %c0_0] : memref<8x64xf32, #tpu.memory_space<vmem>>, vector<8x64xf32>
    %cst = arith.constant 0.000000e+00 : f32
    %1 = vector.broadcast %cst : f32 to vector<8x64xf32>
    %2 = arith.maximumf %0, %1 : vector<8x64xf32>
    %c0_1 = arith.constant 0 : index
    %c0_2 = arith.constant 0 : index
    %c0_3 = arith.constant 0 : index
    %3 = vector.load %arg3[%c0_1, %c0_2, %c0_3] : memref<2x64x128xf32, #tpu.memory_space<vmem>>, vector<1x64x128xf32>
    %4 = vector.shape_cast %3 : vector<1x64x128xf32> to vector<64x128xf32>
    %cst_4 = arith.constant dense<0.000000e+00> : vector<8x128xf32>
    %5 = tpu.matmul %2, %4, %cst_4 {dimension_numbers = #tpu.dot_dimension_numbers<[1], [0], [0], [1], [0, 0, 1, 1], [], []>} : vector<8x64xf32>, vector<64x128xf32>, vector<8x128xf32> -> vector<8x128xf32>
    %c0_5 = arith.constant 0 : index
    %c0_6 = arith.constant 0 : index
    %6 = vector.load %arg4[%c0_5, %c0_6] : memref<3x128xf32, #tpu.memory_space<vmem>>, vector<1x128xf32>
    %7 = vector.broadcast %6 : vector<1x128xf32> to vector<8x128xf32>
    %8 = arith.addf %5, %7 : vector<8x128xf32>
    %c0_7 = arith.constant 0 : index
    %c0_8 = arith.constant 0 : index
    %9 = vector.load %arg2[%c0_7, %c0_8] : memref<8x64xf32, #tpu.memory_space<vmem>>, vector<8x64xf32>
    %cst_9 = arith.constant 0.000000e+00 : f32
    %10 = vector.broadcast %cst_9 : f32 to vector<8x64xf32>
    %11 = arith.maximumf %9, %10 : vector<8x64xf32>
    %c1 = arith.constant 1 : index
    %c0_10 = arith.constant 0 : index
    %c0_11 = arith.constant 0 : index
    %12 = vector.load %arg3[%c1, %c0_10, %c0_11] : memref<2x64x128xf32, #tpu.memory_space<vmem>>, vector<1x64x128xf32>
    %13 = vector.shape_cast %12 : vector<1x64x128xf32> to vector<64x128xf32>
    %cst_12 = arith.constant dense<0.000000e+00> : vector<8x128xf32>
    %14 = tpu.matmul %11, %13, %cst_12 {dimension_numbers = #tpu.dot_dimension_numbers<[1], [0], [0], [1], [0, 0, 1, 1], [], []>} : vector<8x64xf32>, vector<64x128xf32>, vector<8x128xf32> -> vector<8x128xf32>
    %c1_13 = arith.constant 1 : index
    %c0_14 = arith.constant 0 : index
    %15 = vector.load %arg4[%c1_13, %c0_14] : memref<3x128xf32, #tpu.memory_space<vmem>>, vector<1x128xf32>
    %16 = vector.broadcast %15 : vector<1x128xf32> to vector<8x128xf32>
    %17 = arith.addf %14, %16 : vector<8x128xf32>
    %cst_15 = arith.constant 0.000000e+00 : f32
    %18 = vector.broadcast %cst_15 : f32 to vector<8x128xf32>
    %19 = arith.maximumf %8, %18 : vector<8x128xf32>
    %c2 = arith.constant 2 : index
    %c0_16 = arith.constant 0 : index
    %c0_17 = arith.constant 0 : index
    %20 = vector.load %arg5[%c2, %c0_16, %c0_17] : memref<9x8x8xf32, #tpu.memory_space<vmem>>, vector<1x8x8xf32>
    %21 = vector.shape_cast %20 : vector<1x8x8xf32> to vector<8x8xf32>
    %cst_18 = arith.constant dense<0.000000e+00> : vector<8x128xf32>
    %22 = tpu.matmul %21, %19, %cst_18 {dimension_numbers = #tpu.dot_dimension_numbers<[1], [0], [0], [1], [0, 0, 1, 1], [], []>} : vector<8x8xf32>, vector<8x128xf32>, vector<8x128xf32> -> vector<8x128xf32>
    %c0_19 = arith.constant 0 : index
    %c0_20 = arith.constant 0 : index
    %c0_21 = arith.constant 0 : index
    %23 = vector.load %arg6[%c0_19, %c0_20, %c0_21] : memref<64x128x128xf32, #tpu.memory_space<vmem>>, vector<1x128x128xf32>
    %24 = vector.shape_cast %23 : vector<1x128x128xf32> to vector<128x128xf32>
    %cst_22 = arith.constant dense<0.000000e+00> : vector<8x128xf32>
    %25 = tpu.matmul %22, %24, %cst_22 {dimension_numbers = #tpu.dot_dimension_numbers<[1], [0], [0], [1], [0, 0, 1, 1], [], []>} : vector<8x128xf32>, vector<128x128xf32>, vector<8x128xf32> -> vector<8x128xf32>
    %c3 = arith.constant 3 : index
    %c0_23 = arith.constant 0 : index
    %c0_24 = arith.constant 0 : index
    %26 = vector.load %arg5[%c3, %c0_23, %c0_24] : memref<9x8x8xf32, #tpu.memory_space<vmem>>, vector<1x8x8xf32>
    %27 = vector.shape_cast %26 : vector<1x8x8xf32> to vector<8x8xf32>
    %cst_25 = arith.constant dense<0.000000e+00> : vector<8x128xf32>
    %28 = tpu.matmul %27, %19, %cst_25 {dimension_numbers = #tpu.dot_dimension_numbers<[1], [0], [0], [1], [0, 0, 1, 1], [], []>} : vector<8x8xf32>, vector<8x128xf32>, vector<8x128xf32> -> vector<8x128xf32>
    %c1_26 = arith.constant 1 : index
    %c0_27 = arith.constant 0 : index
    %c0_28 = arith.constant 0 : index
    %29 = vector.load %arg6[%c1_26, %c0_27, %c0_28] : memref<64x128x128xf32, #tpu.memory_space<vmem>>, vector<1x128x128xf32>
    %30 = vector.shape_cast %29 : vector<1x128x128xf32> to vector<128x128xf32>
    %cst_29 = arith.constant dense<0.000000e+00> : vector<8x128xf32>
    %31 = tpu.matmul %28, %30, %cst_29 {dimension_numbers = #tpu.dot_dimension_numbers<[1], [0], [0], [1], [0, 0, 1, 1], [], []>} : vector<8x128xf32>, vector<128x128xf32>, vector<8x128xf32> -> vector<8x128xf32>
    %32 = arith.addf %25, %31 : vector<8x128xf32>
    %c2_30 = arith.constant 2 : index
    %c0_31 = arith.constant 0 : index
    %c0_32 = arith.constant 0 : index
    %33 = vector.load %arg6[%c2_30, %c0_31, %c0_32] : memref<64x128x128xf32, #tpu.memory_space<vmem>>, vector<1x128x128xf32>
    %34 = vector.shape_cast %33 : vector<1x128x128xf32> to vector<128x128xf32>
    %cst_33 = arith.constant dense<0.000000e+00> : vector<8x128xf32>
    %35 = tpu.matmul %19, %34, %cst_33 {dimension_numbers = #tpu.dot_dimension_numbers<[1], [0], [0], [1], [0, 0, 1, 1], [], []>} : vector<8x128xf32>, vector<128x128xf32>, vector<8x128xf32> -> vector<8x128xf32>
    %36 = arith.addf %32, %35 : vector<8x128xf32>
    %c5 = arith.constant 5 : index
    %c0_34 = arith.constant 0 : index
    %c0_35 = arith.constant 0 : index
    %37 = vector.load %arg5[%c5, %c0_34, %c0_35] : memref<9x8x8xf32, #tpu.memory_space<vmem>>, vector<1x8x8xf32>
    %38 = vector.shape_cast %37 : vector<1x8x8xf32> to vector<8x8xf32>
    %cst_36 = arith.constant dense<0.000000e+00> : vector<8x128xf32>
    %39 = tpu.matmul %38, %19, %cst_36 {dimension_numbers = #tpu.dot_dimension_numbers<[1], [0], [0], [1], [0, 0, 1, 1], [], []>} : vector<8x8xf32>, vector<8x128xf32>, vector<8x128xf32> -> vector<8x128xf32>
    %c3_37 = arith.constant 3 : index
    %c0_38 = arith.constant 0 : index
    %c0_39 = arith.constant 0 : index
    %40 = vector.load %arg6[%c3_37, %c0_38, %c0_39] : memref<64x128x128xf32, #tpu.memory_space<vmem>>, vector<1x128x128xf32>
    %41 = vector.shape_cast %40 : vector<1x128x128xf32> to vector<128x128xf32>
    %cst_40 = arith.constant dense<0.000000e+00> : vector<8x128xf32>
    %42 = tpu.matmul %39, %41, %cst_40 {dimension_numbers = #tpu.dot_dimension_numbers<[1], [0], [0], [1], [0, 0, 1, 1], [], []>} : vector<8x128xf32>, vector<128x128xf32>, vector<8x128xf32> -> vector<8x128xf32>
    %43 = arith.addf %36, %42 : vector<8x128xf32>
    %c6 = arith.constant 6 : index
    %c0_41 = arith.constant 0 : index
    %c0_42 = arith.constant 0 : index
    %44 = vector.load %arg5[%c6, %c0_41, %c0_42] : memref<9x8x8xf32, #tpu.memory_space<vmem>>, vector<1x8x8xf32>
    %45 = vector.shape_cast %44 : vector<1x8x8xf32> to vector<8x8xf32>
    %cst_43 = arith.constant dense<0.000000e+00> : vector<8x128xf32>
    %46 = tpu.matmul %45, %19, %cst_43 {dimension_numbers = #tpu.dot_dimension_numbers<[1], [0], [0], [1], [0, 0, 1, 1], [], []>} : vector<8x8xf32>, vector<8x128xf32>, vector<8x128xf32> -> vector<8x128xf32>
    %c4 = arith.constant 4 : index
    %c0_44 = arith.constant 0 : index
    %c0_45 = arith.constant 0 : index
    %47 = vector.load %arg6[%c4, %c0_44, %c0_45] : memref<64x128x128xf32, #tpu.memory_space<vmem>>, vector<1x128x128xf32>
    %48 = vector.shape_cast %47 : vector<1x128x128xf32> to vector<128x128xf32>
    %cst_46 = arith.constant dense<0.000000e+00> : vector<8x128xf32>
    %49 = tpu.matmul %46, %48, %cst_46 {dimension_numbers = #tpu.dot_dimension_numbers<[1], [0], [0], [1], [0, 0, 1, 1], [], []>} : vector<8x128xf32>, vector<128x128xf32>, vector<8x128xf32> -> vector<8x128xf32>
    %50 = arith.addf %43, %49 : vector<8x128xf32>
    %cst_47 = arith.constant 0.000000e+00 : f32
    %51 = vector.broadcast %cst_47 : f32 to vector<8x128xf32>
    %52 = arith.maximumf %50, %51 : vector<8x128xf32>
    %c2_48 = arith.constant 2 : index
    %c0_49 = arith.constant 0 : index
    %c0_50 = arith.constant 0 : index
    %53 = vector.load %arg5[%c2_48, %c0_49, %c0_50] : memref<9x8x8xf32, #tpu.memory_space<vmem>>, vector<1x8x8xf32>
    %54 = vector.shape_cast %53 : vector<1x8x8xf32> to vector<8x8xf32>
    %cst_51 = arith.constant dense<0.000000e+00> : vector<8x128xf32>
    %55 = tpu.matmul %54, %52, %cst_51 {dimension_numbers = #tpu.dot_dimension_numbers<[1], [0], [0], [1], [0, 0, 1, 1], [], []>} : vector<8x8xf32>, vector<8x128xf32>, vector<8x128xf32> -> vector<8x128xf32>
    %c5_52 = arith.constant 5 : index
    %c0_53 = arith.constant 0 : index
    %c0_54 = arith.constant 0 : index
    %56 = vector.load %arg6[%c5_52, %c0_53, %c0_54] : memref<64x128x128xf32, #tpu.memory_space<vmem>>, vector<1x128x128xf32>
    %57 = vector.shape_cast %56 : vector<1x128x128xf32> to vector<128x128xf32>
    %cst_55 = arith.constant dense<0.000000e+00> : vector<8x128xf32>
    %58 = tpu.matmul %55, %57, %cst_55 {dimension_numbers = #tpu.dot_dimension_numbers<[1], [0], [0], [1], [0, 0, 1, 1], [], []>} : vector<8x128xf32>, vector<128x128xf32>, vector<8x128xf32> -> vector<8x128xf32>
    %c3_56 = arith.constant 3 : index
    %c0_57 = arith.constant 0 : index
    %c0_58 = arith.constant 0 : index
    %59 = vector.load %arg5[%c3_56, %c0_57, %c0_58] : memref<9x8x8xf32, #tpu.memory_space<vmem>>, vector<1x8x8xf32>
    %60 = vector.shape_cast %59 : vector<1x8x8xf32> to vector<8x8xf32>
    %cst_59 = arith.constant dense<0.000000e+00> : vector<8x128xf32>
    %61 = tpu.matmul %60, %52, %cst_59 {dimension_numbers = #tpu.dot_dimension_numbers<[1], [0], [0], [1], [0, 0, 1, 1], [], []>} : vector<8x8xf32>, vector<8x128xf32>, vector<8x128xf32> -> vector<8x128xf32>
    %c6_60 = arith.constant 6 : index
    %c0_61 = arith.constant 0 : index
    %c0_62 = arith.constant 0 : index
    %62 = vector.load %arg6[%c6_60, %c0_61, %c0_62] : memref<64x128x128xf32, #tpu.memory_space<vmem>>, vector<1x128x128xf32>
    %63 = vector.shape_cast %62 : vector<1x128x128xf32> to vector<128x128xf32>
    %cst_63 = arith.constant dense<0.000000e+00> : vector<8x128xf32>
    %64 = tpu.matmul %61, %63, %cst_63 {dimension_numbers = #tpu.dot_dimension_numbers<[1], [0], [0], [1], [0, 0, 1, 1], [], []>} : vector<8x128xf32>, vector<128x128xf32>, vector<8x128xf32> -> vector<8x128xf32>
    %65 = arith.addf %58, %64 : vector<8x128xf32>
    %c7 = arith.constant 7 : index
    %c0_64 = arith.constant 0 : index
    %c0_65 = arith.constant 0 : index
    %66 = vector.load %arg6[%c7, %c0_64, %c0_65] : memref<64x128x128xf32, #tpu.memory_space<vmem>>, vector<1x128x128xf32>
    %67 = vector.shape_cast %66 : vector<1x128x128xf32> to vector<128x128xf32>
    %cst_66 = arith.constant dense<0.000000e+00> : vector<8x128xf32>
    %68 = tpu.matmul %52, %67, %cst_66 {dimension_numbers = #tpu.dot_dimension_numbers<[1], [0], [0], [1], [0, 0, 1, 1], [], []>} : vector<8x128xf32>, vector<128x128xf32>, vector<8x128xf32> -> vector<8x128xf32>
    %69 = arith.addf %65, %68 : vector<8x128xf32>
    %c5_67 = arith.constant 5 : index
    %c0_68 = arith.constant 0 : index
    %c0_69 = arith.constant 0 : index
    %70 = vector.load %arg5[%c5_67, %c0_68, %c0_69] : memref<9x8x8xf32, #tpu.memory_space<vmem>>, vector<1x8x8xf32>
    %71 = vector.shape_cast %70 : vector<1x8x8xf32> to vector<8x8xf32>
    %cst_70 = arith.constant dense<0.000000e+00> : vector<8x128xf32>
    %72 = tpu.matmul %71, %52, %cst_70 {dimension_numbers = #tpu.dot_dimension_numbers<[1], [0], [0], [1], [0, 0, 1, 1], [], []>} : vector<8x8xf32>, vector<8x128xf32>, vector<8x128xf32> -> vector<8x128xf32>
    %c8 = arith.constant 8 : index
    %c0_71 = arith.constant 0 : index
    %c0_72 = arith.constant 0 : index
    %73 = vector.load %arg6[%c8, %c0_71, %c0_72] : memref<64x128x128xf32, #tpu.memory_space<vmem>>, vector<1x128x128xf32>
    %74 = vector.shape_cast %73 : vector<1x128x128xf32> to vector<128x128xf32>
    %cst_73 = arith.constant dense<0.000000e+00> : vector<8x128xf32>
    %75 = tpu.matmul %72, %74, %cst_73 {dimension_numbers = #tpu.dot_dimension_numbers<[1], [0], [0], [1], [0, 0, 1, 1], [], []>} : vector<8x128xf32>, vector<128x128xf32>, vector<8x128xf32> -> vector<8x128xf32>
    %76 = arith.addf %69, %75 : vector<8x128xf32>
    %c6_74 = arith.constant 6 : index
    %c0_75 = arith.constant 0 : index
    %c0_76 = arith.constant 0 : index
    %77 = vector.load %arg5[%c6_74, %c0_75, %c0_76] : memref<9x8x8xf32, #tpu.memory_space<vmem>>, vector<1x8x8xf32>
    %78 = vector.shape_cast %77 : vector<1x8x8xf32> to vector<8x8xf32>
    %cst_77 = arith.constant dense<0.000000e+00> : vector<8x128xf32>
    %79 = tpu.matmul %78, %52, %cst_77 {dimension_numbers = #tpu.dot_dimension_numbers<[1], [0], [0], [1], [0, 0, 1, 1], [], []>} : vector<8x8xf32>, vector<8x128xf32>, vector<8x128xf32> -> vector<8x128xf32>
    %c9 = arith.constant 9 : index
    %c0_78 = arith.constant 0 : index
    %c0_79 = arith.constant 0 : index
    %80 = vector.load %arg6[%c9, %c0_78, %c0_79] : memref<64x128x128xf32, #tpu.memory_space<vmem>>, vector<1x128x128xf32>
    %81 = vector.shape_cast %80 : vector<1x128x128xf32> to vector<128x128xf32>
    %cst_80 = arith.constant dense<0.000000e+00> : vector<8x128xf32>
    %82 = tpu.matmul %79, %81, %cst_80 {dimension_numbers = #tpu.dot_dimension_numbers<[1], [0], [0], [1], [0, 0, 1, 1], [], []>} : vector<8x128xf32>, vector<128x128xf32>, vector<8x128xf32> -> vector<8x128xf32>
    %83 = arith.addf %76, %82 : vector<8x128xf32>
    %cst_81 = arith.constant 0.000000e+00 : f32
    %84 = vector.broadcast %cst_81 : f32 to vector<8x128xf32>
    %85 = arith.maximumf %17, %84 : vector<8x128xf32>
    %c3_82 = arith.constant 3 : index
    %c0_83 = arith.constant 0 : index
    %c0_84 = arith.constant 0 : index
    %86 = vector.load %arg5[%c3_82, %c0_83, %c0_84] : memref<9x8x8xf32, #tpu.memory_space<vmem>>, vector<1x8x8xf32>
    %87 = vector.shape_cast %86 : vector<1x8x8xf32> to vector<8x8xf32>
    %cst_85 = arith.constant dense<0.000000e+00> : vector<8x128xf32>
    %88 = tpu.matmul %87, %85, %cst_85 {dimension_numbers = #tpu.dot_dimension_numbers<[1], [0], [0], [1], [0, 0, 1, 1], [], []>} : vector<8x8xf32>, vector<8x128xf32>, vector<8x128xf32> -> vector<8x128xf32>
    %c10 = arith.constant 10 : index
    %c0_86 = arith.constant 0 : index
    %c0_87 = arith.constant 0 : index
    %89 = vector.load %arg6[%c10, %c0_86, %c0_87] : memref<64x128x128xf32, #tpu.memory_space<vmem>>, vector<1x128x128xf32>
    %90 = vector.shape_cast %89 : vector<1x128x128xf32> to vector<128x128xf32>
    %cst_88 = arith.constant dense<0.000000e+00> : vector<8x128xf32>
    %91 = tpu.matmul %88, %90, %cst_88 {dimension_numbers = #tpu.dot_dimension_numbers<[1], [0], [0], [1], [0, 0, 1, 1], [], []>} : vector<8x128xf32>, vector<128x128xf32>, vector<8x128xf32> -> vector<8x128xf32>
    %c11 = arith.constant 11 : index
    %c0_89 = arith.constant 0 : index
    %c0_90 = arith.constant 0 : index
    %92 = vector.load %arg6[%c11, %c0_89, %c0_90] : memref<64x128x128xf32, #tpu.memory_space<vmem>>, vector<1x128x128xf32>
    %93 = vector.shape_cast %92 : vector<1x128x128xf32> to vector<128x128xf32>
    %cst_91 = arith.constant dense<0.000000e+00> : vector<8x128xf32>
    %94 = tpu.matmul %85, %93, %cst_91 {dimension_numbers = #tpu.dot_dimension_numbers<[1], [0], [0], [1], [0, 0, 1, 1], [], []>} : vector<8x128xf32>, vector<128x128xf32>, vector<8x128xf32> -> vector<8x128xf32>
    %95 = arith.addf %91, %94 : vector<8x128xf32>
    %c5_92 = arith.constant 5 : index
    %c0_93 = arith.constant 0 : index
    %c0_94 = arith.constant 0 : index
    %96 = vector.load %arg5[%c5_92, %c0_93, %c0_94] : memref<9x8x8xf32, #tpu.memory_space<vmem>>, vector<1x8x8xf32>
    %97 = vector.shape_cast %96 : vector<1x8x8xf32> to vector<8x8xf32>
    %cst_95 = arith.constant dense<0.000000e+00> : vector<8x128xf32>
    %98 = tpu.matmul %97, %85, %cst_95 {dimension_numbers = #tpu.dot_dimension_numbers<[1], [0], [0], [1], [0, 0, 1, 1], [], []>} : vector<8x8xf32>, vector<8x128xf32>, vector<8x128xf32> -> vector<8x128xf32>
    %c12 = arith.constant 12 : index
    %c0_96 = arith.constant 0 : index
    %c0_97 = arith.constant 0 : index
    %99 = vector.load %arg6[%c12, %c0_96, %c0_97] : memref<64x128x128xf32, #tpu.memory_space<vmem>>, vector<1x128x128xf32>
    %100 = vector.shape_cast %99 : vector<1x128x128xf32> to vector<128x128xf32>
    %cst_98 = arith.constant dense<0.000000e+00> : vector<8x128xf32>
    %101 = tpu.matmul %98, %100, %cst_98 {dimension_numbers = #tpu.dot_dimension_numbers<[1], [0], [0], [1], [0, 0, 1, 1], [], []>} : vector<8x128xf32>, vector<128x128xf32>, vector<8x128xf32> -> vector<8x128xf32>
    %102 = arith.addf %95, %101 : vector<8x128xf32>
    %cst_99 = arith.constant 0.000000e+00 : f32
    %103 = vector.broadcast %cst_99 : f32 to vector<8x128xf32>
    %104 = arith.maximumf %102, %103 : vector<8x128xf32>
    %c3_100 = arith.constant 3 : index
    %c0_101 = arith.constant 0 : index
    %c0_102 = arith.constant 0 : index
    %105 = vector.load %arg5[%c3_100, %c0_101, %c0_102] : memref<9x8x8xf32, #tpu.memory_space<vmem>>, vector<1x8x8xf32>
    %106 = vector.shape_cast %105 : vector<1x8x8xf32> to vector<8x8xf32>
    %cst_103 = arith.constant dense<0.000000e+00> : vector<8x128xf32>
    %107 = tpu.matmul %106, %104, %cst_103 {dimension_numbers = #tpu.dot_dimension_numbers<[1], [0], [0], [1], [0, 0, 1, 1], [], []>} : vector<8x8xf32>, vector<8x128xf32>, vector<8x128xf32> -> vector<8x128xf32>
    %c13 = arith.constant 13 : index
    %c0_104 = arith.constant 0 : index
    %c0_105 = arith.constant 0 : index
    %108 = vector.load %arg6[%c13, %c0_104, %c0_105] : memref<64x128x128xf32, #tpu.memory_space<vmem>>, vector<1x128x128xf32>
    %109 = vector.shape_cast %108 : vector<1x128x128xf32> to vector<128x128xf32>
    %cst_106 = arith.constant dense<0.000000e+00> : vector<8x128xf32>
    %110 = tpu.matmul %107, %109, %cst_106 {dimension_numbers = #tpu.dot_dimension_numbers<[1], [0], [0], [1], [0, 0, 1, 1], [], []>} : vector<8x128xf32>, vector<128x128xf32>, vector<8x128xf32> -> vector<8x128xf32>
    %c14 = arith.constant 14 : index
    %c0_107 = arith.constant 0 : index
    %c0_108 = arith.constant 0 : index
    %111 = vector.load %arg6[%c14, %c0_107, %c0_108] : memref<64x128x128xf32, #tpu.memory_space<vmem>>, vector<1x128x128xf32>
    %112 = vector.shape_cast %111 : vector<1x128x128xf32> to vector<128x128xf32>
    %cst_109 = arith.constant dense<0.000000e+00> : vector<8x128xf32>
    %113 = tpu.matmul %104, %112, %cst_109 {dimension_numbers = #tpu.dot_dimension_numbers<[1], [0], [0], [1], [0, 0, 1, 1], [], []>} : vector<8x128xf32>, vector<128x128xf32>, vector<8x128xf32> -> vector<8x128xf32>
    %114 = arith.addf %110, %113 : vector<8x128xf32>
    %c5_110 = arith.constant 5 : index
    %c0_111 = arith.constant 0 : index
    %c0_112 = arith.constant 0 : index
    %115 = vector.load %arg5[%c5_110, %c0_111, %c0_112] : memref<9x8x8xf32, #tpu.memory_space<vmem>>, vector<1x8x8xf32>
    %116 = vector.shape_cast %115 : vector<1x8x8xf32> to vector<8x8xf32>
    %cst_113 = arith.constant dense<0.000000e+00> : vector<8x128xf32>
    %117 = tpu.matmul %116, %104, %cst_113 {dimension_numbers = #tpu.dot_dimension_numbers<[1], [0], [0], [1], [0, 0, 1, 1], [], []>} : vector<8x8xf32>, vector<8x128xf32>, vector<8x128xf32> -> vector<8x128xf32>
    %c15 = arith.constant 15 : index
    %c0_114 = arith.constant 0 : index
    %c0_115 = arith.constant 0 : index
    %118 = vector.load %arg6[%c15, %c0_114, %c0_115] : memref<64x128x128xf32, #tpu.memory_space<vmem>>, vector<1x128x128xf32>
    %119 = vector.shape_cast %118 : vector<1x128x128xf32> to vector<128x128xf32>
    %cst_116 = arith.constant dense<0.000000e+00> : vector<8x128xf32>
    %120 = tpu.matmul %117, %119, %cst_116 {dimension_numbers = #tpu.dot_dimension_numbers<[1], [0], [0], [1], [0, 0, 1, 1], [], []>} : vector<8x128xf32>, vector<128x128xf32>, vector<8x128xf32> -> vector<8x128xf32>
    %121 = arith.addf %114, %120 : vector<8x128xf32>
    %122 = arith.addf %83, %121 : vector<8x128xf32>
    %cst_117 = arith.constant 0.000000e+00 : f32
    %123 = vector.broadcast %cst_117 : f32 to vector<8x128xf32>
    %124 = arith.maximumf %17, %123 : vector<8x128xf32>
    %c3_118 = arith.constant 3 : index
    %c0_119 = arith.constant 0 : index
    %c0_120 = arith.constant 0 : index
    %125 = vector.load %arg5[%c3_118, %c0_119, %c0_120] : memref<9x8x8xf32, #tpu.memory_space<vmem>>, vector<1x8x8xf32>
    %126 = vector.shape_cast %125 : vector<1x8x8xf32> to vector<8x8xf32>
    %cst_121 = arith.constant dense<0.000000e+00> : vector<8x128xf32>
    %127 = tpu.matmul %126, %124, %cst_121 {dimension_numbers = #tpu.dot_dimension_numbers<[1], [0], [0], [1], [0, 0, 1, 1], [], []>} : vector<8x8xf32>, vector<8x128xf32>, vector<8x128xf32> -> vector<8x128xf32>
    %c16 = arith.constant 16 : index
    %c0_122 = arith.constant 0 : index
    %c0_123 = arith.constant 0 : index
    %128 = vector.load %arg6[%c16, %c0_122, %c0_123] : memref<64x128x128xf32, #tpu.memory_space<vmem>>, vector<1x128x128xf32>
    %129 = vector.shape_cast %128 : vector<1x128x128xf32> to vector<128x128xf32>
    %cst_124 = arith.constant dense<0.000000e+00> : vector<8x128xf32>
    %130 = tpu.matmul %127, %129, %cst_124 {dimension_numbers = #tpu.dot_dimension_numbers<[1], [0], [0], [1], [0, 0, 1, 1], [], []>} : vector<8x128xf32>, vector<128x128xf32>, vector<8x128xf32> -> vector<8x128xf32>
    %c17 = arith.constant 17 : index
    %c0_125 = arith.constant 0 : index
    %c0_126 = arith.constant 0 : index
    %131 = vector.load %arg6[%c17, %c0_125, %c0_126] : memref<64x128x128xf32, #tpu.memory_space<vmem>>, vector<1x128x128xf32>
    %132 = vector.shape_cast %131 : vector<1x128x128xf32> to vector<128x128xf32>
    %cst_127 = arith.constant dense<0.000000e+00> : vector<8x128xf32>
    %133 = tpu.matmul %124, %132, %cst_127 {dimension_numbers = #tpu.dot_dimension_numbers<[1], [0], [0], [1], [0, 0, 1, 1], [], []>} : vector<8x128xf32>, vector<128x128xf32>, vector<8x128xf32> -> vector<8x128xf32>
    %134 = arith.addf %130, %133 : vector<8x128xf32>
    %c5_128 = arith.constant 5 : index
    %c0_129 = arith.constant 0 : index
    %c0_130 = arith.constant 0 : index
    %135 = vector.load %arg5[%c5_128, %c0_129, %c0_130] : memref<9x8x8xf32, #tpu.memory_space<vmem>>, vector<1x8x8xf32>
    %136 = vector.shape_cast %135 : vector<1x8x8xf32> to vector<8x8xf32>
    %cst_131 = arith.constant dense<0.000000e+00> : vector<8x128xf32>
    %137 = tpu.matmul %136, %124, %cst_131 {dimension_numbers = #tpu.dot_dimension_numbers<[1], [0], [0], [1], [0, 0, 1, 1], [], []>} : vector<8x8xf32>, vector<8x128xf32>, vector<8x128xf32> -> vector<8x128xf32>
    %c18 = arith.constant 18 : index
    %c0_132 = arith.constant 0 : index
    %c0_133 = arith.constant 0 : index
    %138 = vector.load %arg6[%c18, %c0_132, %c0_133] : memref<64x128x128xf32, #tpu.memory_space<vmem>>, vector<1x128x128xf32>
    %139 = vector.shape_cast %138 : vector<1x128x128xf32> to vector<128x128xf32>
    %cst_134 = arith.constant dense<0.000000e+00> : vector<8x128xf32>
    %140 = tpu.matmul %137, %139, %cst_134 {dimension_numbers = #tpu.dot_dimension_numbers<[1], [0], [0], [1], [0, 0, 1, 1], [], []>} : vector<8x128xf32>, vector<128x128xf32>, vector<8x128xf32> -> vector<8x128xf32>
    %141 = arith.addf %134, %140 : vector<8x128xf32>
    %cst_135 = arith.constant 0.000000e+00 : f32
    %142 = vector.broadcast %cst_135 : f32 to vector<8x128xf32>
    %143 = arith.maximumf %141, %142 : vector<8x128xf32>
    %c3_136 = arith.constant 3 : index
    %c0_137 = arith.constant 0 : index
    %c0_138 = arith.constant 0 : index
    %144 = vector.load %arg5[%c3_136, %c0_137, %c0_138] : memref<9x8x8xf32, #tpu.memory_space<vmem>>, vector<1x8x8xf32>
    %145 = vector.shape_cast %144 : vector<1x8x8xf32> to vector<8x8xf32>
    %cst_139 = arith.constant dense<0.000000e+00> : vector<8x128xf32>
    %146 = tpu.matmul %145, %143, %cst_139 {dimension_numbers = #tpu.dot_dimension_numbers<[1], [0], [0], [1], [0, 0, 1, 1], [], []>} : vector<8x8xf32>, vector<8x128xf32>, vector<8x128xf32> -> vector<8x128xf32>
    %c19 = arith.constant 19 : index
    %c0_140 = arith.constant 0 : index
    %c0_141 = arith.constant 0 : index
    %147 = vector.load %arg6[%c19, %c0_140, %c0_141] : memref<64x128x128xf32, #tpu.memory_space<vmem>>, vector<1x128x128xf32>
    %148 = vector.shape_cast %147 : vector<1x128x128xf32> to vector<128x128xf32>
    %cst_142 = arith.constant dense<0.000000e+00> : vector<8x128xf32>
    %149 = tpu.matmul %146, %148, %cst_142 {dimension_numbers = #tpu.dot_dimension_numbers<[1], [0], [0], [1], [0, 0, 1, 1], [], []>} : vector<8x128xf32>, vector<128x128xf32>, vector<8x128xf32> -> vector<8x128xf32>
    %c20 = arith.constant 20 : index
    %c0_143 = arith.constant 0 : index
    %c0_144 = arith.constant 0 : index
    %150 = vector.load %arg6[%c20, %c0_143, %c0_144] : memref<64x128x128xf32, #tpu.memory_space<vmem>>, vector<1x128x128xf32>
    %151 = vector.shape_cast %150 : vector<1x128x128xf32> to vector<128x128xf32>
    %cst_145 = arith.constant dense<0.000000e+00> : vector<8x128xf32>
    %152 = tpu.matmul %143, %151, %cst_145 {dimension_numbers = #tpu.dot_dimension_numbers<[1], [0], [0], [1], [0, 0, 1, 1], [], []>} : vector<8x128xf32>, vector<128x128xf32>, vector<8x128xf32> -> vector<8x128xf32>
    %153 = arith.addf %149, %152 : vector<8x128xf32>
    %c5_146 = arith.constant 5 : index
    %c0_147 = arith.constant 0 : index
    %c0_148 = arith.constant 0 : index
    %154 = vector.load %arg5[%c5_146, %c0_147, %c0_148] : memref<9x8x8xf32, #tpu.memory_space<vmem>>, vector<1x8x8xf32>
    %155 = vector.shape_cast %154 : vector<1x8x8xf32> to vector<8x8xf32>
    %cst_149 = arith.constant dense<0.000000e+00> : vector<8x128xf32>
    %156 = tpu.matmul %155, %143, %cst_149 {dimension_numbers = #tpu.dot_dimension_numbers<[1], [0], [0], [1], [0, 0, 1, 1], [], []>} : vector<8x8xf32>, vector<8x128xf32>, vector<8x128xf32> -> vector<8x128xf32>
    %c21 = arith.constant 21 : index
    %c0_150 = arith.constant 0 : index
    %c0_151 = arith.constant 0 : index
    %157 = vector.load %arg6[%c21, %c0_150, %c0_151] : memref<64x128x128xf32, #tpu.memory_space<vmem>>, vector<1x128x128xf32>
    %158 = vector.shape_cast %157 : vector<1x128x128xf32> to vector<128x128xf32>
    %cst_152 = arith.constant dense<0.000000e+00> : vector<8x128xf32>
    %159 = tpu.matmul %156, %158, %cst_152 {dimension_numbers = #tpu.dot_dimension_numbers<[1], [0], [0], [1], [0, 0, 1, 1], [], []>} : vector<8x128xf32>, vector<128x128xf32>, vector<8x128xf32> -> vector<8x128xf32>
    %160 = arith.addf %153, %159 : vector<8x128xf32>
    %161 = arith.addf %8, %160 : vector<8x128xf32>
    %cst_153 = arith.constant 0.000000e+00 : f32
    %162 = vector.broadcast %cst_153 : f32 to vector<8x128xf32>
    %163 = arith.maximumf %122, %162 : vector<8x128xf32>
    %c3_154 = arith.constant 3 : index
    %c0_155 = arith.constant 0 : index
    %c0_156 = arith.constant 0 : index
    %164 = vector.load %arg5[%c3_154, %c0_155, %c0_156] : memref<9x8x8xf32, #tpu.memory_space<vmem>>, vector<1x8x8xf32>
    %165 = vector.shape_cast %164 : vector<1x8x8xf32> to vector<8x8xf32>
    %cst_157 = arith.constant dense<0.000000e+00> : vector<8x128xf32>
    %166 = tpu.matmul %165, %163, %cst_157 {dimension_numbers = #tpu.dot_dimension_numbers<[1], [0], [0], [1], [0, 0, 1, 1], [], []>} : vector<8x8xf32>, vector<8x128xf32>, vector<8x128xf32> -> vector<8x128xf32>
    %c22 = arith.constant 22 : index
    %c0_158 = arith.constant 0 : index
    %c0_159 = arith.constant 0 : index
    %167 = vector.load %arg6[%c22, %c0_158, %c0_159] : memref<64x128x128xf32, #tpu.memory_space<vmem>>, vector<1x128x128xf32>
    %168 = vector.shape_cast %167 : vector<1x128x128xf32> to vector<128x128xf32>
    %cst_160 = arith.constant dense<0.000000e+00> : vector<8x128xf32>
    %169 = tpu.matmul %166, %168, %cst_160 {dimension_numbers = #tpu.dot_dimension_numbers<[1], [0], [0], [1], [0, 0, 1, 1], [], []>} : vector<8x128xf32>, vector<128x128xf32>, vector<8x128xf32> -> vector<8x128xf32>
    %c23 = arith.constant 23 : index
    %c0_161 = arith.constant 0 : index
    %c0_162 = arith.constant 0 : index
    %170 = vector.load %arg6[%c23, %c0_161, %c0_162] : memref<64x128x128xf32, #tpu.memory_space<vmem>>, vector<1x128x128xf32>
    %171 = vector.shape_cast %170 : vector<1x128x128xf32> to vector<128x128xf32>
    %cst_163 = arith.constant dense<0.000000e+00> : vector<8x128xf32>
    %172 = tpu.matmul %163, %171, %cst_163 {dimension_numbers = #tpu.dot_dimension_numbers<[1], [0], [0], [1], [0, 0, 1, 1], [], []>} : vector<8x128xf32>, vector<128x128xf32>, vector<8x128xf32> -> vector<8x128xf32>
    %173 = arith.addf %169, %172 : vector<8x128xf32>
    %c5_164 = arith.constant 5 : index
    %c0_165 = arith.constant 0 : index
    %c0_166 = arith.constant 0 : index
    %174 = vector.load %arg5[%c5_164, %c0_165, %c0_166] : memref<9x8x8xf32, #tpu.memory_space<vmem>>, vector<1x8x8xf32>
    %175 = vector.shape_cast %174 : vector<1x8x8xf32> to vector<8x8xf32>
    %cst_167 = arith.constant dense<0.000000e+00> : vector<8x128xf32>
    %176 = tpu.matmul %175, %163, %cst_167 {dimension_numbers = #tpu.dot_dimension_numbers<[1], [0], [0], [1], [0, 0, 1, 1], [], []>} : vector<8x8xf32>, vector<8x128xf32>, vector<8x128xf32> -> vector<8x128xf32>
    %c24 = arith.constant 24 : index
    %c0_168 = arith.constant 0 : index
    %c0_169 = arith.constant 0 : index
    %177 = vector.load %arg6[%c24, %c0_168, %c0_169] : memref<64x128x128xf32, #tpu.memory_space<vmem>>, vector<1x128x128xf32>
    %178 = vector.shape_cast %177 : vector<1x128x128xf32> to vector<128x128xf32>
    %cst_170 = arith.constant dense<0.000000e+00> : vector<8x128xf32>
    %179 = tpu.matmul %176, %178, %cst_170 {dimension_numbers = #tpu.dot_dimension_numbers<[1], [0], [0], [1], [0, 0, 1, 1], [], []>} : vector<8x128xf32>, vector<128x128xf32>, vector<8x128xf32> -> vector<8x128xf32>
    %180 = arith.addf %173, %179 : vector<8x128xf32>
    %cst_171 = arith.constant 0.000000e+00 : f32
    %181 = vector.broadcast %cst_171 : f32 to vector<8x128xf32>
    %182 = arith.maximumf %180, %181 : vector<8x128xf32>
    %c3_172 = arith.constant 3 : index
    %c0_173 = arith.constant 0 : index
    %c0_174 = arith.constant 0 : index
    %183 = vector.load %arg5[%c3_172, %c0_173, %c0_174] : memref<9x8x8xf32, #tpu.memory_space<vmem>>, vector<1x8x8xf32>
    %184 = vector.shape_cast %183 : vector<1x8x8xf32> to vector<8x8xf32>
    %cst_175 = arith.constant dense<0.000000e+00> : vector<8x128xf32>
    %185 = tpu.matmul %184, %182, %cst_175 {dimension_numbers = #tpu.dot_dimension_numbers<[1], [0], [0], [1], [0, 0, 1, 1], [], []>} : vector<8x8xf32>, vector<8x128xf32>, vector<8x128xf32> -> vector<8x128xf32>
    %c25 = arith.constant 25 : index
    %c0_176 = arith.constant 0 : index
    %c0_177 = arith.constant 0 : index
    %186 = vector.load %arg6[%c25, %c0_176, %c0_177] : memref<64x128x128xf32, #tpu.memory_space<vmem>>, vector<1x128x128xf32>
    %187 = vector.shape_cast %186 : vector<1x128x128xf32> to vector<128x128xf32>
    %cst_178 = arith.constant dense<0.000000e+00> : vector<8x128xf32>
    %188 = tpu.matmul %185, %187, %cst_178 {dimension_numbers = #tpu.dot_dimension_numbers<[1], [0], [0], [1], [0, 0, 1, 1], [], []>} : vector<8x128xf32>, vector<128x128xf32>, vector<8x128xf32> -> vector<8x128xf32>
    %c26 = arith.constant 26 : index
    %c0_179 = arith.constant 0 : index
    %c0_180 = arith.constant 0 : index
    %189 = vector.load %arg6[%c26, %c0_179, %c0_180] : memref<64x128x128xf32, #tpu.memory_space<vmem>>, vector<1x128x128xf32>
    %190 = vector.shape_cast %189 : vector<1x128x128xf32> to vector<128x128xf32>
    %cst_181 = arith.constant dense<0.000000e+00> : vector<8x128xf32>
    %191 = tpu.matmul %182, %190, %cst_181 {dimension_numbers = #tpu.dot_dimension_numbers<[1], [0], [0], [1], [0, 0, 1, 1], [], []>} : vector<8x128xf32>, vector<128x128xf32>, vector<8x128xf32> -> vector<8x128xf32>
    %192 = arith.addf %188, %191 : vector<8x128xf32>
    %c5_182 = arith.constant 5 : index
    %c0_183 = arith.constant 0 : index
    %c0_184 = arith.constant 0 : index
    %193 = vector.load %arg5[%c5_182, %c0_183, %c0_184] : memref<9x8x8xf32, #tpu.memory_space<vmem>>, vector<1x8x8xf32>
    %194 = vector.shape_cast %193 : vector<1x8x8xf32> to vector<8x8xf32>
    %cst_185 = arith.constant dense<0.000000e+00> : vector<8x128xf32>
    %195 = tpu.matmul %194, %182, %cst_185 {dimension_numbers = #tpu.dot_dimension_numbers<[1], [0], [0], [1], [0, 0, 1, 1], [], []>} : vector<8x8xf32>, vector<8x128xf32>, vector<8x128xf32> -> vector<8x128xf32>
    %c27 = arith.constant 27 : index
    %c0_186 = arith.constant 0 : index
    %c0_187 = arith.constant 0 : index
    %196 = vector.load %arg6[%c27, %c0_186, %c0_187] : memref<64x128x128xf32, #tpu.memory_space<vmem>>, vector<1x128x128xf32>
    %197 = vector.shape_cast %196 : vector<1x128x128xf32> to vector<128x128xf32>
    %cst_188 = arith.constant dense<0.000000e+00> : vector<8x128xf32>
    %198 = tpu.matmul %195, %197, %cst_188 {dimension_numbers = #tpu.dot_dimension_numbers<[1], [0], [0], [1], [0, 0, 1, 1], [], []>} : vector<8x128xf32>, vector<128x128xf32>, vector<8x128xf32> -> vector<8x128xf32>
    %199 = arith.addf %192, %198 : vector<8x128xf32>
    %200 = arith.addf %161, %199 : vector<8x128xf32>
    %cst_189 = arith.constant 0.000000e+00 : f32
    %201 = vector.broadcast %cst_189 : f32 to vector<8x128xf32>
    %202 = arith.maximumf %8, %201 : vector<8x128xf32>
    %c2_190 = arith.constant 2 : index
    %c0_191 = arith.constant 0 : index
    %c0_192 = arith.constant 0 : index
    %203 = vector.load %arg5[%c2_190, %c0_191, %c0_192] : memref<9x8x8xf32, #tpu.memory_space<vmem>>, vector<1x8x8xf32>
    %204 = vector.shape_cast %203 : vector<1x8x8xf32> to vector<8x8xf32>
    %cst_193 = arith.constant dense<0.000000e+00> : vector<8x128xf32>
    %205 = tpu.matmul %204, %202, %cst_193 {dimension_numbers = #tpu.dot_dimension_numbers<[1], [0], [0], [1], [0, 0, 1, 1], [], []>} : vector<8x8xf32>, vector<8x128xf32>, vector<8x128xf32> -> vector<8x128xf32>
    %c28 = arith.constant 28 : index
    %c0_194 = arith.constant 0 : index
    %c0_195 = arith.constant 0 : index
    %206 = vector.load %arg6[%c28, %c0_194, %c0_195] : memref<64x128x128xf32, #tpu.memory_space<vmem>>, vector<1x128x128xf32>
    %207 = vector.shape_cast %206 : vector<1x128x128xf32> to vector<128x128xf32>
    %cst_196 = arith.constant dense<0.000000e+00> : vector<8x128xf32>
    %208 = tpu.matmul %205, %207, %cst_196 {dimension_numbers = #tpu.dot_dimension_numbers<[1], [0], [0], [1], [0, 0, 1, 1], [], []>} : vector<8x128xf32>, vector<128x128xf32>, vector<8x128xf32> -> vector<8x128xf32>
    %c3_197 = arith.constant 3 : index
    %c0_198 = arith.constant 0 : index
    %c0_199 = arith.constant 0 : index
    %209 = vector.load %arg5[%c3_197, %c0_198, %c0_199] : memref<9x8x8xf32, #tpu.memory_space<vmem>>, vector<1x8x8xf32>
    %210 = vector.shape_cast %209 : vector<1x8x8xf32> to vector<8x8xf32>
    %cst_200 = arith.constant dense<0.000000e+00> : vector<8x128xf32>
    %211 = tpu.matmul %210, %202, %cst_200 {dimension_numbers = #tpu.dot_dimension_numbers<[1], [0], [0], [1], [0, 0, 1, 1], [], []>} : vector<8x8xf32>, vector<8x128xf32>, vector<8x128xf32> -> vector<8x128xf32>
    %c29 = arith.constant 29 : index
    %c0_201 = arith.constant 0 : index
    %c0_202 = arith.constant 0 : index
    %212 = vector.load %arg6[%c29, %c0_201, %c0_202] : memref<64x128x128xf32, #tpu.memory_space<vmem>>, vector<1x128x128xf32>
    %213 = vector.shape_cast %212 : vector<1x128x128xf32> to vector<128x128xf32>
    %cst_203 = arith.constant dense<0.000000e+00> : vector<8x128xf32>
    %214 = tpu.matmul %211, %213, %cst_203 {dimension_numbers = #tpu.dot_dimension_numbers<[1], [0], [0], [1], [0, 0, 1, 1], [], []>} : vector<8x128xf32>, vector<128x128xf32>, vector<8x128xf32> -> vector<8x128xf32>
    %215 = arith.addf %208, %214 : vector<8x128xf32>
    %c30 = arith.constant 30 : index
    %c0_204 = arith.constant 0 : index
    %c0_205 = arith.constant 0 : index
    %216 = vector.load %arg6[%c30, %c0_204, %c0_205] : memref<64x128x128xf32, #tpu.memory_space<vmem>>, vector<1x128x128xf32>
    %217 = vector.shape_cast %216 : vector<1x128x128xf32> to vector<128x128xf32>
    %cst_206 = arith.constant dense<0.000000e+00> : vector<8x128xf32>
    %218 = tpu.matmul %202, %217, %cst_206 {dimension_numbers = #tpu.dot_dimension_numbers<[1], [0], [0], [1], [0, 0, 1, 1], [], []>} : vector<8x128xf32>, vector<128x128xf32>, vector<8x128xf32> -> vector<8x128xf32>
    %219 = arith.addf %215, %218 : vector<8x128xf32>
    %c5_207 = arith.constant 5 : index
    %c0_208 = arith.constant 0 : index
    %c0_209 = arith.constant 0 : index
    %220 = vector.load %arg5[%c5_207, %c0_208, %c0_209] : memref<9x8x8xf32, #tpu.memory_space<vmem>>, vector<1x8x8xf32>
    %221 = vector.shape_cast %220 : vector<1x8x8xf32> to vector<8x8xf32>
    %cst_210 = arith.constant dense<0.000000e+00> : vector<8x128xf32>
    %222 = tpu.matmul %221, %202, %cst_210 {dimension_numbers = #tpu.dot_dimension_numbers<[1], [0], [0], [1], [0, 0, 1, 1], [], []>} : vector<8x8xf32>, vector<8x128xf32>, vector<8x128xf32> -> vector<8x128xf32>
    %c31 = arith.constant 31 : index
    %c0_211 = arith.constant 0 : index
    %c0_212 = arith.constant 0 : index
    %223 = vector.load %arg6[%c31, %c0_211, %c0_212] : memref<64x128x128xf32, #tpu.memory_space<vmem>>, vector<1x128x128xf32>
    %224 = vector.shape_cast %223 : vector<1x128x128xf32> to vector<128x128xf32>
    %cst_213 = arith.constant dense<0.000000e+00> : vector<8x128xf32>
    %225 = tpu.matmul %222, %224, %cst_213 {dimension_numbers = #tpu.dot_dimension_numbers<[1], [0], [0], [1], [0, 0, 1, 1], [], []>} : vector<8x128xf32>, vector<128x128xf32>, vector<8x128xf32> -> vector<8x128xf32>
    %226 = arith.addf %219, %225 : vector<8x128xf32>
    %c6_214 = arith.constant 6 : index
    %c0_215 = arith.constant 0 : index
    %c0_216 = arith.constant 0 : index
    %227 = vector.load %arg5[%c6_214, %c0_215, %c0_216] : memref<9x8x8xf32, #tpu.memory_space<vmem>>, vector<1x8x8xf32>
    %228 = vector.shape_cast %227 : vector<1x8x8xf32> to vector<8x8xf32>
    %cst_217 = arith.constant dense<0.000000e+00> : vector<8x128xf32>
    %229 = tpu.matmul %228, %202, %cst_217 {dimension_numbers = #tpu.dot_dimension_numbers<[1], [0], [0], [1], [0, 0, 1, 1], [], []>} : vector<8x8xf32>, vector<8x128xf32>, vector<8x128xf32> -> vector<8x128xf32>
    %c32 = arith.constant 32 : index
    %c0_218 = arith.constant 0 : index
    %c0_219 = arith.constant 0 : index
    %230 = vector.load %arg6[%c32, %c0_218, %c0_219] : memref<64x128x128xf32, #tpu.memory_space<vmem>>, vector<1x128x128xf32>
    %231 = vector.shape_cast %230 : vector<1x128x128xf32> to vector<128x128xf32>
    %cst_220 = arith.constant dense<0.000000e+00> : vector<8x128xf32>
    %232 = tpu.matmul %229, %231, %cst_220 {dimension_numbers = #tpu.dot_dimension_numbers<[1], [0], [0], [1], [0, 0, 1, 1], [], []>} : vector<8x128xf32>, vector<128x128xf32>, vector<8x128xf32> -> vector<8x128xf32>
    %233 = arith.addf %226, %232 : vector<8x128xf32>
    %cst_221 = arith.constant 0.000000e+00 : f32
    %234 = vector.broadcast %cst_221 : f32 to vector<8x128xf32>
    %235 = arith.maximumf %233, %234 : vector<8x128xf32>
    %c2_222 = arith.constant 2 : index
    %c0_223 = arith.constant 0 : index
    %c0_224 = arith.constant 0 : index
    %236 = vector.load %arg5[%c2_222, %c0_223, %c0_224] : memref<9x8x8xf32, #tpu.memory_space<vmem>>, vector<1x8x8xf32>
    %237 = vector.shape_cast %236 : vector<1x8x8xf32> to vector<8x8xf32>
    %cst_225 = arith.constant dense<0.000000e+00> : vector<8x128xf32>
    %238 = tpu.matmul %237, %235, %cst_225 {dimension_numbers = #tpu.dot_dimension_numbers<[1], [0], [0], [1], [0, 0, 1, 1], [], []>} : vector<8x8xf32>, vector<8x128xf32>, vector<8x128xf32> -> vector<8x128xf32>
    %c33 = arith.constant 33 : index
    %c0_226 = arith.constant 0 : index
    %c0_227 = arith.constant 0 : index
    %239 = vector.load %arg6[%c33, %c0_226, %c0_227] : memref<64x128x128xf32, #tpu.memory_space<vmem>>, vector<1x128x128xf32>
    %240 = vector.shape_cast %239 : vector<1x128x128xf32> to vector<128x128xf32>
    %cst_228 = arith.constant dense<0.000000e+00> : vector<8x128xf32>
    %241 = tpu.matmul %238, %240, %cst_228 {dimension_numbers = #tpu.dot_dimension_numbers<[1], [0], [0], [1], [0, 0, 1, 1], [], []>} : vector<8x128xf32>, vector<128x128xf32>, vector<8x128xf32> -> vector<8x128xf32>
    %c3_229 = arith.constant 3 : index
    %c0_230 = arith.constant 0 : index
    %c0_231 = arith.constant 0 : index
    %242 = vector.load %arg5[%c3_229, %c0_230, %c0_231] : memref<9x8x8xf32, #tpu.memory_space<vmem>>, vector<1x8x8xf32>
    %243 = vector.shape_cast %242 : vector<1x8x8xf32> to vector<8x8xf32>
    %cst_232 = arith.constant dense<0.000000e+00> : vector<8x128xf32>
    %244 = tpu.matmul %243, %235, %cst_232 {dimension_numbers = #tpu.dot_dimension_numbers<[1], [0], [0], [1], [0, 0, 1, 1], [], []>} : vector<8x8xf32>, vector<8x128xf32>, vector<8x128xf32> -> vector<8x128xf32>
    %c34 = arith.constant 34 : index
    %c0_233 = arith.constant 0 : index
    %c0_234 = arith.constant 0 : index
    %245 = vector.load %arg6[%c34, %c0_233, %c0_234] : memref<64x128x128xf32, #tpu.memory_space<vmem>>, vector<1x128x128xf32>
    %246 = vector.shape_cast %245 : vector<1x128x128xf32> to vector<128x128xf32>
    %cst_235 = arith.constant dense<0.000000e+00> : vector<8x128xf32>
    %247 = tpu.matmul %244, %246, %cst_235 {dimension_numbers = #tpu.dot_dimension_numbers<[1], [0], [0], [1], [0, 0, 1, 1], [], []>} : vector<8x128xf32>, vector<128x128xf32>, vector<8x128xf32> -> vector<8x128xf32>
    %248 = arith.addf %241, %247 : vector<8x128xf32>
    %c35 = arith.constant 35 : index
    %c0_236 = arith.constant 0 : index
    %c0_237 = arith.constant 0 : index
    %249 = vector.load %arg6[%c35, %c0_236, %c0_237] : memref<64x128x128xf32, #tpu.memory_space<vmem>>, vector<1x128x128xf32>
    %250 = vector.shape_cast %249 : vector<1x128x128xf32> to vector<128x128xf32>
    %cst_238 = arith.constant dense<0.000000e+00> : vector<8x128xf32>
    %251 = tpu.matmul %235, %250, %cst_238 {dimension_numbers = #tpu.dot_dimension_numbers<[1], [0], [0], [1], [0, 0, 1, 1], [], []>} : vector<8x128xf32>, vector<128x128xf32>, vector<8x128xf32> -> vector<8x128xf32>
    %252 = arith.addf %248, %251 : vector<8x128xf32>
    %c5_239 = arith.constant 5 : index
    %c0_240 = arith.constant 0 : index
    %c0_241 = arith.constant 0 : index
    %253 = vector.load %arg5[%c5_239, %c0_240, %c0_241] : memref<9x8x8xf32, #tpu.memory_space<vmem>>, vector<1x8x8xf32>
    %254 = vector.shape_cast %253 : vector<1x8x8xf32> to vector<8x8xf32>
    %cst_242 = arith.constant dense<0.000000e+00> : vector<8x128xf32>
    %255 = tpu.matmul %254, %235, %cst_242 {dimension_numbers = #tpu.dot_dimension_numbers<[1], [0], [0], [1], [0, 0, 1, 1], [], []>} : vector<8x8xf32>, vector<8x128xf32>, vector<8x128xf32> -> vector<8x128xf32>
    %c36 = arith.constant 36 : index
    %c0_243 = arith.constant 0 : index
    %c0_244 = arith.constant 0 : index
    %256 = vector.load %arg6[%c36, %c0_243, %c0_244] : memref<64x128x128xf32, #tpu.memory_space<vmem>>, vector<1x128x128xf32>
    %257 = vector.shape_cast %256 : vector<1x128x128xf32> to vector<128x128xf32>
    %cst_245 = arith.constant dense<0.000000e+00> : vector<8x128xf32>
    %258 = tpu.matmul %255, %257, %cst_245 {dimension_numbers = #tpu.dot_dimension_numbers<[1], [0], [0], [1], [0, 0, 1, 1], [], []>} : vector<8x128xf32>, vector<128x128xf32>, vector<8x128xf32> -> vector<8x128xf32>
    %259 = arith.addf %252, %258 : vector<8x128xf32>
    %c6_246 = arith.constant 6 : index
    %c0_247 = arith.constant 0 : index
    %c0_248 = arith.constant 0 : index
    %260 = vector.load %arg5[%c6_246, %c0_247, %c0_248] : memref<9x8x8xf32, #tpu.memory_space<vmem>>, vector<1x8x8xf32>
    %261 = vector.shape_cast %260 : vector<1x8x8xf32> to vector<8x8xf32>
    %cst_249 = arith.constant dense<0.000000e+00> : vector<8x128xf32>
    %262 = tpu.matmul %261, %235, %cst_249 {dimension_numbers = #tpu.dot_dimension_numbers<[1], [0], [0], [1], [0, 0, 1, 1], [], []>} : vector<8x8xf32>, vector<8x128xf32>, vector<8x128xf32> -> vector<8x128xf32>
    %c37 = arith.constant 37 : index
    %c0_250 = arith.constant 0 : index
    %c0_251 = arith.constant 0 : index
    %263 = vector.load %arg6[%c37, %c0_250, %c0_251] : memref<64x128x128xf32, #tpu.memory_space<vmem>>, vector<1x128x128xf32>
    %264 = vector.shape_cast %263 : vector<1x128x128xf32> to vector<128x128xf32>
    %cst_252 = arith.constant dense<0.000000e+00> : vector<8x128xf32>
    %265 = tpu.matmul %262, %264, %cst_252 {dimension_numbers = #tpu.dot_dimension_numbers<[1], [0], [0], [1], [0, 0, 1, 1], [], []>} : vector<8x128xf32>, vector<128x128xf32>, vector<8x128xf32> -> vector<8x128xf32>
    %266 = arith.addf %259, %265 : vector<8x128xf32>
    %cst_253 = arith.constant 0.000000e+00 : f32
    %267 = vector.broadcast %cst_253 : f32 to vector<8x128xf32>
    %268 = arith.maximumf %17, %267 : vector<8x128xf32>
    %c2_254 = arith.constant 2 : index
    %c0_255 = arith.constant 0 : index
    %c0_256 = arith.constant 0 : index
    %269 = vector.load %arg5[%c2_254, %c0_255, %c0_256] : memref<9x8x8xf32, #tpu.memory_space<vmem>>, vector<1x8x8xf32>
    %270 = vector.shape_cast %269 : vector<1x8x8xf32> to vector<8x8xf32>
    %cst_257 = arith.constant dense<0.000000e+00> : vector<8x128xf32>
    %271 = tpu.matmul %270, %268, %cst_257 {dimension_numbers = #tpu.dot_dimension_numbers<[1], [0], [0], [1], [0, 0, 1, 1], [], []>} : vector<8x8xf32>, vector<8x128xf32>, vector<8x128xf32> -> vector<8x128xf32>
    %c38 = arith.constant 38 : index
    %c0_258 = arith.constant 0 : index
    %c0_259 = arith.constant 0 : index
    %272 = vector.load %arg6[%c38, %c0_258, %c0_259] : memref<64x128x128xf32, #tpu.memory_space<vmem>>, vector<1x128x128xf32>
    %273 = vector.shape_cast %272 : vector<1x128x128xf32> to vector<128x128xf32>
    %cst_260 = arith.constant dense<0.000000e+00> : vector<8x128xf32>
    %274 = tpu.matmul %271, %273, %cst_260 {dimension_numbers = #tpu.dot_dimension_numbers<[1], [0], [0], [1], [0, 0, 1, 1], [], []>} : vector<8x128xf32>, vector<128x128xf32>, vector<8x128xf32> -> vector<8x128xf32>
    %c3_261 = arith.constant 3 : index
    %c0_262 = arith.constant 0 : index
    %c0_263 = arith.constant 0 : index
    %275 = vector.load %arg5[%c3_261, %c0_262, %c0_263] : memref<9x8x8xf32, #tpu.memory_space<vmem>>, vector<1x8x8xf32>
    %276 = vector.shape_cast %275 : vector<1x8x8xf32> to vector<8x8xf32>
    %cst_264 = arith.constant dense<0.000000e+00> : vector<8x128xf32>
    %277 = tpu.matmul %276, %268, %cst_264 {dimension_numbers = #tpu.dot_dimension_numbers<[1], [0], [0], [1], [0, 0, 1, 1], [], []>} : vector<8x8xf32>, vector<8x128xf32>, vector<8x128xf32> -> vector<8x128xf32>
    %c39 = arith.constant 39 : index
    %c0_265 = arith.constant 0 : index
    %c0_266 = arith.constant 0 : index
    %278 = vector.load %arg6[%c39, %c0_265, %c0_266] : memref<64x128x128xf32, #tpu.memory_space<vmem>>, vector<1x128x128xf32>
    %279 = vector.shape_cast %278 : vector<1x128x128xf32> to vector<128x128xf32>
    %cst_267 = arith.constant dense<0.000000e+00> : vector<8x128xf32>
    %280 = tpu.matmul %277, %279, %cst_267 {dimension_numbers = #tpu.dot_dimension_numbers<[1], [0], [0], [1], [0, 0, 1, 1], [], []>} : vector<8x128xf32>, vector<128x128xf32>, vector<8x128xf32> -> vector<8x128xf32>
    %281 = arith.addf %274, %280 : vector<8x128xf32>
    %c40 = arith.constant 40 : index
    %c0_268 = arith.constant 0 : index
    %c0_269 = arith.constant 0 : index
    %282 = vector.load %arg6[%c40, %c0_268, %c0_269] : memref<64x128x128xf32, #tpu.memory_space<vmem>>, vector<1x128x128xf32>
    %283 = vector.shape_cast %282 : vector<1x128x128xf32> to vector<128x128xf32>
    %cst_270 = arith.constant dense<0.000000e+00> : vector<8x128xf32>
    %284 = tpu.matmul %268, %283, %cst_270 {dimension_numbers = #tpu.dot_dimension_numbers<[1], [0], [0], [1], [0, 0, 1, 1], [], []>} : vector<8x128xf32>, vector<128x128xf32>, vector<8x128xf32> -> vector<8x128xf32>
    %285 = arith.addf %281, %284 : vector<8x128xf32>
    %c5_271 = arith.constant 5 : index
    %c0_272 = arith.constant 0 : index
    %c0_273 = arith.constant 0 : index
    %286 = vector.load %arg5[%c5_271, %c0_272, %c0_273] : memref<9x8x8xf32, #tpu.memory_space<vmem>>, vector<1x8x8xf32>
    %287 = vector.shape_cast %286 : vector<1x8x8xf32> to vector<8x8xf32>
    %cst_274 = arith.constant dense<0.000000e+00> : vector<8x128xf32>
    %288 = tpu.matmul %287, %268, %cst_274 {dimension_numbers = #tpu.dot_dimension_numbers<[1], [0], [0], [1], [0, 0, 1, 1], [], []>} : vector<8x8xf32>, vector<8x128xf32>, vector<8x128xf32> -> vector<8x128xf32>
    %c41 = arith.constant 41 : index
    %c0_275 = arith.constant 0 : index
    %c0_276 = arith.constant 0 : index
    %289 = vector.load %arg6[%c41, %c0_275, %c0_276] : memref<64x128x128xf32, #tpu.memory_space<vmem>>, vector<1x128x128xf32>
    %290 = vector.shape_cast %289 : vector<1x128x128xf32> to vector<128x128xf32>
    %cst_277 = arith.constant dense<0.000000e+00> : vector<8x128xf32>
    %291 = tpu.matmul %288, %290, %cst_277 {dimension_numbers = #tpu.dot_dimension_numbers<[1], [0], [0], [1], [0, 0, 1, 1], [], []>} : vector<8x128xf32>, vector<128x128xf32>, vector<8x128xf32> -> vector<8x128xf32>
    %292 = arith.addf %285, %291 : vector<8x128xf32>
    %c6_278 = arith.constant 6 : index
    %c0_279 = arith.constant 0 : index
    %c0_280 = arith.constant 0 : index
    %293 = vector.load %arg5[%c6_278, %c0_279, %c0_280] : memref<9x8x8xf32, #tpu.memory_space<vmem>>, vector<1x8x8xf32>
    %294 = vector.shape_cast %293 : vector<1x8x8xf32> to vector<8x8xf32>
    %cst_281 = arith.constant dense<0.000000e+00> : vector<8x128xf32>
    %295 = tpu.matmul %294, %268, %cst_281 {dimension_numbers = #tpu.dot_dimension_numbers<[1], [0], [0], [1], [0, 0, 1, 1], [], []>} : vector<8x8xf32>, vector<8x128xf32>, vector<8x128xf32> -> vector<8x128xf32>
    %c42 = arith.constant 42 : index
    %c0_282 = arith.constant 0 : index
    %c0_283 = arith.constant 0 : index
    %296 = vector.load %arg6[%c42, %c0_282, %c0_283] : memref<64x128x128xf32, #tpu.memory_space<vmem>>, vector<1x128x128xf32>
    %297 = vector.shape_cast %296 : vector<1x128x128xf32> to vector<128x128xf32>
    %cst_284 = arith.constant dense<0.000000e+00> : vector<8x128xf32>
    %298 = tpu.matmul %295, %297, %cst_284 {dimension_numbers = #tpu.dot_dimension_numbers<[1], [0], [0], [1], [0, 0, 1, 1], [], []>} : vector<8x128xf32>, vector<128x128xf32>, vector<8x128xf32> -> vector<8x128xf32>
    %299 = arith.addf %292, %298 : vector<8x128xf32>
    %cst_285 = arith.constant 0.000000e+00 : f32
    %300 = vector.broadcast %cst_285 : f32 to vector<8x128xf32>
    %301 = arith.maximumf %299, %300 : vector<8x128xf32>
    %c2_286 = arith.constant 2 : index
    %c0_287 = arith.constant 0 : index
    %c0_288 = arith.constant 0 : index
    %302 = vector.load %arg5[%c2_286, %c0_287, %c0_288] : memref<9x8x8xf32, #tpu.memory_space<vmem>>, vector<1x8x8xf32>
    %303 = vector.shape_cast %302 : vector<1x8x8xf32> to vector<8x8xf32>
    %cst_289 = arith.constant dense<0.000000e+00> : vector<8x128xf32>
    %304 = tpu.matmul %303, %301, %cst_289 {dimension_numbers = #tpu.dot_dimension_numbers<[1], [0], [0], [1], [0, 0, 1, 1], [], []>} : vector<8x8xf32>, vector<8x128xf32>, vector<8x128xf32> -> vector<8x128xf32>
    %c43 = arith.constant 43 : index
    %c0_290 = arith.constant 0 : index
    %c0_291 = arith.constant 0 : index
    %305 = vector.load %arg6[%c43, %c0_290, %c0_291] : memref<64x128x128xf32, #tpu.memory_space<vmem>>, vector<1x128x128xf32>
    %306 = vector.shape_cast %305 : vector<1x128x128xf32> to vector<128x128xf32>
    %cst_292 = arith.constant dense<0.000000e+00> : vector<8x128xf32>
    %307 = tpu.matmul %304, %306, %cst_292 {dimension_numbers = #tpu.dot_dimension_numbers<[1], [0], [0], [1], [0, 0, 1, 1], [], []>} : vector<8x128xf32>, vector<128x128xf32>, vector<8x128xf32> -> vector<8x128xf32>
    %c3_293 = arith.constant 3 : index
    %c0_294 = arith.constant 0 : index
    %c0_295 = arith.constant 0 : index
    %308 = vector.load %arg5[%c3_293, %c0_294, %c0_295] : memref<9x8x8xf32, #tpu.memory_space<vmem>>, vector<1x8x8xf32>
    %309 = vector.shape_cast %308 : vector<1x8x8xf32> to vector<8x8xf32>
    %cst_296 = arith.constant dense<0.000000e+00> : vector<8x128xf32>
    %310 = tpu.matmul %309, %301, %cst_296 {dimension_numbers = #tpu.dot_dimension_numbers<[1], [0], [0], [1], [0, 0, 1, 1], [], []>} : vector<8x8xf32>, vector<8x128xf32>, vector<8x128xf32> -> vector<8x128xf32>
    %c44 = arith.constant 44 : index
    %c0_297 = arith.constant 0 : index
    %c0_298 = arith.constant 0 : index
    %311 = vector.load %arg6[%c44, %c0_297, %c0_298] : memref<64x128x128xf32, #tpu.memory_space<vmem>>, vector<1x128x128xf32>
    %312 = vector.shape_cast %311 : vector<1x128x128xf32> to vector<128x128xf32>
    %cst_299 = arith.constant dense<0.000000e+00> : vector<8x128xf32>
    %313 = tpu.matmul %310, %312, %cst_299 {dimension_numbers = #tpu.dot_dimension_numbers<[1], [0], [0], [1], [0, 0, 1, 1], [], []>} : vector<8x128xf32>, vector<128x128xf32>, vector<8x128xf32> -> vector<8x128xf32>
    %314 = arith.addf %307, %313 : vector<8x128xf32>
    %c45 = arith.constant 45 : index
    %c0_300 = arith.constant 0 : index
    %c0_301 = arith.constant 0 : index
    %315 = vector.load %arg6[%c45, %c0_300, %c0_301] : memref<64x128x128xf32, #tpu.memory_space<vmem>>, vector<1x128x128xf32>
    %316 = vector.shape_cast %315 : vector<1x128x128xf32> to vector<128x128xf32>
    %cst_302 = arith.constant dense<0.000000e+00> : vector<8x128xf32>
    %317 = tpu.matmul %301, %316, %cst_302 {dimension_numbers = #tpu.dot_dimension_numbers<[1], [0], [0], [1], [0, 0, 1, 1], [], []>} : vector<8x128xf32>, vector<128x128xf32>, vector<8x128xf32> -> vector<8x128xf32>
    %318 = arith.addf %314, %317 : vector<8x128xf32>
    %c5_303 = arith.constant 5 : index
    %c0_304 = arith.constant 0 : index
    %c0_305 = arith.constant 0 : index
    %319 = vector.load %arg5[%c5_303, %c0_304, %c0_305] : memref<9x8x8xf32, #tpu.memory_space<vmem>>, vector<1x8x8xf32>
    %320 = vector.shape_cast %319 : vector<1x8x8xf32> to vector<8x8xf32>
    %cst_306 = arith.constant dense<0.000000e+00> : vector<8x128xf32>
    %321 = tpu.matmul %320, %301, %cst_306 {dimension_numbers = #tpu.dot_dimension_numbers<[1], [0], [0], [1], [0, 0, 1, 1], [], []>} : vector<8x8xf32>, vector<8x128xf32>, vector<8x128xf32> -> vector<8x128xf32>
    %c46 = arith.constant 46 : index
    %c0_307 = arith.constant 0 : index
    %c0_308 = arith.constant 0 : index
    %322 = vector.load %arg6[%c46, %c0_307, %c0_308] : memref<64x128x128xf32, #tpu.memory_space<vmem>>, vector<1x128x128xf32>
    %323 = vector.shape_cast %322 : vector<1x128x128xf32> to vector<128x128xf32>
    %cst_309 = arith.constant dense<0.000000e+00> : vector<8x128xf32>
    %324 = tpu.matmul %321, %323, %cst_309 {dimension_numbers = #tpu.dot_dimension_numbers<[1], [0], [0], [1], [0, 0, 1, 1], [], []>} : vector<8x128xf32>, vector<128x128xf32>, vector<8x128xf32> -> vector<8x128xf32>
    %325 = arith.addf %318, %324 : vector<8x128xf32>
    %c6_310 = arith.constant 6 : index
    %c0_311 = arith.constant 0 : index
    %c0_312 = arith.constant 0 : index
    %326 = vector.load %arg5[%c6_310, %c0_311, %c0_312] : memref<9x8x8xf32, #tpu.memory_space<vmem>>, vector<1x8x8xf32>
    %327 = vector.shape_cast %326 : vector<1x8x8xf32> to vector<8x8xf32>
    %cst_313 = arith.constant dense<0.000000e+00> : vector<8x128xf32>
    %328 = tpu.matmul %327, %301, %cst_313 {dimension_numbers = #tpu.dot_dimension_numbers<[1], [0], [0], [1], [0, 0, 1, 1], [], []>} : vector<8x8xf32>, vector<8x128xf32>, vector<8x128xf32> -> vector<8x128xf32>
    %c47 = arith.constant 47 : index
    %c0_314 = arith.constant 0 : index
    %c0_315 = arith.constant 0 : index
    %329 = vector.load %arg6[%c47, %c0_314, %c0_315] : memref<64x128x128xf32, #tpu.memory_space<vmem>>, vector<1x128x128xf32>
    %330 = vector.shape_cast %329 : vector<1x128x128xf32> to vector<128x128xf32>
    %cst_316 = arith.constant dense<0.000000e+00> : vector<8x128xf32>
    %331 = tpu.matmul %328, %330, %cst_316 {dimension_numbers = #tpu.dot_dimension_numbers<[1], [0], [0], [1], [0, 0, 1, 1], [], []>} : vector<8x128xf32>, vector<128x128xf32>, vector<8x128xf32> -> vector<8x128xf32>
    %332 = arith.addf %325, %331 : vector<8x128xf32>
    %333 = arith.addf %266, %332 : vector<8x128xf32>
    %cst_317 = arith.constant 0.000000e+00 : f32
    %334 = vector.broadcast %cst_317 : f32 to vector<8x128xf32>
    %335 = arith.maximumf %200, %334 : vector<8x128xf32>
    %c2_318 = arith.constant 2 : index
    %c0_319 = arith.constant 0 : index
    %c0_320 = arith.constant 0 : index
    %336 = vector.load %arg5[%c2_318, %c0_319, %c0_320] : memref<9x8x8xf32, #tpu.memory_space<vmem>>, vector<1x8x8xf32>
    %337 = vector.shape_cast %336 : vector<1x8x8xf32> to vector<8x8xf32>
    %cst_321 = arith.constant dense<0.000000e+00> : vector<8x128xf32>
    %338 = tpu.matmul %337, %335, %cst_321 {dimension_numbers = #tpu.dot_dimension_numbers<[1], [0], [0], [1], [0, 0, 1, 1], [], []>} : vector<8x8xf32>, vector<8x128xf32>, vector<8x128xf32> -> vector<8x128xf32>
    %c48 = arith.constant 48 : index
    %c0_322 = arith.constant 0 : index
    %c0_323 = arith.constant 0 : index
    %339 = vector.load %arg6[%c48, %c0_322, %c0_323] : memref<64x128x128xf32, #tpu.memory_space<vmem>>, vector<1x128x128xf32>
    %340 = vector.shape_cast %339 : vector<1x128x128xf32> to vector<128x128xf32>
    %cst_324 = arith.constant dense<0.000000e+00> : vector<8x128xf32>
    %341 = tpu.matmul %338, %340, %cst_324 {dimension_numbers = #tpu.dot_dimension_numbers<[1], [0], [0], [1], [0, 0, 1, 1], [], []>} : vector<8x128xf32>, vector<128x128xf32>, vector<8x128xf32> -> vector<8x128xf32>
    %c3_325 = arith.constant 3 : index
    %c0_326 = arith.constant 0 : index
    %c0_327 = arith.constant 0 : index
    %342 = vector.load %arg5[%c3_325, %c0_326, %c0_327] : memref<9x8x8xf32, #tpu.memory_space<vmem>>, vector<1x8x8xf32>
    %343 = vector.shape_cast %342 : vector<1x8x8xf32> to vector<8x8xf32>
    %cst_328 = arith.constant dense<0.000000e+00> : vector<8x128xf32>
    %344 = tpu.matmul %343, %335, %cst_328 {dimension_numbers = #tpu.dot_dimension_numbers<[1], [0], [0], [1], [0, 0, 1, 1], [], []>} : vector<8x8xf32>, vector<8x128xf32>, vector<8x128xf32> -> vector<8x128xf32>
    %c49 = arith.constant 49 : index
    %c0_329 = arith.constant 0 : index
    %c0_330 = arith.constant 0 : index
    %345 = vector.load %arg6[%c49, %c0_329, %c0_330] : memref<64x128x128xf32, #tpu.memory_space<vmem>>, vector<1x128x128xf32>
    %346 = vector.shape_cast %345 : vector<1x128x128xf32> to vector<128x128xf32>
    %cst_331 = arith.constant dense<0.000000e+00> : vector<8x128xf32>
    %347 = tpu.matmul %344, %346, %cst_331 {dimension_numbers = #tpu.dot_dimension_numbers<[1], [0], [0], [1], [0, 0, 1, 1], [], []>} : vector<8x128xf32>, vector<128x128xf32>, vector<8x128xf32> -> vector<8x128xf32>
    %348 = arith.addf %341, %347 : vector<8x128xf32>
    %c50 = arith.constant 50 : index
    %c0_332 = arith.constant 0 : index
    %c0_333 = arith.constant 0 : index
    %349 = vector.load %arg6[%c50, %c0_332, %c0_333] : memref<64x128x128xf32, #tpu.memory_space<vmem>>, vector<1x128x128xf32>
    %350 = vector.shape_cast %349 : vector<1x128x128xf32> to vector<128x128xf32>
    %cst_334 = arith.constant dense<0.000000e+00> : vector<8x128xf32>
    %351 = tpu.matmul %335, %350, %cst_334 {dimension_numbers = #tpu.dot_dimension_numbers<[1], [0], [0], [1], [0, 0, 1, 1], [], []>} : vector<8x128xf32>, vector<128x128xf32>, vector<8x128xf32> -> vector<8x128xf32>
    %352 = arith.addf %348, %351 : vector<8x128xf32>
    %c5_335 = arith.constant 5 : index
    %c0_336 = arith.constant 0 : index
    %c0_337 = arith.constant 0 : index
    %353 = vector.load %arg5[%c5_335, %c0_336, %c0_337] : memref<9x8x8xf32, #tpu.memory_space<vmem>>, vector<1x8x8xf32>
    %354 = vector.shape_cast %353 : vector<1x8x8xf32> to vector<8x8xf32>
    %cst_338 = arith.constant dense<0.000000e+00> : vector<8x128xf32>
    %355 = tpu.matmul %354, %335, %cst_338 {dimension_numbers = #tpu.dot_dimension_numbers<[1], [0], [0], [1], [0, 0, 1, 1], [], []>} : vector<8x8xf32>, vector<8x128xf32>, vector<8x128xf32> -> vector<8x128xf32>
    %c51 = arith.constant 51 : index
    %c0_339 = arith.constant 0 : index
    %c0_340 = arith.constant 0 : index
    %356 = vector.load %arg6[%c51, %c0_339, %c0_340] : memref<64x128x128xf32, #tpu.memory_space<vmem>>, vector<1x128x128xf32>
    %357 = vector.shape_cast %356 : vector<1x128x128xf32> to vector<128x128xf32>
    %cst_341 = arith.constant dense<0.000000e+00> : vector<8x128xf32>
    %358 = tpu.matmul %355, %357, %cst_341 {dimension_numbers = #tpu.dot_dimension_numbers<[1], [0], [0], [1], [0, 0, 1, 1], [], []>} : vector<8x128xf32>, vector<128x128xf32>, vector<8x128xf32> -> vector<8x128xf32>
    %359 = arith.addf %352, %358 : vector<8x128xf32>
    %c6_342 = arith.constant 6 : index
    %c0_343 = arith.constant 0 : index
    %c0_344 = arith.constant 0 : index
    %360 = vector.load %arg5[%c6_342, %c0_343, %c0_344] : memref<9x8x8xf32, #tpu.memory_space<vmem>>, vector<1x8x8xf32>
    %361 = vector.shape_cast %360 : vector<1x8x8xf32> to vector<8x8xf32>
    %cst_345 = arith.constant dense<0.000000e+00> : vector<8x128xf32>
    %362 = tpu.matmul %361, %335, %cst_345 {dimension_numbers = #tpu.dot_dimension_numbers<[1], [0], [0], [1], [0, 0, 1, 1], [], []>} : vector<8x8xf32>, vector<8x128xf32>, vector<8x128xf32> -> vector<8x128xf32>
    %c52 = arith.constant 52 : index
    %c0_346 = arith.constant 0 : index
    %c0_347 = arith.constant 0 : index
    %363 = vector.load %arg6[%c52, %c0_346, %c0_347] : memref<64x128x128xf32, #tpu.memory_space<vmem>>, vector<1x128x128xf32>
    %364 = vector.shape_cast %363 : vector<1x128x128xf32> to vector<128x128xf32>
    %cst_348 = arith.constant dense<0.000000e+00> : vector<8x128xf32>
    %365 = tpu.matmul %362, %364, %cst_348 {dimension_numbers = #tpu.dot_dimension_numbers<[1], [0], [0], [1], [0, 0, 1, 1], [], []>} : vector<8x128xf32>, vector<128x128xf32>, vector<8x128xf32> -> vector<8x128xf32>
    %366 = arith.addf %359, %365 : vector<8x128xf32>
    %cst_349 = arith.constant 0.000000e+00 : f32
    %367 = vector.broadcast %cst_349 : f32 to vector<8x128xf32>
    %368 = arith.maximumf %366, %367 : vector<8x128xf32>
    %c2_350 = arith.constant 2 : index
    %c0_351 = arith.constant 0 : index
    %c0_352 = arith.constant 0 : index
    %369 = vector.load %arg5[%c2_350, %c0_351, %c0_352] : memref<9x8x8xf32, #tpu.memory_space<vmem>>, vector<1x8x8xf32>
    %370 = vector.shape_cast %369 : vector<1x8x8xf32> to vector<8x8xf32>
    %cst_353 = arith.constant dense<0.000000e+00> : vector<8x128xf32>
    %371 = tpu.matmul %370, %368, %cst_353 {dimension_numbers = #tpu.dot_dimension_numbers<[1], [0], [0], [1], [0, 0, 1, 1], [], []>} : vector<8x8xf32>, vector<8x128xf32>, vector<8x128xf32> -> vector<8x128xf32>
    %c53 = arith.constant 53 : index
    %c0_354 = arith.constant 0 : index
    %c0_355 = arith.constant 0 : index
    %372 = vector.load %arg6[%c53, %c0_354, %c0_355] : memref<64x128x128xf32, #tpu.memory_space<vmem>>, vector<1x128x128xf32>
    %373 = vector.shape_cast %372 : vector<1x128x128xf32> to vector<128x128xf32>
    %cst_356 = arith.constant dense<0.000000e+00> : vector<8x128xf32>
    %374 = tpu.matmul %371, %373, %cst_356 {dimension_numbers = #tpu.dot_dimension_numbers<[1], [0], [0], [1], [0, 0, 1, 1], [], []>} : vector<8x128xf32>, vector<128x128xf32>, vector<8x128xf32> -> vector<8x128xf32>
    %c3_357 = arith.constant 3 : index
    %c0_358 = arith.constant 0 : index
    %c0_359 = arith.constant 0 : index
    %375 = vector.load %arg5[%c3_357, %c0_358, %c0_359] : memref<9x8x8xf32, #tpu.memory_space<vmem>>, vector<1x8x8xf32>
    %376 = vector.shape_cast %375 : vector<1x8x8xf32> to vector<8x8xf32>
    %cst_360 = arith.constant dense<0.000000e+00> : vector<8x128xf32>
    %377 = tpu.matmul %376, %368, %cst_360 {dimension_numbers = #tpu.dot_dimension_numbers<[1], [0], [0], [1], [0, 0, 1, 1], [], []>} : vector<8x8xf32>, vector<8x128xf32>, vector<8x128xf32> -> vector<8x128xf32>
    %c54 = arith.constant 54 : index
    %c0_361 = arith.constant 0 : index
    %c0_362 = arith.constant 0 : index
    %378 = vector.load %arg6[%c54, %c0_361, %c0_362] : memref<64x128x128xf32, #tpu.memory_space<vmem>>, vector<1x128x128xf32>
    %379 = vector.shape_cast %378 : vector<1x128x128xf32> to vector<128x128xf32>
    %cst_363 = arith.constant dense<0.000000e+00> : vector<8x128xf32>
    %380 = tpu.matmul %377, %379, %cst_363 {dimension_numbers = #tpu.dot_dimension_numbers<[1], [0], [0], [1], [0, 0, 1, 1], [], []>} : vector<8x128xf32>, vector<128x128xf32>, vector<8x128xf32> -> vector<8x128xf32>
    %381 = arith.addf %374, %380 : vector<8x128xf32>
    %c55 = arith.constant 55 : index
    %c0_364 = arith.constant 0 : index
    %c0_365 = arith.constant 0 : index
    %382 = vector.load %arg6[%c55, %c0_364, %c0_365] : memref<64x128x128xf32, #tpu.memory_space<vmem>>, vector<1x128x128xf32>
    %383 = vector.shape_cast %382 : vector<1x128x128xf32> to vector<128x128xf32>
    %cst_366 = arith.constant dense<0.000000e+00> : vector<8x128xf32>
    %384 = tpu.matmul %368, %383, %cst_366 {dimension_numbers = #tpu.dot_dimension_numbers<[1], [0], [0], [1], [0, 0, 1, 1], [], []>} : vector<8x128xf32>, vector<128x128xf32>, vector<8x128xf32> -> vector<8x128xf32>
    %385 = arith.addf %381, %384 : vector<8x128xf32>
    %c5_367 = arith.constant 5 : index
    %c0_368 = arith.constant 0 : index
    %c0_369 = arith.constant 0 : index
    %386 = vector.load %arg5[%c5_367, %c0_368, %c0_369] : memref<9x8x8xf32, #tpu.memory_space<vmem>>, vector<1x8x8xf32>
    %387 = vector.shape_cast %386 : vector<1x8x8xf32> to vector<8x8xf32>
    %cst_370 = arith.constant dense<0.000000e+00> : vector<8x128xf32>
    %388 = tpu.matmul %387, %368, %cst_370 {dimension_numbers = #tpu.dot_dimension_numbers<[1], [0], [0], [1], [0, 0, 1, 1], [], []>} : vector<8x8xf32>, vector<8x128xf32>, vector<8x128xf32> -> vector<8x128xf32>
    %c56 = arith.constant 56 : index
    %c0_371 = arith.constant 0 : index
    %c0_372 = arith.constant 0 : index
    %389 = vector.load %arg6[%c56, %c0_371, %c0_372] : memref<64x128x128xf32, #tpu.memory_space<vmem>>, vector<1x128x128xf32>
    %390 = vector.shape_cast %389 : vector<1x128x128xf32> to vector<128x128xf32>
    %cst_373 = arith.constant dense<0.000000e+00> : vector<8x128xf32>
    %391 = tpu.matmul %388, %390, %cst_373 {dimension_numbers = #tpu.dot_dimension_numbers<[1], [0], [0], [1], [0, 0, 1, 1], [], []>} : vector<8x128xf32>, vector<128x128xf32>, vector<8x128xf32> -> vector<8x128xf32>
    %392 = arith.addf %385, %391 : vector<8x128xf32>
    %c6_374 = arith.constant 6 : index
    %c0_375 = arith.constant 0 : index
    %c0_376 = arith.constant 0 : index
    %393 = vector.load %arg5[%c6_374, %c0_375, %c0_376] : memref<9x8x8xf32, #tpu.memory_space<vmem>>, vector<1x8x8xf32>
    %394 = vector.shape_cast %393 : vector<1x8x8xf32> to vector<8x8xf32>
    %cst_377 = arith.constant dense<0.000000e+00> : vector<8x128xf32>
    %395 = tpu.matmul %394, %368, %cst_377 {dimension_numbers = #tpu.dot_dimension_numbers<[1], [0], [0], [1], [0, 0, 1, 1], [], []>} : vector<8x8xf32>, vector<8x128xf32>, vector<8x128xf32> -> vector<8x128xf32>
    %c57 = arith.constant 57 : index
    %c0_378 = arith.constant 0 : index
    %c0_379 = arith.constant 0 : index
    %396 = vector.load %arg6[%c57, %c0_378, %c0_379] : memref<64x128x128xf32, #tpu.memory_space<vmem>>, vector<1x128x128xf32>
    %397 = vector.shape_cast %396 : vector<1x128x128xf32> to vector<128x128xf32>
    %cst_380 = arith.constant dense<0.000000e+00> : vector<8x128xf32>
    %398 = tpu.matmul %395, %397, %cst_380 {dimension_numbers = #tpu.dot_dimension_numbers<[1], [0], [0], [1], [0, 0, 1, 1], [], []>} : vector<8x128xf32>, vector<128x128xf32>, vector<8x128xf32> -> vector<8x128xf32>
    %399 = arith.addf %392, %398 : vector<8x128xf32>
    %400 = arith.addf %333, %399 : vector<8x128xf32>
    %cst_381 = arith.constant 0.000000e+00 : f32
    %401 = vector.broadcast %cst_381 : f32 to vector<8x128xf32>
    %402 = arith.maximumf %17, %401 : vector<8x128xf32>
    %c0_382 = arith.constant 0 : index
    %c0_383 = arith.constant 0 : index
    %c0_384 = arith.constant 0 : index
    %403 = vector.load %arg5[%c0_382, %c0_383, %c0_384] : memref<9x8x8xf32, #tpu.memory_space<vmem>>, vector<1x8x8xf32>
    %404 = vector.shape_cast %403 : vector<1x8x8xf32> to vector<8x8xf32>
    %cst_385 = arith.constant dense<0.000000e+00> : vector<8x128xf32>
    %405 = tpu.matmul %404, %402, %cst_385 {dimension_numbers = #tpu.dot_dimension_numbers<[1], [0], [0], [1], [0, 0, 1, 1], [], []>} : vector<8x8xf32>, vector<8x128xf32>, vector<8x128xf32> -> vector<8x128xf32>
    %c58 = arith.constant 58 : index
    %c0_386 = arith.constant 0 : index
    %c0_387 = arith.constant 0 : index
    %406 = vector.load %arg6[%c58, %c0_386, %c0_387] : memref<64x128x128xf32, #tpu.memory_space<vmem>>, vector<1x128x128xf32>
    %407 = vector.shape_cast %406 : vector<1x128x128xf32> to vector<128x128xf32>
    %cst_388 = arith.constant dense<0.000000e+00> : vector<8x128xf32>
    %408 = tpu.matmul %405, %407, %cst_388 {dimension_numbers = #tpu.dot_dimension_numbers<[1], [0], [0], [1], [0, 0, 1, 1], [], []>} : vector<8x128xf32>, vector<128x128xf32>, vector<8x128xf32> -> vector<8x128xf32>
    %c2_389 = arith.constant 2 : index
    %c0_390 = arith.constant 0 : index
    %c0_391 = arith.constant 0 : index
    %409 = vector.load %arg5[%c2_389, %c0_390, %c0_391] : memref<9x8x8xf32, #tpu.memory_space<vmem>>, vector<1x8x8xf32>
    %410 = vector.shape_cast %409 : vector<1x8x8xf32> to vector<8x8xf32>
    %cst_392 = arith.constant dense<0.000000e+00> : vector<8x128xf32>
    %411 = tpu.matmul %410, %402, %cst_392 {dimension_numbers = #tpu.dot_dimension_numbers<[1], [0], [0], [1], [0, 0, 1, 1], [], []>} : vector<8x8xf32>, vector<8x128xf32>, vector<8x128xf32> -> vector<8x128xf32>
    %c59 = arith.constant 59 : index
    %c0_393 = arith.constant 0 : index
    %c0_394 = arith.constant 0 : index
    %412 = vector.load %arg6[%c59, %c0_393, %c0_394] : memref<64x128x128xf32, #tpu.memory_space<vmem>>, vector<1x128x128xf32>
    %413 = vector.shape_cast %412 : vector<1x128x128xf32> to vector<128x128xf32>
    %cst_395 = arith.constant dense<0.000000e+00> : vector<8x128xf32>
    %414 = tpu.matmul %411, %413, %cst_395 {dimension_numbers = #tpu.dot_dimension_numbers<[1], [0], [0], [1], [0, 0, 1, 1], [], []>} : vector<8x128xf32>, vector<128x128xf32>, vector<8x128xf32> -> vector<8x128xf32>
    %415 = arith.addf %408, %414 : vector<8x128xf32>
    %c60 = arith.constant 60 : index
    %c0_396 = arith.constant 0 : index
    %c0_397 = arith.constant 0 : index
    %416 = vector.load %arg6[%c60, %c0_396, %c0_397] : memref<64x128x128xf32, #tpu.memory_space<vmem>>, vector<1x128x128xf32>
    %417 = vector.shape_cast %416 : vector<1x128x128xf32> to vector<128x128xf32>
    %cst_398 = arith.constant dense<0.000000e+00> : vector<8x128xf32>
    %418 = tpu.matmul %402, %417, %cst_398 {dimension_numbers = #tpu.dot_dimension_numbers<[1], [0], [0], [1], [0, 0, 1, 1], [], []>} : vector<8x128xf32>, vector<128x128xf32>, vector<8x128xf32> -> vector<8x128xf32>
    %419 = arith.addf %415, %418 : vector<8x128xf32>
    %c6_399 = arith.constant 6 : index
    %c0_400 = arith.constant 0 : index
    %c0_401 = arith.constant 0 : index
    %420 = vector.load %arg5[%c6_399, %c0_400, %c0_401] : memref<9x8x8xf32, #tpu.memory_space<vmem>>, vector<1x8x8xf32>
    %421 = vector.shape_cast %420 : vector<1x8x8xf32> to vector<8x8xf32>
    %cst_402 = arith.constant dense<0.000000e+00> : vector<8x128xf32>
    %422 = tpu.matmul %421, %402, %cst_402 {dimension_numbers = #tpu.dot_dimension_numbers<[1], [0], [0], [1], [0, 0, 1, 1], [], []>} : vector<8x8xf32>, vector<8x128xf32>, vector<8x128xf32> -> vector<8x128xf32>
    %c61 = arith.constant 61 : index
    %c0_403 = arith.constant 0 : index
    %c0_404 = arith.constant 0 : index
    %423 = vector.load %arg6[%c61, %c0_403, %c0_404] : memref<64x128x128xf32, #tpu.memory_space<vmem>>, vector<1x128x128xf32>
    %424 = vector.shape_cast %423 : vector<1x128x128xf32> to vector<128x128xf32>
    %cst_405 = arith.constant dense<0.000000e+00> : vector<8x128xf32>
    %425 = tpu.matmul %422, %424, %cst_405 {dimension_numbers = #tpu.dot_dimension_numbers<[1], [0], [0], [1], [0, 0, 1, 1], [], []>} : vector<8x128xf32>, vector<128x128xf32>, vector<8x128xf32> -> vector<8x128xf32>
    %426 = arith.addf %419, %425 : vector<8x128xf32>
    %c8_406 = arith.constant 8 : index
    %c0_407 = arith.constant 0 : index
    %c0_408 = arith.constant 0 : index
    %427 = vector.load %arg5[%c8_406, %c0_407, %c0_408] : memref<9x8x8xf32, #tpu.memory_space<vmem>>, vector<1x8x8xf32>
    %428 = vector.shape_cast %427 : vector<1x8x8xf32> to vector<8x8xf32>
    %cst_409 = arith.constant dense<0.000000e+00> : vector<8x128xf32>
    %429 = tpu.matmul %428, %402, %cst_409 {dimension_numbers = #tpu.dot_dimension_numbers<[1], [0], [0], [1], [0, 0, 1, 1], [], []>} : vector<8x8xf32>, vector<8x128xf32>, vector<8x128xf32> -> vector<8x128xf32>
    %c62 = arith.constant 62 : index
    %c0_410 = arith.constant 0 : index
    %c0_411 = arith.constant 0 : index
    %430 = vector.load %arg6[%c62, %c0_410, %c0_411] : memref<64x128x128xf32, #tpu.memory_space<vmem>>, vector<1x128x128xf32>
    %431 = vector.shape_cast %430 : vector<1x128x128xf32> to vector<128x128xf32>
    %cst_412 = arith.constant dense<0.000000e+00> : vector<8x128xf32>
    %432 = tpu.matmul %429, %431, %cst_412 {dimension_numbers = #tpu.dot_dimension_numbers<[1], [0], [0], [1], [0, 0, 1, 1], [], []>} : vector<8x128xf32>, vector<128x128xf32>, vector<8x128xf32> -> vector<8x128xf32>
    %433 = arith.addf %426, %432 : vector<8x128xf32>
    %434 = arith.addf %8, %433 : vector<8x128xf32>
    %c5_413 = arith.constant 5 : index
    %c0_414 = arith.constant 0 : index
    %c0_415 = arith.constant 0 : index
    %435 = vector.load %arg5[%c5_413, %c0_414, %c0_415] : memref<9x8x8xf32, #tpu.memory_space<vmem>>, vector<1x8x8xf32>
    %436 = vector.shape_cast %435 : vector<1x8x8xf32> to vector<8x8xf32>
    %cst_416 = arith.constant dense<0.000000e+00> : vector<8x128xf32>
    %437 = tpu.matmul %436, %122, %cst_416 {dimension_numbers = #tpu.dot_dimension_numbers<[1], [0], [0], [1], [0, 0, 1, 1], [], []>} : vector<8x8xf32>, vector<8x128xf32>, vector<8x128xf32> -> vector<8x128xf32>
    %438 = arith.addf %122, %437 : vector<8x128xf32>
    %c3_417 = arith.constant 3 : index
    %c0_418 = arith.constant 0 : index
    %c0_419 = arith.constant 0 : index
    %439 = vector.load %arg5[%c3_417, %c0_418, %c0_419] : memref<9x8x8xf32, #tpu.memory_space<vmem>>, vector<1x8x8xf32>
    %440 = vector.shape_cast %439 : vector<1x8x8xf32> to vector<8x8xf32>
    %cst_420 = arith.constant dense<0.000000e+00> : vector<8x128xf32>
    %441 = tpu.matmul %440, %122, %cst_420 {dimension_numbers = #tpu.dot_dimension_numbers<[1], [0], [0], [1], [0, 0, 1, 1], [], []>} : vector<8x8xf32>, vector<8x128xf32>, vector<8x128xf32> -> vector<8x128xf32>
    %442 = arith.addf %438, %441 : vector<8x128xf32>
    %c63 = arith.constant 63 : index
    %c0_421 = arith.constant 0 : index
    %c0_422 = arith.constant 0 : index
    %443 = vector.load %arg6[%c63, %c0_421, %c0_422] : memref<64x128x128xf32, #tpu.memory_space<vmem>>, vector<1x128x128xf32>
    %444 = vector.shape_cast %443 : vector<1x128x128xf32> to vector<128x128xf32>
    %cst_423 = arith.constant dense<0.000000e+00> : vector<8x128xf32>
    %445 = tpu.matmul %442, %444, %cst_423 {dimension_numbers = #tpu.dot_dimension_numbers<[1], [0], [0], [1], [0, 0, 1, 1], [], []>} : vector<8x128xf32>, vector<128x128xf32>, vector<8x128xf32> -> vector<8x128xf32>
    %c0_424 = arith.constant 0 : index
    %c0_425 = arith.constant 0 : index
    %446 = vector.load %arg7[%c0_424, %c0_425] : memref<8x128xf32, #tpu.memory_space<vmem>>, vector<8x128xf32>
    %447 = arith.mulf %445, %446 : vector<8x128xf32>
    %448 = arith.addf %434, %447 : vector<8x128xf32>
    %449 = arith.addf %448, %200 : vector<8x128xf32>
    %450 = arith.addf %449, %400 : vector<8x128xf32>
    %451 = tpu.concatenate %122, %200, %400, %450 in 1 : vector<8x128xf32>, vector<8x128xf32>, vector<8x128xf32>, vector<8x128xf32> -> vector<8x512xf32>
    %c0_426 = arith.constant 0 : index
    %c0_427 = arith.constant 0 : index
    %452 = vector.load %arg8[%c0_426, %c0_427] : memref<512x128xf32, #tpu.memory_space<vmem>>, vector<512x128xf32>
    %cst_428 = arith.constant dense<0.000000e+00> : vector<8x128xf32>
    %453 = tpu.matmul %451, %452, %cst_428 {dimension_numbers = #tpu.dot_dimension_numbers<[1], [0], [0], [1], [0, 0, 1, 1], [], []>} : vector<8x512xf32>, vector<512x128xf32>, vector<8x128xf32> -> vector<8x128xf32>
    %c2_429 = arith.constant 2 : index
    %c0_430 = arith.constant 0 : index
    %454 = vector.load %arg4[%c2_429, %c0_430] : memref<3x128xf32, #tpu.memory_space<vmem>>, vector<1x128xf32>
    %455 = vector.broadcast %454 : vector<1x128xf32> to vector<8x128xf32>
    %456 = arith.addf %453, %455 : vector<8x128xf32>
    %c0_431 = arith.constant 0 : index
    %c0_432 = arith.constant 0 : index
    %457 = vector.load %arg9[%c0_431, %c0_432] : memref<8x128xf32, #tpu.memory_space<vmem>>, vector<8x128xf32>
    tpu.vector_store %arg9[%c0_431, %c0_432], %456 {strides = array<i32>} : memref<8x128xf32, #tpu.memory_space<vmem>>, vector<8x128xf32>,
    return
  }
  func.func @transform_0(%arg0: i32) -> (i32, i32) {
    %c0_i32 = arith.constant 0 : i32
    %c0_i32_0 = arith.constant 0 : i32
    return %arg0, %c0_i32 : i32, i32
  }
  func.func @transform_1(%arg0: i32) -> (i32, i32) {
    %c0_i32 = arith.constant 0 : i32
    %c0_i32_0 = arith.constant 0 : i32
    return %arg0, %c0_i32 : i32, i32
  }
  func.func @transform_2(%arg0: i32) -> (i32, i32, i32) {
    %c0_i32 = arith.constant 0 : i32
    %c0_i32_0 = arith.constant 0 : i32
    %c0_i32_1 = arith.constant 0 : i32
    %c0_i32_2 = arith.constant 0 : i32
    return %c0_i32, %c0_i32_0, %c0_i32_1 : i32, i32, i32
  }
  func.func @transform_3(%arg0: i32) -> (i32, i32) {
    %c0_i32 = arith.constant 0 : i32
    %c0_i32_0 = arith.constant 0 : i32
    %c0_i32_1 = arith.constant 0 : i32
    return %c0_i32, %c0_i32_0 : i32, i32
  }
  func.func @transform_4(%arg0: i32) -> (i32, i32, i32) {
    %c0_i32 = arith.constant 0 : i32
    %c0_i32_0 = arith.constant 0 : i32
    %c0_i32_1 = arith.constant 0 : i32
    %c0_i32_2 = arith.constant 0 : i32
    return %c0_i32, %c0_i32_0, %c0_i32_1 : i32, i32, i32
  }
  func.func @transform_5(%arg0: i32) -> (i32, i32, i32) {
    %c0_i32 = arith.constant 0 : i32
    %c0_i32_0 = arith.constant 0 : i32
    %c0_i32_1 = arith.constant 0 : i32
    %c0_i32_2 = arith.constant 0 : i32
    return %c0_i32, %c0_i32_0, %c0_i32_1 : i32, i32, i32
  }
  func.func @transform_6(%arg0: i32) -> (i32, i32) {
    %c0_i32 = arith.constant 0 : i32
    %c0_i32_0 = arith.constant 0 : i32
    %c0_i32_1 = arith.constant 0 : i32
    return %c0_i32, %c0_i32_0 : i32, i32
  }
  func.func @transform_7(%arg0: i32) -> (i32, i32) {
    %c0_i32 = arith.constant 0 : i32
    %c0_i32_0 = arith.constant 0 : i32
    %c0_i32_1 = arith.constant 0 : i32
    return %c0_i32, %c0_i32_0 : i32, i32
  }
  func.func @transform_8(%arg0: i32) -> (i32, i32) {
    %c0_i32 = arith.constant 0 : i32
    %c0_i32_0 = arith.constant 0 : i32
    return %arg0, %c0_i32 : i32, i32
  }
}

</mosaic_0001>

<llo_original>
// kernel: _lambda_.1
$region0: #{_lambda_.1}
  #allocation0 [shape = 'u32[]', space=smem, size = 0x4, offset = 0x4, fixed_abs, tag = 'smem constant byte address 0x4 - core index']
  #allocation1 [shape = 'u32[144,128]{1,0:T(1,128)}', space=vmem, size = 0x12000, scoped, tag = 'internal scratch']
  %s0 = inlined_call_operand.vmem [shape: f32[16,64], index: 0, kind: input, shape index: {}]
  %s1 = inlined_call_operand.vmem [shape: f32[16,64], index: 1, kind: input, shape index: {}]
  %s2 = inlined_call_operand.hbm [shape: f32[2,64,128], index: 2, kind: input, shape index: {}]
  %s3 = inlined_call_operand.hbm [shape: f32[3,128], index: 3, kind: input, shape index: {}]
  %s4 = inlined_call_operand.hbm [shape: f32[9,8,8], index: 4, kind: input, shape index: {}]
  %s5 = inlined_call_operand.hbm [shape: f32[64,128,128], index: 5, kind: input, shape index: {}]
  %s6 = inlined_call_operand.hbm [shape: f32[8,128], index: 6, kind: input, shape index: {}]
  %s7 = inlined_call_operand.hbm [shape: f32[512,128], index: 7, kind: input, shape index: {}]
  %s8 = inlined_call_operand.vmem [shape: f32[16,128], index: 8, kind: output, shape index: {}]
  %s9 = sld [smem:[#allocation0]]
  $region89: #{_lambda_.1} parent=0
    _
  %s11 = ssub.s32 1, %s9
  %s12 = scalar_select 0, %s11, %s9
  $region1: #{_lambda_.1} parent=0
    #allocation2 [shape = 'u8[65536]{0}', space=vmem, size = 0x10000, scoped, tag = 'input window, operand 2, single buffered']
    #allocation3 [shape = 's32[2]{0}', space=sflag, size = 0x8, scoped, tag = 'scoped memory for _lambda_.1']
    #allocation4 [shape = 'u8[2048]{0}', space=vmem, size = 0x800, scoped, tag = 'input window, operand 3, single buffered']
    #allocation5 [shape = 's32[1]{0}', space=sflag, size = 0x4, scoped, tag = 'scoped memory for _lambda_.1']
    #allocation6 [shape = 'u8[36864]{0}', space=vmem, size = 0x9000, scoped, tag = 'input window, operand 4, single buffered']
    #allocation7 [shape = 'u8[4194304]{0}', space=vmem, size = 0x400000, scoped, tag = 'input window, operand 5, single buffered']
    #allocation8 [shape = 's32[1]{0}', space=sflag, size = 0x4, scoped, tag = 'scoped memory for _lambda_.1']
    #allocation9 [shape = 'u8[4096]{0}', space=vmem, size = 0x1000, scoped, tag = 'input window, operand 6, single buffered']
    #allocation10 [shape = 'u8[262144]{0}', space=vmem, size = 0x40000, scoped, tag = 'input window, operand 7, single buffered']
    #allocation11 [shape = 's32[1]{0}', space=sflag, size = 0x4, scoped, tag = 'scoped memory for _lambda_.1']
    %13 = vsyncpa [#allocation3], 0
    %14 = vsyncpa [#allocation5], 0
    %15 = vsyncpa [#allocation8], 0
    %16 = vsyncpa [#allocation11], 0
    loop: start=0, step=1, limit=4
    $region2: #{_lambda_.1} parent=1 // loop_pre_header
      _
    $region3: #{_lambda_.1} parent=1 // loop_header
      %s18 = sphi 0, %s22
      %p19 = scmp.ge.s32.totalorder %s18, 4
      %s28 = sphi 0, %s30
      %s31 = sphi 0, %s28
      %s32 = sphi 0, %s31
      %s48 = sphi 0, %s32
      %s54 = sphi 0, %s56
      %s57 = sphi 0, %s54
      %s58 = sphi 0, %s57
      %s74 = sphi 0, %s58
      %s78 = sphi 0, %s78
      %s80 = sphi 0, %s78
      %s81 = sphi 0, %s80
      %s95 = sphi 0, %s81
      %s99 = sphi 0, %s99
      %s101 = sphi 0, %s99
      %s102 = sphi 0, %s101
      %s116 = sphi 0, %s102
      %s120 = sphi 0, %s120
      %s122 = sphi 0, %s120
      %s123 = sphi 0, %s122
      %s137 = sphi 0, %s123
      %s141 = sphi 0, %s141
      %s143 = sphi 0, %s141
      %s144 = sphi 0, %s143
      %s158 = sphi 0, %s144
      %s162 = sphi 0, %s162
      %s164 = sphi 0, %s162
      %s165 = sphi 0, %s164
      %s179 = sphi 0, %s165
      %s183 = sphi 0, %s183
      %s185 = sphi 0, %s183
      %s186 = sphi 0, %s185
      %s200 = sphi 0, %s186
      %s206 = sphi 0, %s208
      %s209 = sphi 0, %s206
      %s210 = sphi 0, %s209
      %s226 = sphi 0, %s210
    $region4: #{_lambda_.1} parent=1 // loop_header_branch
      %21 = sbr.rel (%p19) target = $region8
    $region5: #{_lambda_.1} parent=1 // loop_body
      %s23 = ssub.s32 %s18, 1
      %s24 = ssub.s32 %s18, 2
      %s25 = sadd.s32 %s18, 1
      %s26 = ssub.s32 %s18, %s25
      %p27 = scmp.eq.s32.totalorder %s26, 0
      %s29 = sadd.s32 %s28, 1
      %s30 = scalar_select %p27, %s28, %s29
      %p33 = pneg %p27
      %p34 = scmp.eq.s32.totalorder %s18, 1
      %p35 = por %p33, %p34
      %p36 = scmp.ne.s32.totalorder %s28, %s31
      %p37 = scmp.eq.s32.totalorder %s18, 0
      %p38 = por %p36, %p37
      %p39 = scmp.ne.s32.totalorder %s28, %s31
      %p40 = scmp.eq.s32.totalorder %s23, 1
      %p41 = por %p39, %p40
      %p42 = scmp.ne.s32.totalorder %s31, %s32
      %p43 = scmp.eq.s32.totalorder %s23, 0
      %p44 = por %p42, %p43
      %p45 = scmp.ne.s32.totalorder %s31, %s32
      %p46 = scmp.eq.s32.totalorder %s24, 1
      %p47 = por %p45, %p46
      %p49 = scmp.ne.s32.totalorder %s32, %s48
      %p50 = scmp.eq.s32.totalorder %s24, 0
      %p51 = por %p49, %p50
      %s52 = ssub.s32 %s18, %s25
      %p53 = scmp.eq.s32.totalorder %s52, 0
      %s55 = sadd.s32 %s54, 1
      %s56 = scalar_select %p53, %s54, %s55
      %p59 = pneg %p53
      %p60 = scmp.eq.s32.totalorder %s18, 1
      %p61 = por %p59, %p60
      %p62 = scmp.ne.s32.totalorder %s54, %s57
      %p63 = scmp.eq.s32.totalorder %s18, 0
      %p64 = por %p62, %p63
      %p65 = scmp.ne.s32.totalorder %s54, %s57
      %p66 = scmp.eq.s32.totalorder %s23, 1
      %p67 = por %p65, %p66
      %p68 = scmp.ne.s32.totalorder %s57, %s58
      %p69 = scmp.eq.s32.totalorder %s23, 0
      %p70 = por %p68, %p69
      %p71 = scmp.ne.s32.totalorder %s57, %s58
      %p72 = scmp.eq.s32.totalorder %s24, 1
      %p73 = por %p71, %p72
      %p75 = scmp.ne.s32.totalorder %s58, %s74
      %p76 = scmp.eq.s32.totalorder %s24, 0
      %p77 = por %p75, %p76
      %s79 = sadd.s32 %s78, 1
      %p82 = scmp.eq.s32.totalorder %s18, 1
      %p83 = scmp.ne.s32.totalorder %s78, %s80
      %p84 = scmp.eq.s32.totalorder %s18, 0
      %p85 = por %p83, %p84
      %p86 = scmp.ne.s32.totalorder %s78, %s80
      %p87 = scmp.eq.s32.totalorder %s23, 1
      %p88 = por %p86, %p87
      %p89 = scmp.ne.s32.totalorder %s80, %s81
      %p90 = scmp.eq.s32.totalorder %s23, 0
      %p91 = por %p89, %p90
      %p92 = scmp.ne.s32.totalorder %s80, %s81
      %p93 = scmp.eq.s32.totalorder %s24, 1
      %p94 = por %p92, %p93
      %p96 = scmp.ne.s32.totalorder %s81, %s95
      %p97 = scmp.eq.s32.totalorder %s24, 0
      %p98 = por %p96, %p97
      %s100 = sadd.s32 %s99, 1
      %p103 = scmp.eq.s32.totalorder %s18, 1
      %p104 = scmp.ne.s32.totalorder %s99, %s101
      %p105 = scmp.eq.s32.totalorder %s18, 0
      %p106 = por %p104, %p105
      %p107 = scmp.ne.s32.totalorder %s99, %s101
      %p108 = scmp.eq.s32.totalorder %s23, 1
      %p109 = por %p107, %p108
      %p110 = scmp.ne.s32.totalorder %s101, %s102
      %p111 = scmp.eq.s32.totalorder %s23, 0
      %p112 = por %p110, %p111
      %p113 = scmp.ne.s32.totalorder %s101, %s102
      %p114 = scmp.eq.s32.totalorder %s24, 1
      %p115 = por %p113, %p114
      %p117 = scmp.ne.s32.totalorder %s102, %s116
      %p118 = scmp.eq.s32.totalorder %s24, 0
      %p119 = por %p117, %p118
      %s121 = sadd.s32 %s120, 1
      %p124 = scmp.eq.s32.totalorder %s18, 1
      %p125 = scmp.ne.s32.totalorder %s120, %s122
      %p126 = scmp.eq.s32.totalorder %s18, 0
      %p127 = por %p125, %p126
      %p128 = scmp.ne.s32.totalorder %s120, %s122
      %p129 = scmp.eq.s32.totalorder %s23, 1
      %p130 = por %p128, %p129
      %p131 = scmp.ne.s32.totalorder %s122, %s123
      %p132 = scmp.eq.s32.totalorder %s23, 0
      %p133 = por %p131, %p132
      %p134 = scmp.ne.s32.totalorder %s122, %s123
      %p135 = scmp.eq.s32.totalorder %s24, 1
      %p136 = por %p134, %p135
      %p138 = scmp.ne.s32.totalorder %s123, %s137
      %p139 = scmp.eq.s32.totalorder %s24, 0
      %p140 = por %p138, %p139
      %s142 = sadd.s32 %s141, 1
      %p145 = scmp.eq.s32.totalorder %s18, 1
      %p146 = scmp.ne.s32.totalorder %s141, %s143
      %p147 = scmp.eq.s32.totalorder %s18, 0
      %p148 = por %p146, %p147
      %p149 = scmp.ne.s32.totalorder %s141, %s143
      %p150 = scmp.eq.s32.totalorder %s23, 1
      %p151 = por %p149, %p150
      %p152 = scmp.ne.s32.totalorder %s143, %s144
      %p153 = scmp.eq.s32.totalorder %s23, 0
      %p154 = por %p152, %p153
      %p155 = scmp.ne.s32.totalorder %s143, %s144
      %p156 = scmp.eq.s32.totalorder %s24, 1
      %p157 = por %p155, %p156
      %p159 = scmp.ne.s32.totalorder %s144, %s158
      %p160 = scmp.eq.s32.totalorder %s24, 0
      %p161 = por %p159, %p160
      %s163 = sadd.s32 %s162, 1
      %p166 = scmp.eq.s32.totalorder %s18, 1
      %p167 = scmp.ne.s32.totalorder %s162, %s164
      %p168 = scmp.eq.s32.totalorder %s18, 0
      %p169 = por %p167, %p168
      %p170 = scmp.ne.s32.totalorder %s162, %s164
      %p171 = scmp.eq.s32.totalorder %s23, 1
      %p172 = por %p170, %p171
      %p173 = scmp.ne.s32.totalorder %s164, %s165
      %p174 = scmp.eq.s32.totalorder %s23, 0
      %p175 = por %p173, %p174
      %p176 = scmp.ne.s32.totalorder %s164, %s165
      %p177 = scmp.eq.s32.totalorder %s24, 1
      %p178 = por %p176, %p177
      %p180 = scmp.ne.s32.totalorder %s165, %s179
      %p181 = scmp.eq.s32.totalorder %s24, 0
      %p182 = por %p180, %p181
      %s184 = sadd.s32 %s183, 1
      %p187 = scmp.eq.s32.totalorder %s18, 1
      %p188 = scmp.ne.s32.totalorder %s183, %s185
      %p189 = scmp.eq.s32.totalorder %s18, 0
      %p190 = por %p188, %p189
      %p191 = scmp.ne.s32.totalorder %s183, %s185
      %p192 = scmp.eq.s32.totalorder %s23, 1
      %p193 = por %p191, %p192
      %p194 = scmp.ne.s32.totalorder %s185, %s186
      %p195 = scmp.eq.s32.totalorder %s23, 0
      %p196 = por %p194, %p195
      %p197 = scmp.ne.s32.totalorder %s185, %s186
      %p198 = scmp.eq.s32.totalorder %s24, 1
      %p199 = por %p197, %p198
      %p201 = scmp.ne.s32.totalorder %s186, %s200
      %p202 = scmp.eq.s32.totalorder %s24, 0
      %p203 = por %p201, %p202
      %s204 = ssub.s32 %s18, %s25
      %p205 = scmp.eq.s32.totalorder %s204, 0
      %s207 = sadd.s32 %s206, 1
      %s208 = scalar_select %p205, %s206, %s207
      %p211 = pneg %p205
      %p212 = scmp.eq.s32.totalorder %s18, 1
      %p213 = por %p211, %p212
      %p214 = scmp.ne.s32.totalorder %s206, %s209
      %p215 = scmp.eq.s32.totalorder %s18, 0
      %p216 = por %p214, %p215
      %p217 = scmp.ne.s32.totalorder %s206, %s209
      %p218 = scmp.eq.s32.totalorder %s23, 1
      %p219 = por %p217, %p218
      %p220 = scmp.ne.s32.totalorder %s209, %s210
      %p221 = scmp.eq.s32.totalorder %s23, 0
      %p222 = por %p220, %p221
      %p223 = scmp.ne.s32.totalorder %s209, %s210
      %p224 = scmp.eq.s32.totalorder %s24, 1
      %p225 = por %p223, %p224
      %p227 = scmp.ne.s32.totalorder %s210, %s226
      %p228 = scmp.eq.s32.totalorder %s24, 0
      %p229 = por %p227, %p228
      %p230 = scmp.le.s32.totalorder 1, %s18
      %p231 = scmp.lt.s32.totalorder %s18, 3
      %p232 = pnand %p230, %p231
      %p233 = pneg %p232
      // Predicated region
      $region9: #{_lambda_.1} parent=5 // pred_check
        _
      $region10: #{_lambda_.1} parent=5 // pred_check_branch
        %235 = sbr.rel (%p232) target = $region12
      $region11: #{_lambda_.1} parent=5 // pred_region
        %s236 = ssub.s32 %s18, 1
        // Predicated region
        $region13: #{_lambda_.1} parent=11 // pred_check
          %p237 = pneg %p91
        $region14: #{_lambda_.1} parent=11 // pred_check_branch
          %239 = sbr.rel (%p237) target = $region16
        $region15: #{_lambda_.1} parent=11 // pred_region
          %s241 = ssub.s32 2048, 2048
          %242 = vsyncadd [#allocation3], %s241
          %s243 = sshll.u32 [#allocation2], 4
          %s244 = int_to_ptr.vmem [resolvable:$true] %s243
          %249 = dma.hbm_to_vmem [thread:$0]  %s2, 2048, %s244, [#allocation3], 128, 128, 8
        $region16: #{_lambda_.1} parent=11 // pred_fallthru
          _
        // Predicated region
        $region17: #{_lambda_.1} parent=11 // pred_check
          %p250 = pneg %p112
        $region18: #{_lambda_.1} parent=11 // pred_check_branch
          %252 = sbr.rel (%p250) target = $region20
        $region19: #{_lambda_.1} parent=11 // pred_region
          %s254 = ssub.s32 64, 64
          %255 = vsyncadd [#allocation5], %s254
          %s257 = sshll.u32 [#allocation4], 4
          %s258 = int_to_ptr.vmem [resolvable:$true] %s257
          %260 = dma.hbm_to_vmem [thread:$0]  %s3, 64, %s258, [#allocation5]
        $region20: #{_lambda_.1} parent=11 // pred_fallthru
          _
        // Predicated region
        $region21: #{_lambda_.1} parent=11 // pred_check
          %p261 = pneg %p133
        $region22: #{_lambda_.1} parent=11 // pred_check_branch
          %263 = sbr.rel (%p261) target = $region24
        $region23: #{_lambda_.1} parent=11 // pred_region
          %s265 = ssub.s32 1152, 1152
          %266 = vsyncadd [#allocation5], %s265
          %s267 = sshll.u32 [#allocation6], 4
          %s268 = int_to_ptr.vmem [resolvable:$true] %s267
          %273 = dma.hbm_to_vmem [thread:$0]  %s4, 1152, %s268, [#allocation5], 128, 128, 8
        $region24: #{_lambda_.1} parent=11 // pred_fallthru
          _
        // Predicated region
        $region25: #{_lambda_.1} parent=11 // pred_check
          %p274 = pneg %p154
        $region26: #{_lambda_.1} parent=11 // pred_check_branch
          %276 = sbr.rel (%p274) target = $region28
        $region27: #{_lambda_.1} parent=11 // pred_region
          %s278 = ssub.s32 131072, 131072
          %279 = vsyncadd [#allocation8], %s278
          %s280 = sshll.u32 [#allocation7], 4
          %s281 = int_to_ptr.vmem [resolvable:$true] %s280
          %286 = dma.hbm_to_vmem [thread:$0]  %s5, 131072, %s281, [#allocation8], 128, 128, 8
        $region28: #{_lambda_.1} parent=11 // pred_fallthru
          _
        // Predicated region
        $region29: #{_lambda_.1} parent=11 // pred_check
          %p287 = pneg %p175
        $region30: #{_lambda_.1} parent=11 // pred_check_branch
          %289 = sbr.rel (%p287) target = $region32
        $region31: #{_lambda_.1} parent=11 // pred_region
          %s291 = ssub.s32 128, 128
          %292 = vsyncadd [#allocation8], %s291
          %s294 = sshll.u32 [#allocation9], 4
          %s295 = int_to_ptr.vmem [resolvable:$true] %s294
          %297 = dma.hbm_to_vmem [thread:$0]  %s6, 128, %s295, [#allocation8]
        $region32: #{_lambda_.1} parent=11 // pred_fallthru
          _
        // Predicated region
        $region33: #{_lambda_.1} parent=11 // pred_check
          %p298 = pneg %p196
        $region34: #{_lambda_.1} parent=11 // pred_check_branch
          %300 = sbr.rel (%p298) target = $region36
        $region35: #{_lambda_.1} parent=11 // pred_region
          %s302 = ssub.s32 8192, 8192
          %303 = vsyncadd [#allocation11], %s302
          %s304 = sshll.u32 [#allocation10], 4
          %s305 = int_to_ptr.vmem [resolvable:$true] %s304
          %310 = dma.hbm_to_vmem [thread:$0]  %s7, 8192, %s305, [#allocation11], 128, 128, 8
        $region36: #{_lambda_.1} parent=11 // pred_fallthru
          _
      $region12: #{_lambda_.1} parent=5 // pred_fallthru
        _
      %p311 = scmp.lt.s32.totalorder %s18, 2
      // Predicated region
      $region37: #{_lambda_.1} parent=5 // pred_check
        %p312 = pneg %p311
      $region38: #{_lambda_.1} parent=5 // pred_check_branch
        %314 = sbr.rel (%p312) target = $region40
      $region39: #{_lambda_.1} parent=5 // pred_region
        // Predicated region
        $region41: #{_lambda_.1} parent=39 // pred_check
          %p315 = pneg %p38
        $region42: #{_lambda_.1} parent=39 // pred_check_branch
          %317 = sbr.rel (%p315) target = $region44
        $region43: #{_lambda_.1} parent=39 // pred_region
          %p318 = scmp.lt.s32.totalorder %s18, 1
          %s319 = scalar_select %p318, %s18, 1
          %s320 = smul.addr %s319, 8
          %s321 = scalar_lea.vmem %s0, %s320
        $region44: #{_lambda_.1} parent=39 // pred_fallthru
          _
        // Predicated region
        $region45: #{_lambda_.1} parent=39 // pred_check
          %p322 = pneg %p64
        $region46: #{_lambda_.1} parent=39 // pred_check_branch
          %324 = sbr.rel (%p322) target = $region48
        $region47: #{_lambda_.1} parent=39 // pred_region
          %p325 = scmp.lt.s32.totalorder %s18, 1
          %s326 = scalar_select %p325, %s18, 1
          %s327 = smul.addr %s326, 8
          %s328 = scalar_lea.vmem %s1, %s327
        $region48: #{_lambda_.1} parent=39 // pred_fallthru
          _
      $region40: #{_lambda_.1} parent=5 // pred_fallthru
        _
      %p329 = scmp.le.s32.totalorder 1, %s18
      %p330 = scmp.lt.s32.totalorder %s18, 3
      %p331 = pnand %p329, %p330
      %p332 = pneg %p331
      // Predicated region
      $region49: #{_lambda_.1} parent=5 // pred_check
        _
      $region50: #{_lambda_.1} parent=5 // pred_check_branch
        %334 = sbr.rel (%p331) target = $region52
      $region51: #{_lambda_.1} parent=5 // pred_region
        %s335 = ssub.s32 %s18, 1
        // Predicated region
        $region53: #{_lambda_.1} parent=51 // pred_check
          %p336 = pneg %p91
        $region54: #{_lambda_.1} parent=51 // pred_check_branch
          %338 = sbr.rel (%p336) target = $region56
        $region55: #{_lambda_.1} parent=51 // pred_region
          %339 = dma.done [#allocation3], 2048
        $region56: #{_lambda_.1} parent=51 // pred_fallthru
          _
        // Predicated region
        $region57: #{_lambda_.1} parent=51 // pred_check
          %p340 = pneg %p112
        $region58: #{_lambda_.1} parent=51 // pred_check_branch
          %342 = sbr.rel (%p340) target = $region60
        $region59: #{_lambda_.1} parent=51 // pred_region
          %343 = dma.done [#allocation5], 64
        $region60: #{_lambda_.1} parent=51 // pred_fallthru
          _
        // Predicated region
        $region61: #{_lambda_.1} parent=51 // pred_check
          %p344 = pneg %p133
        $region62: #{_lambda_.1} parent=51 // pred_check_branch
          %346 = sbr.rel (%p344) target = $region64
        $region63: #{_lambda_.1} parent=51 // pred_region
          %347 = dma.done [#allocation5], 1152
        $region64: #{_lambda_.1} parent=51 // pred_fallthru
          _
        // Predicated region
        $region65: #{_lambda_.1} parent=51 // pred_check
          %p348 = pneg %p154
        $region66: #{_lambda_.1} parent=51 // pred_check_branch
          %350 = sbr.rel (%p348) target = $region68
        $region67: #{_lambda_.1} parent=51 // pred_region
          %351 = dma.done [#allocation8], 131072
        $region68: #{_lambda_.1} parent=51 // pred_fallthru
          _
        // Predicated region
        $region69: #{_lambda_.1} parent=51 // pred_check
          %p352 = pneg %p175
        $region70: #{_lambda_.1} parent=51 // pred_check_branch
          %354 = sbr.rel (%p352) target = $region72
        $region71: #{_lambda_.1} parent=51 // pred_region
          %355 = dma.done [#allocation8], 128
        $region72: #{_lambda_.1} parent=51 // pred_fallthru
          _
        // Predicated region
        $region73: #{_lambda_.1} parent=51 // pred_check
          %p356 = pneg %p196
        $region74: #{_lambda_.1} parent=51 // pred_check_branch
          %358 = sbr.rel (%p356) target = $region76
        $region75: #{_lambda_.1} parent=51 // pred_region
          %359 = dma.done [#allocation11], 8192
        $region76: #{_lambda_.1} parent=51 // pred_fallthru
          _
        %p360 = scmp.lt.s32.totalorder %s23, 1
        %s361 = scalar_select %p360, %s23, 1
        %s362 = smul.addr %s361, 8
        %s363 = scalar_lea.vmem %s0, %s362
        %p364 = pneg %p44
        %p365 = pneg %p41
        %p366 = scmp.lt.s32.totalorder %s23, 1
        %s367 = scalar_select %p366, %s23, 1
        %s368 = smul.addr %s367, 8
        %s369 = scalar_lea.vmem %s1, %s368
        %p370 = pneg %p70
        %p371 = pneg %p67
        %p372 = pneg %p91
        %p373 = pneg %p88
        %p374 = pneg %p112
        %p375 = pneg %p109
        %p376 = pneg %p133
        %p377 = pneg %p130
        %p378 = pneg %p154
        %p379 = pneg %p151
        %p380 = pneg %p175
        %p381 = pneg %p172
        %p382 = pneg %p196
        %p383 = pneg %p193
        %p384 = pneg %p222
        %p385 = pneg %p219
        %p386 = scmp.lt.s32.totalorder %s23, 1
        %s387 = scalar_select %p386, %s23, 1
        %s388 = smul.addr %s387, 8
        %s389 = scalar_lea.vmem %s8, %s388
        %p390 = scmp.lt.s32.totalorder %s23, 1
        %s391 = scalar_select %p390, %s23, 1
        %s392 = smul.addr %s391, 8
        %s393 = scalar_lea.vmem %s0, %s392
        %p394 = scmp.lt.s32.totalorder %s23, 1
        %s395 = scalar_select %p394, %s23, 1
        %s396 = smul.addr %s395, 8
        %s397 = scalar_lea.vmem %s1, %s396
        %p398 = scmp.lt.s32.totalorder %s23, 1
        %s399 = scalar_select %p398, %s23, 1
        %s400 = smul.addr %s399, 8
        %s401 = scalar_lea.vmem %s8, %s400
        %v402 = vld [vmem:[%s393] sm:$0xff]
        %v403 = vmax.f32 %v402, 0.0
        %v404 = vld [vmem:[#allocation2] sm:$0xff]
        %v405 = vld [vmem:[#allocation2 + $0x8] sm:$0xff]
        %v406 = vld [vmem:[#allocation2 + $0x10] sm:$0xff]
        %v407 = vld [vmem:[#allocation2 + $0x18] sm:$0xff]
        %v408 = vld [vmem:[#allocation2 + $0x20] sm:$0xff]
        %v409 = vld [vmem:[#allocation2 + $0x28] sm:$0xff]
        %v410 = vld [vmem:[#allocation2 + $0x30] sm:$0xff]
        %v411 = vld [vmem:[#allocation2 + $0x38] sm:$0xff]
        %v412 = vld [vmem:[#allocation4] sm:$0x1]
        %v413 = vlaneseq
        %v414 = vshrl.u32 %v413, 7
        %v415 = vsub.s32 0, %v414
        %v416 = vrot.slane %v412, %v415
        %vm417 = vcmask 523264
        %v419 = vsel %vm417, %v403, 0
        %421 = vmatprep.subr.mxu0 0.0
        %422 = vmatpush1.msra.mxu0 %v404
        %423 = vmatprep.subr.mxu0 0.0
        %424 = vmatpush1.msra.mxu0 %v405
        %425 = vmatprep.subr.mxu0 0.0
        %426 = vmatpush1.msra.mxu0 %v406
        %427 = vmatprep.subr.mxu0 0.0
        %428 = vmatpush1.msra.mxu0 %v407
        %429 = vmatprep.subr.mxu0 0.0
        %430 = vmatpush1.msra.mxu0 %v408
        %431 = vmatprep.subr.mxu0 0.0
        %432 = vmatpush1.msra.mxu0 %v409
        %433 = vmatprep.subr.mxu0 0.0
        %434 = vmatpush1.msra.mxu0 %v410
        %435 = vmatprep.subr.mxu0 0.0
        %436 = vmatpush1.msra.mxu0 %v411
        %437 = vmatprep.subr.mxu0 0.0
        %438 = vmatpush1.msra.mxu0 0.0
        %439 = vmatprep.subr.mxu0 0.0
        %440 = vmatpush1.msra.mxu0 0.0
        %441 = vmatprep.subr.mxu0 0.0
        %442 = vmatpush1.msra.mxu0 0.0
        %443 = vmatprep.subr.mxu0 0.0
        %444 = vmatpush1.msra.mxu0 0.0
        %445 = vmatprep.subr.mxu0 0.0
        %446 = vmatpush1.msra.mxu0 0.0
        %447 = vmatprep.subr.mxu0 0.0
        %448 = vmatpush1.msra.mxu0 0.0
        %449 = vmatprep.subr.mxu0 0.0
        %450 = vmatpush1.msra.mxu0 0.0
        %451 = vmatprep.subr.mxu0 0.0
        %452 = vmatpush1.msra.mxu0 0.0
        %453 = vmatprep.subr.mxu0 0.0
        %454 = vmatpush1.msra.mxu0 0.0
        %455 = vmatprep.subr.mxu0 0.0
        %456 = vmatpush1.msra.mxu0 0.0
        %457 = vmatprep.subr.mxu0 0.0
        %458 = vmatpush1.msra.mxu0 0.0
        %459 = vmatprep.subr.mxu0 0.0
        %460 = vmatpush1.msra.mxu0 0.0
        %461 = vmatprep.subr.mxu0 0.0
        %462 = vmatpush1.msra.mxu0 0.0
        %463 = vmatprep.subr.mxu0 0.0
        %464 = vmatpush1.msra.mxu0 0.0
        %465 = vmatprep.subr.mxu0 0.0
        %466 = vmatpush1.msra.mxu0 0.0
        %467 = vmatprep.subr.mxu0 0.0
        %468 = vmatpush1.msra.mxu0 0.0
        %469 = vmatprep.subr.mxu0 0.0
        %470 = vmatpush1.msra.mxu0 0.0
        %471 = vmatprep.subr.mxu0 0.0
        %472 = vmatpush1.msra.mxu0 0.0
        %473 = vmatprep.subr.mxu0 0.0
        %474 = vmatpush1.msra.mxu0 0.0
        %475 = vmatprep.subr.mxu0 0.0
        %476 = vmatpush1.msra.mxu0 0.0
        %477 = vmatprep.subr.mxu0 0.0
        %478 = vmatpush1.msra.mxu0 0.0
        %479 = vmatprep.subr.mxu0 0.0
        %480 = vmatpush1.msra.mxu0 0.0
        %481 = vmatprep.subr.mxu0 0.0
        %482 = vmatpush1.msra.mxu0 0.0
        %483 = vmatprep.subr.mxu0 0.0
        %484 = vmatpush1.msra.mxu0 0.0
        %485 = vmatprep.mubr.f32.mxu0 0.0
        %486 = vmatmul.mubr.f32.gmra.mrb[0].mxu0 %v419
        %v487 = vpop.f32.mrb[0].mxu0
        %v488 = vadd.f32 %v416, %v487
        %v489 = vpop.f32.mrb[0].mxu0
        %490 = vdwg.mxu0
        %v491 = vld [vmem:[%s397] sm:$0xff]
        %v492 = vmax.f32 %v491, 0.0
        %s493 = scalar_lea.vmem [#allocation2], 64
        %v494 = vld [vmem:[%s493] sm:$0xff]
        %v495 = vld [vmem:[%s493 + $0x8] sm:$0xff]
        %v496 = vld [vmem:[%s493 + $0x10] sm:$0xff]
        %v497 = vld [vmem:[%s493 + $0x18] sm:$0xff]
        %v498 = vld [vmem:[%s493 + $0x20] sm:$0xff]
        %v499 = vld [vmem:[%s493 + $0x28] sm:$0xff]
        %v500 = vld [vmem:[%s493 + $0x30] sm:$0xff]
        %v501 = vld [vmem:[%s493 + $0x38] sm:$0xff]
        %v502 = vld [vmem:[#allocation4 + $0x1] sm:$0x1]
        %v503 = vlaneseq
        %v504 = vshrl.u32 %v503, 7
        %v505 = vsub.s32 0, %v504
        %v506 = vrot.slane %v502, %v505
        %v508 = vsel %vm417, %v492, 0
        %510 = vmatprep.subr.mxu0 0.0
        %511 = vmatpush1.msra.mxu0 %v494
        %512 = vmatprep.subr.mxu0 0.0
        %513 = vmatpush1.msra.mxu0 %v495
        %514 = vmatprep.subr.mxu0 0.0
        %515 = vmatpush1.msra.mxu0 %v496
        %516 = vmatprep.subr.mxu0 0.0
        %517 = vmatpush1.msra.mxu0 %v497
        %518 = vmatprep.subr.mxu0 0.0
        %519 = vmatpush1.msra.mxu0 %v498
        %520 = vmatprep.subr.mxu0 0.0
        %521 = vmatpush1.msra.mxu0 %v499
        %522 = vmatprep.subr.mxu0 0.0
        %523 = vmatpush1.msra.mxu0 %v500
        %524 = vmatprep.subr.mxu0 0.0
        %525 = vmatpush1.msra.mxu0 %v501
        %526 = vmatprep.subr.mxu0 0.0
        %527 = vmatpush1.msra.mxu0 0.0
        %528 = vmatprep.subr.mxu0 0.0
        %529 = vmatpush1.msra.mxu0 0.0
        %530 = vmatprep.subr.mxu0 0.0
        %531 = vmatpush1.msra.mxu0 0.0
        %532 = vmatprep.subr.mxu0 0.0
        %533 = vmatpush1.msra.mxu0 0.0
        %534 = vmatprep.subr.mxu0 0.0
        %535 = vmatpush1.msra.mxu0 0.0
        %536 = vmatprep.subr.mxu0 0.0
        %537 = vmatpush1.msra.mxu0 0.0
        %538 = vmatprep.subr.mxu0 0.0
        %539 = vmatpush1.msra.mxu0 0.0
        %540 = vmatprep.subr.mxu0 0.0
        %541 = vmatpush1.msra.mxu0 0.0
        %542 = vmatprep.subr.mxu0 0.0
        %543 = vmatpush1.msra.mxu0 0.0
        %544 = vmatprep.subr.mxu0 0.0
        %545 = vmatpush1.msra.mxu0 0.0
        %546 = vmatprep.subr.mxu0 0.0
        %547 = vmatpush1.msra.mxu0 0.0
        %548 = vmatprep.subr.mxu0 0.0
        %549 = vmatpush1.msra.mxu0 0.0
        %550 = vmatprep.subr.mxu0 0.0
        %551 = vmatpush1.msra.mxu0 0.0
        %552 = vmatprep.subr.mxu0 0.0
        %553 = vmatpush1.msra.mxu0 0.0
        %554 = vmatprep.subr.mxu0 0.0
        %555 = vmatpush1.msra.mxu0 0.0
        %556 = vmatprep.subr.mxu0 0.0
        %557 = vmatpush1.msra.mxu0 0.0
        %558 = vmatprep.subr.mxu0 0.0
        %559 = vmatpush1.msra.mxu0 0.0
        %560 = vmatprep.subr.mxu0 0.0
        %561 = vmatpush1.msra.mxu0 0.0
        %562 = vmatprep.subr.mxu0 0.0
        %563 = vmatpush1.msra.mxu0 0.0
        %564 = vmatprep.subr.mxu0 0.0
        %565 = vmatpush1.msra.mxu0 0.0
        %566 = vmatprep.subr.mxu0 0.0
        %567 = vmatpush1.msra.mxu0 0.0
        %568 = vmatprep.subr.mxu0 0.0
        %569 = vmatpush1.msra.mxu0 0.0
        %570 = vmatprep.subr.mxu0 0.0
        %571 = vmatpush1.msra.mxu0 0.0
        %572 = vmatprep.subr.mxu0 0.0
        %573 = vmatpush1.msra.mxu0 0.0
        %574 = vmatprep.mubr.f32.mxu0 0.0
        %575 = vmatmul.mubr.f32.gmra.mrb[0].mxu0 %v508
        %v576 = vpop.f32.mrb[0].mxu0
        %v577 = vadd.f32 %v506, %v576
        %v578 = vpop.f32.mrb[0].mxu0
        %579 = vdwg.mxu0
        %v580 = vmax.f32 %v488, 0.0
        %s581 = scalar_lea.vmem [#allocation6], 16
        %v582 = vld [vmem:[%s581] sm:$0xff]
        %vm583 = vcmask 64512
        %v585 = vsel %vm583, %v582, 0
        %587 = vmatprep.subr.mxu0 0.0
        %588 = vmatpush1.msra.mxu0 %v580
        %589 = vmatprep.subr.mxu0 0.0
        %590 = vmatpush1.msra.mxu0 0.0
        %591 = vmatprep.subr.mxu0 0.0
        %592 = vmatpush1.msra.mxu0 0.0
        %593 = vmatprep.subr.mxu0 0.0
        %594 = vmatpush1.msra.mxu0 0.0
        %595 = vmatprep.subr.mxu0 0.0
        %596 = vmatpush1.msra.mxu0 0.0
        %597 = vmatprep.subr.mxu0 0.0
        %598 = vmatpush1.msra.mxu0 0.0
        %599 = vmatprep.subr.mxu0 0.0
        %600 = vmatpush1.msra.mxu0 0.0
        %601 = vmatprep.subr.mxu0 0.0
        %602 = vmatpush1.msra.mxu0 0.0
        %603 = vmatprep.subr.mxu0 0.0
        %604 = vmatpush1.msra.mxu0 0.0
        %605 = vmatprep.subr.mxu0 0.0
        %606 = vmatpush1.msra.mxu0 0.0
        %607 = vmatprep.subr.mxu0 0.0
        %608 = vmatpush1.msra.mxu0 0.0
        %609 = vmatprep.subr.mxu0 0.0
        %610 = vmatpush1.msra.mxu0 0.0
        %611 = vmatprep.subr.mxu0 0.0
        %612 = vmatpush1.msra.mxu0 0.0
        %613 = vmatprep.subr.mxu0 0.0
        %614 = vmatpush1.msra.mxu0 0.0
        %615 = vmatprep.subr.mxu0 0.0
        %616 = vmatpush1.msra.mxu0 0.0
        %617 = vmatprep.subr.mxu0 0.0
        %618 = vmatpush1.msra.mxu0 0.0
        %619 = vmatprep.subr.mxu0 0.0
        %620 = vmatpush1.msra.mxu0 0.0
        %621 = vmatprep.subr.mxu0 0.0
        %622 = vmatpush1.msra.mxu0 0.0
        %623 = vmatprep.subr.mxu0 0.0
        %624 = vmatpush1.msra.mxu0 0.0
        %625 = vmatprep.subr.mxu0 0.0
        %626 = vmatpush1.msra.mxu0 0.0
        %627 = vmatprep.subr.mxu0 0.0
        %628 = vmatpush1.msra.mxu0 0.0
        %629 = vmatprep.subr.mxu0 0.0
        %630 = vmatpush1.msra.mxu0 0.0
        %631 = vmatprep.subr.mxu0 0.0
        %632 = vmatpush1.msra.mxu0 0.0
        %633 = vmatprep.subr.mxu0 0.0
        %634 = vmatpush1.msra.mxu0 0.0
        %635 = vmatprep.subr.mxu0 0.0
        %636 = vmatpush1.msra.mxu0 0.0
        %637 = vmatprep.subr.mxu0 0.0
        %638 = vmatpush1.msra.mxu0 0.0
        %639 = vmatprep.subr.mxu0 0.0
        %640 = vmatpush1.msra.mxu0 0.0
        %641 = vmatprep.subr.mxu0 0.0
        %642 = vmatpush1.msra.mxu0 0.0
        %643 = vmatprep.subr.mxu0 0.0
        %644 = vmatpush1.msra.mxu0 0.0
        %645 = vmatprep.subr.mxu0 0.0
        %646 = vmatpush1.msra.mxu0 0.0
        %647 = vmatprep.subr.mxu0 0.0
        %648 = vmatpush1.msra.mxu0 0.0
        %649 = vmatprep.subr.mxu0 0.0
        %650 = vmatpush1.msra.mxu0 0.0
        %651 = vmatprep.mubr.f32.mxu0 0.0
        %652 = vmatmul.mubr.f32.gmra.mrb[0].mxu0 %v585
        %v653 = vpop.f32.mrb[0].mxu0
        %v654 = vadd.f32 0.0, %v653
        %v655 = vpop.f32.mrb[0].mxu0
        %656 = vdwg.mxu0
        %v657 = vld [vmem:[#allocation7] sm:$0xff]
        %v658 = vld [vmem:[#allocation7 + $0x8] sm:$0xff]
        %v659 = vld [vmem:[#allocation7 + $0x10] sm:$0xff]
        %v660 = vld [vmem:[#allocation7 + $0x18] sm:$0xff]
        %v661 = vld [vmem:[#allocation7 + $0x20] sm:$0xff]
        %v662 = vld [vmem:[#allocation7 + $0x28] sm:$0xff]
        %v663 = vld [vmem:[#allocation7 + $0x30] sm:$0xff]
        %v664 = vld [vmem:[#allocation7 + $0x38] sm:$0xff]
        %v665 = vld [vmem:[#allocation7 + $0x40] sm:$0xff]
        %v666 = vld [vmem:[#allocation7 + $0x48] sm:$0xff]
        %v667 = vld [vmem:[#allocation7 + $0x50] sm:$0xff]
        %v668 = vld [vmem:[#allocation7 + $0x58] sm:$0xff]
        %v669 = vld [vmem:[#allocation7 + $0x60] sm:$0xff]
        %v670 = vld [vmem:[#allocation7 + $0x68] sm:$0xff]
        %v671 = vld [vmem:[#allocation7 + $0x70] sm:$0xff]
        %v672 = vld [vmem:[#allocation7 + $0x78] sm:$0xff]
        %s673 = scalar_lea.vmem [#allocation6], 24
        %v674 = vld [vmem:[%s673] sm:$0xff]
        %v676 = vsel %vm583, %v674, 0
        %678 = vmatprep.subr.mxu0 0.0
        %679 = vmatpush1.msra.mxu0 %v580
        %680 = vmatprep.subr.mxu0 0.0
        %681 = vmatpush1.msra.mxu0 0.0
        %682 = vmatprep.subr.mxu0 0.0
        %683 = vmatpush1.msra.mxu0 0.0
        %684 = vmatprep.subr.mxu0 0.0
        %685 = vmatpush1.msra.mxu0 0.0
        %686 = vmatprep.subr.mxu0 0.0
        %687 = vmatpush1.msra.mxu0 0.0
        %688 = vmatprep.subr.mxu0 0.0
        %689 = vmatpush1.msra.mxu0 0.0
        %690 = vmatprep.subr.mxu0 0.0
        %691 = vmatpush1.msra.mxu0 0.0
        %692 = vmatprep.subr.mxu0 0.0
        %693 = vmatpush1.msra.mxu0 0.0
        %694 = vmatprep.subr.mxu0 0.0
        %695 = vmatpush1.msra.mxu0 0.0
        %696 = vmatprep.subr.mxu0 0.0
        %697 = vmatpush1.msra.mxu0 0.0
        %698 = vmatprep.subr.mxu0 0.0
        %699 = vmatpush1.msra.mxu0 0.0
        %700 = vmatprep.subr.mxu0 0.0
        %701 = vmatpush1.msra.mxu0 0.0
        %702 = vmatprep.subr.mxu0 0.0
        %703 = vmatpush1.msra.mxu0 0.0
        %704 = vmatprep.subr.mxu0 0.0
        %705 = vmatpush1.msra.mxu0 0.0
        %706 = vmatprep.subr.mxu0 0.0
        %707 = vmatpush1.msra.mxu0 0.0
        %708 = vmatprep.subr.mxu0 0.0
        %709 = vmatpush1.msra.mxu0 0.0
        %710 = vmatprep.subr.mxu0 0.0
        %711 = vmatpush1.msra.mxu0 0.0
        %712 = vmatprep.subr.mxu0 0.0
        %713 = vmatpush1.msra.mxu0 0.0
        %714 = vmatprep.subr.mxu0 0.0
        %715 = vmatpush1.msra.mxu0 0.0
        %716 = vmatprep.subr.mxu0 0.0
        %717 = vmatpush1.msra.mxu0 0.0
        %718 = vmatprep.subr.mxu0 0.0
        %719 = vmatpush1.msra.mxu0 0.0
        %720 = vmatprep.subr.mxu0 0.0
        %721 = vmatpush1.msra.mxu0 0.0
        %722 = vmatprep.subr.mxu0 0.0
        %723 = vmatpush1.msra.mxu0 0.0
        %724 = vmatprep.subr.mxu0 0.0
        %725 = vmatpush1.msra.mxu0 0.0
        %726 = vmatprep.subr.mxu0 0.0
        %727 = vmatpush1.msra.mxu0 0.0
        %728 = vmatprep.subr.mxu0 0.0
        %729 = vmatpush1.msra.mxu0 0.0
        %730 = vmatprep.subr.mxu0 0.0
        %731 = vmatpush1.msra.mxu0 0.0
        %732 = vmatprep.subr.mxu0 0.0
        %733 = vmatpush1.msra.mxu0 0.0
        %734 = vmatprep.subr.mxu0 0.0
        %735 = vmatpush1.msra.mxu0 0.0
        %736 = vmatprep.subr.mxu0 0.0
        %737 = vmatpush1.msra.mxu0 0.0
        %738 = vmatprep.subr.mxu0 0.0
        %739 = vmatpush1.msra.mxu0 0.0
        %740 = vmatprep.subr.mxu0 0.0
        %741 = vmatpush1.msra.mxu0 0.0
        %742 = vmatprep.mubr.f32.mxu0 0.0
        %743 = vmatmul.mubr.f32.gmra.mrb[0].mxu0 %v676
        %v744 = vpop.f32.mrb[0].mxu0
        %v745 = vadd.f32 0.0, %v744
        %v746 = vpop.f32.mrb[0].mxu0
        %747 = vdwg.mxu0
        %s748 = scalar_lea.vmem [#allocation7], 128
        %v749 = vld [vmem:[%s748] sm:$0xff]
        %v750 = vld [vmem:[%s748 + $0x8] sm:$0xff]
        %v751 = vld [vmem:[%s748 + $0x10] sm:$0xff]
        %v752 = vld [vmem:[%s748 + $0x18] sm:$0xff]
        %v753 = vld [vmem:[%s748 + $0x20] sm:$0xff]
        %v754 = vld [vmem:[%s748 + $0x28] sm:$0xff]
        %v755 = vld [vmem:[%s748 + $0x30] sm:$0xff]
        %v756 = vld [vmem:[%s748 + $0x38] sm:$0xff]
        %v757 = vld [vmem:[%s748 + $0x40] sm:$0xff]
        %v758 = vld [vmem:[%s748 + $0x48] sm:$0xff]
        %v759 = vld [vmem:[%s748 + $0x50] sm:$0xff]
        %v760 = vld [vmem:[%s748 + $0x58] sm:$0xff]
        %v761 = vld [vmem:[%s748 + $0x60] sm:$0xff]
        %v762 = vld [vmem:[%s748 + $0x68] sm:$0xff]
        %v763 = vld [vmem:[%s748 + $0x70] sm:$0xff]
        %v764 = vld [vmem:[%s748 + $0x78] sm:$0xff]
        %765 = vmatprep.subr.mxu0 0.0
        %766 = vmatpush1.msra.mxu0 %v749
        %767 = vmatprep.subr.mxu0 0.0
        %768 = vmatpush1.msra.mxu0 %v750
        %769 = vmatprep.subr.mxu0 0.0
        %770 = vmatpush1.msra.mxu0 %v751
        %771 = vmatprep.subr.mxu0 0.0
        %772 = vmatpush1.msra.mxu0 %v752
        %773 = vmatprep.subr.mxu0 0.0
        %774 = vmatpush1.msra.mxu0 %v753
        %775 = vmatprep.subr.mxu0 0.0
        %776 = vmatpush1.msra.mxu0 %v754
        %777 = vmatprep.subr.mxu0 0.0
        %778 = vmatpush1.msra.mxu0 %v755
        %779 = vmatprep.subr.mxu0 0.0
        %780 = vmatpush1.msra.mxu0 %v756
        %781 = vmatprep.subr.mxu0 0.0
        %782 = vmatpush1.msra.mxu0 %v757
        %783 = vmatprep.subr.mxu0 0.0
        %784 = vmatpush1.msra.mxu0 %v758
        %785 = vmatprep.subr.mxu0 0.0
        %786 = vmatpush1.msra.mxu0 %v759
        %787 = vmatprep.subr.mxu0 0.0
        %788 = vmatpush1.msra.mxu0 %v760
        %789 = vmatprep.subr.mxu0 0.0
        %790 = vmatpush1.msra.mxu0 %v761
        %791 = vmatprep.subr.mxu0 0.0
        %792 = vmatpush1.msra.mxu0 %v762
        %793 = vmatprep.subr.mxu0 0.0
        %794 = vmatpush1.msra.mxu0 %v763
        %795 = vmatprep.subr.mxu0 0.0
        %796 = vmatpush1.msra.mxu0 %v764
        %797 = vmatprep.subr.mxu0 0.0
        %798 = vmatpush1.msra.mxu0 0.0
        %799 = vmatprep.subr.mxu0 0.0
        %800 = vmatpush1.msra.mxu0 0.0
        %801 = vmatprep.subr.mxu0 0.0
        %802 = vmatpush1.msra.mxu0 0.0
        %803 = vmatprep.subr.mxu0 0.0
        %804 = vmatpush1.msra.mxu0 0.0
        %805 = vmatprep.subr.mxu0 0.0
        %806 = vmatpush1.msra.mxu0 0.0
        %807 = vmatprep.subr.mxu0 0.0
        %808 = vmatpush1.msra.mxu0 0.0
        %809 = vmatprep.subr.mxu0 0.0
        %810 = vmatpush1.msra.mxu0 0.0
        %811 = vmatprep.subr.mxu0 0.0
        %812 = vmatpush1.msra.mxu0 0.0
        %813 = vmatprep.subr.mxu0 0.0
        %814 = vmatpush1.msra.mxu0 0.0
        %815 = vmatprep.subr.mxu0 0.0
        %816 = vmatpush1.msra.mxu0 0.0
        %817 = vmatprep.subr.mxu0 0.0
        %818 = vmatpush1.msra.mxu0 0.0
        %819 = vmatprep.subr.mxu0 0.0
        %820 = vmatpush1.msra.mxu0 0.0
        %821 = vmatprep.subr.mxu0 0.0
        %822 = vmatpush1.msra.mxu0 0.0
        %823 = vmatprep.subr.mxu0 0.0
        %824 = vmatpush1.msra.mxu0 0.0
        %825 = vmatprep.subr.mxu0 0.0
        %826 = vmatpush1.msra.mxu0 0.0
        %827 = vmatprep.subr.mxu0 0.0
        %828 = vmatpush1.msra.mxu0 0.0
        %829 = vmatprep.mubr.f32.mxu0 0.0
        %830 = vmatmul.mubr.f32.gmra.mrb[0].mxu0 %v745
        %v831 = vpop.f32.mrb[0].mxu0
        %v832 = vadd.f32 0.0, %v831
        %v833 = vpop.f32.mrb[0].mxu0
        %834 = vdwg.mxu0
        %835 = vmatprep.subr.mxu0 0.0
        %836 = vmatpush1.msra.mxu0 %v657
        %837 = vmatprep.subr.mxu0 0.0
        %838 = vmatpush1.msra.mxu0 %v658
        %839 = vmatprep.subr.mxu0 0.0
        %840 = vmatpush1.msra.mxu0 %v659
        %841 = vmatprep.subr.mxu0 0.0
        %842 = vmatpush1.msra.mxu0 %v660
        %843 = vmatprep.subr.mxu0 0.0
        %844 = vmatpush1.msra.mxu0 %v661
        %845 = vmatprep.subr.mxu0 0.0
        %846 = vmatpush1.msra.mxu0 %v662
        %847 = vmatprep.subr.mxu0 0.0
        %848 = vmatpush1.msra.mxu0 %v663
        %849 = vmatprep.subr.mxu0 0.0
        %850 = vmatpush1.msra.mxu0 %v664
        %851 = vmatprep.subr.mxu0 0.0
        %852 = vmatpush1.msra.mxu0 %v665
        %853 = vmatprep.subr.mxu0 0.0
        %854 = vmatpush1.msra.mxu0 %v666
        %855 = vmatprep.subr.mxu0 0.0
        %856 = vmatpush1.msra.mxu0 %v667
        %857 = vmatprep.subr.mxu0 0.0
        %858 = vmatpush1.msra.mxu0 %v668
        %859 = vmatprep.subr.mxu0 0.0
        %860 = vmatpush1.msra.mxu0 %v669
        %861 = vmatprep.subr.mxu0 0.0
        %862 = vmatpush1.msra.mxu0 %v670
        %863 = vmatprep.subr.mxu0 0.0
        %864 = vmatpush1.msra.mxu0 %v671
        %865 = vmatprep.subr.mxu0 0.0
        %866 = vmatpush1.msra.mxu0 %v672
        %867 = vmatprep.subr.mxu0 0.0
        %868 = vmatpush1.msra.mxu0 0.0
        %869 = vmatprep.subr.mxu0 0.0
        %870 = vmatpush1.msra.mxu0 0.0
        %871 = vmatprep.subr.mxu0 0.0
        %872 = vmatpush1.msra.mxu0 0.0
        %873 = vmatprep.subr.mxu0 0.0
        %874 = vmatpush1.msra.mxu0 0.0
        %875 = vmatprep.subr.mxu0 0.0
        %876 = vmatpush1.msra.mxu0 0.0
        %877 = vmatprep.subr.mxu0 0.0
        %878 = vmatpush1.msra.mxu0 0.0
        %879 = vmatprep.subr.mxu0 0.0
        %880 = vmatpush1.msra.mxu0 0.0
        %881 = vmatprep.subr.mxu0 0.0
        %882 = vmatpush1.msra.mxu0 0.0
        %883 = vmatprep.subr.mxu0 0.0
        %884 = vmatpush1.msra.mxu0 0.0
        %885 = vmatprep.subr.mxu0 0.0
        %886 = vmatpush1.msra.mxu0 0.0
        %887 = vmatprep.subr.mxu0 0.0
        %888 = vmatpush1.msra.mxu0 0.0
        %889 = vmatprep.subr.mxu0 0.0
        %890 = vmatpush1.msra.mxu0 0.0
        %891 = vmatprep.subr.mxu0 0.0
        %892 = vmatpush1.msra.mxu0 0.0
        %893 = vmatprep.subr.mxu0 0.0
        %894 = vmatpush1.msra.mxu0 0.0
        %895 = vmatprep.subr.mxu0 0.0
        %896 = vmatpush1.msra.mxu0 0.0
        %897 = vmatprep.subr.mxu0 0.0
        %898 = vmatpush1.msra.mxu0 0.0
        %899 = vmatprep.mubr.f32.mxu0 0.0
        %900 = vmatmul.mubr.f32.gmra.mrb[0].mxu0 %v654
        %v901 = vpop.f32.mrb[0].mxu0
        %v902 = vadd.f32 %v832, %v901
        %v903 = vpop.f32.mrb[0].mxu0
        %904 = vdwg.mxu0
        %s905 = scalar_lea.vmem [#allocation7], 256
        %v906 = vld [vmem:[%s905] sm:$0xff]
        %v907 = vld [vmem:[%s905 + $0x8] sm:$0xff]
        %v908 = vld [vmem:[%s905 + $0x10] sm:$0xff]
        %v909 = vld [vmem:[%s905 + $0x18] sm:$0xff]
        %v910 = vld [vmem:[%s905 + $0x20] sm:$0xff]
        %v911 = vld [vmem:[%s905 + $0x28] sm:$0xff]
        %v912 = vld [vmem:[%s905 + $0x30] sm:$0xff]
        %v913 = vld [vmem:[%s905 + $0x38] sm:$0xff]
        %v914 = vld [vmem:[%s905 + $0x40] sm:$0xff]
        %v915 = vld [vmem:[%s905 + $0x48] sm:$0xff]
        %v916 = vld [vmem:[%s905 + $0x50] sm:$0xff]
        %v917 = vld [vmem:[%s905 + $0x58] sm:$0xff]
        %v918 = vld [vmem:[%s905 + $0x60] sm:$0xff]
        %v919 = vld [vmem:[%s905 + $0x68] sm:$0xff]
        %v920 = vld [vmem:[%s905 + $0x70] sm:$0xff]
        %v921 = vld [vmem:[%s905 + $0x78] sm:$0xff]
        %922 = vmatprep.subr.mxu0 0.0
        %923 = vmatpush1.msra.mxu0 %v906
        %924 = vmatprep.subr.mxu0 0.0
        %925 = vmatpush1.msra.mxu0 %v907
        %926 = vmatprep.subr.mxu0 0.0
        %927 = vmatpush1.msra.mxu0 %v908
        %928 = vmatprep.subr.mxu0 0.0
        %929 = vmatpush1.msra.mxu0 %v909
        %930 = vmatprep.subr.mxu0 0.0
        %931 = vmatpush1.msra.mxu0 %v910
        %932 = vmatprep.subr.mxu0 0.0
        %933 = vmatpush1.msra.mxu0 %v911
        %934 = vmatprep.subr.mxu0 0.0
        %935 = vmatpush1.msra.mxu0 %v912
        %936 = vmatprep.subr.mxu0 0.0
        %937 = vmatpush1.msra.mxu0 %v913
        %938 = vmatprep.subr.mxu0 0.0
        %939 = vmatpush1.msra.mxu0 %v914
        %940 = vmatprep.subr.mxu0 0.0
        %941 = vmatpush1.msra.mxu0 %v915
        %942 = vmatprep.subr.mxu0 0.0
        %943 = vmatpush1.msra.mxu0 %v916
        %944 = vmatprep.subr.mxu0 0.0
        %945 = vmatpush1.msra.mxu0 %v917
        %946 = vmatprep.subr.mxu0 0.0
        %947 = vmatpush1.msra.mxu0 %v918
        %948 = vmatprep.subr.mxu0 0.0
        %949 = vmatpush1.msra.mxu0 %v919
        %950 = vmatprep.subr.mxu0 0.0
        %951 = vmatpush1.msra.mxu0 %v920
        %952 = vmatprep.subr.mxu0 0.0
        %953 = vmatpush1.msra.mxu0 %v921
        %954 = vmatprep.subr.mxu0 0.0
        %955 = vmatpush1.msra.mxu0 0.0
        %956 = vmatprep.subr.mxu0 0.0
        %957 = vmatpush1.msra.mxu0 0.0
        %958 = vmatprep.subr.mxu0 0.0
        %959 = vmatpush1.msra.mxu0 0.0
        %960 = vmatprep.subr.mxu0 0.0
        %961 = vmatpush1.msra.mxu0 0.0
        %962 = vmatprep.subr.mxu0 0.0
        %963 = vmatpush1.msra.mxu0 0.0
        %964 = vmatprep.subr.mxu0 0.0
        %965 = vmatpush1.msra.mxu0 0.0
        %966 = vmatprep.subr.mxu0 0.0
        %967 = vmatpush1.msra.mxu0 0.0
        %968 = vmatprep.subr.mxu0 0.0
        %969 = vmatpush1.msra.mxu0 0.0
        %970 = vmatprep.subr.mxu0 0.0
        %971 = vmatpush1.msra.mxu0 0.0
        %972 = vmatprep.subr.mxu0 0.0
        %973 = vmatpush1.msra.mxu0 0.0
        %974 = vmatprep.subr.mxu0 0.0
        %975 = vmatpush1.msra.mxu0 0.0
        %976 = vmatprep.subr.mxu0 0.0
        %977 = vmatpush1.msra.mxu0 0.0
        %978 = vmatprep.subr.mxu0 0.0
        %979 = vmatpush1.msra.mxu0 0.0
        %980 = vmatprep.subr.mxu0 0.0
        %981 = vmatpush1.msra.mxu0 0.0
        %982 = vmatprep.subr.mxu0 0.0
        %983 = vmatpush1.msra.mxu0 0.0
        %984 = vmatprep.subr.mxu0 0.0
        %985 = vmatpush1.msra.mxu0 0.0
        %986 = vmatprep.mubr.f32.mxu0 0.0
        %987 = vmatmul.mubr.f32.gmra.mrb[0].mxu0 %v580
        %v988 = vpop.f32.mrb[0].mxu0
        %v989 = vadd.f32 0.0, %v988
        %v990 = vpop.f32.mrb[0].mxu0
        %991 = vdwg.mxu0
        %v992 = vadd.f32 %v902, %v989
        %s993 = scalar_lea.vmem [#allocation6], 40
        %v994 = vld [vmem:[%s993] sm:$0xff]
        %v996 = vsel %vm583, %v994, 0
        %998 = vmatprep.subr.mxu0 0.0
        %999 = vmatpush1.msra.mxu0 %v580
        %1000 = vmatprep.subr.mxu0 0.0
        %1001 = vmatpush1.msra.mxu0 0.0
        %1002 = vmatprep.subr.mxu0 0.0
        %1003 = vmatpush1.msra.mxu0 0.0
        %1004 = vmatprep.subr.mxu0 0.0
        %1005 = vmatpush1.msra.mxu0 0.0
        %1006 = vmatprep.subr.mxu0 0.0
        %1007 = vmatpush1.msra.mxu0 0.0
        %1008 = vmatprep.subr.mxu0 0.0
        %1009 = vmatpush1.msra.mxu0 0.0
        %1010 = vmatprep.subr.mxu0 0.0
        %1011 = vmatpush1.msra.mxu0 0.0
        %1012 = vmatprep.subr.mxu0 0.0
        %1013 = vmatpush1.msra.mxu0 0.0
        %1014 = vmatprep.subr.mxu0 0.0
        %1015 = vmatpush1.msra.mxu0 0.0
        %1016 = vmatprep.subr.mxu0 0.0
        %1017 = vmatpush1.msra.mxu0 0.0
        %1018 = vmatprep.subr.mxu0 0.0
        %1019 = vmatpush1.msra.mxu0 0.0
        %1020 = vmatprep.subr.mxu0 0.0
        %1021 = vmatpush1.msra.mxu0 0.0
        %1022 = vmatprep.subr.mxu0 0.0
        %1023 = vmatpush1.msra.mxu0 0.0
        %1024 = vmatprep.subr.mxu0 0.0
        %1025 = vmatpush1.msra.mxu0 0.0
        %1026 = vmatprep.subr.mxu0 0.0
        %1027 = vmatpush1.msra.mxu0 0.0
        %1028 = vmatprep.subr.mxu0 0.0
        %1029 = vmatpush1.msra.mxu0 0.0
        %1030 = vmatprep.subr.mxu0 0.0
        %1031 = vmatpush1.msra.mxu0 0.0
        %1032 = vmatprep.subr.mxu0 0.0
        %1033 = vmatpush1.msra.mxu0 0.0
        %1034 = vmatprep.subr.mxu0 0.0
        %1035 = vmatpush1.msra.mxu0 0.0
        %1036 = vmatprep.subr.mxu0 0.0
        %1037 = vmatpush1.msra.mxu0 0.0
        %1038 = vmatprep.subr.mxu0 0.0
        %1039 = vmatpush1.msra.mxu0 0.0
        %1040 = vmatprep.subr.mxu0 0.0
        %1041 = vmatpush1.msra.mxu0 0.0
        %1042 = vmatprep.subr.mxu0 0.0
        %1043 = vmatpush1.msra.mxu0 0.0
        %1044 = vmatprep.subr.mxu0 0.0
        %1045 = vmatpush1.msra.mxu0 0.0
        %1046 = vmatprep.subr.mxu0 0.0
        %1047 = vmatpush1.msra.mxu0 0.0
        %1048 = vmatprep.subr.mxu0 0.0
        %1049 = vmatpush1.msra.mxu0 0.0
        %1050 = vmatprep.subr.mxu0 0.0
        %1051 = vmatpush1.msra.mxu0 0.0
        %1052 = vmatprep.subr.mxu0 0.0
        %1053 = vmatpush1.msra.mxu0 0.0
        %1054 = vmatprep.subr.mxu0 0.0
        %1055 = vmatpush1.msra.mxu0 0.0
        %1056 = vmatprep.subr.mxu0 0.0
        %1057 = vmatpush1.msra.mxu0 0.0
        %1058 = vmatprep.subr.mxu0 0.0
        %1059 = vmatpush1.msra.mxu0 0.0
        %1060 = vmatprep.subr.mxu0 0.0
        %1061 = vmatpush1.msra.mxu0 0.0
        %1062 = vmatprep.mubr.f32.mxu0 0.0
        %1063 = vmatmul.mubr.f32.gmra.mrb[0].mxu0 %v996
        %v1064 = vpop.f32.mrb[0].mxu0
        %v1065 = vadd.f32 0.0, %v1064
        %v1066 = vpop.f32.mrb[0].mxu0
        %1067 = vdwg.mxu0
        %s1068 = scalar_lea.vmem [#allocation7], 384
        %v1069 = vld [vmem:[%s1068] sm:$0xff]
        %v1070 = vld [vmem:[%s1068 + $0x8] sm:$0xff]
        %v1071 = vld [vmem:[%s1068 + $0x10] sm:$0xff]
        %v1072 = vld [vmem:[%s1068 + $0x18] sm:$0xff]
        %v1073 = vld [vmem:[%s1068 + $0x20] sm:$0xff]
        %v1074 = vld [vmem:[%s1068 + $0x28] sm:$0xff]
        %v1075 = vld [vmem:[%s1068 + $0x30] sm:$0xff]
        %v1076 = vld [vmem:[%s1068 + $0x38] sm:$0xff]
        %v1077 = vld [vmem:[%s1068 + $0x40] sm:$0xff]
        %v1078 = vld [vmem:[%s1068 + $0x48] sm:$0xff]
        %v1079 = vld [vmem:[%s1068 + $0x50] sm:$0xff]
        %v1080 = vld [vmem:[%s1068 + $0x58] sm:$0xff]
        %v1081 = vld [vmem:[%s1068 + $0x60] sm:$0xff]
        %v1082 = vld [vmem:[%s1068 + $0x68] sm:$0xff]
        %v1083 = vld [vmem:[%s1068 + $0x70] sm:$0xff]
        %v1084 = vld [vmem:[%s1068 + $0x78] sm:$0xff]
        %1085 = vmatprep.subr.mxu0 0.0
        %1086 = vmatpush1.msra.mxu0 %v1069
        %1087 = vmatprep.subr.mxu0 0.0
        %1088 = vmatpush1.msra.mxu0 %v1070
        %1089 = vmatprep.subr.mxu0 0.0
        %1090 = vmatpush1.msra.mxu0 %v1071
        %1091 = vmatprep.subr.mxu0 0.0
        %1092 = vmatpush1.msra.mxu0 %v1072
        %1093 = vmatprep.subr.mxu0 0.0
        %1094 = vmatpush1.msra.mxu0 %v1073
        %1095 = vmatprep.subr.mxu0 0.0
        %1096 = vmatpush1.msra.mxu0 %v1074
        %1097 = vmatprep.subr.mxu0 0.0
        %1098 = vmatpush1.msra.mxu0 %v1075
        %1099 = vmatprep.subr.mxu0 0.0
        %1100 = vmatpush1.msra.mxu0 %v1076
        %1101 = vmatprep.subr.mxu0 0.0
        %1102 = vmatpush1.msra.mxu0 %v1077
        %1103 = vmatprep.subr.mxu0 0.0
        %1104 = vmatpush1.msra.mxu0 %v1078
        %1105 = vmatprep.subr.mxu0 0.0
        %1106 = vmatpush1.msra.mxu0 %v1079
        %1107 = vmatprep.subr.mxu0 0.0
        %1108 = vmatpush1.msra.mxu0 %v1080
        %1109 = vmatprep.subr.mxu0 0.0
        %1110 = vmatpush1.msra.mxu0 %v1081
        %1111 = vmatprep.subr.mxu0 0.0
        %1112 = vmatpush1.msra.mxu0 %v1082
        %1113 = vmatprep.subr.mxu0 0.0
        %1114 = vmatpush1.msra.mxu0 %v1083
        %1115 = vmatprep.subr.mxu0 0.0
        %1116 = vmatpush1.msra.mxu0 %v1084
        %1117 = vmatprep.subr.mxu0 0.0
        %1118 = vmatpush1.msra.mxu0 0.0
        %1119 = vmatprep.subr.mxu0 0.0
        %1120 = vmatpush1.msra.mxu0 0.0
        %1121 = vmatprep.subr.mxu0 0.0
        %1122 = vmatpush1.msra.mxu0 0.0
        %1123 = vmatprep.subr.mxu0 0.0
        %1124 = vmatpush1.msra.mxu0 0.0
        %1125 = vmatprep.subr.mxu0 0.0
        %1126 = vmatpush1.msra.mxu0 0.0
        %1127 = vmatprep.subr.mxu0 0.0
        %1128 = vmatpush1.msra.mxu0 0.0
        %1129 = vmatprep.subr.mxu0 0.0
        %1130 = vmatpush1.msra.mxu0 0.0
        %1131 = vmatprep.subr.mxu0 0.0
        %1132 = vmatpush1.msra.mxu0 0.0
        %1133 = vmatprep.subr.mxu0 0.0
        %1134 = vmatpush1.msra.mxu0 0.0
        %1135 = vmatprep.subr.mxu0 0.0
        %1136 = vmatpush1.msra.mxu0 0.0
        %1137 = vmatprep.subr.mxu0 0.0
        %1138 = vmatpush1.msra.mxu0 0.0
        %1139 = vmatprep.subr.mxu0 0.0
        %1140 = vmatpush1.msra.mxu0 0.0
        %1141 = vmatprep.subr.mxu0 0.0
        %1142 = vmatpush1.msra.mxu0 0.0
        %1143 = vmatprep.subr.mxu0 0.0
        %1144 = vmatpush1.msra.mxu0 0.0
        %1145 = vmatprep.subr.mxu0 0.0
        %1146 = vmatpush1.msra.mxu0 0.0
        %1147 = vmatprep.subr.mxu0 0.0
        %1148 = vmatpush1.msra.mxu0 0.0
        %1149 = vmatprep.mubr.f32.mxu0 0.0
        %1150 = vmatmul.mubr.f32.gmra.mrb[0].mxu0 %v1065
        %v1151 = vpop.f32.mrb[0].mxu0
        %v1152 = vadd.f32 0.0, %v1151
        %v1153 = vpop.f32.mrb[0].mxu0
        %1154 = vdwg.mxu0
        %v1155 = vadd.f32 %v992, %v1152
        %s1156 = scalar_lea.vmem [#allocation6], 48
        %v1157 = vld [vmem:[%s1156] sm:$0xff]
        %v1159 = vsel %vm583, %v1157, 0
        %1161 = vmatprep.subr.mxu0 0.0
        %1162 = vmatpush1.msra.mxu0 %v580
        %1163 = vmatprep.subr.mxu0 0.0
        %1164 = vmatpush1.msra.mxu0 0.0
        %1165 = vmatprep.subr.mxu0 0.0
        %1166 = vmatpush1.msra.mxu0 0.0
        %1167 = vmatprep.subr.mxu0 0.0
        %1168 = vmatpush1.msra.mxu0 0.0
        %1169 = vmatprep.subr.mxu0 0.0
        %1170 = vmatpush1.msra.mxu0 0.0
        %1171 = vmatprep.subr.mxu0 0.0
        %1172 = vmatpush1.msra.mxu0 0.0
        %1173 = vmatprep.subr.mxu0 0.0
        %1174 = vmatpush1.msra.mxu0 0.0
        %1175 = vmatprep.subr.mxu0 0.0
        %1176 = vmatpush1.msra.mxu0 0.0
        %1177 = vmatprep.subr.mxu0 0.0
        %1178 = vmatpush1.msra.mxu0 0.0
        %1179 = vmatprep.subr.mxu0 0.0
        %1180 = vmatpush1.msra.mxu0 0.0
        %1181 = vmatprep.subr.mxu0 0.0
        %1182 = vmatpush1.msra.mxu0 0.0
        %1183 = vmatprep.subr.mxu0 0.0
        %1184 = vmatpush1.msra.mxu0 0.0
        %1185 = vmatprep.subr.mxu0 0.0
        %1186 = vmatpush1.msra.mxu0 0.0
        %1187 = vmatprep.subr.mxu0 0.0
        %1188 = vmatpush1.msra.mxu0 0.0
        %1189 = vmatprep.subr.mxu0 0.0
        %1190 = vmatpush1.msra.mxu0 0.0
        %1191 = vmatprep.subr.mxu0 0.0
        %1192 = vmatpush1.msra.mxu0 0.0
        %1193 = vmatprep.subr.mxu0 0.0
        %1194 = vmatpush1.msra.mxu0 0.0
        %1195 = vmatprep.subr.mxu0 0.0
        %1196 = vmatpush1.msra.mxu0 0.0
        %1197 = vmatprep.subr.mxu0 0.0
        %1198 = vmatpush1.msra.mxu0 0.0
        %1199 = vmatprep.subr.mxu0 0.0
        %1200 = vmatpush1.msra.mxu0 0.0
        %1201 = vmatprep.subr.mxu0 0.0
        %1202 = vmatpush1.msra.mxu0 0.0
        %1203 = vmatprep.subr.mxu0 0.0
        %1204 = vmatpush1.msra.mxu0 0.0
        %1205 = vmatprep.subr.mxu0 0.0
        %1206 = vmatpush1.msra.mxu0 0.0
        %1207 = vmatprep.subr.mxu0 0.0
        %1208 = vmatpush1.msra.mxu0 0.0
        %1209 = vmatprep.subr.mxu0 0.0
        %1210 = vmatpush1.msra.mxu0 0.0
        %1211 = vmatprep.subr.mxu0 0.0
        %1212 = vmatpush1.msra.mxu0 0.0
        %1213 = vmatprep.subr.mxu0 0.0
        %1214 = vmatpush1.msra.mxu0 0.0
        %1215 = vmatprep.subr.mxu0 0.0
        %1216 = vmatpush1.msra.mxu0 0.0
        %1217 = vmatprep.subr.mxu0 0.0
        %1218 = vmatpush1.msra.mxu0 0.0
        %1219 = vmatprep.subr.mxu0 0.0
        %1220 = vmatpush1.msra.mxu0 0.0
        %1221 = vmatprep.subr.mxu0 0.0
        %1222 = vmatpush1.msra.mxu0 0.0
        %1223 = vmatprep.subr.mxu0 0.0
        %1224 = vmatpush1.msra.mxu0 0.0
        %1225 = vmatprep.mubr.f32.mxu0 0.0
        %1226 = vmatmul.mubr.f32.gmra.mrb[0].mxu0 %v1159
        %v1227 = vpop.f32.mrb[0].mxu0
        %v1228 = vadd.f32 0.0, %v1227
        %v1229 = vpop.f32.mrb[0].mxu0
        %1230 = vdwg.mxu0
        %s1231 = scalar_lea.vmem [#allocation7], 512
        %v1232 = vld [vmem:[%s1231] sm:$0xff]
        %v1233 = vld [vmem:[%s1231 + $0x8] sm:$0xff]
        %v1234 = vld [vmem:[%s1231 + $0x10] sm:$0xff]
        %v1235 = vld [vmem:[%s1231 + $0x18] sm:$0xff]
        %v1236 = vld [vmem:[%s1231 + $0x20] sm:$0xff]
        %v1237 = vld [vmem:[%s1231 + $0x28] sm:$0xff]
        %v1238 = vld [vmem:[%s1231 + $0x30] sm:$0xff]
        %v1239 = vld [vmem:[%s1231 + $0x38] sm:$0xff]
        %v1240 = vld [vmem:[%s1231 + $0x40] sm:$0xff]
        %v1241 = vld [vmem:[%s1231 + $0x48] sm:$0xff]
        %v1242 = vld [vmem:[%s1231 + $0x50] sm:$0xff]
        %v1243 = vld [vmem:[%s1231 + $0x58] sm:$0xff]
        %v1244 = vld [vmem:[%s1231 + $0x60] sm:$0xff]
        %v1245 = vld [vmem:[%s1231 + $0x68] sm:$0xff]
        %v1246 = vld [vmem:[%s1231 + $0x70] sm:$0xff]
        %v1247 = vld [vmem:[%s1231 + $0x78] sm:$0xff]
        %1248 = vmatprep.subr.mxu0 0.0
        %1249 = vmatpush1.msra.mxu0 %v1232
        %1250 = vmatprep.subr.mxu0 0.0
        %1251 = vmatpush1.msra.mxu0 %v1233
        %1252 = vmatprep.subr.mxu0 0.0
        %1253 = vmatpush1.msra.mxu0 %v1234
        %1254 = vmatprep.subr.mxu0 0.0
        %1255 = vmatpush1.msra.mxu0 %v1235
        %1256 = vmatprep.subr.mxu0 0.0
        %1257 = vmatpush1.msra.mxu0 %v1236
        %1258 = vmatprep.subr.mxu0 0.0
        %1259 = vmatpush1.msra.mxu0 %v1237
        %1260 = vmatprep.subr.mxu0 0.0
        %1261 = vmatpush1.msra.mxu0 %v1238
        %1262 = vmatprep.subr.mxu0 0.0
        %1263 = vmatpush1.msra.mxu0 %v1239
        %1264 = vmatprep.subr.mxu0 0.0
        %1265 = vmatpush1.msra.mxu0 %v1240
        %1266 = vmatprep.subr.mxu0 0.0
        %1267 = vmatpush1.msra.mxu0 %v1241
        %1268 = vmatprep.subr.mxu0 0.0
        %1269 = vmatpush1.msra.mxu0 %v1242
        %1270 = vmatprep.subr.mxu0 0.0
        %1271 = vmatpush1.msra.mxu0 %v1243
        %1272 = vmatprep.subr.mxu0 0.0
        %1273 = vmatpush1.msra.mxu0 %v1244
        %1274 = vmatprep.subr.mxu0 0.0
        %1275 = vmatpush1.msra.mxu0 %v1245
        %1276 = vmatprep.subr.mxu0 0.0
        %1277 = vmatpush1.msra.mxu0 %v1246
        %1278 = vmatprep.subr.mxu0 0.0
        %1279 = vmatpush1.msra.mxu0 %v1247
        %1280 = vmatprep.subr.mxu0 0.0
        %1281 = vmatpush1.msra.mxu0 0.0
        %1282 = vmatprep.subr.mxu0 0.0
        %1283 = vmatpush1.msra.mxu0 0.0
        %1284 = vmatprep.subr.mxu0 0.0
        %1285 = vmatpush1.msra.mxu0 0.0
        %1286 = vmatprep.subr.mxu0 0.0
        %1287 = vmatpush1.msra.mxu0 0.0
        %1288 = vmatprep.subr.mxu0 0.0
        %1289 = vmatpush1.msra.mxu0 0.0
        %1290 = vmatprep.subr.mxu0 0.0
        %1291 = vmatpush1.msra.mxu0 0.0
        %1292 = vmatprep.subr.mxu0 0.0
        %1293 = vmatpush1.msra.mxu0 0.0
        %1294 = vmatprep.subr.mxu0 0.0
        %1295 = vmatpush1.msra.mxu0 0.0
        %1296 = vmatprep.subr.mxu0 0.0
        %1297 = vmatpush1.msra.mxu0 0.0
        %1298 = vmatprep.subr.mxu0 0.0
        %1299 = vmatpush1.msra.mxu0 0.0
        %1300 = vmatprep.subr.mxu0 0.0
        %1301 = vmatpush1.msra.mxu0 0.0
        %1302 = vmatprep.subr.mxu0 0.0
        %1303 = vmatpush1.msra.mxu0 0.0
        %1304 = vmatprep.subr.mxu0 0.0
        %1305 = vmatpush1.msra.mxu0 0.0
        %1306 = vmatprep.subr.mxu0 0.0
        %1307 = vmatpush1.msra.mxu0 0.0
        %1308 = vmatprep.subr.mxu0 0.0
        %1309 = vmatpush1.msra.mxu0 0.0
        %1310 = vmatprep.subr.mxu0 0.0
        %1311 = vmatpush1.msra.mxu0 0.0
        %1312 = vmatprep.mubr.f32.mxu0 0.0
        %1313 = vmatmul.mubr.f32.gmra.mrb[0].mxu0 %v1228
        %v1314 = vpop.f32.mrb[0].mxu0
        %v1315 = vadd.f32 0.0, %v1314
        %v1316 = vpop.f32.mrb[0].mxu0
        %1317 = vdwg.mxu0
        %v1318 = vadd.f32 %v1155, %v1315
        %v1319 = vmax.f32 %v1318, 0.0
        %1320 = vmatprep.subr.mxu0 0.0
        %1321 = vmatpush1.msra.mxu0 %v1319
        %1322 = vmatprep.subr.mxu0 0.0
        %1323 = vmatpush1.msra.mxu0 0.0
        %1324 = vmatprep.subr.mxu0 0.0
        %1325 = vmatpush1.msra.mxu0 0.0
        %1326 = vmatprep.subr.mxu0 0.0
        %1327 = vmatpush1.msra.mxu0 0.0
        %1328 = vmatprep.subr.mxu0 0.0
        %1329 = vmatpush1.msra.mxu0 0.0
        %1330 = vmatprep.subr.mxu0 0.0
        %1331 = vmatpush1.msra.mxu0 0.0
        %1332 = vmatprep.subr.mxu0 0.0
        %1333 = vmatpush1.msra.mxu0 0.0
        %1334 = vmatprep.subr.mxu0 0.0
        %1335 = vmatpush1.msra.mxu0 0.0
        %1336 = vmatprep.subr.mxu0 0.0
        %1337 = vmatpush1.msra.mxu0 0.0
        %1338 = vmatprep.subr.mxu0 0.0
        %1339 = vmatpush1.msra.mxu0 0.0
        %1340 = vmatprep.subr.mxu0 0.0
        %1341 = vmatpush1.msra.mxu0 0.0
        %1342 = vmatprep.subr.mxu0 0.0
        %1343 = vmatpush1.msra.mxu0 0.0
        %1344 = vmatprep.subr.mxu0 0.0
        %1345 = vmatpush1.msra.mxu0 0.0
        %1346 = vmatprep.subr.mxu0 0.0
        %1347 = vmatpush1.msra.mxu0 0.0
        %1348 = vmatprep.subr.mxu0 0.0
        %1349 = vmatpush1.msra.mxu0 0.0
        %1350 = vmatprep.subr.mxu0 0.0
        %1351 = vmatpush1.msra.mxu0 0.0
        %1352 = vmatprep.subr.mxu0 0.0
        %1353 = vmatpush1.msra.mxu0 0.0
        %1354 = vmatprep.subr.mxu0 0.0
        %1355 = vmatpush1.msra.mxu0 0.0
        %1356 = vmatprep.subr.mxu0 0.0
        %1357 = vmatpush1.msra.mxu0 0.0
        %1358 = vmatprep.subr.mxu0 0.0
        %1359 = vmatpush1.msra.mxu0 0.0
        %1360 = vmatprep.subr.mxu0 0.0
        %1361 = vmatpush1.msra.mxu0 0.0
        %1362 = vmatprep.subr.mxu0 0.0
        %1363 = vmatpush1.msra.mxu0 0.0
        %1364 = vmatprep.subr.mxu0 0.0
        %1365 = vmatpush1.msra.mxu0 0.0
        %1366 = vmatprep.subr.mxu0 0.0
        %1367 = vmatpush1.msra.mxu0 0.0
        %1368 = vmatprep.subr.mxu0 0.0
        %1369 = vmatpush1.msra.mxu0 0.0
        %1370 = vmatprep.subr.mxu0 0.0
        %1371 = vmatpush1.msra.mxu0 0.0
        %1372 = vmatprep.subr.mxu0 0.0
        %1373 = vmatpush1.msra.mxu0 0.0
        %1374 = vmatprep.subr.mxu0 0.0
        %1375 = vmatpush1.msra.mxu0 0.0
        %1376 = vmatprep.subr.mxu0 0.0
        %1377 = vmatpush1.msra.mxu0 0.0
        %1378 = vmatprep.subr.mxu0 0.0
        %1379 = vmatpush1.msra.mxu0 0.0
        %1380 = vmatprep.subr.mxu0 0.0
        %1381 = vmatpush1.msra.mxu0 0.0
        %1382 = vmatprep.subr.mxu0 0.0
        %1383 = vmatpush1.msra.mxu0 0.0
        %1384 = vmatprep.mubr.f32.mxu0 0.0
        %1385 = vmatmul.mubr.f32.gmra.mrb[0].mxu0 %v585
        %v1386 = vpop.f32.mrb[0].mxu0
        %v1387 = vadd.f32 0.0, %v1386
        %v1388 = vpop.f32.mrb[0].mxu0
        %1389 = vdwg.mxu0
        %s1390 = scalar_lea.vmem [#allocation7], 640
        %v1391 = vld [vmem:[%s1390] sm:$0xff]
        %v1392 = vld [vmem:[%s1390 + $0x8] sm:$0xff]
        %v1393 = vld [vmem:[%s1390 + $0x10] sm:$0xff]
        %v1394 = vld [vmem:[%s1390 + $0x18] sm:$0xff]
        %v1395 = vld [vmem:[%s1390 + $0x20] sm:$0xff]
        %v1396 = vld [vmem:[%s1390 + $0x28] sm:$0xff]
        %v1397 = vld [vmem:[%s1390 + $0x30] sm:$0xff]
        %v1398 = vld [vmem:[%s1390 + $0x38] sm:$0xff]
        %v1399 = vld [vmem:[%s1390 + $0x40] sm:$0xff]
        %v1400 = vld [vmem:[%s1390 + $0x48] sm:$0xff]
        %v1401 = vld [vmem:[%s1390 + $0x50] sm:$0xff]
        %v1402 = vld [vmem:[%s1390 + $0x58] sm:$0xff]
        %v1403 = vld [vmem:[%s1390 + $0x60] sm:$0xff]
        %v1404 = vld [vmem:[%s1390 + $0x68] sm:$0xff]
        %v1405 = vld [vmem:[%s1390 + $0x70] sm:$0xff]
        %v1406 = vld [vmem:[%s1390 + $0x78] sm:$0xff]
        %1407 = vmatprep.subr.mxu0 0.0
        %1408 = vmatpush1.msra.mxu0 %v1319
        %1409 = vmatprep.subr.mxu0 0.0
        %1410 = vmatpush1.msra.mxu0 0.0
        %1411 = vmatprep.subr.mxu0 0.0
        %1412 = vmatpush1.msra.mxu0 0.0
        %1413 = vmatprep.subr.mxu0 0.0
        %1414 = vmatpush1.msra.mxu0 0.0
        %1415 = vmatprep.subr.mxu0 0.0
        %1416 = vmatpush1.msra.mxu0 0.0
        %1417 = vmatprep.subr.mxu0 0.0
        %1418 = vmatpush1.msra.mxu0 0.0
        %1419 = vmatprep.subr.mxu0 0.0
        %1420 = vmatpush1.msra.mxu0 0.0
        %1421 = vmatprep.subr.mxu0 0.0
        %1422 = vmatpush1.msra.mxu0 0.0
        %1423 = vmatprep.subr.mxu0 0.0
        %1424 = vmatpush1.msra.mxu0 0.0
        %1425 = vmatprep.subr.mxu0 0.0
        %1426 = vmatpush1.msra.mxu0 0.0
        %1427 = vmatprep.subr.mxu0 0.0
        %1428 = vmatpush1.msra.mxu0 0.0
        %1429 = vmatprep.subr.mxu0 0.0
        %1430 = vmatpush1.msra.mxu0 0.0
        %1431 = vmatprep.subr.mxu0 0.0
        %1432 = vmatpush1.msra.mxu0 0.0
        %1433 = vmatprep.subr.mxu0 0.0
        %1434 = vmatpush1.msra.mxu0 0.0
        %1435 = vmatprep.subr.mxu0 0.0
        %1436 = vmatpush1.msra.mxu0 0.0
        %1437 = vmatprep.subr.mxu0 0.0
        %1438 = vmatpush1.msra.mxu0 0.0
        %1439 = vmatprep.subr.mxu0 0.0
        %1440 = vmatpush1.msra.mxu0 0.0
        %1441 = vmatprep.subr.mxu0 0.0
        %1442 = vmatpush1.msra.mxu0 0.0
        %1443 = vmatprep.subr.mxu0 0.0
        %1444 = vmatpush1.msra.mxu0 0.0
        %1445 = vmatprep.subr.mxu0 0.0
        %1446 = vmatpush1.msra.mxu0 0.0
        %1447 = vmatprep.subr.mxu0 0.0
        %1448 = vmatpush1.msra.mxu0 0.0
        %1449 = vmatprep.subr.mxu0 0.0
        %1450 = vmatpush1.msra.mxu0 0.0
        %1451 = vmatprep.subr.mxu0 0.0
        %1452 = vmatpush1.msra.mxu0 0.0
        %1453 = vmatprep.subr.mxu0 0.0
        %1454 = vmatpush1.msra.mxu0 0.0
        %1455 = vmatprep.subr.mxu0 0.0
        %1456 = vmatpush1.msra.mxu0 0.0
        %1457 = vmatprep.subr.mxu0 0.0
        %1458 = vmatpush1.msra.mxu0 0.0
        %1459 = vmatprep.subr.mxu0 0.0
        %1460 = vmatpush1.msra.mxu0 0.0
        %1461 = vmatprep.subr.mxu0 0.0
        %1462 = vmatpush1.msra.mxu0 0.0
        %1463 = vmatprep.subr.mxu0 0.0
        %1464 = vmatpush1.msra.mxu0 0.0
        %1465 = vmatprep.subr.mxu0 0.0
        %1466 = vmatpush1.msra.mxu0 0.0
        %1467 = vmatprep.subr.mxu0 0.0
        %1468 = vmatpush1.msra.mxu0 0.0
        %1469 = vmatprep.subr.mxu0 0.0
        %1470 = vmatpush1.msra.mxu0 0.0
        %1471 = vmatprep.mubr.f32.mxu0 0.0
        %1472 = vmatmul.mubr.f32.gmra.mrb[0].mxu0 %v676
        %v1473 = vpop.f32.mrb[0].mxu0
        %v1474 = vadd.f32 0.0, %v1473
        %v1475 = vpop.f32.mrb[0].mxu0
        %1476 = vdwg.mxu0
        %s1477 = scalar_lea.vmem [#allocation7], 768
        %v1478 = vld [vmem:[%s1477] sm:$0xff]
        %v1479 = vld [vmem:[%s1477 + $0x8] sm:$0xff]
        %v1480 = vld [vmem:[%s1477 + $0x10] sm:$0xff]
        %v1481 = vld [vmem:[%s1477 + $0x18] sm:$0xff]
        %v1482 = vld [vmem:[%s1477 + $0x20] sm:$0xff]
        %v1483 = vld [vmem:[%s1477 + $0x28] sm:$0xff]
        %v1484 = vld [vmem:[%s1477 + $0x30] sm:$0xff]
        %v1485 = vld [vmem:[%s1477 + $0x38] sm:$0xff]
        %v1486 = vld [vmem:[%s1477 + $0x40] sm:$0xff]
        %v1487 = vld [vmem:[%s1477 + $0x48] sm:$0xff]
        %v1488 = vld [vmem:[%s1477 + $0x50] sm:$0xff]
        %v1489 = vld [vmem:[%s1477 + $0x58] sm:$0xff]
        %v1490 = vld [vmem:[%s1477 + $0x60] sm:$0xff]
        %v1491 = vld [vmem:[%s1477 + $0x68] sm:$0xff]
        %v1492 = vld [vmem:[%s1477 + $0x70] sm:$0xff]
        %v1493 = vld [vmem:[%s1477 + $0x78] sm:$0xff]
        %1494 = vmatprep.subr.mxu0 0.0
        %1495 = vmatpush1.msra.mxu0 %v1478
        %1496 = vmatprep.subr.mxu0 0.0
        %1497 = vmatpush1.msra.mxu0 %v1479
        %1498 = vmatprep.subr.mxu0 0.0
        %1499 = vmatpush1.msra.mxu0 %v1480
        %1500 = vmatprep.subr.mxu0 0.0
        %1501 = vmatpush1.msra.mxu0 %v1481
        %1502 = vmatprep.subr.mxu0 0.0
        %1503 = vmatpush1.msra.mxu0 %v1482
        %1504 = vmatprep.subr.mxu0 0.0
        %1505 = vmatpush1.msra.mxu0 %v1483
        %1506 = vmatprep.subr.mxu0 0.0
        %1507 = vmatpush1.msra.mxu0 %v1484
        %1508 = vmatprep.subr.mxu0 0.0
        %1509 = vmatpush1.msra.mxu0 %v1485
        %1510 = vmatprep.subr.mxu0 0.0
        %1511 = vmatpush1.msra.mxu0 %v1486
        %1512 = vmatprep.subr.mxu0 0.0
        %1513 = vmatpush1.msra.mxu0 %v1487
        %1514 = vmatprep.subr.mxu0 0.0
        %1515 = vmatpush1.msra.mxu0 %v1488
        %1516 = vmatprep.subr.mxu0 0.0
        %1517 = vmatpush1.msra.mxu0 %v1489
        %1518 = vmatprep.subr.mxu0 0.0
        %1519 = vmatpush1.msra.mxu0 %v1490
        %1520 = vmatprep.subr.mxu0 0.0
        %1521 = vmatpush1.msra.mxu0 %v1491
        %1522 = vmatprep.subr.mxu0 0.0
        %1523 = vmatpush1.msra.mxu0 %v1492
        %1524 = vmatprep.subr.mxu0 0.0
        %1525 = vmatpush1.msra.mxu0 %v1493
        %1526 = vmatprep.subr.mxu0 0.0
        %1527 = vmatpush1.msra.mxu0 0.0
        %1528 = vmatprep.subr.mxu0 0.0
        %1529 = vmatpush1.msra.mxu0 0.0
        %1530 = vmatprep.subr.mxu0 0.0
        %1531 = vmatpush1.msra.mxu0 0.0
        %1532 = vmatprep.subr.mxu0 0.0
        %1533 = vmatpush1.msra.mxu0 0.0
        %1534 = vmatprep.subr.mxu0 0.0
        %1535 = vmatpush1.msra.mxu0 0.0
        %1536 = vmatprep.subr.mxu0 0.0
        %1537 = vmatpush1.msra.mxu0 0.0
        %1538 = vmatprep.subr.mxu0 0.0
        %1539 = vmatpush1.msra.mxu0 0.0
        %1540 = vmatprep.subr.mxu0 0.0
        %1541 = vmatpush1.msra.mxu0 0.0
        %1542 = vmatprep.subr.mxu0 0.0
        %1543 = vmatpush1.msra.mxu0 0.0
        %1544 = vmatprep.subr.mxu0 0.0
        %1545 = vmatpush1.msra.mxu0 0.0
        %1546 = vmatprep.subr.mxu0 0.0
        %1547 = vmatpush1.msra.mxu0 0.0
        %1548 = vmatprep.subr.mxu0 0.0
        %1549 = vmatpush1.msra.mxu0 0.0
        %1550 = vmatprep.subr.mxu0 0.0
        %1551 = vmatpush1.msra.mxu0 0.0
        %1552 = vmatprep.subr.mxu0 0.0
        %1553 = vmatpush1.msra.mxu0 0.0
        %1554 = vmatprep.subr.mxu0 0.0
        %1555 = vmatpush1.msra.mxu0 0.0
        %1556 = vmatprep.subr.mxu0 0.0
        %1557 = vmatpush1.msra.mxu0 0.0
        %1558 = vmatprep.mubr.f32.mxu0 0.0
        %1559 = vmatmul.mubr.f32.gmra.mrb[0].mxu0 %v1474
        %v1560 = vpop.f32.mrb[0].mxu0
        %v1561 = vadd.f32 0.0, %v1560
        %v1562 = vpop.f32.mrb[0].mxu0
        %1563 = vdwg.mxu0
        %1564 = vmatprep.subr.mxu0 0.0
        %1565 = vmatpush1.msra.mxu0 %v1391
        %1566 = vmatprep.subr.mxu0 0.0
        %1567 = vmatpush1.msra.mxu0 %v1392
        %1568 = vmatprep.subr.mxu0 0.0
        %1569 = vmatpush1.msra.mxu0 %v1393
        %1570 = vmatprep.subr.mxu0 0.0
        %1571 = vmatpush1.msra.mxu0 %v1394
        %1572 = vmatprep.subr.mxu0 0.0
        %1573 = vmatpush1.msra.mxu0 %v1395
        %1574 = vmatprep.subr.mxu0 0.0
        %1575 = vmatpush1.msra.mxu0 %v1396
        %1576 = vmatprep.subr.mxu0 0.0
        %1577 = vmatpush1.msra.mxu0 %v1397
        %1578 = vmatprep.subr.mxu0 0.0
        %1579 = vmatpush1.msra.mxu0 %v1398
        %1580 = vmatprep.subr.mxu0 0.0
        %1581 = vmatpush1.msra.mxu0 %v1399
        %1582 = vmatprep.subr.mxu0 0.0
        %1583 = vmatpush1.msra.mxu0 %v1400
        %1584 = vmatprep.subr.mxu0 0.0
        %1585 = vmatpush1.msra.mxu0 %v1401
        %1586 = vmatprep.subr.mxu0 0.0
        %1587 = vmatpush1.msra.mxu0 %v1402
        %1588 = vmatprep.subr.mxu0 0.0
        %1589 = vmatpush1.msra.mxu0 %v1403
        %1590 = vmatprep.subr.mxu0 0.0
        %1591 = vmatpush1.msra.mxu0 %v1404
        %1592 = vmatprep.subr.mxu0 0.0
        %1593 = vmatpush1.msra.mxu0 %v1405
        %1594 = vmatprep.subr.mxu0 0.0
        %1595 = vmatpush1.msra.mxu0 %v1406
        %1596 = vmatprep.subr.mxu0 0.0
        %1597 = vmatpush1.msra.mxu0 0.0
        %1598 = vmatprep.subr.mxu0 0.0
        %1599 = vmatpush1.msra.mxu0 0.0
        %1600 = vmatprep.subr.mxu0 0.0
        %1601 = vmatpush1.msra.mxu0 0.0
        %1602 = vmatprep.subr.mxu0 0.0
        %1603 = vmatpush1.msra.mxu0 0.0
        %1604 = vmatprep.subr.mxu0 0.0
        %1605 = vmatpush1.msra.mxu0 0.0
        %1606 = vmatprep.subr.mxu0 0.0
        %1607 = vmatpush1.msra.mxu0 0.0
        %1608 = vmatprep.subr.mxu0 0.0
        %1609 = vmatpush1.msra.mxu0 0.0
        %1610 = vmatprep.subr.mxu0 0.0
        %1611 = vmatpush1.msra.mxu0 0.0
        %1612 = vmatprep.subr.mxu0 0.0
        %1613 = vmatpush1.msra.mxu0 0.0
        %1614 = vmatprep.subr.mxu0 0.0
        %1615 = vmatpush1.msra.mxu0 0.0
        %1616 = vmatprep.subr.mxu0 0.0
        %1617 = vmatpush1.msra.mxu0 0.0
        %1618 = vmatprep.subr.mxu0 0.0
        %1619 = vmatpush1.msra.mxu0 0.0
        %1620 = vmatprep.subr.mxu0 0.0
        %1621 = vmatpush1.msra.mxu0 0.0
        %1622 = vmatprep.subr.mxu0 0.0
        %1623 = vmatpush1.msra.mxu0 0.0
        %1624 = vmatprep.subr.mxu0 0.0
        %1625 = vmatpush1.msra.mxu0 0.0
        %1626 = vmatprep.subr.mxu0 0.0
        %1627 = vmatpush1.msra.mxu0 0.0
        %1628 = vmatprep.mubr.f32.mxu0 0.0
        %1629 = vmatmul.mubr.f32.gmra.mrb[0].mxu0 %v1387
        %v1630 = vpop.f32.mrb[0].mxu0
        %v1631 = vadd.f32 %v1561, %v1630
        %v1632 = vpop.f32.mrb[0].mxu0
        %1633 = vdwg.mxu0
        %s1634 = scalar_lea.vmem [#allocation7], 896
        %v1635 = vld [vmem:[%s1634] sm:$0xff]
        %v1636 = vld [vmem:[%s1634 + $0x8] sm:$0xff]
        %v1637 = vld [vmem:[%s1634 + $0x10] sm:$0xff]
        %v1638 = vld [vmem:[%s1634 + $0x18] sm:$0xff]
        %v1639 = vld [vmem:[%s1634 + $0x20] sm:$0xff]
        %v1640 = vld [vmem:[%s1634 + $0x28] sm:$0xff]
        %v1641 = vld [vmem:[%s1634 + $0x30] sm:$0xff]
        %v1642 = vld [vmem:[%s1634 + $0x38] sm:$0xff]
        %v1643 = vld [vmem:[%s1634 + $0x40] sm:$0xff]
        %v1644 = vld [vmem:[%s1634 + $0x48] sm:$0xff]
        %v1645 = vld [vmem:[%s1634 + $0x50] sm:$0xff]
        %v1646 = vld [vmem:[%s1634 + $0x58] sm:$0xff]
        %v1647 = vld [vmem:[%s1634 + $0x60] sm:$0xff]
        %v1648 = vld [vmem:[%s1634 + $0x68] sm:$0xff]
        %v1649 = vld [vmem:[%s1634 + $0x70] sm:$0xff]
        %v1650 = vld [vmem:[%s1634 + $0x78] sm:$0xff]
        %1651 = vmatprep.subr.mxu0 0.0
        %1652 = vmatpush1.msra.mxu0 %v1635
        %1653 = vmatprep.subr.mxu0 0.0
        %1654 = vmatpush1.msra.mxu0 %v1636
        %1655 = vmatprep.subr.mxu0 0.0
        %1656 = vmatpush1.msra.mxu0 %v1637
        %1657 = vmatprep.subr.mxu0 0.0
        %1658 = vmatpush1.msra.mxu0 %v1638
        %1659 = vmatprep.subr.mxu0 0.0
        %1660 = vmatpush1.msra.mxu0 %v1639
        %1661 = vmatprep.subr.mxu0 0.0
        %1662 = vmatpush1.msra.mxu0 %v1640
        %1663 = vmatprep.subr.mxu0 0.0
        %1664 = vmatpush1.msra.mxu0 %v1641
        %1665 = vmatprep.subr.mxu0 0.0
        %1666 = vmatpush1.msra.mxu0 %v1642
        %1667 = vmatprep.subr.mxu0 0.0
        %1668 = vmatpush1.msra.mxu0 %v1643
        %1669 = vmatprep.subr.mxu0 0.0
        %1670 = vmatpush1.msra.mxu0 %v1644
        %1671 = vmatprep.subr.mxu0 0.0
        %1672 = vmatpush1.msra.mxu0 %v1645
        %1673 = vmatprep.subr.mxu0 0.0
        %1674 = vmatpush1.msra.mxu0 %v1646
        %1675 = vmatprep.subr.mxu0 0.0
        %1676 = vmatpush1.msra.mxu0 %v1647
        %1677 = vmatprep.subr.mxu0 0.0
        %1678 = vmatpush1.msra.mxu0 %v1648
        %1679 = vmatprep.subr.mxu0 0.0
        %1680 = vmatpush1.msra.mxu0 %v1649
        %1681 = vmatprep.subr.mxu0 0.0
        %1682 = vmatpush1.msra.mxu0 %v1650
        %1683 = vmatprep.subr.mxu0 0.0
        %1684 = vmatpush1.msra.mxu0 0.0
        %1685 = vmatprep.subr.mxu0 0.0
        %1686 = vmatpush1.msra.mxu0 0.0
        %1687 = vmatprep.subr.mxu0 0.0
        %1688 = vmatpush1.msra.mxu0 0.0
        %1689 = vmatprep.subr.mxu0 0.0
        %1690 = vmatpush1.msra.mxu0 0.0
        %1691 = vmatprep.subr.mxu0 0.0
        %1692 = vmatpush1.msra.mxu0 0.0
        %1693 = vmatprep.subr.mxu0 0.0
        %1694 = vmatpush1.msra.mxu0 0.0
        %1695 = vmatprep.subr.mxu0 0.0
        %1696 = vmatpush1.msra.mxu0 0.0
        %1697 = vmatprep.subr.mxu0 0.0
        %1698 = vmatpush1.msra.mxu0 0.0
        %1699 = vmatprep.subr.mxu0 0.0
        %1700 = vmatpush1.msra.mxu0 0.0
        %1701 = vmatprep.subr.mxu0 0.0
        %1702 = vmatpush1.msra.mxu0 0.0
        %1703 = vmatprep.subr.mxu0 0.0
        %1704 = vmatpush1.msra.mxu0 0.0
        %1705 = vmatprep.subr.mxu0 0.0
        %1706 = vmatpush1.msra.mxu0 0.0
        %1707 = vmatprep.subr.mxu0 0.0
        %1708 = vmatpush1.msra.mxu0 0.0
        %1709 = vmatprep.subr.mxu0 0.0
        %1710 = vmatpush1.msra.mxu0 0.0
        %1711 = vmatprep.subr.mxu0 0.0
        %1712 = vmatpush1.msra.mxu0 0.0
        %1713 = vmatprep.subr.mxu0 0.0
        %1714 = vmatpush1.msra.mxu0 0.0
        %1715 = vmatprep.mubr.f32.mxu0 0.0
        %1716 = vmatmul.mubr.f32.gmra.mrb[0].mxu0 %v1319
        %v1717 = vpop.f32.mrb[0].mxu0
        %v1718 = vadd.f32 0.0, %v1717
        %v1719 = vpop.f32.mrb[0].mxu0
        %1720 = vdwg.mxu0
        %v1721 = vadd.f32 %v1631, %v1718
        %1722 = vmatprep.subr.mxu0 0.0
        %1723 = vmatpush1.msra.mxu0 %v1319
        %1724 = vmatprep.subr.mxu0 0.0
        %1725 = vmatpush1.msra.mxu0 0.0
        %1726 = vmatprep.subr.mxu0 0.0
        %1727 = vmatpush1.msra.mxu0 0.0
        %1728 = vmatprep.subr.mxu0 0.0
        %1729 = vmatpush1.msra.mxu0 0.0
        %1730 = vmatprep.subr.mxu0 0.0
        %1731 = vmatpush1.msra.mxu0 0.0
        %1732 = vmatprep.subr.mxu0 0.0
        %1733 = vmatpush1.msra.mxu0 0.0
        %1734 = vmatprep.subr.mxu0 0.0
        %1735 = vmatpush1.msra.mxu0 0.0
        %1736 = vmatprep.subr.mxu0 0.0
        %1737 = vmatpush1.msra.mxu0 0.0
        %1738 = vmatprep.subr.mxu0 0.0
        %1739 = vmatpush1.msra.mxu0 0.0
        %1740 = vmatprep.subr.mxu0 0.0
        %1741 = vmatpush1.msra.mxu0 0.0
        %1742 = vmatprep.subr.mxu0 0.0
        %1743 = vmatpush1.msra.mxu0 0.0
        %1744 = vmatprep.subr.mxu0 0.0
        %1745 = vmatpush1.msra.mxu0 0.0
        %1746 = vmatprep.subr.mxu0 0.0
        %1747 = vmatpush1.msra.mxu0 0.0
        %1748 = vmatprep.subr.mxu0 0.0
        %1749 = vmatpush1.msra.mxu0 0.0
        %1750 = vmatprep.subr.mxu0 0.0
        %1751 = vmatpush1.msra.mxu0 0.0
        %1752 = vmatprep.subr.mxu0 0.0
        %1753 = vmatpush1.msra.mxu0 0.0
        %1754 = vmatprep.subr.mxu0 0.0
        %1755 = vmatpush1.msra.mxu0 0.0
        %1756 = vmatprep.subr.mxu0 0.0
        %1757 = vmatpush1.msra.mxu0 0.0
        %1758 = vmatprep.subr.mxu0 0.0
        %1759 = vmatpush1.msra.mxu0 0.0
        %1760 = vmatprep.subr.mxu0 0.0
        %1761 = vmatpush1.msra.mxu0 0.0
        %1762 = vmatprep.subr.mxu0 0.0
        %1763 = vmatpush1.msra.mxu0 0.0
        %1764 = vmatprep.subr.mxu0 0.0
        %1765 = vmatpush1.msra.mxu0 0.0
        %1766 = vmatprep.subr.mxu0 0.0
        %1767 = vmatpush1.msra.mxu0 0.0
        %1768 = vmatprep.subr.mxu0 0.0
        %1769 = vmatpush1.msra.mxu0 0.0
        %1770 = vmatprep.subr.mxu0 0.0
        %1771 = vmatpush1.msra.mxu0 0.0
        %1772 = vmatprep.subr.mxu0 0.0
        %1773 = vmatpush1.msra.mxu0 0.0
        %1774 = vmatprep.subr.mxu0 0.0
        %1775 = vmatpush1.msra.mxu0 0.0
        %1776 = vmatprep.subr.mxu0 0.0
        %1777 = vmatpush1.msra.mxu0 0.0
        %1778 = vmatprep.subr.mxu0 0.0
        %1779 = vmatpush1.msra.mxu0 0.0
        %1780 = vmatprep.subr.mxu0 0.0
        %1781 = vmatpush1.msra.mxu0 0.0
        %1782 = vmatprep.subr.mxu0 0.0
        %1783 = vmatpush1.msra.mxu0 0.0
        %1784 = vmatprep.subr.mxu0 0.0
        %1785 = vmatpush1.msra.mxu0 0.0
        %1786 = vmatprep.mubr.f32.mxu0 0.0
        %1787 = vmatmul.mubr.f32.gmra.mrb[0].mxu0 %v996
        %v1788 = vpop.f32.mrb[0].mxu0
        %v1789 = vadd.f32 0.0, %v1788
        %v1790 = vpop.f32.mrb[0].mxu0
        %1791 = vdwg.mxu0
        %s1792 = scalar_lea.vmem [#allocation7], 1024
        %v1793 = vld [vmem:[%s1792] sm:$0xff]
        %v1794 = vld [vmem:[%s1792 + $0x8] sm:$0xff]
        %v1795 = vld [vmem:[%s1792 + $0x10] sm:$0xff]
        %v1796 = vld [vmem:[%s1792 + $0x18] sm:$0xff]
        %v1797 = vld [vmem:[%s1792 + $0x20] sm:$0xff]
        %v1798 = vld [vmem:[%s1792 + $0x28] sm:$0xff]
        %v1799 = vld [vmem:[%s1792 + $0x30] sm:$0xff]
        %v1800 = vld [vmem:[%s1792 + $0x38] sm:$0xff]
        %v1801 = vld [vmem:[%s1792 + $0x40] sm:$0xff]
        %v1802 = vld [vmem:[%s1792 + $0x48] sm:$0xff]
        %v1803 = vld [vmem:[%s1792 + $0x50] sm:$0xff]
        %v1804 = vld [vmem:[%s1792 + $0x58] sm:$0xff]
        %v1805 = vld [vmem:[%s1792 + $0x60] sm:$0xff]
        %v1806 = vld [vmem:[%s1792 + $0x68] sm:$0xff]
        %v1807 = vld [vmem:[%s1792 + $0x70] sm:$0xff]
        %v1808 = vld [vmem:[%s1792 + $0x78] sm:$0xff]
        %1809 = vmatprep.subr.mxu0 0.0
        %1810 = vmatpush1.msra.mxu0 %v1793
        %1811 = vmatprep.subr.mxu0 0.0
        %1812 = vmatpush1.msra.mxu0 %v1794
        %1813 = vmatprep.subr.mxu0 0.0
        %1814 = vmatpush1.msra.mxu0 %v1795
        %1815 = vmatprep.subr.mxu0 0.0
        %1816 = vmatpush1.msra.mxu0 %v1796
        %1817 = vmatprep.subr.mxu0 0.0
        %1818 = vmatpush1.msra.mxu0 %v1797
        %1819 = vmatprep.subr.mxu0 0.0
        %1820 = vmatpush1.msra.mxu0 %v1798
        %1821 = vmatprep.subr.mxu0 0.0
        %1822 = vmatpush1.msra.mxu0 %v1799
        %1823 = vmatprep.subr.mxu0 0.0
        %1824 = vmatpush1.msra.mxu0 %v1800
        %1825 = vmatprep.subr.mxu0 0.0
        %1826 = vmatpush1.msra.mxu0 %v1801
        %1827 = vmatprep.subr.mxu0 0.0
        %1828 = vmatpush1.msra.mxu0 %v1802
        %1829 = vmatprep.subr.mxu0 0.0
        %1830 = vmatpush1.msra.mxu0 %v1803
        %1831 = vmatprep.subr.mxu0 0.0
        %1832 = vmatpush1.msra.mxu0 %v1804
        %1833 = vmatprep.subr.mxu0 0.0
        %1834 = vmatpush1.msra.mxu0 %v1805
        %1835 = vmatprep.subr.mxu0 0.0
        %1836 = vmatpush1.msra.mxu0 %v1806
        %1837 = vmatprep.subr.mxu0 0.0
        %1838 = vmatpush1.msra.mxu0 %v1807
        %1839 = vmatprep.subr.mxu0 0.0
        %1840 = vmatpush1.msra.mxu0 %v1808
        %1841 = vmatprep.subr.mxu0 0.0
        %1842 = vmatpush1.msra.mxu0 0.0
        %1843 = vmatprep.subr.mxu0 0.0
        %1844 = vmatpush1.msra.mxu0 0.0
        %1845 = vmatprep.subr.mxu0 0.0
        %1846 = vmatpush1.msra.mxu0 0.0
        %1847 = vmatprep.subr.mxu0 0.0
        %1848 = vmatpush1.msra.mxu0 0.0
        %1849 = vmatprep.subr.mxu0 0.0
        %1850 = vmatpush1.msra.mxu0 0.0
        %1851 = vmatprep.subr.mxu0 0.0
        %1852 = vmatpush1.msra.mxu0 0.0
        %1853 = vmatprep.subr.mxu0 0.0
        %1854 = vmatpush1.msra.mxu0 0.0
        %1855 = vmatprep.subr.mxu0 0.0
        %1856 = vmatpush1.msra.mxu0 0.0
        %1857 = vmatprep.subr.mxu0 0.0
        %1858 = vmatpush1.msra.mxu0 0.0
        %1859 = vmatprep.subr.mxu0 0.0
        %1860 = vmatpush1.msra.mxu0 0.0
        %1861 = vmatprep.subr.mxu0 0.0
        %1862 = vmatpush1.msra.mxu0 0.0
        %1863 = vmatprep.subr.mxu0 0.0
        %1864 = vmatpush1.msra.mxu0 0.0
        %1865 = vmatprep.subr.mxu0 0.0
        %1866 = vmatpush1.msra.mxu0 0.0
        %1867 = vmatprep.subr.mxu0 0.0
        %1868 = vmatpush1.msra.mxu0 0.0
        %1869 = vmatprep.subr.mxu0 0.0
        %1870 = vmatpush1.msra.mxu0 0.0
        %1871 = vmatprep.subr.mxu0 0.0
        %1872 = vmatpush1.msra.mxu0 0.0
        %1873 = vmatprep.mubr.f32.mxu0 0.0
        %1874 = vmatmul.mubr.f32.gmra.mrb[0].mxu0 %v1789
        %v1875 = vpop.f32.mrb[0].mxu0
        %v1876 = vadd.f32 0.0, %v1875
        %v1877 = vpop.f32.mrb[0].mxu0
        %1878 = vdwg.mxu0
        %v1879 = vadd.f32 %v1721, %v1876
        %1880 = vmatprep.subr.mxu0 0.0
        %1881 = vmatpush1.msra.mxu0 %v1319
        %1882 = vmatprep.subr.mxu0 0.0
        %1883 = vmatpush1.msra.mxu0 0.0
        %1884 = vmatprep.subr.mxu0 0.0
        %1885 = vmatpush1.msra.mxu0 0.0
        %1886 = vmatprep.subr.mxu0 0.0
        %1887 = vmatpush1.msra.mxu0 0.0
        %1888 = vmatprep.subr.mxu0 0.0
        %1889 = vmatpush1.msra.mxu0 0.0
        %1890 = vmatprep.subr.mxu0 0.0
        %1891 = vmatpush1.msra.mxu0 0.0
        %1892 = vmatprep.subr.mxu0 0.0
        %1893 = vmatpush1.msra.mxu0 0.0
        %1894 = vmatprep.subr.mxu0 0.0
        %1895 = vmatpush1.msra.mxu0 0.0
        %1896 = vmatprep.subr.mxu0 0.0
        %1897 = vmatpush1.msra.mxu0 0.0
        %1898 = vmatprep.subr.mxu0 0.0
        %1899 = vmatpush1.msra.mxu0 0.0
        %1900 = vmatprep.subr.mxu0 0.0
        %1901 = vmatpush1.msra.mxu0 0.0
        %1902 = vmatprep.subr.mxu0 0.0
        %1903 = vmatpush1.msra.mxu0 0.0
        %1904 = vmatprep.subr.mxu0 0.0
        %1905 = vmatpush1.msra.mxu0 0.0
        %1906 = vmatprep.subr.mxu0 0.0
        %1907 = vmatpush1.msra.mxu0 0.0
        %1908 = vmatprep.subr.mxu0 0.0
        %1909 = vmatpush1.msra.mxu0 0.0
        %1910 = vmatprep.subr.mxu0 0.0
        %1911 = vmatpush1.msra.mxu0 0.0
        %1912 = vmatprep.subr.mxu0 0.0
        %1913 = vmatpush1.msra.mxu0 0.0
        %1914 = vmatprep.subr.mxu0 0.0
        %1915 = vmatpush1.msra.mxu0 0.0
        %1916 = vmatprep.subr.mxu0 0.0
        %1917 = vmatpush1.msra.mxu0 0.0
        %1918 = vmatprep.subr.mxu0 0.0
        %1919 = vmatpush1.msra.mxu0 0.0
        %1920 = vmatprep.subr.mxu0 0.0
        %1921 = vmatpush1.msra.mxu0 0.0
        %1922 = vmatprep.subr.mxu0 0.0
        %1923 = vmatpush1.msra.mxu0 0.0
        %1924 = vmatprep.subr.mxu0 0.0
        %1925 = vmatpush1.msra.mxu0 0.0
        %1926 = vmatprep.subr.mxu0 0.0
        %1927 = vmatpush1.msra.mxu0 0.0
        %1928 = vmatprep.subr.mxu0 0.0
        %1929 = vmatpush1.msra.mxu0 0.0
        %1930 = vmatprep.subr.mxu0 0.0
        %1931 = vmatpush1.msra.mxu0 0.0
        %1932 = vmatprep.subr.mxu0 0.0
        %1933 = vmatpush1.msra.mxu0 0.0
        %1934 = vmatprep.subr.mxu0 0.0
        %1935 = vmatpush1.msra.mxu0 0.0
        %1936 = vmatprep.subr.mxu0 0.0
        %1937 = vmatpush1.msra.mxu0 0.0
        %1938 = vmatprep.subr.mxu0 0.0
        %1939 = vmatpush1.msra.mxu0 0.0
        %1940 = vmatprep.subr.mxu0 0.0
        %1941 = vmatpush1.msra.mxu0 0.0
        %1942 = vmatprep.subr.mxu0 0.0
        %1943 = vmatpush1.msra.mxu0 0.0
        %1944 = vmatprep.mubr.f32.mxu0 0.0
        %1945 = vmatmul.mubr.f32.gmra.mrb[0].mxu0 %v1159
        %v1946 = vpop.f32.mrb[0].mxu0
        %v1947 = vadd.f32 0.0, %v1946
        %v1948 = vpop.f32.mrb[0].mxu0
        %1949 = vdwg.mxu0
        %s1950 = scalar_lea.vmem [#allocation7], 1152
        %v1951 = vld [vmem:[%s1950] sm:$0xff]
        %v1952 = vld [vmem:[%s1950 + $0x8] sm:$0xff]
        %v1953 = vld [vmem:[%s1950 + $0x10] sm:$0xff]
        %v1954 = vld [vmem:[%s1950 + $0x18] sm:$0xff]
        %v1955 = vld [vmem:[%s1950 + $0x20] sm:$0xff]
        %v1956 = vld [vmem:[%s1950 + $0x28] sm:$0xff]
        %v1957 = vld [vmem:[%s1950 + $0x30] sm:$0xff]
        %v1958 = vld [vmem:[%s1950 + $0x38] sm:$0xff]
        %v1959 = vld [vmem:[%s1950 + $0x40] sm:$0xff]
        %v1960 = vld [vmem:[%s1950 + $0x48] sm:$0xff]
        %v1961 = vld [vmem:[%s1950 + $0x50] sm:$0xff]
        %v1962 = vld [vmem:[%s1950 + $0x58] sm:$0xff]
        %v1963 = vld [vmem:[%s1950 + $0x60] sm:$0xff]
        %v1964 = vld [vmem:[%s1950 + $0x68] sm:$0xff]
        %v1965 = vld [vmem:[%s1950 + $0x70] sm:$0xff]
        %v1966 = vld [vmem:[%s1950 + $0x78] sm:$0xff]
        %1967 = vmatprep.subr.mxu0 0.0
        %1968 = vmatpush1.msra.mxu0 %v1951
        %1969 = vmatprep.subr.mxu0 0.0
        %1970 = vmatpush1.msra.mxu0 %v1952
        %1971 = vmatprep.subr.mxu0 0.0
        %1972 = vmatpush1.msra.mxu0 %v1953
        %1973 = vmatprep.subr.mxu0 0.0
        %1974 = vmatpush1.msra.mxu0 %v1954
        %1975 = vmatprep.subr.mxu0 0.0
        %1976 = vmatpush1.msra.mxu0 %v1955
        %1977 = vmatprep.subr.mxu0 0.0
        %1978 = vmatpush1.msra.mxu0 %v1956
        %1979 = vmatprep.subr.mxu0 0.0
        %1980 = vmatpush1.msra.mxu0 %v1957
        %1981 = vmatprep.subr.mxu0 0.0
        %1982 = vmatpush1.msra.mxu0 %v1958
        %1983 = vmatprep.subr.mxu0 0.0
        %1984 = vmatpush1.msra.mxu0 %v1959
        %1985 = vmatprep.subr.mxu0 0.0
        %1986 = vmatpush1.msra.mxu0 %v1960
        %1987 = vmatprep.subr.mxu0 0.0
        %1988 = vmatpush1.msra.mxu0 %v1961
        %1989 = vmatprep.subr.mxu0 0.0
        %1990 = vmatpush1.msra.mxu0 %v1962
        %1991 = vmatprep.subr.mxu0 0.0
        %1992 = vmatpush1.msra.mxu0 %v1963
        %1993 = vmatprep.subr.mxu0 0.0
        %1994 = vmatpush1.msra.mxu0 %v1964
        %1995 = vmatprep.subr.mxu0 0.0
        %1996 = vmatpush1.msra.mxu0 %v1965
        %1997 = vmatprep.subr.mxu0 0.0
        %1998 = vmatpush1.msra.mxu0 %v1966
        %1999 = vmatprep.subr.mxu0 0.0
        %2000 = vmatpush1.msra.mxu0 0.0
        %2001 = vmatprep.subr.mxu0 0.0
        %2002 = vmatpush1.msra.mxu0 0.0
        %2003 = vmatprep.subr.mxu0 0.0
        %2004 = vmatpush1.msra.mxu0 0.0
        %2005 = vmatprep.subr.mxu0 0.0
        %2006 = vmatpush1.msra.mxu0 0.0
        %2007 = vmatprep.subr.mxu0 0.0
        %2008 = vmatpush1.msra.mxu0 0.0
        %2009 = vmatprep.subr.mxu0 0.0
        %2010 = vmatpush1.msra.mxu0 0.0
        %2011 = vmatprep.subr.mxu0 0.0
        %2012 = vmatpush1.msra.mxu0 0.0
        %2013 = vmatprep.subr.mxu0 0.0
        %2014 = vmatpush1.msra.mxu0 0.0
        %2015 = vmatprep.subr.mxu0 0.0
        %2016 = vmatpush1.msra.mxu0 0.0
        %2017 = vmatprep.subr.mxu0 0.0
        %2018 = vmatpush1.msra.mxu0 0.0
        %2019 = vmatprep.subr.mxu0 0.0
        %2020 = vmatpush1.msra.mxu0 0.0
        %2021 = vmatprep.subr.mxu0 0.0
        %2022 = vmatpush1.msra.mxu0 0.0
        %2023 = vmatprep.subr.mxu0 0.0
        %2024 = vmatpush1.msra.mxu0 0.0
        %2025 = vmatprep.subr.mxu0 0.0
        %2026 = vmatpush1.msra.mxu0 0.0
        %2027 = vmatprep.subr.mxu0 0.0
        %2028 = vmatpush1.msra.mxu0 0.0
        %2029 = vmatprep.subr.mxu0 0.0
        %2030 = vmatpush1.msra.mxu0 0.0
        %2031 = vmatprep.mubr.f32.mxu0 0.0
        %2032 = vmatmul.mubr.f32.gmra.mrb[0].mxu0 %v1947
        %v2033 = vpop.f32.mrb[0].mxu0
        %v2034 = vadd.f32 0.0, %v2033
        %v2035 = vpop.f32.mrb[0].mxu0
        %2036 = vdwg.mxu0
        %v2037 = vadd.f32 %v1879, %v2034
        %v2038 = vmax.f32 %v577, 0.0
        %2039 = vmatprep.subr.mxu0 0.0
        %2040 = vmatpush1.msra.mxu0 %v2038
        %2041 = vmatprep.subr.mxu0 0.0
        %2042 = vmatpush1.msra.mxu0 0.0
        %2043 = vmatprep.subr.mxu0 0.0
        %2044 = vmatpush1.msra.mxu0 0.0
        %2045 = vmatprep.subr.mxu0 0.0
        %2046 = vmatpush1.msra.mxu0 0.0
        %2047 = vmatprep.subr.mxu0 0.0
        %2048 = vmatpush1.msra.mxu0 0.0
        %2049 = vmatprep.subr.mxu0 0.0
        %2050 = vmatpush1.msra.mxu0 0.0
        %2051 = vmatprep.subr.mxu0 0.0
        %2052 = vmatpush1.msra.mxu0 0.0
        %2053 = vmatprep.subr.mxu0 0.0
        %2054 = vmatpush1.msra.mxu0 0.0
        %2055 = vmatprep.subr.mxu0 0.0
        %2056 = vmatpush1.msra.mxu0 0.0
        %2057 = vmatprep.subr.mxu0 0.0
        %2058 = vmatpush1.msra.mxu0 0.0
        %2059 = vmatprep.subr.mxu0 0.0
        %2060 = vmatpush1.msra.mxu0 0.0
        %2061 = vmatprep.subr.mxu0 0.0
        %2062 = vmatpush1.msra.mxu0 0.0
        %2063 = vmatprep.subr.mxu0 0.0
        %2064 = vmatpush1.msra.mxu0 0.0
        %2065 = vmatprep.subr.mxu0 0.0
        %2066 = vmatpush1.msra.mxu0 0.0
        %2067 = vmatprep.subr.mxu0 0.0
        %2068 = vmatpush1.msra.mxu0 0.0
        %2069 = vmatprep.subr.mxu0 0.0
        %2070 = vmatpush1.msra.mxu0 0.0
        %2071 = vmatprep.subr.mxu0 0.0
        %2072 = vmatpush1.msra.mxu0 0.0
        %2073 = vmatprep.subr.mxu0 0.0
        %2074 = vmatpush1.msra.mxu0 0.0
        %2075 = vmatprep.subr.mxu0 0.0
        %2076 = vmatpush1.msra.mxu0 0.0
        %2077 = vmatprep.subr.mxu0 0.0
        %2078 = vmatpush1.msra.mxu0 0.0
        %2079 = vmatprep.subr.mxu0 0.0
        %2080 = vmatpush1.msra.mxu0 0.0
        %2081 = vmatprep.subr.mxu0 0.0
        %2082 = vmatpush1.msra.mxu0 0.0
        %2083 = vmatprep.subr.mxu0 0.0
        %2084 = vmatpush1.msra.mxu0 0.0
        %2085 = vmatprep.subr.mxu0 0.0
        %2086 = vmatpush1.msra.mxu0 0.0
        %2087 = vmatprep.subr.mxu0 0.0
        %2088 = vmatpush1.msra.mxu0 0.0
        %2089 = vmatprep.subr.mxu0 0.0
        %2090 = vmatpush1.msra.mxu0 0.0
        %2091 = vmatprep.subr.mxu0 0.0
        %2092 = vmatpush1.msra.mxu0 0.0
        %2093 = vmatprep.subr.mxu0 0.0
        %2094 = vmatpush1.msra.mxu0 0.0
        %2095 = vmatprep.subr.mxu0 0.0
        %2096 = vmatpush1.msra.mxu0 0.0
        %2097 = vmatprep.subr.mxu0 0.0
        %2098 = vmatpush1.msra.mxu0 0.0
        %2099 = vmatprep.subr.mxu0 0.0
        %2100 = vmatpush1.msra.mxu0 0.0
        %2101 = vmatprep.subr.mxu0 0.0
        %2102 = vmatpush1.msra.mxu0 0.0
        %2103 = vmatprep.mubr.f32.mxu0 0.0
        %2104 = vmatmul.mubr.f32.gmra.mrb[0].mxu0 %v676
        %v2105 = vpop.f32.mrb[0].mxu0
        %v2106 = vadd.f32 0.0, %v2105
        %v2107 = vpop.f32.mrb[0].mxu0
        %2108 = vdwg.mxu0
        %s2109 = scalar_lea.vmem [#allocation7], 1280
        %v2110 = vld [vmem:[%s2109] sm:$0xff]
        %v2111 = vld [vmem:[%s2109 + $0x8] sm:$0xff]
        %v2112 = vld [vmem:[%s2109 + $0x10] sm:$0xff]
        %v2113 = vld [vmem:[%s2109 + $0x18] sm:$0xff]
        %v2114 = vld [vmem:[%s2109 + $0x20] sm:$0xff]
        %v2115 = vld [vmem:[%s2109 + $0x28] sm:$0xff]
        %v2116 = vld [vmem:[%s2109 + $0x30] sm:$0xff]
        %v2117 = vld [vmem:[%s2109 + $0x38] sm:$0xff]
        %v2118 = vld [vmem:[%s2109 + $0x40] sm:$0xff]
        %v2119 = vld [vmem:[%s2109 + $0x48] sm:$0xff]
        %v2120 = vld [vmem:[%s2109 + $0x50] sm:$0xff]
        %v2121 = vld [vmem:[%s2109 + $0x58] sm:$0xff]
        %v2122 = vld [vmem:[%s2109 + $0x60] sm:$0xff]
        %v2123 = vld [vmem:[%s2109 + $0x68] sm:$0xff]
        %v2124 = vld [vmem:[%s2109 + $0x70] sm:$0xff]
        %v2125 = vld [vmem:[%s2109 + $0x78] sm:$0xff]
        %s2126 = scalar_lea.vmem [#allocation7], 1408
        %v2127 = vld [vmem:[%s2126] sm:$0xff]
        %v2128 = vld [vmem:[%s2126 + $0x8] sm:$0xff]
        %v2129 = vld [vmem:[%s2126 + $0x10] sm:$0xff]
        %v2130 = vld [vmem:[%s2126 + $0x18] sm:$0xff]
        %v2131 = vld [vmem:[%s2126 + $0x20] sm:$0xff]
        %v2132 = vld [vmem:[%s2126 + $0x28] sm:$0xff]
        %v2133 = vld [vmem:[%s2126 + $0x30] sm:$0xff]
        %v2134 = vld [vmem:[%s2126 + $0x38] sm:$0xff]
        %v2135 = vld [vmem:[%s2126 + $0x40] sm:$0xff]
        %v2136 = vld [vmem:[%s2126 + $0x48] sm:$0xff]
        %v2137 = vld [vmem:[%s2126 + $0x50] sm:$0xff]
        %v2138 = vld [vmem:[%s2126 + $0x58] sm:$0xff]
        %v2139 = vld [vmem:[%s2126 + $0x60] sm:$0xff]
        %v2140 = vld [vmem:[%s2126 + $0x68] sm:$0xff]
        %v2141 = vld [vmem:[%s2126 + $0x70] sm:$0xff]
        %v2142 = vld [vmem:[%s2126 + $0x78] sm:$0xff]
        %2143 = vmatprep.subr.mxu0 0.0
        %2144 = vmatpush1.msra.mxu0 %v2127
        %2145 = vmatprep.subr.mxu0 0.0
        %2146 = vmatpush1.msra.mxu0 %v2128
        %2147 = vmatprep.subr.mxu0 0.0
        %2148 = vmatpush1.msra.mxu0 %v2129
        %2149 = vmatprep.subr.mxu0 0.0
        %2150 = vmatpush1.msra.mxu0 %v2130
        %2151 = vmatprep.subr.mxu0 0.0
        %2152 = vmatpush1.msra.mxu0 %v2131
        %2153 = vmatprep.subr.mxu0 0.0
        %2154 = vmatpush1.msra.mxu0 %v2132
        %2155 = vmatprep.subr.mxu0 0.0
        %2156 = vmatpush1.msra.mxu0 %v2133
        %2157 = vmatprep.subr.mxu0 0.0
        %2158 = vmatpush1.msra.mxu0 %v2134
        %2159 = vmatprep.subr.mxu0 0.0
        %2160 = vmatpush1.msra.mxu0 %v2135
        %2161 = vmatprep.subr.mxu0 0.0
        %2162 = vmatpush1.msra.mxu0 %v2136
        %2163 = vmatprep.subr.mxu0 0.0
        %2164 = vmatpush1.msra.mxu0 %v2137
        %2165 = vmatprep.subr.mxu0 0.0
        %2166 = vmatpush1.msra.mxu0 %v2138
        %2167 = vmatprep.subr.mxu0 0.0
        %2168 = vmatpush1.msra.mxu0 %v2139
        %2169 = vmatprep.subr.mxu0 0.0
        %2170 = vmatpush1.msra.mxu0 %v2140
        %2171 = vmatprep.subr.mxu0 0.0
        %2172 = vmatpush1.msra.mxu0 %v2141
        %2173 = vmatprep.subr.mxu0 0.0
        %2174 = vmatpush1.msra.mxu0 %v2142
        %2175 = vmatprep.subr.mxu0 0.0
        %2176 = vmatpush1.msra.mxu0 0.0
        %2177 = vmatprep.subr.mxu0 0.0
        %2178 = vmatpush1.msra.mxu0 0.0
        %2179 = vmatprep.subr.mxu0 0.0
        %2180 = vmatpush1.msra.mxu0 0.0
        %2181 = vmatprep.subr.mxu0 0.0
        %2182 = vmatpush1.msra.mxu0 0.0
        %2183 = vmatprep.subr.mxu0 0.0
        %2184 = vmatpush1.msra.mxu0 0.0
        %2185 = vmatprep.subr.mxu0 0.0
        %2186 = vmatpush1.msra.mxu0 0.0
        %2187 = vmatprep.subr.mxu0 0.0
        %2188 = vmatpush1.msra.mxu0 0.0
        %2189 = vmatprep.subr.mxu0 0.0
        %2190 = vmatpush1.msra.mxu0 0.0
        %2191 = vmatprep.subr.mxu0 0.0
        %2192 = vmatpush1.msra.mxu0 0.0
        %2193 = vmatprep.subr.mxu0 0.0
        %2194 = vmatpush1.msra.mxu0 0.0
        %2195 = vmatprep.subr.mxu0 0.0
        %2196 = vmatpush1.msra.mxu0 0.0
        %2197 = vmatprep.subr.mxu0 0.0
        %2198 = vmatpush1.msra.mxu0 0.0
        %2199 = vmatprep.subr.mxu0 0.0
        %2200 = vmatpush1.msra.mxu0 0.0
        %2201 = vmatprep.subr.mxu0 0.0
        %2202 = vmatpush1.msra.mxu0 0.0
        %2203 = vmatprep.subr.mxu0 0.0
        %2204 = vmatpush1.msra.mxu0 0.0
        %2205 = vmatprep.subr.mxu0 0.0
        %2206 = vmatpush1.msra.mxu0 0.0
        %2207 = vmatprep.mubr.f32.mxu0 0.0
        %2208 = vmatmul.mubr.f32.gmra.mrb[0].mxu0 %v2038
        %v2209 = vpop.f32.mrb[0].mxu0
        %v2210 = vadd.f32 0.0, %v2209
        %v2211 = vpop.f32.mrb[0].mxu0
        %2212 = vdwg.mxu0
        %2213 = vmatprep.subr.mxu0 0.0
        %2214 = vmatpush1.msra.mxu0 %v2110
        %2215 = vmatprep.subr.mxu0 0.0
        %2216 = vmatpush1.msra.mxu0 %v2111
        %2217 = vmatprep.subr.mxu0 0.0
        %2218 = vmatpush1.msra.mxu0 %v2112
        %2219 = vmatprep.subr.mxu0 0.0
        %2220 = vmatpush1.msra.mxu0 %v2113
        %2221 = vmatprep.subr.mxu0 0.0
        %2222 = vmatpush1.msra.mxu0 %v2114
        %2223 = vmatprep.subr.mxu0 0.0
        %2224 = vmatpush1.msra.mxu0 %v2115
        %2225 = vmatprep.subr.mxu0 0.0
        %2226 = vmatpush1.msra.mxu0 %v2116
        %2227 = vmatprep.subr.mxu0 0.0
        %2228 = vmatpush1.msra.mxu0 %v2117
        %2229 = vmatprep.subr.mxu0 0.0
        %2230 = vmatpush1.msra.mxu0 %v2118
        %2231 = vmatprep.subr.mxu0 0.0
        %2232 = vmatpush1.msra.mxu0 %v2119
        %2233 = vmatprep.subr.mxu0 0.0
        %2234 = vmatpush1.msra.mxu0 %v2120
        %2235 = vmatprep.subr.mxu0 0.0
        %2236 = vmatpush1.msra.mxu0 %v2121
        %2237 = vmatprep.subr.mxu0 0.0
        %2238 = vmatpush1.msra.mxu0 %v2122
        %2239 = vmatprep.subr.mxu0 0.0
        %2240 = vmatpush1.msra.mxu0 %v2123
        %2241 = vmatprep.subr.mxu0 0.0
        %2242 = vmatpush1.msra.mxu0 %v2124
        %2243 = vmatprep.subr.mxu0 0.0
        %2244 = vmatpush1.msra.mxu0 %v2125
        %2245 = vmatprep.subr.mxu0 0.0
        %2246 = vmatpush1.msra.mxu0 0.0
        %2247 = vmatprep.subr.mxu0 0.0
        %2248 = vmatpush1.msra.mxu0 0.0
        %2249 = vmatprep.subr.mxu0 0.0
        %2250 = vmatpush1.msra.mxu0 0.0
        %2251 = vmatprep.subr.mxu0 0.0
        %2252 = vmatpush1.msra.mxu0 0.0
        %2253 = vmatprep.subr.mxu0 0.0
        %2254 = vmatpush1.msra.mxu0 0.0
        %2255 = vmatprep.subr.mxu0 0.0
        %2256 = vmatpush1.msra.mxu0 0.0
        %2257 = vmatprep.subr.mxu0 0.0
        %2258 = vmatpush1.msra.mxu0 0.0
        %2259 = vmatprep.subr.mxu0 0.0
        %2260 = vmatpush1.msra.mxu0 0.0
        %2261 = vmatprep.subr.mxu0 0.0
        %2262 = vmatpush1.msra.mxu0 0.0
        %2263 = vmatprep.subr.mxu0 0.0
        %2264 = vmatpush1.msra.mxu0 0.0
        %2265 = vmatprep.subr.mxu0 0.0
        %2266 = vmatpush1.msra.mxu0 0.0
        %2267 = vmatprep.subr.mxu0 0.0
        %2268 = vmatpush1.msra.mxu0 0.0
        %2269 = vmatprep.subr.mxu0 0.0
        %2270 = vmatpush1.msra.mxu0 0.0
        %2271 = vmatprep.subr.mxu0 0.0
        %2272 = vmatpush1.msra.mxu0 0.0
        %2273 = vmatprep.subr.mxu0 0.0
        %2274 = vmatpush1.msra.mxu0 0.0
        %2275 = vmatprep.subr.mxu0 0.0
        %2276 = vmatpush1.msra.mxu0 0.0
        %2277 = vmatprep.mubr.f32.mxu0 0.0
        %2278 = vmatmul.mubr.f32.gmra.mrb[0].mxu0 %v2106
        %v2279 = vpop.f32.mrb[0].mxu0
        %v2280 = vadd.f32 %v2210, %v2279
        %v2281 = vpop.f32.mrb[0].mxu0
        %2282 = vdwg.mxu0
        %2283 = vmatprep.subr.mxu0 0.0
        %2284 = vmatpush1.msra.mxu0 %v2038
        %2285 = vmatprep.subr.mxu0 0.0
        %2286 = vmatpush1.msra.mxu0 0.0
        %2287 = vmatprep.subr.mxu0 0.0
        %2288 = vmatpush1.msra.mxu0 0.0
        %2289 = vmatprep.subr.mxu0 0.0
        %2290 = vmatpush1.msra.mxu0 0.0
        %2291 = vmatprep.subr.mxu0 0.0
        %2292 = vmatpush1.msra.mxu0 0.0
        %2293 = vmatprep.subr.mxu0 0.0
        %2294 = vmatpush1.msra.mxu0 0.0
        %2295 = vmatprep.subr.mxu0 0.0
        %2296 = vmatpush1.msra.mxu0 0.0
        %2297 = vmatprep.subr.mxu0 0.0
        %2298 = vmatpush1.msra.mxu0 0.0
        %2299 = vmatprep.subr.mxu0 0.0
        %2300 = vmatpush1.msra.mxu0 0.0
        %2301 = vmatprep.subr.mxu0 0.0
        %2302 = vmatpush1.msra.mxu0 0.0
        %2303 = vmatprep.subr.mxu0 0.0
        %2304 = vmatpush1.msra.mxu0 0.0
        %2305 = vmatprep.subr.mxu0 0.0
        %2306 = vmatpush1.msra.mxu0 0.0
        %2307 = vmatprep.subr.mxu0 0.0
        %2308 = vmatpush1.msra.mxu0 0.0
        %2309 = vmatprep.subr.mxu0 0.0
        %2310 = vmatpush1.msra.mxu0 0.0
        %2311 = vmatprep.subr.mxu0 0.0
        %2312 = vmatpush1.msra.mxu0 0.0
        %2313 = vmatprep.subr.mxu0 0.0
        %2314 = vmatpush1.msra.mxu0 0.0
        %2315 = vmatprep.subr.mxu0 0.0
        %2316 = vmatpush1.msra.mxu0 0.0
        %2317 = vmatprep.subr.mxu0 0.0
        %2318 = vmatpush1.msra.mxu0 0.0
        %2319 = vmatprep.subr.mxu0 0.0
        %2320 = vmatpush1.msra.mxu0 0.0
        %2321 = vmatprep.subr.mxu0 0.0
        %2322 = vmatpush1.msra.mxu0 0.0
        %2323 = vmatprep.subr.mxu0 0.0
        %2324 = vmatpush1.msra.mxu0 0.0
        %2325 = vmatprep.subr.mxu0 0.0
        %2326 = vmatpush1.msra.mxu0 0.0
        %2327 = vmatprep.subr.mxu0 0.0
        %2328 = vmatpush1.msra.mxu0 0.0
        %2329 = vmatprep.subr.mxu0 0.0
        %2330 = vmatpush1.msra.mxu0 0.0
        %2331 = vmatprep.subr.mxu0 0.0
        %2332 = vmatpush1.msra.mxu0 0.0
        %2333 = vmatprep.subr.mxu0 0.0
        %2334 = vmatpush1.msra.mxu0 0.0
        %2335 = vmatprep.subr.mxu0 0.0
        %2336 = vmatpush1.msra.mxu0 0.0
        %2337 = vmatprep.subr.mxu0 0.0
        %2338 = vmatpush1.msra.mxu0 0.0
        %2339 = vmatprep.subr.mxu0 0.0
        %2340 = vmatpush1.msra.mxu0 0.0
        %2341 = vmatprep.subr.mxu0 0.0
        %2342 = vmatpush1.msra.mxu0 0.0
        %2343 = vmatprep.subr.mxu0 0.0
        %2344 = vmatpush1.msra.mxu0 0.0
        %2345 = vmatprep.subr.mxu0 0.0
        %2346 = vmatpush1.msra.mxu0 0.0
        %2347 = vmatprep.mubr.f32.mxu0 0.0
        %2348 = vmatmul.mubr.f32.gmra.mrb[0].mxu0 %v996
        %v2349 = vpop.f32.mrb[0].mxu0
        %v2350 = vadd.f32 0.0, %v2349
        %v2351 = vpop.f32.mrb[0].mxu0
        %2352 = vdwg.mxu0
        %s2353 = scalar_lea.vmem [#allocation7], 1536
        %v2354 = vld [vmem:[%s2353] sm:$0xff]
        %v2355 = vld [vmem:[%s2353 + $0x8] sm:$0xff]
        %v2356 = vld [vmem:[%s2353 + $0x10] sm:$0xff]
        %v2357 = vld [vmem:[%s2353 + $0x18] sm:$0xff]
        %v2358 = vld [vmem:[%s2353 + $0x20] sm:$0xff]
        %v2359 = vld [vmem:[%s2353 + $0x28] sm:$0xff]
        %v2360 = vld [vmem:[%s2353 + $0x30] sm:$0xff]
        %v2361 = vld [vmem:[%s2353 + $0x38] sm:$0xff]
        %v2362 = vld [vmem:[%s2353 + $0x40] sm:$0xff]
        %v2363 = vld [vmem:[%s2353 + $0x48] sm:$0xff]
        %v2364 = vld [vmem:[%s2353 + $0x50] sm:$0xff]
        %v2365 = vld [vmem:[%s2353 + $0x58] sm:$0xff]
        %v2366 = vld [vmem:[%s2353 + $0x60] sm:$0xff]
        %v2367 = vld [vmem:[%s2353 + $0x68] sm:$0xff]
        %v2368 = vld [vmem:[%s2353 + $0x70] sm:$0xff]
        %v2369 = vld [vmem:[%s2353 + $0x78] sm:$0xff]
        %2370 = vmatprep.subr.mxu0 0.0
        %2371 = vmatpush1.msra.mxu0 %v2354
        %2372 = vmatprep.subr.mxu0 0.0
        %2373 = vmatpush1.msra.mxu0 %v2355
        %2374 = vmatprep.subr.mxu0 0.0
        %2375 = vmatpush1.msra.mxu0 %v2356
        %2376 = vmatprep.subr.mxu0 0.0
        %2377 = vmatpush1.msra.mxu0 %v2357
        %2378 = vmatprep.subr.mxu0 0.0
        %2379 = vmatpush1.msra.mxu0 %v2358
        %2380 = vmatprep.subr.mxu0 0.0
        %2381 = vmatpush1.msra.mxu0 %v2359
        %2382 = vmatprep.subr.mxu0 0.0
        %2383 = vmatpush1.msra.mxu0 %v2360
        %2384 = vmatprep.subr.mxu0 0.0
        %2385 = vmatpush1.msra.mxu0 %v2361
        %2386 = vmatprep.subr.mxu0 0.0
        %2387 = vmatpush1.msra.mxu0 %v2362
        %2388 = vmatprep.subr.mxu0 0.0
        %2389 = vmatpush1.msra.mxu0 %v2363
        %2390 = vmatprep.subr.mxu0 0.0
        %2391 = vmatpush1.msra.mxu0 %v2364
        %2392 = vmatprep.subr.mxu0 0.0
        %2393 = vmatpush1.msra.mxu0 %v2365
        %2394 = vmatprep.subr.mxu0 0.0
        %2395 = vmatpush1.msra.mxu0 %v2366
        %2396 = vmatprep.subr.mxu0 0.0
        %2397 = vmatpush1.msra.mxu0 %v2367
        %2398 = vmatprep.subr.mxu0 0.0
        %2399 = vmatpush1.msra.mxu0 %v2368
        %2400 = vmatprep.subr.mxu0 0.0
        %2401 = vmatpush1.msra.mxu0 %v2369
        %2402 = vmatprep.subr.mxu0 0.0
        %2403 = vmatpush1.msra.mxu0 0.0
        %2404 = vmatprep.subr.mxu0 0.0
        %2405 = vmatpush1.msra.mxu0 0.0
        %2406 = vmatprep.subr.mxu0 0.0
        %2407 = vmatpush1.msra.mxu0 0.0
        %2408 = vmatprep.subr.mxu0 0.0
        %2409 = vmatpush1.msra.mxu0 0.0
        %2410 = vmatprep.subr.mxu0 0.0
        %2411 = vmatpush1.msra.mxu0 0.0
        %2412 = vmatprep.subr.mxu0 0.0
        %2413 = vmatpush1.msra.mxu0 0.0
        %2414 = vmatprep.subr.mxu0 0.0
        %2415 = vmatpush1.msra.mxu0 0.0
        %2416 = vmatprep.subr.mxu0 0.0
        %2417 = vmatpush1.msra.mxu0 0.0
        %2418 = vmatprep.subr.mxu0 0.0
        %2419 = vmatpush1.msra.mxu0 0.0
        %2420 = vmatprep.subr.mxu0 0.0
        %2421 = vmatpush1.msra.mxu0 0.0
        %2422 = vmatprep.subr.mxu0 0.0
        %2423 = vmatpush1.msra.mxu0 0.0
        %2424 = vmatprep.subr.mxu0 0.0
        %2425 = vmatpush1.msra.mxu0 0.0
        %2426 = vmatprep.subr.mxu0 0.0
        %2427 = vmatpush1.msra.mxu0 0.0
        %2428 = vmatprep.subr.mxu0 0.0
        %2429 = vmatpush1.msra.mxu0 0.0
        %2430 = vmatprep.subr.mxu0 0.0
        %2431 = vmatpush1.msra.mxu0 0.0
        %2432 = vmatprep.subr.mxu0 0.0
        %2433 = vmatpush1.msra.mxu0 0.0
        %2434 = vmatprep.mubr.f32.mxu0 0.0
        %2435 = vmatmul.mubr.f32.gmra.mrb[0].mxu0 %v2350
        %v2436 = vpop.f32.mrb[0].mxu0
        %v2437 = vadd.f32 0.0, %v2436
        %v2438 = vpop.f32.mrb[0].mxu0
        %2439 = vdwg.mxu0
        %v2440 = vadd.f32 %v2280, %v2437
        %v2441 = vmax.f32 %v2440, 0.0
        %2442 = vmatprep.subr.mxu0 0.0
        %2443 = vmatpush1.msra.mxu0 %v2441
        %2444 = vmatprep.subr.mxu0 0.0
        %2445 = vmatpush1.msra.mxu0 0.0
        %2446 = vmatprep.subr.mxu0 0.0
        %2447 = vmatpush1.msra.mxu0 0.0
        %2448 = vmatprep.subr.mxu0 0.0
        %2449 = vmatpush1.msra.mxu0 0.0
        %2450 = vmatprep.subr.mxu0 0.0
        %2451 = vmatpush1.msra.mxu0 0.0
        %2452 = vmatprep.subr.mxu0 0.0
        %2453 = vmatpush1.msra.mxu0 0.0
        %2454 = vmatprep.subr.mxu0 0.0
        %2455 = vmatpush1.msra.mxu0 0.0
        %2456 = vmatprep.subr.mxu0 0.0
        %2457 = vmatpush1.msra.mxu0 0.0
        %2458 = vmatprep.subr.mxu0 0.0
        %2459 = vmatpush1.msra.mxu0 0.0
        %2460 = vmatprep.subr.mxu0 0.0
        %2461 = vmatpush1.msra.mxu0 0.0
        %2462 = vmatprep.subr.mxu0 0.0
        %2463 = vmatpush1.msra.mxu0 0.0
        %2464 = vmatprep.subr.mxu0 0.0
        %2465 = vmatpush1.msra.mxu0 0.0
        %2466 = vmatprep.subr.mxu0 0.0
        %2467 = vmatpush1.msra.mxu0 0.0
        %2468 = vmatprep.subr.mxu0 0.0
        %2469 = vmatpush1.msra.mxu0 0.0
        %2470 = vmatprep.subr.mxu0 0.0
        %2471 = vmatpush1.msra.mxu0 0.0
        %2472 = vmatprep.subr.mxu0 0.0
        %2473 = vmatpush1.msra.mxu0 0.0
        %2474 = vmatprep.subr.mxu0 0.0
        %2475 = vmatpush1.msra.mxu0 0.0
        %2476 = vmatprep.subr.mxu0 0.0
        %2477 = vmatpush1.msra.mxu0 0.0
        %2478 = vmatprep.subr.mxu0 0.0
        %2479 = vmatpush1.msra.mxu0 0.0
        %2480 = vmatprep.subr.mxu0 0.0
        %2481 = vmatpush1.msra.mxu0 0.0
        %2482 = vmatprep.subr.mxu0 0.0
        %2483 = vmatpush1.msra.mxu0 0.0
        %2484 = vmatprep.subr.mxu0 0.0
        %2485 = vmatpush1.msra.mxu0 0.0
        %2486 = vmatprep.subr.mxu0 0.0
        %2487 = vmatpush1.msra.mxu0 0.0
        %2488 = vmatprep.subr.mxu0 0.0
        %2489 = vmatpush1.msra.mxu0 0.0
        %2490 = vmatprep.subr.mxu0 0.0
        %2491 = vmatpush1.msra.mxu0 0.0
        %2492 = vmatprep.subr.mxu0 0.0
        %2493 = vmatpush1.msra.mxu0 0.0
        %2494 = vmatprep.subr.mxu0 0.0
        %2495 = vmatpush1.msra.mxu0 0.0
        %2496 = vmatprep.subr.mxu0 0.0
        %2497 = vmatpush1.msra.mxu0 0.0
        %2498 = vmatprep.subr.mxu0 0.0
        %2499 = vmatpush1.msra.mxu0 0.0
        %2500 = vmatprep.subr.mxu0 0.0
        %2501 = vmatpush1.msra.mxu0 0.0
        %2502 = vmatprep.subr.mxu0 0.0
        %2503 = vmatpush1.msra.mxu0 0.0
        %2504 = vmatprep.subr.mxu0 0.0
        %2505 = vmatpush1.msra.mxu0 0.0
        %2506 = vmatprep.mubr.f32.mxu0 0.0
        %2507 = vmatmul.mubr.f32.gmra.mrb[0].mxu0 %v676
        %v2508 = vpop.f32.mrb[0].mxu0
        %v2509 = vadd.f32 0.0, %v2508
        %v2510 = vpop.f32.mrb[0].mxu0
        %2511 = vdwg.mxu0
        %s2512 = scalar_lea.vmem [#allocation7], 1664
        %v2513 = vld [vmem:[%s2512] sm:$0xff]
        %v2514 = vld [vmem:[%s2512 + $0x8] sm:$0xff]
        %v2515 = vld [vmem:[%s2512 + $0x10] sm:$0xff]
        %v2516 = vld [vmem:[%s2512 + $0x18] sm:$0xff]
        %v2517 = vld [vmem:[%s2512 + $0x20] sm:$0xff]
        %v2518 = vld [vmem:[%s2512 + $0x28] sm:$0xff]
        %v2519 = vld [vmem:[%s2512 + $0x30] sm:$0xff]
        %v2520 = vld [vmem:[%s2512 + $0x38] sm:$0xff]
        %v2521 = vld [vmem:[%s2512 + $0x40] sm:$0xff]
        %v2522 = vld [vmem:[%s2512 + $0x48] sm:$0xff]
        %v2523 = vld [vmem:[%s2512 + $0x50] sm:$0xff]
        %v2524 = vld [vmem:[%s2512 + $0x58] sm:$0xff]
        %v2525 = vld [vmem:[%s2512 + $0x60] sm:$0xff]
        %v2526 = vld [vmem:[%s2512 + $0x68] sm:$0xff]
        %v2527 = vld [vmem:[%s2512 + $0x70] sm:$0xff]
        %v2528 = vld [vmem:[%s2512 + $0x78] sm:$0xff]
        %s2529 = scalar_lea.vmem [#allocation7], 1792
        %v2530 = vld [vmem:[%s2529] sm:$0xff]
        %v2531 = vld [vmem:[%s2529 + $0x8] sm:$0xff]
        %v2532 = vld [vmem:[%s2529 + $0x10] sm:$0xff]
        %v2533 = vld [vmem:[%s2529 + $0x18] sm:$0xff]
        %v2534 = vld [vmem:[%s2529 + $0x20] sm:$0xff]
        %v2535 = vld [vmem:[%s2529 + $0x28] sm:$0xff]
        %v2536 = vld [vmem:[%s2529 + $0x30] sm:$0xff]
        %v2537 = vld [vmem:[%s2529 + $0x38] sm:$0xff]
        %v2538 = vld [vmem:[%s2529 + $0x40] sm:$0xff]
        %v2539 = vld [vmem:[%s2529 + $0x48] sm:$0xff]
        %v2540 = vld [vmem:[%s2529 + $0x50] sm:$0xff]
        %v2541 = vld [vmem:[%s2529 + $0x58] sm:$0xff]
        %v2542 = vld [vmem:[%s2529 + $0x60] sm:$0xff]
        %v2543 = vld [vmem:[%s2529 + $0x68] sm:$0xff]
        %v2544 = vld [vmem:[%s2529 + $0x70] sm:$0xff]
        %v2545 = vld [vmem:[%s2529 + $0x78] sm:$0xff]
        %2546 = vmatprep.subr.mxu0 0.0
        %2547 = vmatpush1.msra.mxu0 %v2530
        %2548 = vmatprep.subr.mxu0 0.0
        %2549 = vmatpush1.msra.mxu0 %v2531
        %2550 = vmatprep.subr.mxu0 0.0
        %2551 = vmatpush1.msra.mxu0 %v2532
        %2552 = vmatprep.subr.mxu0 0.0
        %2553 = vmatpush1.msra.mxu0 %v2533
        %2554 = vmatprep.subr.mxu0 0.0
        %2555 = vmatpush1.msra.mxu0 %v2534
        %2556 = vmatprep.subr.mxu0 0.0
        %2557 = vmatpush1.msra.mxu0 %v2535
        %2558 = vmatprep.subr.mxu0 0.0
        %2559 = vmatpush1.msra.mxu0 %v2536
        %2560 = vmatprep.subr.mxu0 0.0
        %2561 = vmatpush1.msra.mxu0 %v2537
        %2562 = vmatprep.subr.mxu0 0.0
        %2563 = vmatpush1.msra.mxu0 %v2538
        %2564 = vmatprep.subr.mxu0 0.0
        %2565 = vmatpush1.msra.mxu0 %v2539
        %2566 = vmatprep.subr.mxu0 0.0
        %2567 = vmatpush1.msra.mxu0 %v2540
        %2568 = vmatprep.subr.mxu0 0.0
        %2569 = vmatpush1.msra.mxu0 %v2541
        %2570 = vmatprep.subr.mxu0 0.0
        %2571 = vmatpush1.msra.mxu0 %v2542
        %2572 = vmatprep.subr.mxu0 0.0
        %2573 = vmatpush1.msra.mxu0 %v2543
        %2574 = vmatprep.subr.mxu0 0.0
        %2575 = vmatpush1.msra.mxu0 %v2544
        %2576 = vmatprep.subr.mxu0 0.0
        %2577 = vmatpush1.msra.mxu0 %v2545
        %2578 = vmatprep.subr.mxu0 0.0
        %2579 = vmatpush1.msra.mxu0 0.0
        %2580 = vmatprep.subr.mxu0 0.0
        %2581 = vmatpush1.msra.mxu0 0.0
        %2582 = vmatprep.subr.mxu0 0.0
        %2583 = vmatpush1.msra.mxu0 0.0
        %2584 = vmatprep.subr.mxu0 0.0
        %2585 = vmatpush1.msra.mxu0 0.0
        %2586 = vmatprep.subr.mxu0 0.0
        %2587 = vmatpush1.msra.mxu0 0.0
        %2588 = vmatprep.subr.mxu0 0.0
        %2589 = vmatpush1.msra.mxu0 0.0
        %2590 = vmatprep.subr.mxu0 0.0
        %2591 = vmatpush1.msra.mxu0 0.0
        %2592 = vmatprep.subr.mxu0 0.0
        %2593 = vmatpush1.msra.mxu0 0.0
        %2594 = vmatprep.subr.mxu0 0.0
        %2595 = vmatpush1.msra.mxu0 0.0
        %2596 = vmatprep.subr.mxu0 0.0
        %2597 = vmatpush1.msra.mxu0 0.0
        %2598 = vmatprep.subr.mxu0 0.0
        %2599 = vmatpush1.msra.mxu0 0.0
        %2600 = vmatprep.subr.mxu0 0.0
        %2601 = vmatpush1.msra.mxu0 0.0
        %2602 = vmatprep.subr.mxu0 0.0
        %2603 = vmatpush1.msra.mxu0 0.0
        %2604 = vmatprep.subr.mxu0 0.0
        %2605 = vmatpush1.msra.mxu0 0.0
        %2606 = vmatprep.subr.mxu0 0.0
        %2607 = vmatpush1.msra.mxu0 0.0
        %2608 = vmatprep.subr.mxu0 0.0
        %2609 = vmatpush1.msra.mxu0 0.0
        %2610 = vmatprep.mubr.f32.mxu0 0.0
        %2611 = vmatmul.mubr.f32.gmra.mrb[0].mxu0 %v2441
        %v2612 = vpop.f32.mrb[0].mxu0
        %v2613 = vadd.f32 0.0, %v2612
        %v2614 = vpop.f32.mrb[0].mxu0
        %2615 = vdwg.mxu0
        %2616 = vmatprep.subr.mxu0 0.0
        %2617 = vmatpush1.msra.mxu0 %v2513
        %2618 = vmatprep.subr.mxu0 0.0
        %2619 = vmatpush1.msra.mxu0 %v2514
        %2620 = vmatprep.subr.mxu0 0.0
        %2621 = vmatpush1.msra.mxu0 %v2515
        %2622 = vmatprep.subr.mxu0 0.0
        %2623 = vmatpush1.msra.mxu0 %v2516
        %2624 = vmatprep.subr.mxu0 0.0
        %2625 = vmatpush1.msra.mxu0 %v2517
        %2626 = vmatprep.subr.mxu0 0.0
        %2627 = vmatpush1.msra.mxu0 %v2518
        %2628 = vmatprep.subr.mxu0 0.0
        %2629 = vmatpush1.msra.mxu0 %v2519
        %2630 = vmatprep.subr.mxu0 0.0
        %2631 = vmatpush1.msra.mxu0 %v2520
        %2632 = vmatprep.subr.mxu0 0.0
        %2633 = vmatpush1.msra.mxu0 %v2521
        %2634 = vmatprep.subr.mxu0 0.0
        %2635 = vmatpush1.msra.mxu0 %v2522
        %2636 = vmatprep.subr.mxu0 0.0
        %2637 = vmatpush1.msra.mxu0 %v2523
        %2638 = vmatprep.subr.mxu0 0.0
        %2639 = vmatpush1.msra.mxu0 %v2524
        %2640 = vmatprep.subr.mxu0 0.0
        %2641 = vmatpush1.msra.mxu0 %v2525
        %2642 = vmatprep.subr.mxu0 0.0
        %2643 = vmatpush1.msra.mxu0 %v2526
        %2644 = vmatprep.subr.mxu0 0.0
        %2645 = vmatpush1.msra.mxu0 %v2527
        %2646 = vmatprep.subr.mxu0 0.0
        %2647 = vmatpush1.msra.mxu0 %v2528
        %2648 = vmatprep.subr.mxu0 0.0
        %2649 = vmatpush1.msra.mxu0 0.0
        %2650 = vmatprep.subr.mxu0 0.0
        %2651 = vmatpush1.msra.mxu0 0.0
        %2652 = vmatprep.subr.mxu0 0.0
        %2653 = vmatpush1.msra.mxu0 0.0
        %2654 = vmatprep.subr.mxu0 0.0
        %2655 = vmatpush1.msra.mxu0 0.0
        %2656 = vmatprep.subr.mxu0 0.0
        %2657 = vmatpush1.msra.mxu0 0.0
        %2658 = vmatprep.subr.mxu0 0.0
        %2659 = vmatpush1.msra.mxu0 0.0
        %2660 = vmatprep.subr.mxu0 0.0
        %2661 = vmatpush1.msra.mxu0 0.0
        %2662 = vmatprep.subr.mxu0 0.0
        %2663 = vmatpush1.msra.mxu0 0.0
        %2664 = vmatprep.subr.mxu0 0.0
        %2665 = vmatpush1.msra.mxu0 0.0
        %2666 = vmatprep.subr.mxu0 0.0
        %2667 = vmatpush1.msra.mxu0 0.0
        %2668 = vmatprep.subr.mxu0 0.0
        %2669 = vmatpush1.msra.mxu0 0.0
        %2670 = vmatprep.subr.mxu0 0.0
        %2671 = vmatpush1.msra.mxu0 0.0
        %2672 = vmatprep.subr.mxu0 0.0
        %2673 = vmatpush1.msra.mxu0 0.0
        %2674 = vmatprep.subr.mxu0 0.0
        %2675 = vmatpush1.msra.mxu0 0.0
        %2676 = vmatprep.subr.mxu0 0.0
        %2677 = vmatpush1.msra.mxu0 0.0
        %2678 = vmatprep.subr.mxu0 0.0
        %2679 = vmatpush1.msra.mxu0 0.0
        %2680 = vmatprep.mubr.f32.mxu0 0.0
        %2681 = vmatmul.mubr.f32.gmra.mrb[0].mxu0 %v2509
        %v2682 = vpop.f32.mrb[0].mxu0
        %v2683 = vadd.f32 %v2613, %v2682
        %v2684 = vpop.f32.mrb[0].mxu0
        %2685 = vdwg.mxu0
        %2686 = vmatprep.subr.mxu0 0.0
        %2687 = vmatpush1.msra.mxu0 %v2441
        %2688 = vmatprep.subr.mxu0 0.0
        %2689 = vmatpush1.msra.mxu0 0.0
        %2690 = vmatprep.subr.mxu0 0.0
        %2691 = vmatpush1.msra.mxu0 0.0
        %2692 = vmatprep.subr.mxu0 0.0
        %2693 = vmatpush1.msra.mxu0 0.0
        %2694 = vmatprep.subr.mxu0 0.0
        %2695 = vmatpush1.msra.mxu0 0.0
        %2696 = vmatprep.subr.mxu0 0.0
        %2697 = vmatpush1.msra.mxu0 0.0
        %2698 = vmatprep.subr.mxu0 0.0
        %2699 = vmatpush1.msra.mxu0 0.0
        %2700 = vmatprep.subr.mxu0 0.0
        %2701 = vmatpush1.msra.mxu0 0.0
        %2702 = vmatprep.subr.mxu0 0.0
        %2703 = vmatpush1.msra.mxu0 0.0
        %2704 = vmatprep.subr.mxu0 0.0
        %2705 = vmatpush1.msra.mxu0 0.0
        %2706 = vmatprep.subr.mxu0 0.0
        %2707 = vmatpush1.msra.mxu0 0.0
        %2708 = vmatprep.subr.mxu0 0.0
        %2709 = vmatpush1.msra.mxu0 0.0
        %2710 = vmatprep.subr.mxu0 0.0
        %2711 = vmatpush1.msra.mxu0 0.0
        %2712 = vmatprep.subr.mxu0 0.0
        %2713 = vmatpush1.msra.mxu0 0.0
        %2714 = vmatprep.subr.mxu0 0.0
        %2715 = vmatpush1.msra.mxu0 0.0
        %2716 = vmatprep.subr.mxu0 0.0
        %2717 = vmatpush1.msra.mxu0 0.0
        %2718 = vmatprep.subr.mxu0 0.0
        %2719 = vmatpush1.msra.mxu0 0.0
        %2720 = vmatprep.subr.mxu0 0.0
        %2721 = vmatpush1.msra.mxu0 0.0
        %2722 = vmatprep.subr.mxu0 0.0
        %2723 = vmatpush1.msra.mxu0 0.0
        %2724 = vmatprep.subr.mxu0 0.0
        %2725 = vmatpush1.msra.mxu0 0.0
        %2726 = vmatprep.subr.mxu0 0.0
        %2727 = vmatpush1.msra.mxu0 0.0
        %2728 = vmatprep.subr.mxu0 0.0
        %2729 = vmatpush1.msra.mxu0 0.0
        %2730 = vmatprep.subr.mxu0 0.0
        %2731 = vmatpush1.msra.mxu0 0.0
        %2732 = vmatprep.subr.mxu0 0.0
        %2733 = vmatpush1.msra.mxu0 0.0
        %2734 = vmatprep.subr.mxu0 0.0
        %2735 = vmatpush1.msra.mxu0 0.0
        %2736 = vmatprep.subr.mxu0 0.0
        %2737 = vmatpush1.msra.mxu0 0.0
        %2738 = vmatprep.subr.mxu0 0.0
        %2739 = vmatpush1.msra.mxu0 0.0
        %2740 = vmatprep.subr.mxu0 0.0
        %2741 = vmatpush1.msra.mxu0 0.0
        %2742 = vmatprep.subr.mxu0 0.0
        %2743 = vmatpush1.msra.mxu0 0.0
        %2744 = vmatprep.subr.mxu0 0.0
        %2745 = vmatpush1.msra.mxu0 0.0
        %2746 = vmatprep.subr.mxu0 0.0
        %2747 = vmatpush1.msra.mxu0 0.0
        %2748 = vmatprep.subr.mxu0 0.0
        %2749 = vmatpush1.msra.mxu0 0.0
        %2750 = vmatprep.mubr.f32.mxu0 0.0
        %2751 = vmatmul.mubr.f32.gmra.mrb[0].mxu0 %v996
        %v2752 = vpop.f32.mrb[0].mxu0
        %v2753 = vadd.f32 0.0, %v2752
        %v2754 = vpop.f32.mrb[0].mxu0
        %2755 = vdwg.mxu0
        %s2756 = scalar_lea.vmem [#allocation7], 1920
        %v2757 = vld [vmem:[%s2756] sm:$0xff]
        %v2758 = vld [vmem:[%s2756 + $0x8] sm:$0xff]
        %v2759 = vld [vmem:[%s2756 + $0x10] sm:$0xff]
        %v2760 = vld [vmem:[%s2756 + $0x18] sm:$0xff]
        %v2761 = vld [vmem:[%s2756 + $0x20] sm:$0xff]
        %v2762 = vld [vmem:[%s2756 + $0x28] sm:$0xff]
        %v2763 = vld [vmem:[%s2756 + $0x30] sm:$0xff]
        %v2764 = vld [vmem:[%s2756 + $0x38] sm:$0xff]
        %v2765 = vld [vmem:[%s2756 + $0x40] sm:$0xff]
        %v2766 = vld [vmem:[%s2756 + $0x48] sm:$0xff]
        %v2767 = vld [vmem:[%s2756 + $0x50] sm:$0xff]
        %v2768 = vld [vmem:[%s2756 + $0x58] sm:$0xff]
        %v2769 = vld [vmem:[%s2756 + $0x60] sm:$0xff]
        %v2770 = vld [vmem:[%s2756 + $0x68] sm:$0xff]
        %v2771 = vld [vmem:[%s2756 + $0x70] sm:$0xff]
        %v2772 = vld [vmem:[%s2756 + $0x78] sm:$0xff]
        %2773 = vmatprep.subr.mxu0 0.0
        %2774 = vmatpush1.msra.mxu0 %v2757
        %2775 = vmatprep.subr.mxu0 0.0
        %2776 = vmatpush1.msra.mxu0 %v2758
        %2777 = vmatprep.subr.mxu0 0.0
        %2778 = vmatpush1.msra.mxu0 %v2759
        %2779 = vmatprep.subr.mxu0 0.0
        %2780 = vmatpush1.msra.mxu0 %v2760
        %2781 = vmatprep.subr.mxu0 0.0
        %2782 = vmatpush1.msra.mxu0 %v2761
        %2783 = vmatprep.subr.mxu0 0.0
        %2784 = vmatpush1.msra.mxu0 %v2762
        %2785 = vmatprep.subr.mxu0 0.0
        %2786 = vmatpush1.msra.mxu0 %v2763
        %2787 = vmatprep.subr.mxu0 0.0
        %2788 = vmatpush1.msra.mxu0 %v2764
        %2789 = vmatprep.subr.mxu0 0.0
        %2790 = vmatpush1.msra.mxu0 %v2765
        %2791 = vmatprep.subr.mxu0 0.0
        %2792 = vmatpush1.msra.mxu0 %v2766
        %2793 = vmatprep.subr.mxu0 0.0
        %2794 = vmatpush1.msra.mxu0 %v2767
        %2795 = vmatprep.subr.mxu0 0.0
        %2796 = vmatpush1.msra.mxu0 %v2768
        %2797 = vmatprep.subr.mxu0 0.0
        %2798 = vmatpush1.msra.mxu0 %v2769
        %2799 = vmatprep.subr.mxu0 0.0
        %2800 = vmatpush1.msra.mxu0 %v2770
        %2801 = vmatprep.subr.mxu0 0.0
        %2802 = vmatpush1.msra.mxu0 %v2771
        %2803 = vmatprep.subr.mxu0 0.0
        %2804 = vmatpush1.msra.mxu0 %v2772
        %2805 = vmatprep.subr.mxu0 0.0
        %2806 = vmatpush1.msra.mxu0 0.0
        %2807 = vmatprep.subr.mxu0 0.0
        %2808 = vmatpush1.msra.mxu0 0.0
        %2809 = vmatprep.subr.mxu0 0.0
        %2810 = vmatpush1.msra.mxu0 0.0
        %2811 = vmatprep.subr.mxu0 0.0
        %2812 = vmatpush1.msra.mxu0 0.0
        %2813 = vmatprep.subr.mxu0 0.0
        %2814 = vmatpush1.msra.mxu0 0.0
        %2815 = vmatprep.subr.mxu0 0.0
        %2816 = vmatpush1.msra.mxu0 0.0
        %2817 = vmatprep.subr.mxu0 0.0
        %2818 = vmatpush1.msra.mxu0 0.0
        %2819 = vmatprep.subr.mxu0 0.0
        %2820 = vmatpush1.msra.mxu0 0.0
        %2821 = vmatprep.subr.mxu0 0.0
        %2822 = vmatpush1.msra.mxu0 0.0
        %2823 = vmatprep.subr.mxu0 0.0
        %2824 = vmatpush1.msra.mxu0 0.0
        %2825 = vmatprep.subr.mxu0 0.0
        %2826 = vmatpush1.msra.mxu0 0.0
        %2827 = vmatprep.subr.mxu0 0.0
        %2828 = vmatpush1.msra.mxu0 0.0
        %2829 = vmatprep.subr.mxu0 0.0
        %2830 = vmatpush1.msra.mxu0 0.0
        %2831 = vmatprep.subr.mxu0 0.0
        %2832 = vmatpush1.msra.mxu0 0.0
        %2833 = vmatprep.subr.mxu0 0.0
        %2834 = vmatpush1.msra.mxu0 0.0
        %2835 = vmatprep.subr.mxu0 0.0
        %2836 = vmatpush1.msra.mxu0 0.0
        %2837 = vmatprep.mubr.f32.mxu0 0.0
        %2838 = vmatmul.mubr.f32.gmra.mrb[0].mxu0 %v2753
        %v2839 = vpop.f32.mrb[0].mxu0
        %v2840 = vadd.f32 0.0, %v2839
        %v2841 = vpop.f32.mrb[0].mxu0
        %2842 = vdwg.mxu0
        %v2843 = vadd.f32 %v2683, %v2840
        %v2844 = vadd.f32 %v2037, %v2843
        %s2845 = scalar_lea.vmem [#allocation7], 2048
        %v2846 = vld [vmem:[%s2845] sm:$0xff]
        %v2847 = vld [vmem:[%s2845 + $0x8] sm:$0xff]
        %v2848 = vld [vmem:[%s2845 + $0x10] sm:$0xff]
        %v2849 = vld [vmem:[%s2845 + $0x18] sm:$0xff]
        %v2850 = vld [vmem:[%s2845 + $0x20] sm:$0xff]
        %v2851 = vld [vmem:[%s2845 + $0x28] sm:$0xff]
        %v2852 = vld [vmem:[%s2845 + $0x30] sm:$0xff]
        %v2853 = vld [vmem:[%s2845 + $0x38] sm:$0xff]
        %v2854 = vld [vmem:[%s2845 + $0x40] sm:$0xff]
        %v2855 = vld [vmem:[%s2845 + $0x48] sm:$0xff]
        %v2856 = vld [vmem:[%s2845 + $0x50] sm:$0xff]
        %v2857 = vld [vmem:[%s2845 + $0x58] sm:$0xff]
        %v2858 = vld [vmem:[%s2845 + $0x60] sm:$0xff]
        %v2859 = vld [vmem:[%s2845 + $0x68] sm:$0xff]
        %v2860 = vld [vmem:[%s2845 + $0x70] sm:$0xff]
        %v2861 = vld [vmem:[%s2845 + $0x78] sm:$0xff]
        %s2862 = scalar_lea.vmem [#allocation7], 2176
        %v2863 = vld [vmem:[%s2862] sm:$0xff]
        %v2864 = vld [vmem:[%s2862 + $0x8] sm:$0xff]
        %v2865 = vld [vmem:[%s2862 + $0x10] sm:$0xff]
        %v2866 = vld [vmem:[%s2862 + $0x18] sm:$0xff]
        %v2867 = vld [vmem:[%s2862 + $0x20] sm:$0xff]
        %v2868 = vld [vmem:[%s2862 + $0x28] sm:$0xff]
        %v2869 = vld [vmem:[%s2862 + $0x30] sm:$0xff]
        %v2870 = vld [vmem:[%s2862 + $0x38] sm:$0xff]
        %v2871 = vld [vmem:[%s2862 + $0x40] sm:$0xff]
        %v2872 = vld [vmem:[%s2862 + $0x48] sm:$0xff]
        %v2873 = vld [vmem:[%s2862 + $0x50] sm:$0xff]
        %v2874 = vld [vmem:[%s2862 + $0x58] sm:$0xff]
        %v2875 = vld [vmem:[%s2862 + $0x60] sm:$0xff]
        %v2876 = vld [vmem:[%s2862 + $0x68] sm:$0xff]
        %v2877 = vld [vmem:[%s2862 + $0x70] sm:$0xff]
        %v2878 = vld [vmem:[%s2862 + $0x78] sm:$0xff]
        %2879 = vmatprep.subr.mxu0 0.0
        %2880 = vmatpush1.msra.mxu0 %v2863
        %2881 = vmatprep.subr.mxu0 0.0
        %2882 = vmatpush1.msra.mxu0 %v2864
        %2883 = vmatprep.subr.mxu0 0.0
        %2884 = vmatpush1.msra.mxu0 %v2865
        %2885 = vmatprep.subr.mxu0 0.0
        %2886 = vmatpush1.msra.mxu0 %v2866
        %2887 = vmatprep.subr.mxu0 0.0
        %2888 = vmatpush1.msra.mxu0 %v2867
        %2889 = vmatprep.subr.mxu0 0.0
        %2890 = vmatpush1.msra.mxu0 %v2868
        %2891 = vmatprep.subr.mxu0 0.0
        %2892 = vmatpush1.msra.mxu0 %v2869
        %2893 = vmatprep.subr.mxu0 0.0
        %2894 = vmatpush1.msra.mxu0 %v2870
        %2895 = vmatprep.subr.mxu0 0.0
        %2896 = vmatpush1.msra.mxu0 %v2871
        %2897 = vmatprep.subr.mxu0 0.0
        %2898 = vmatpush1.msra.mxu0 %v2872
        %2899 = vmatprep.subr.mxu0 0.0
        %2900 = vmatpush1.msra.mxu0 %v2873
        %2901 = vmatprep.subr.mxu0 0.0
        %2902 = vmatpush1.msra.mxu0 %v2874
        %2903 = vmatprep.subr.mxu0 0.0
        %2904 = vmatpush1.msra.mxu0 %v2875
        %2905 = vmatprep.subr.mxu0 0.0
        %2906 = vmatpush1.msra.mxu0 %v2876
        %2907 = vmatprep.subr.mxu0 0.0
        %2908 = vmatpush1.msra.mxu0 %v2877
        %2909 = vmatprep.subr.mxu0 0.0
        %2910 = vmatpush1.msra.mxu0 %v2878
        %2911 = vmatprep.subr.mxu0 0.0
        %2912 = vmatpush1.msra.mxu0 0.0
        %2913 = vmatprep.subr.mxu0 0.0
        %2914 = vmatpush1.msra.mxu0 0.0
        %2915 = vmatprep.subr.mxu0 0.0
        %2916 = vmatpush1.msra.mxu0 0.0
        %2917 = vmatprep.subr.mxu0 0.0
        %2918 = vmatpush1.msra.mxu0 0.0
        %2919 = vmatprep.subr.mxu0 0.0
        %2920 = vmatpush1.msra.mxu0 0.0
        %2921 = vmatprep.subr.mxu0 0.0
        %2922 = vmatpush1.msra.mxu0 0.0
        %2923 = vmatprep.subr.mxu0 0.0
        %2924 = vmatpush1.msra.mxu0 0.0
        %2925 = vmatprep.subr.mxu0 0.0
        %2926 = vmatpush1.msra.mxu0 0.0
        %2927 = vmatprep.subr.mxu0 0.0
        %2928 = vmatpush1.msra.mxu0 0.0
        %2929 = vmatprep.subr.mxu0 0.0
        %2930 = vmatpush1.msra.mxu0 0.0
        %2931 = vmatprep.subr.mxu0 0.0
        %2932 = vmatpush1.msra.mxu0 0.0
        %2933 = vmatprep.subr.mxu0 0.0
        %2934 = vmatpush1.msra.mxu0 0.0
        %2935 = vmatprep.subr.mxu0 0.0
        %2936 = vmatpush1.msra.mxu0 0.0
        %2937 = vmatprep.subr.mxu0 0.0
        %2938 = vmatpush1.msra.mxu0 0.0
        %2939 = vmatprep.subr.mxu0 0.0
        %2940 = vmatpush1.msra.mxu0 0.0
        %2941 = vmatprep.subr.mxu0 0.0
        %2942 = vmatpush1.msra.mxu0 0.0
        %2943 = vmatprep.mubr.f32.mxu0 0.0
        %2944 = vmatmul.mubr.f32.gmra.mrb[0].mxu0 %v2038
        %v2945 = vpop.f32.mrb[0].mxu0
        %v2946 = vadd.f32 0.0, %v2945
        %v2947 = vpop.f32.mrb[0].mxu0
        %2948 = vdwg.mxu0
        %2949 = vmatprep.subr.mxu0 0.0
        %2950 = vmatpush1.msra.mxu0 %v2846
        %2951 = vmatprep.subr.mxu0 0.0
        %2952 = vmatpush1.msra.mxu0 %v2847
        %2953 = vmatprep.subr.mxu0 0.0
        %2954 = vmatpush1.msra.mxu0 %v2848
        %2955 = vmatprep.subr.mxu0 0.0
        %2956 = vmatpush1.msra.mxu0 %v2849
        %2957 = vmatprep.subr.mxu0 0.0
        %2958 = vmatpush1.msra.mxu0 %v2850
        %2959 = vmatprep.subr.mxu0 0.0
        %2960 = vmatpush1.msra.mxu0 %v2851
        %2961 = vmatprep.subr.mxu0 0.0
        %2962 = vmatpush1.msra.mxu0 %v2852
        %2963 = vmatprep.subr.mxu0 0.0
        %2964 = vmatpush1.msra.mxu0 %v2853
        %2965 = vmatprep.subr.mxu0 0.0
        %2966 = vmatpush1.msra.mxu0 %v2854
        %2967 = vmatprep.subr.mxu0 0.0
        %2968 = vmatpush1.msra.mxu0 %v2855
        %2969 = vmatprep.subr.mxu0 0.0
        %2970 = vmatpush1.msra.mxu0 %v2856
        %2971 = vmatprep.subr.mxu0 0.0
        %2972 = vmatpush1.msra.mxu0 %v2857
        %2973 = vmatprep.subr.mxu0 0.0
        %2974 = vmatpush1.msra.mxu0 %v2858
        %2975 = vmatprep.subr.mxu0 0.0
        %2976 = vmatpush1.msra.mxu0 %v2859
        %2977 = vmatprep.subr.mxu0 0.0
        %2978 = vmatpush1.msra.mxu0 %v2860
        %2979 = vmatprep.subr.mxu0 0.0
        %2980 = vmatpush1.msra.mxu0 %v2861
        %2981 = vmatprep.subr.mxu0 0.0
        %2982 = vmatpush1.msra.mxu0 0.0
        %2983 = vmatprep.subr.mxu0 0.0
        %2984 = vmatpush1.msra.mxu0 0.0
        %2985 = vmatprep.subr.mxu0 0.0
        %2986 = vmatpush1.msra.mxu0 0.0
        %2987 = vmatprep.subr.mxu0 0.0
        %2988 = vmatpush1.msra.mxu0 0.0
        %2989 = vmatprep.subr.mxu0 0.0
        %2990 = vmatpush1.msra.mxu0 0.0
        %2991 = vmatprep.subr.mxu0 0.0
        %2992 = vmatpush1.msra.mxu0 0.0
        %2993 = vmatprep.subr.mxu0 0.0
        %2994 = vmatpush1.msra.mxu0 0.0
        %2995 = vmatprep.subr.mxu0 0.0
        %2996 = vmatpush1.msra.mxu0 0.0
        %2997 = vmatprep.subr.mxu0 0.0
        %2998 = vmatpush1.msra.mxu0 0.0
        %2999 = vmatprep.subr.mxu0 0.0
        %3000 = vmatpush1.msra.mxu0 0.0
        %3001 = vmatprep.subr.mxu0 0.0
        %3002 = vmatpush1.msra.mxu0 0.0
        %3003 = vmatprep.subr.mxu0 0.0
        %3004 = vmatpush1.msra.mxu0 0.0
        %3005 = vmatprep.subr.mxu0 0.0
        %3006 = vmatpush1.msra.mxu0 0.0
        %3007 = vmatprep.subr.mxu0 0.0
        %3008 = vmatpush1.msra.mxu0 0.0
        %3009 = vmatprep.subr.mxu0 0.0
        %3010 = vmatpush1.msra.mxu0 0.0
        %3011 = vmatprep.subr.mxu0 0.0
        %3012 = vmatpush1.msra.mxu0 0.0
        %3013 = vmatprep.mubr.f32.mxu0 0.0
        %3014 = vmatmul.mubr.f32.gmra.mrb[0].mxu0 %v2106
        %v3015 = vpop.f32.mrb[0].mxu0
        %v3016 = vadd.f32 %v2946, %v3015
        %v3017 = vpop.f32.mrb[0].mxu0
        %3018 = vdwg.mxu0
        %s3019 = scalar_lea.vmem [#allocation7], 2304
        %v3020 = vld [vmem:[%s3019] sm:$0xff]
        %v3021 = vld [vmem:[%s3019 + $0x8] sm:$0xff]
        %v3022 = vld [vmem:[%s3019 + $0x10] sm:$0xff]
        %v3023 = vld [vmem:[%s3019 + $0x18] sm:$0xff]
        %v3024 = vld [vmem:[%s3019 + $0x20] sm:$0xff]
        %v3025 = vld [vmem:[%s3019 + $0x28] sm:$0xff]
        %v3026 = vld [vmem:[%s3019 + $0x30] sm:$0xff]
        %v3027 = vld [vmem:[%s3019 + $0x38] sm:$0xff]
        %v3028 = vld [vmem:[%s3019 + $0x40] sm:$0xff]
        %v3029 = vld [vmem:[%s3019 + $0x48] sm:$0xff]
        %v3030 = vld [vmem:[%s3019 + $0x50] sm:$0xff]
        %v3031 = vld [vmem:[%s3019 + $0x58] sm:$0xff]
        %v3032 = vld [vmem:[%s3019 + $0x60] sm:$0xff]
        %v3033 = vld [vmem:[%s3019 + $0x68] sm:$0xff]
        %v3034 = vld [vmem:[%s3019 + $0x70] sm:$0xff]
        %v3035 = vld [vmem:[%s3019 + $0x78] sm:$0xff]
        %3036 = vmatprep.subr.mxu0 0.0
        %3037 = vmatpush1.msra.mxu0 %v3020
        %3038 = vmatprep.subr.mxu0 0.0
        %3039 = vmatpush1.msra.mxu0 %v3021
        %3040 = vmatprep.subr.mxu0 0.0
        %3041 = vmatpush1.msra.mxu0 %v3022
        %3042 = vmatprep.subr.mxu0 0.0
        %3043 = vmatpush1.msra.mxu0 %v3023
        %3044 = vmatprep.subr.mxu0 0.0
        %3045 = vmatpush1.msra.mxu0 %v3024
        %3046 = vmatprep.subr.mxu0 0.0
        %3047 = vmatpush1.msra.mxu0 %v3025
        %3048 = vmatprep.subr.mxu0 0.0
        %3049 = vmatpush1.msra.mxu0 %v3026
        %3050 = vmatprep.subr.mxu0 0.0
        %3051 = vmatpush1.msra.mxu0 %v3027
        %3052 = vmatprep.subr.mxu0 0.0
        %3053 = vmatpush1.msra.mxu0 %v3028
        %3054 = vmatprep.subr.mxu0 0.0
        %3055 = vmatpush1.msra.mxu0 %v3029
        %3056 = vmatprep.subr.mxu0 0.0
        %3057 = vmatpush1.msra.mxu0 %v3030
        %3058 = vmatprep.subr.mxu0 0.0
        %3059 = vmatpush1.msra.mxu0 %v3031
        %3060 = vmatprep.subr.mxu0 0.0
        %3061 = vmatpush1.msra.mxu0 %v3032
        %3062 = vmatprep.subr.mxu0 0.0
        %3063 = vmatpush1.msra.mxu0 %v3033
        %3064 = vmatprep.subr.mxu0 0.0
        %3065 = vmatpush1.msra.mxu0 %v3034
        %3066 = vmatprep.subr.mxu0 0.0
        %3067 = vmatpush1.msra.mxu0 %v3035
        %3068 = vmatprep.subr.mxu0 0.0
        %3069 = vmatpush1.msra.mxu0 0.0
        %3070 = vmatprep.subr.mxu0 0.0
        %3071 = vmatpush1.msra.mxu0 0.0
        %3072 = vmatprep.subr.mxu0 0.0
        %3073 = vmatpush1.msra.mxu0 0.0
        %3074 = vmatprep.subr.mxu0 0.0
        %3075 = vmatpush1.msra.mxu0 0.0
        %3076 = vmatprep.subr.mxu0 0.0
        %3077 = vmatpush1.msra.mxu0 0.0
        %3078 = vmatprep.subr.mxu0 0.0
        %3079 = vmatpush1.msra.mxu0 0.0
        %3080 = vmatprep.subr.mxu0 0.0
        %3081 = vmatpush1.msra.mxu0 0.0
        %3082 = vmatprep.subr.mxu0 0.0
        %3083 = vmatpush1.msra.mxu0 0.0
        %3084 = vmatprep.subr.mxu0 0.0
        %3085 = vmatpush1.msra.mxu0 0.0
        %3086 = vmatprep.subr.mxu0 0.0
        %3087 = vmatpush1.msra.mxu0 0.0
        %3088 = vmatprep.subr.mxu0 0.0
        %3089 = vmatpush1.msra.mxu0 0.0
        %3090 = vmatprep.subr.mxu0 0.0
        %3091 = vmatpush1.msra.mxu0 0.0
        %3092 = vmatprep.subr.mxu0 0.0
        %3093 = vmatpush1.msra.mxu0 0.0
        %3094 = vmatprep.subr.mxu0 0.0
        %3095 = vmatpush1.msra.mxu0 0.0
        %3096 = vmatprep.subr.mxu0 0.0
        %3097 = vmatpush1.msra.mxu0 0.0
        %3098 = vmatprep.subr.mxu0 0.0
        %3099 = vmatpush1.msra.mxu0 0.0
        %3100 = vmatprep.mubr.f32.mxu0 0.0
        %3101 = vmatmul.mubr.f32.gmra.mrb[0].mxu0 %v2350
        %v3102 = vpop.f32.mrb[0].mxu0
        %v3103 = vadd.f32 0.0, %v3102
        %v3104 = vpop.f32.mrb[0].mxu0
        %3105 = vdwg.mxu0
        %v3106 = vadd.f32 %v3016, %v3103
        %v3107 = vmax.f32 %v3106, 0.0
        %3108 = vmatprep.subr.mxu0 0.0
        %3109 = vmatpush1.msra.mxu0 %v3107
        %3110 = vmatprep.subr.mxu0 0.0
        %3111 = vmatpush1.msra.mxu0 0.0
        %3112 = vmatprep.subr.mxu0 0.0
        %3113 = vmatpush1.msra.mxu0 0.0
        %3114 = vmatprep.subr.mxu0 0.0
        %3115 = vmatpush1.msra.mxu0 0.0
        %3116 = vmatprep.subr.mxu0 0.0
        %3117 = vmatpush1.msra.mxu0 0.0
        %3118 = vmatprep.subr.mxu0 0.0
        %3119 = vmatpush1.msra.mxu0 0.0
        %3120 = vmatprep.subr.mxu0 0.0
        %3121 = vmatpush1.msra.mxu0 0.0
        %3122 = vmatprep.subr.mxu0 0.0
        %3123 = vmatpush1.msra.mxu0 0.0
        %3124 = vmatprep.subr.mxu0 0.0
        %3125 = vmatpush1.msra.mxu0 0.0
        %3126 = vmatprep.subr.mxu0 0.0
        %3127 = vmatpush1.msra.mxu0 0.0
        %3128 = vmatprep.subr.mxu0 0.0
        %3129 = vmatpush1.msra.mxu0 0.0
        %3130 = vmatprep.subr.mxu0 0.0
        %3131 = vmatpush1.msra.mxu0 0.0
        %3132 = vmatprep.subr.mxu0 0.0
        %3133 = vmatpush1.msra.mxu0 0.0
        %3134 = vmatprep.subr.mxu0 0.0
        %3135 = vmatpush1.msra.mxu0 0.0
        %3136 = vmatprep.subr.mxu0 0.0
        %3137 = vmatpush1.msra.mxu0 0.0
        %3138 = vmatprep.subr.mxu0 0.0
        %3139 = vmatpush1.msra.mxu0 0.0
        %3140 = vmatprep.subr.mxu0 0.0
        %3141 = vmatpush1.msra.mxu0 0.0
        %3142 = vmatprep.subr.mxu0 0.0
        %3143 = vmatpush1.msra.mxu0 0.0
        %3144 = vmatprep.subr.mxu0 0.0
        %3145 = vmatpush1.msra.mxu0 0.0
        %3146 = vmatprep.subr.mxu0 0.0
        %3147 = vmatpush1.msra.mxu0 0.0
        %3148 = vmatprep.subr.mxu0 0.0
        %3149 = vmatpush1.msra.mxu0 0.0
        %3150 = vmatprep.subr.mxu0 0.0
        %3151 = vmatpush1.msra.mxu0 0.0
        %3152 = vmatprep.subr.mxu0 0.0
        %3153 = vmatpush1.msra.mxu0 0.0
        %3154 = vmatprep.subr.mxu0 0.0
        %3155 = vmatpush1.msra.mxu0 0.0
        %3156 = vmatprep.subr.mxu0 0.0
        %3157 = vmatpush1.msra.mxu0 0.0
        %3158 = vmatprep.subr.mxu0 0.0
        %3159 = vmatpush1.msra.mxu0 0.0
        %3160 = vmatprep.subr.mxu0 0.0
        %3161 = vmatpush1.msra.mxu0 0.0
        %3162 = vmatprep.subr.mxu0 0.0
        %3163 = vmatpush1.msra.mxu0 0.0
        %3164 = vmatprep.subr.mxu0 0.0
        %3165 = vmatpush1.msra.mxu0 0.0
        %3166 = vmatprep.subr.mxu0 0.0
        %3167 = vmatpush1.msra.mxu0 0.0
        %3168 = vmatprep.subr.mxu0 0.0
        %3169 = vmatpush1.msra.mxu0 0.0
        %3170 = vmatprep.subr.mxu0 0.0
        %3171 = vmatpush1.msra.mxu0 0.0
        %3172 = vmatprep.mubr.f32.mxu0 0.0
        %3173 = vmatmul.mubr.f32.gmra.mrb[0].mxu0 %v676
        %v3174 = vpop.f32.mrb[0].mxu0
        %v3175 = vadd.f32 0.0, %v3174
        %v3176 = vpop.f32.mrb[0].mxu0
        %3177 = vdwg.mxu0
        %s3178 = scalar_lea.vmem [#allocation7], 2432
        %v3179 = vld [vmem:[%s3178] sm:$0xff]
        %v3180 = vld [vmem:[%s3178 + $0x8] sm:$0xff]
        %v3181 = vld [vmem:[%s3178 + $0x10] sm:$0xff]
        %v3182 = vld [vmem:[%s3178 + $0x18] sm:$0xff]
        %v3183 = vld [vmem:[%s3178 + $0x20] sm:$0xff]
        %v3184 = vld [vmem:[%s3178 + $0x28] sm:$0xff]
        %v3185 = vld [vmem:[%s3178 + $0x30] sm:$0xff]
        %v3186 = vld [vmem:[%s3178 + $0x38] sm:$0xff]
        %v3187 = vld [vmem:[%s3178 + $0x40] sm:$0xff]
        %v3188 = vld [vmem:[%s3178 + $0x48] sm:$0xff]
        %v3189 = vld [vmem:[%s3178 + $0x50] sm:$0xff]
        %v3190 = vld [vmem:[%s3178 + $0x58] sm:$0xff]
        %v3191 = vld [vmem:[%s3178 + $0x60] sm:$0xff]
        %v3192 = vld [vmem:[%s3178 + $0x68] sm:$0xff]
        %v3193 = vld [vmem:[%s3178 + $0x70] sm:$0xff]
        %v3194 = vld [vmem:[%s3178 + $0x78] sm:$0xff]
        %s3195 = scalar_lea.vmem [#allocation7], 2560
        %v3196 = vld [vmem:[%s3195] sm:$0xff]
        %v3197 = vld [vmem:[%s3195 + $0x8] sm:$0xff]
        %v3198 = vld [vmem:[%s3195 + $0x10] sm:$0xff]
        %v3199 = vld [vmem:[%s3195 + $0x18] sm:$0xff]
        %v3200 = vld [vmem:[%s3195 + $0x20] sm:$0xff]
        %v3201 = vld [vmem:[%s3195 + $0x28] sm:$0xff]
        %v3202 = vld [vmem:[%s3195 + $0x30] sm:$0xff]
        %v3203 = vld [vmem:[%s3195 + $0x38] sm:$0xff]
        %v3204 = vld [vmem:[%s3195 + $0x40] sm:$0xff]
        %v3205 = vld [vmem:[%s3195 + $0x48] sm:$0xff]
        %v3206 = vld [vmem:[%s3195 + $0x50] sm:$0xff]
        %v3207 = vld [vmem:[%s3195 + $0x58] sm:$0xff]
        %v3208 = vld [vmem:[%s3195 + $0x60] sm:$0xff]
        %v3209 = vld [vmem:[%s3195 + $0x68] sm:$0xff]
        %v3210 = vld [vmem:[%s3195 + $0x70] sm:$0xff]
        %v3211 = vld [vmem:[%s3195 + $0x78] sm:$0xff]
        %3212 = vmatprep.subr.mxu0 0.0
        %3213 = vmatpush1.msra.mxu0 %v3196
        %3214 = vmatprep.subr.mxu0 0.0
        %3215 = vmatpush1.msra.mxu0 %v3197
        %3216 = vmatprep.subr.mxu0 0.0
        %3217 = vmatpush1.msra.mxu0 %v3198
        %3218 = vmatprep.subr.mxu0 0.0
        %3219 = vmatpush1.msra.mxu0 %v3199
        %3220 = vmatprep.subr.mxu0 0.0
        %3221 = vmatpush1.msra.mxu0 %v3200
        %3222 = vmatprep.subr.mxu0 0.0
        %3223 = vmatpush1.msra.mxu0 %v3201
        %3224 = vmatprep.subr.mxu0 0.0
        %3225 = vmatpush1.msra.mxu0 %v3202
        %3226 = vmatprep.subr.mxu0 0.0
        %3227 = vmatpush1.msra.mxu0 %v3203
        %3228 = vmatprep.subr.mxu0 0.0
        %3229 = vmatpush1.msra.mxu0 %v3204
        %3230 = vmatprep.subr.mxu0 0.0
        %3231 = vmatpush1.msra.mxu0 %v3205
        %3232 = vmatprep.subr.mxu0 0.0
        %3233 = vmatpush1.msra.mxu0 %v3206
        %3234 = vmatprep.subr.mxu0 0.0
        %3235 = vmatpush1.msra.mxu0 %v3207
        %3236 = vmatprep.subr.mxu0 0.0
        %3237 = vmatpush1.msra.mxu0 %v3208
        %3238 = vmatprep.subr.mxu0 0.0
        %3239 = vmatpush1.msra.mxu0 %v3209
        %3240 = vmatprep.subr.mxu0 0.0
        %3241 = vmatpush1.msra.mxu0 %v3210
        %3242 = vmatprep.subr.mxu0 0.0
        %3243 = vmatpush1.msra.mxu0 %v3211
        %3244 = vmatprep.subr.mxu0 0.0
        %3245 = vmatpush1.msra.mxu0 0.0
        %3246 = vmatprep.subr.mxu0 0.0
        %3247 = vmatpush1.msra.mxu0 0.0
        %3248 = vmatprep.subr.mxu0 0.0
        %3249 = vmatpush1.msra.mxu0 0.0
        %3250 = vmatprep.subr.mxu0 0.0
        %3251 = vmatpush1.msra.mxu0 0.0
        %3252 = vmatprep.subr.mxu0 0.0
        %3253 = vmatpush1.msra.mxu0 0.0
        %3254 = vmatprep.subr.mxu0 0.0
        %3255 = vmatpush1.msra.mxu0 0.0
        %3256 = vmatprep.subr.mxu0 0.0
        %3257 = vmatpush1.msra.mxu0 0.0
        %3258 = vmatprep.subr.mxu0 0.0
        %3259 = vmatpush1.msra.mxu0 0.0
        %3260 = vmatprep.subr.mxu0 0.0
        %3261 = vmatpush1.msra.mxu0 0.0
        %3262 = vmatprep.subr.mxu0 0.0
        %3263 = vmatpush1.msra.mxu0 0.0
        %3264 = vmatprep.subr.mxu0 0.0
        %3265 = vmatpush1.msra.mxu0 0.0
        %3266 = vmatprep.subr.mxu0 0.0
        %3267 = vmatpush1.msra.mxu0 0.0
        %3268 = vmatprep.subr.mxu0 0.0
        %3269 = vmatpush1.msra.mxu0 0.0
        %3270 = vmatprep.subr.mxu0 0.0
        %3271 = vmatpush1.msra.mxu0 0.0
        %3272 = vmatprep.subr.mxu0 0.0
        %3273 = vmatpush1.msra.mxu0 0.0
        %3274 = vmatprep.subr.mxu0 0.0
        %3275 = vmatpush1.msra.mxu0 0.0
        %3276 = vmatprep.mubr.f32.mxu0 0.0
        %3277 = vmatmul.mubr.f32.gmra.mrb[0].mxu0 %v3107
        %v3278 = vpop.f32.mrb[0].mxu0
        %v3279 = vadd.f32 0.0, %v3278
        %v3280 = vpop.f32.mrb[0].mxu0
        %3281 = vdwg.mxu0
        %3282 = vmatprep.subr.mxu0 0.0
        %3283 = vmatpush1.msra.mxu0 %v3179
        %3284 = vmatprep.subr.mxu0 0.0
        %3285 = vmatpush1.msra.mxu0 %v3180
        %3286 = vmatprep.subr.mxu0 0.0
        %3287 = vmatpush1.msra.mxu0 %v3181
        %3288 = vmatprep.subr.mxu0 0.0
        %3289 = vmatpush1.msra.mxu0 %v3182
        %3290 = vmatprep.subr.mxu0 0.0
        %3291 = vmatpush1.msra.mxu0 %v3183
        %3292 = vmatprep.subr.mxu0 0.0
        %3293 = vmatpush1.msra.mxu0 %v3184
        %3294 = vmatprep.subr.mxu0 0.0
        %3295 = vmatpush1.msra.mxu0 %v3185
        %3296 = vmatprep.subr.mxu0 0.0
        %3297 = vmatpush1.msra.mxu0 %v3186
        %3298 = vmatprep.subr.mxu0 0.0
        %3299 = vmatpush1.msra.mxu0 %v3187
        %3300 = vmatprep.subr.mxu0 0.0
        %3301 = vmatpush1.msra.mxu0 %v3188
        %3302 = vmatprep.subr.mxu0 0.0
        %3303 = vmatpush1.msra.mxu0 %v3189
        %3304 = vmatprep.subr.mxu0 0.0
        %3305 = vmatpush1.msra.mxu0 %v3190
        %3306 = vmatprep.subr.mxu0 0.0
        %3307 = vmatpush1.msra.mxu0 %v3191
        %3308 = vmatprep.subr.mxu0 0.0
        %3309 = vmatpush1.msra.mxu0 %v3192
        %3310 = vmatprep.subr.mxu0 0.0
        %3311 = vmatpush1.msra.mxu0 %v3193
        %3312 = vmatprep.subr.mxu0 0.0
        %3313 = vmatpush1.msra.mxu0 %v3194
        %3314 = vmatprep.subr.mxu0 0.0
        %3315 = vmatpush1.msra.mxu0 0.0
        %3316 = vmatprep.subr.mxu0 0.0
        %3317 = vmatpush1.msra.mxu0 0.0
        %3318 = vmatprep.subr.mxu0 0.0
        %3319 = vmatpush1.msra.mxu0 0.0
        %3320 = vmatprep.subr.mxu0 0.0
        %3321 = vmatpush1.msra.mxu0 0.0
        %3322 = vmatprep.subr.mxu0 0.0
        %3323 = vmatpush1.msra.mxu0 0.0
        %3324 = vmatprep.subr.mxu0 0.0
        %3325 = vmatpush1.msra.mxu0 0.0
        %3326 = vmatprep.subr.mxu0 0.0
        %3327 = vmatpush1.msra.mxu0 0.0
        %3328 = vmatprep.subr.mxu0 0.0
        %3329 = vmatpush1.msra.mxu0 0.0
        %3330 = vmatprep.subr.mxu0 0.0
        %3331 = vmatpush1.msra.mxu0 0.0
        %3332 = vmatprep.subr.mxu0 0.0
        %3333 = vmatpush1.msra.mxu0 0.0
        %3334 = vmatprep.subr.mxu0 0.0
        %3335 = vmatpush1.msra.mxu0 0.0
        %3336 = vmatprep.subr.mxu0 0.0
        %3337 = vmatpush1.msra.mxu0 0.0
        %3338 = vmatprep.subr.mxu0 0.0
        %3339 = vmatpush1.msra.mxu0 0.0
        %3340 = vmatprep.subr.mxu0 0.0
        %3341 = vmatpush1.msra.mxu0 0.0
        %3342 = vmatprep.subr.mxu0 0.0
        %3343 = vmatpush1.msra.mxu0 0.0
        %3344 = vmatprep.subr.mxu0 0.0
        %3345 = vmatpush1.msra.mxu0 0.0
        %3346 = vmatprep.mubr.f32.mxu0 0.0
        %3347 = vmatmul.mubr.f32.gmra.mrb[0].mxu0 %v3175
        %v3348 = vpop.f32.mrb[0].mxu0
        %v3349 = vadd.f32 %v3279, %v3348
        %v3350 = vpop.f32.mrb[0].mxu0
        %3351 = vdwg.mxu0
        %3352 = vmatprep.subr.mxu0 0.0
        %3353 = vmatpush1.msra.mxu0 %v3107
        %3354 = vmatprep.subr.mxu0 0.0
        %3355 = vmatpush1.msra.mxu0 0.0
        %3356 = vmatprep.subr.mxu0 0.0
        %3357 = vmatpush1.msra.mxu0 0.0
        %3358 = vmatprep.subr.mxu0 0.0
        %3359 = vmatpush1.msra.mxu0 0.0
        %3360 = vmatprep.subr.mxu0 0.0
        %3361 = vmatpush1.msra.mxu0 0.0
        %3362 = vmatprep.subr.mxu0 0.0
        %3363 = vmatpush1.msra.mxu0 0.0
        %3364 = vmatprep.subr.mxu0 0.0
        %3365 = vmatpush1.msra.mxu0 0.0
        %3366 = vmatprep.subr.mxu0 0.0
        %3367 = vmatpush1.msra.mxu0 0.0
        %3368 = vmatprep.subr.mxu0 0.0
        %3369 = vmatpush1.msra.mxu0 0.0
        %3370 = vmatprep.subr.mxu0 0.0
        %3371 = vmatpush1.msra.mxu0 0.0
        %3372 = vmatprep.subr.mxu0 0.0
        %3373 = vmatpush1.msra.mxu0 0.0
        %3374 = vmatprep.subr.mxu0 0.0
        %3375 = vmatpush1.msra.mxu0 0.0
        %3376 = vmatprep.subr.mxu0 0.0
        %3377 = vmatpush1.msra.mxu0 0.0
        %3378 = vmatprep.subr.mxu0 0.0
        %3379 = vmatpush1.msra.mxu0 0.0
        %3380 = vmatprep.subr.mxu0 0.0
        %3381 = vmatpush1.msra.mxu0 0.0
        %3382 = vmatprep.subr.mxu0 0.0
        %3383 = vmatpush1.msra.mxu0 0.0
        %3384 = vmatprep.subr.mxu0 0.0
        %3385 = vmatpush1.msra.mxu0 0.0
        %3386 = vmatprep.subr.mxu0 0.0
        %3387 = vmatpush1.msra.mxu0 0.0
        %3388 = vmatprep.subr.mxu0 0.0
        %3389 = vmatpush1.msra.mxu0 0.0
        %3390 = vmatprep.subr.mxu0 0.0
        %3391 = vmatpush1.msra.mxu0 0.0
        %3392 = vmatprep.subr.mxu0 0.0
        %3393 = vmatpush1.msra.mxu0 0.0
        %3394 = vmatprep.subr.mxu0 0.0
        %3395 = vmatpush1.msra.mxu0 0.0
        %3396 = vmatprep.subr.mxu0 0.0
        %3397 = vmatpush1.msra.mxu0 0.0
        %3398 = vmatprep.subr.mxu0 0.0
        %3399 = vmatpush1.msra.mxu0 0.0
        %3400 = vmatprep.subr.mxu0 0.0
        %3401 = vmatpush1.msra.mxu0 0.0
        %3402 = vmatprep.subr.mxu0 0.0
        %3403 = vmatpush1.msra.mxu0 0.0
        %3404 = vmatprep.subr.mxu0 0.0
        %3405 = vmatpush1.msra.mxu0 0.0
        %3406 = vmatprep.subr.mxu0 0.0
        %3407 = vmatpush1.msra.mxu0 0.0
        %3408 = vmatprep.subr.mxu0 0.0
        %3409 = vmatpush1.msra.mxu0 0.0
        %3410 = vmatprep.subr.mxu0 0.0
        %3411 = vmatpush1.msra.mxu0 0.0
        %3412 = vmatprep.subr.mxu0 0.0
        %3413 = vmatpush1.msra.mxu0 0.0
        %3414 = vmatprep.subr.mxu0 0.0
        %3415 = vmatpush1.msra.mxu0 0.0
        %3416 = vmatprep.mubr.f32.mxu0 0.0
        %3417 = vmatmul.mubr.f32.gmra.mrb[0].mxu0 %v996
        %v3418 = vpop.f32.mrb[0].mxu0
        %v3419 = vadd.f32 0.0, %v3418
        %v3420 = vpop.f32.mrb[0].mxu0
        %3421 = vdwg.mxu0
        %s3422 = scalar_lea.vmem [#allocation7], 2688
        %v3423 = vld [vmem:[%s3422] sm:$0xff]
        %v3424 = vld [vmem:[%s3422 + $0x8] sm:$0xff]
        %v3425 = vld [vmem:[%s3422 + $0x10] sm:$0xff]
        %v3426 = vld [vmem:[%s3422 + $0x18] sm:$0xff]
        %v3427 = vld [vmem:[%s3422 + $0x20] sm:$0xff]
        %v3428 = vld [vmem:[%s3422 + $0x28] sm:$0xff]
        %v3429 = vld [vmem:[%s3422 + $0x30] sm:$0xff]
        %v3430 = vld [vmem:[%s3422 + $0x38] sm:$0xff]
        %v3431 = vld [vmem:[%s3422 + $0x40] sm:$0xff]
        %v3432 = vld [vmem:[%s3422 + $0x48] sm:$0xff]
        %v3433 = vld [vmem:[%s3422 + $0x50] sm:$0xff]
        %v3434 = vld [vmem:[%s3422 + $0x58] sm:$0xff]
        %v3435 = vld [vmem:[%s3422 + $0x60] sm:$0xff]
        %v3436 = vld [vmem:[%s3422 + $0x68] sm:$0xff]
        %v3437 = vld [vmem:[%s3422 + $0x70] sm:$0xff]
        %v3438 = vld [vmem:[%s3422 + $0x78] sm:$0xff]
        %3439 = vmatprep.subr.mxu0 0.0
        %3440 = vmatpush1.msra.mxu0 %v3423
        %3441 = vmatprep.subr.mxu0 0.0
        %3442 = vmatpush1.msra.mxu0 %v3424
        %3443 = vmatprep.subr.mxu0 0.0
        %3444 = vmatpush1.msra.mxu0 %v3425
        %3445 = vmatprep.subr.mxu0 0.0
        %3446 = vmatpush1.msra.mxu0 %v3426
        %3447 = vmatprep.subr.mxu0 0.0
        %3448 = vmatpush1.msra.mxu0 %v3427
        %3449 = vmatprep.subr.mxu0 0.0
        %3450 = vmatpush1.msra.mxu0 %v3428
        %3451 = vmatprep.subr.mxu0 0.0
        %3452 = vmatpush1.msra.mxu0 %v3429
        %3453 = vmatprep.subr.mxu0 0.0
        %3454 = vmatpush1.msra.mxu0 %v3430
        %3455 = vmatprep.subr.mxu0 0.0
        %3456 = vmatpush1.msra.mxu0 %v3431
        %3457 = vmatprep.subr.mxu0 0.0
        %3458 = vmatpush1.msra.mxu0 %v3432
        %3459 = vmatprep.subr.mxu0 0.0
        %3460 = vmatpush1.msra.mxu0 %v3433
        %3461 = vmatprep.subr.mxu0 0.0
        %3462 = vmatpush1.msra.mxu0 %v3434
        %3463 = vmatprep.subr.mxu0 0.0
        %3464 = vmatpush1.msra.mxu0 %v3435
        %3465 = vmatprep.subr.mxu0 0.0
        %3466 = vmatpush1.msra.mxu0 %v3436
        %3467 = vmatprep.subr.mxu0 0.0
        %3468 = vmatpush1.msra.mxu0 %v3437
        %3469 = vmatprep.subr.mxu0 0.0
        %3470 = vmatpush1.msra.mxu0 %v3438
        %3471 = vmatprep.subr.mxu0 0.0
        %3472 = vmatpush1.msra.mxu0 0.0
        %3473 = vmatprep.subr.mxu0 0.0
        %3474 = vmatpush1.msra.mxu0 0.0
        %3475 = vmatprep.subr.mxu0 0.0
        %3476 = vmatpush1.msra.mxu0 0.0
        %3477 = vmatprep.subr.mxu0 0.0
        %3478 = vmatpush1.msra.mxu0 0.0
        %3479 = vmatprep.subr.mxu0 0.0
        %3480 = vmatpush1.msra.mxu0 0.0
        %3481 = vmatprep.subr.mxu0 0.0
        %3482 = vmatpush1.msra.mxu0 0.0
        %3483 = vmatprep.subr.mxu0 0.0
        %3484 = vmatpush1.msra.mxu0 0.0
        %3485 = vmatprep.subr.mxu0 0.0
        %3486 = vmatpush1.msra.mxu0 0.0
        %3487 = vmatprep.subr.mxu0 0.0
        %3488 = vmatpush1.msra.mxu0 0.0
        %3489 = vmatprep.subr.mxu0 0.0
        %3490 = vmatpush1.msra.mxu0 0.0
        %3491 = vmatprep.subr.mxu0 0.0
        %3492 = vmatpush1.msra.mxu0 0.0
        %3493 = vmatprep.subr.mxu0 0.0
        %3494 = vmatpush1.msra.mxu0 0.0
        %3495 = vmatprep.subr.mxu0 0.0
        %3496 = vmatpush1.msra.mxu0 0.0
        %3497 = vmatprep.subr.mxu0 0.0
        %3498 = vmatpush1.msra.mxu0 0.0
        %3499 = vmatprep.subr.mxu0 0.0
        %3500 = vmatpush1.msra.mxu0 0.0
        %3501 = vmatprep.subr.mxu0 0.0
        %3502 = vmatpush1.msra.mxu0 0.0
        %3503 = vmatprep.mubr.f32.mxu0 0.0
        %3504 = vmatmul.mubr.f32.gmra.mrb[0].mxu0 %v3419
        %v3505 = vpop.f32.mrb[0].mxu0
        %v3506 = vadd.f32 0.0, %v3505
        %v3507 = vpop.f32.mrb[0].mxu0
        %3508 = vdwg.mxu0
        %v3509 = vadd.f32 %v3349, %v3506
        %v3510 = vadd.f32 %v488, %v3509
        %v3511 = vmax.f32 %v2844, 0.0
        %3512 = vmatprep.subr.mxu0 0.0
        %3513 = vmatpush1.msra.mxu0 %v3511
        %3514 = vmatprep.subr.mxu0 0.0
        %3515 = vmatpush1.msra.mxu0 0.0
        %3516 = vmatprep.subr.mxu0 0.0
        %3517 = vmatpush1.msra.mxu0 0.0
        %3518 = vmatprep.subr.mxu0 0.0
        %3519 = vmatpush1.msra.mxu0 0.0
        %3520 = vmatprep.subr.mxu0 0.0
        %3521 = vmatpush1.msra.mxu0 0.0
        %3522 = vmatprep.subr.mxu0 0.0
        %3523 = vmatpush1.msra.mxu0 0.0
        %3524 = vmatprep.subr.mxu0 0.0
        %3525 = vmatpush1.msra.mxu0 0.0
        %3526 = vmatprep.subr.mxu0 0.0
        %3527 = vmatpush1.msra.mxu0 0.0
        %3528 = vmatprep.subr.mxu0 0.0
        %3529 = vmatpush1.msra.mxu0 0.0
        %3530 = vmatprep.subr.mxu0 0.0
        %3531 = vmatpush1.msra.mxu0 0.0
        %3532 = vmatprep.subr.mxu0 0.0
        %3533 = vmatpush1.msra.mxu0 0.0
        %3534 = vmatprep.subr.mxu0 0.0
        %3535 = vmatpush1.msra.mxu0 0.0
        %3536 = vmatprep.subr.mxu0 0.0
        %3537 = vmatpush1.msra.mxu0 0.0
        %3538 = vmatprep.subr.mxu0 0.0
        %3539 = vmatpush1.msra.mxu0 0.0
        %3540 = vmatprep.subr.mxu0 0.0
        %3541 = vmatpush1.msra.mxu0 0.0
        %3542 = vmatprep.subr.mxu0 0.0
        %3543 = vmatpush1.msra.mxu0 0.0
        %3544 = vmatprep.subr.mxu0 0.0
        %3545 = vmatpush1.msra.mxu0 0.0
        %3546 = vmatprep.subr.mxu0 0.0
        %3547 = vmatpush1.msra.mxu0 0.0
        %3548 = vmatprep.subr.mxu0 0.0
        %3549 = vmatpush1.msra.mxu0 0.0
        %3550 = vmatprep.subr.mxu0 0.0
        %3551 = vmatpush1.msra.mxu0 0.0
        %3552 = vmatprep.subr.mxu0 0.0
        %3553 = vmatpush1.msra.mxu0 0.0
        %3554 = vmatprep.subr.mxu0 0.0
        %3555 = vmatpush1.msra.mxu0 0.0
        %3556 = vmatprep.subr.mxu0 0.0
        %3557 = vmatpush1.msra.mxu0 0.0
        %3558 = vmatprep.subr.mxu0 0.0
        %3559 = vmatpush1.msra.mxu0 0.0
        %3560 = vmatprep.subr.mxu0 0.0
        %3561 = vmatpush1.msra.mxu0 0.0
        %3562 = vmatprep.subr.mxu0 0.0
        %3563 = vmatpush1.msra.mxu0 0.0
        %3564 = vmatprep.subr.mxu0 0.0
        %3565 = vmatpush1.msra.mxu0 0.0
        %3566 = vmatprep.subr.mxu0 0.0
        %3567 = vmatpush1.msra.mxu0 0.0
        %3568 = vmatprep.subr.mxu0 0.0
        %3569 = vmatpush1.msra.mxu0 0.0
        %3570 = vmatprep.subr.mxu0 0.0
        %3571 = vmatpush1.msra.mxu0 0.0
        %3572 = vmatprep.subr.mxu0 0.0
        %3573 = vmatpush1.msra.mxu0 0.0
        %3574 = vmatprep.subr.mxu0 0.0
        %3575 = vmatpush1.msra.mxu0 0.0
        %3576 = vmatprep.mubr.f32.mxu0 0.0
        %3577 = vmatmul.mubr.f32.gmra.mrb[0].mxu0 %v676
        %v3578 = vpop.f32.mrb[0].mxu0
        %v3579 = vadd.f32 0.0, %v3578
        %v3580 = vpop.f32.mrb[0].mxu0
        %3581 = vdwg.mxu0
        %s3582 = scalar_lea.vmem [#allocation7], 2816
        %v3583 = vld [vmem:[%s3582] sm:$0xff]
        %v3584 = vld [vmem:[%s3582 + $0x8] sm:$0xff]
        %v3585 = vld [vmem:[%s3582 + $0x10] sm:$0xff]
        %v3586 = vld [vmem:[%s3582 + $0x18] sm:$0xff]
        %v3587 = vld [vmem:[%s3582 + $0x20] sm:$0xff]
        %v3588 = vld [vmem:[%s3582 + $0x28] sm:$0xff]
        %v3589 = vld [vmem:[%s3582 + $0x30] sm:$0xff]
        %v3590 = vld [vmem:[%s3582 + $0x38] sm:$0xff]
        %v3591 = vld [vmem:[%s3582 + $0x40] sm:$0xff]
        %v3592 = vld [vmem:[%s3582 + $0x48] sm:$0xff]
        %v3593 = vld [vmem:[%s3582 + $0x50] sm:$0xff]
        %v3594 = vld [vmem:[%s3582 + $0x58] sm:$0xff]
        %v3595 = vld [vmem:[%s3582 + $0x60] sm:$0xff]
        %v3596 = vld [vmem:[%s3582 + $0x68] sm:$0xff]
        %v3597 = vld [vmem:[%s3582 + $0x70] sm:$0xff]
        %v3598 = vld [vmem:[%s3582 + $0x78] sm:$0xff]
        %s3599 = scalar_lea.vmem [#allocation7], 2944
        %v3600 = vld [vmem:[%s3599] sm:$0xff]
        %v3601 = vld [vmem:[%s3599 + $0x8] sm:$0xff]
        %v3602 = vld [vmem:[%s3599 + $0x10] sm:$0xff]
        %v3603 = vld [vmem:[%s3599 + $0x18] sm:$0xff]
        %v3604 = vld [vmem:[%s3599 + $0x20] sm:$0xff]
        %v3605 = vld [vmem:[%s3599 + $0x28] sm:$0xff]
        %v3606 = vld [vmem:[%s3599 + $0x30] sm:$0xff]
        %v3607 = vld [vmem:[%s3599 + $0x38] sm:$0xff]
        %v3608 = vld [vmem:[%s3599 + $0x40] sm:$0xff]
        %v3609 = vld [vmem:[%s3599 + $0x48] sm:$0xff]
        %v3610 = vld [vmem:[%s3599 + $0x50] sm:$0xff]
        %v3611 = vld [vmem:[%s3599 + $0x58] sm:$0xff]
        %v3612 = vld [vmem:[%s3599 + $0x60] sm:$0xff]
        %v3613 = vld [vmem:[%s3599 + $0x68] sm:$0xff]
        %v3614 = vld [vmem:[%s3599 + $0x70] sm:$0xff]
        %v3615 = vld [vmem:[%s3599 + $0x78] sm:$0xff]
        %3616 = vmatprep.subr.mxu0 0.0
        %3617 = vmatpush1.msra.mxu0 %v3600
        %3618 = vmatprep.subr.mxu0 0.0
        %3619 = vmatpush1.msra.mxu0 %v3601
        %3620 = vmatprep.subr.mxu0 0.0
        %3621 = vmatpush1.msra.mxu0 %v3602
        %3622 = vmatprep.subr.mxu0 0.0
        %3623 = vmatpush1.msra.mxu0 %v3603
        %3624 = vmatprep.subr.mxu0 0.0
        %3625 = vmatpush1.msra.mxu0 %v3604
        %3626 = vmatprep.subr.mxu0 0.0
        %3627 = vmatpush1.msra.mxu0 %v3605
        %3628 = vmatprep.subr.mxu0 0.0
        %3629 = vmatpush1.msra.mxu0 %v3606
        %3630 = vmatprep.subr.mxu0 0.0
        %3631 = vmatpush1.msra.mxu0 %v3607
        %3632 = vmatprep.subr.mxu0 0.0
        %3633 = vmatpush1.msra.mxu0 %v3608
        %3634 = vmatprep.subr.mxu0 0.0
        %3635 = vmatpush1.msra.mxu0 %v3609
        %3636 = vmatprep.subr.mxu0 0.0
        %3637 = vmatpush1.msra.mxu0 %v3610
        %3638 = vmatprep.subr.mxu0 0.0
        %3639 = vmatpush1.msra.mxu0 %v3611
        %3640 = vmatprep.subr.mxu0 0.0
        %3641 = vmatpush1.msra.mxu0 %v3612
        %3642 = vmatprep.subr.mxu0 0.0
        %3643 = vmatpush1.msra.mxu0 %v3613
        %3644 = vmatprep.subr.mxu0 0.0
        %3645 = vmatpush1.msra.mxu0 %v3614
        %3646 = vmatprep.subr.mxu0 0.0
        %3647 = vmatpush1.msra.mxu0 %v3615
        %3648 = vmatprep.subr.mxu0 0.0
        %3649 = vmatpush1.msra.mxu0 0.0
        %3650 = vmatprep.subr.mxu0 0.0
        %3651 = vmatpush1.msra.mxu0 0.0
        %3652 = vmatprep.subr.mxu0 0.0
        %3653 = vmatpush1.msra.mxu0 0.0
        %3654 = vmatprep.subr.mxu0 0.0
        %3655 = vmatpush1.msra.mxu0 0.0
        %3656 = vmatprep.subr.mxu0 0.0
        %3657 = vmatpush1.msra.mxu0 0.0
        %3658 = vmatprep.subr.mxu0 0.0
        %3659 = vmatpush1.msra.mxu0 0.0
        %3660 = vmatprep.subr.mxu0 0.0
        %3661 = vmatpush1.msra.mxu0 0.0
        %3662 = vmatprep.subr.mxu0 0.0
        %3663 = vmatpush1.msra.mxu0 0.0
        %3664 = vmatprep.subr.mxu0 0.0
        %3665 = vmatpush1.msra.mxu0 0.0
        %3666 = vmatprep.subr.mxu0 0.0
        %3667 = vmatpush1.msra.mxu0 0.0
        %3668 = vmatprep.subr.mxu0 0.0
        %3669 = vmatpush1.msra.mxu0 0.0
        %3670 = vmatprep.subr.mxu0 0.0
        %3671 = vmatpush1.msra.mxu0 0.0
        %3672 = vmatprep.subr.mxu0 0.0
        %3673 = vmatpush1.msra.mxu0 0.0
        %3674 = vmatprep.subr.mxu0 0.0
        %3675 = vmatpush1.msra.mxu0 0.0
        %3676 = vmatprep.subr.mxu0 0.0
        %3677 = vmatpush1.msra.mxu0 0.0
        %3678 = vmatprep.subr.mxu0 0.0
        %3679 = vmatpush1.msra.mxu0 0.0
        %3680 = vmatprep.mubr.f32.mxu0 0.0
        %3681 = vmatmul.mubr.f32.gmra.mrb[0].mxu0 %v3511
        %v3682 = vpop.f32.mrb[0].mxu0
        %v3683 = vadd.f32 0.0, %v3682
        %v3684 = vpop.f32.mrb[0].mxu0
        %3685 = vdwg.mxu0
        %3686 = vmatprep.subr.mxu0 0.0
        %3687 = vmatpush1.msra.mxu0 %v3583
        %3688 = vmatprep.subr.mxu0 0.0
        %3689 = vmatpush1.msra.mxu0 %v3584
        %3690 = vmatprep.subr.mxu0 0.0
        %3691 = vmatpush1.msra.mxu0 %v3585
        %3692 = vmatprep.subr.mxu0 0.0
        %3693 = vmatpush1.msra.mxu0 %v3586
        %3694 = vmatprep.subr.mxu0 0.0
        %3695 = vmatpush1.msra.mxu0 %v3587
        %3696 = vmatprep.subr.mxu0 0.0
        %3697 = vmatpush1.msra.mxu0 %v3588
        %3698 = vmatprep.subr.mxu0 0.0
        %3699 = vmatpush1.msra.mxu0 %v3589
        %3700 = vmatprep.subr.mxu0 0.0
        %3701 = vmatpush1.msra.mxu0 %v3590
        %3702 = vmatprep.subr.mxu0 0.0
        %3703 = vmatpush1.msra.mxu0 %v3591
        %3704 = vmatprep.subr.mxu0 0.0
        %3705 = vmatpush1.msra.mxu0 %v3592
        %3706 = vmatprep.subr.mxu0 0.0
        %3707 = vmatpush1.msra.mxu0 %v3593
        %3708 = vmatprep.subr.mxu0 0.0
        %3709 = vmatpush1.msra.mxu0 %v3594
        %3710 = vmatprep.subr.mxu0 0.0
        %3711 = vmatpush1.msra.mxu0 %v3595
        %3712 = vmatprep.subr.mxu0 0.0
        %3713 = vmatpush1.msra.mxu0 %v3596
        %3714 = vmatprep.subr.mxu0 0.0
        %3715 = vmatpush1.msra.mxu0 %v3597
        %3716 = vmatprep.subr.mxu0 0.0
        %3717 = vmatpush1.msra.mxu0 %v3598
        %3718 = vmatprep.subr.mxu0 0.0
        %3719 = vmatpush1.msra.mxu0 0.0
        %3720 = vmatprep.subr.mxu0 0.0
        %3721 = vmatpush1.msra.mxu0 0.0
        %3722 = vmatprep.subr.mxu0 0.0
        %3723 = vmatpush1.msra.mxu0 0.0
        %3724 = vmatprep.subr.mxu0 0.0
        %3725 = vmatpush1.msra.mxu0 0.0
        %3726 = vmatprep.subr.mxu0 0.0
        %3727 = vmatpush1.msra.mxu0 0.0
        %3728 = vmatprep.subr.mxu0 0.0
        %3729 = vmatpush1.msra.mxu0 0.0
        %3730 = vmatprep.subr.mxu0 0.0
        %3731 = vmatpush1.msra.mxu0 0.0
        %3732 = vmatprep.subr.mxu0 0.0
        %3733 = vmatpush1.msra.mxu0 0.0
        %3734 = vmatprep.subr.mxu0 0.0
        %3735 = vmatpush1.msra.mxu0 0.0
        %3736 = vmatprep.subr.mxu0 0.0
        %3737 = vmatpush1.msra.mxu0 0.0
        %3738 = vmatprep.subr.mxu0 0.0
        %3739 = vmatpush1.msra.mxu0 0.0
        %3740 = vmatprep.subr.mxu0 0.0
        %3741 = vmatpush1.msra.mxu0 0.0
        %3742 = vmatprep.subr.mxu0 0.0
        %3743 = vmatpush1.msra.mxu0 0.0
        %3744 = vmatprep.subr.mxu0 0.0
        %3745 = vmatpush1.msra.mxu0 0.0
        %3746 = vmatprep.subr.mxu0 0.0
        %3747 = vmatpush1.msra.mxu0 0.0
        %3748 = vmatprep.subr.mxu0 0.0
        %3749 = vmatpush1.msra.mxu0 0.0
        %3750 = vmatprep.mubr.f32.mxu0 0.0
        %3751 = vmatmul.mubr.f32.gmra.mrb[0].mxu0 %v3579
        %v3752 = vpop.f32.mrb[0].mxu0
        %v3753 = vadd.f32 %v3683, %v3752
        %v3754 = vpop.f32.mrb[0].mxu0
        %3755 = vdwg.mxu0
        %3756 = vmatprep.subr.mxu0 0.0
        %3757 = vmatpush1.msra.mxu0 %v3511
        %3758 = vmatprep.subr.mxu0 0.0
        %3759 = vmatpush1.msra.mxu0 0.0
        %3760 = vmatprep.subr.mxu0 0.0
        %3761 = vmatpush1.msra.mxu0 0.0
        %3762 = vmatprep.subr.mxu0 0.0
        %3763 = vmatpush1.msra.mxu0 0.0
        %3764 = vmatprep.subr.mxu0 0.0
        %3765 = vmatpush1.msra.mxu0 0.0
        %3766 = vmatprep.subr.mxu0 0.0
        %3767 = vmatpush1.msra.mxu0 0.0
        %3768 = vmatprep.subr.mxu0 0.0
        %3769 = vmatpush1.msra.mxu0 0.0
        %3770 = vmatprep.subr.mxu0 0.0
        %3771 = vmatpush1.msra.mxu0 0.0
        %3772 = vmatprep.subr.mxu0 0.0
        %3773 = vmatpush1.msra.mxu0 0.0
        %3774 = vmatprep.subr.mxu0 0.0
        %3775 = vmatpush1.msra.mxu0 0.0
        %3776 = vmatprep.subr.mxu0 0.0
        %3777 = vmatpush1.msra.mxu0 0.0
        %3778 = vmatprep.subr.mxu0 0.0
        %3779 = vmatpush1.msra.mxu0 0.0
        %3780 = vmatprep.subr.mxu0 0.0
        %3781 = vmatpush1.msra.mxu0 0.0
        %3782 = vmatprep.subr.mxu0 0.0
        %3783 = vmatpush1.msra.mxu0 0.0
        %3784 = vmatprep.subr.mxu0 0.0
        %3785 = vmatpush1.msra.mxu0 0.0
        %3786 = vmatprep.subr.mxu0 0.0
        %3787 = vmatpush1.msra.mxu0 0.0
        %3788 = vmatprep.subr.mxu0 0.0
        %3789 = vmatpush1.msra.mxu0 0.0
        %3790 = vmatprep.subr.mxu0 0.0
        %3791 = vmatpush1.msra.mxu0 0.0
        %3792 = vmatprep.subr.mxu0 0.0
        %3793 = vmatpush1.msra.mxu0 0.0
        %3794 = vmatprep.subr.mxu0 0.0
        %3795 = vmatpush1.msra.mxu0 0.0
        %3796 = vmatprep.subr.mxu0 0.0
        %3797 = vmatpush1.msra.mxu0 0.0
        %3798 = vmatprep.subr.mxu0 0.0
        %3799 = vmatpush1.msra.mxu0 0.0
        %3800 = vmatprep.subr.mxu0 0.0
        %3801 = vmatpush1.msra.mxu0 0.0
        %3802 = vmatprep.subr.mxu0 0.0
        %3803 = vmatpush1.msra.mxu0 0.0
        %3804 = vmatprep.subr.mxu0 0.0
        %3805 = vmatpush1.msra.mxu0 0.0
        %3806 = vmatprep.subr.mxu0 0.0
        %3807 = vmatpush1.msra.mxu0 0.0
        %3808 = vmatprep.subr.mxu0 0.0
        %3809 = vmatpush1.msra.mxu0 0.0
        %3810 = vmatprep.subr.mxu0 0.0
        %3811 = vmatpush1.msra.mxu0 0.0
        %3812 = vmatprep.subr.mxu0 0.0
        %3813 = vmatpush1.msra.mxu0 0.0
        %3814 = vmatprep.subr.mxu0 0.0
        %3815 = vmatpush1.msra.mxu0 0.0
        %3816 = vmatprep.subr.mxu0 0.0
        %3817 = vmatpush1.msra.mxu0 0.0
        %3818 = vmatprep.subr.mxu0 0.0
        %3819 = vmatpush1.msra.mxu0 0.0
        %3820 = vmatprep.mubr.f32.mxu0 0.0
        %3821 = vmatmul.mubr.f32.gmra.mrb[0].mxu0 %v996
        %v3822 = vpop.f32.mrb[0].mxu0
        %v3823 = vadd.f32 0.0, %v3822
        %v3824 = vpop.f32.mrb[0].mxu0
        %3825 = vdwg.mxu0
        %s3826 = scalar_lea.vmem [#allocation7], 3072
        %v3827 = vld [vmem:[%s3826] sm:$0xff]
        %v3828 = vld [vmem:[%s3826 + $0x8] sm:$0xff]
        %v3829 = vld [vmem:[%s3826 + $0x10] sm:$0xff]
        %v3830 = vld [vmem:[%s3826 + $0x18] sm:$0xff]
        %v3831 = vld [vmem:[%s3826 + $0x20] sm:$0xff]
        %v3832 = vld [vmem:[%s3826 + $0x28] sm:$0xff]
        %v3833 = vld [vmem:[%s3826 + $0x30] sm:$0xff]
        %v3834 = vld [vmem:[%s3826 + $0x38] sm:$0xff]
        %v3835 = vld [vmem:[%s3826 + $0x40] sm:$0xff]
        %v3836 = vld [vmem:[%s3826 + $0x48] sm:$0xff]
        %v3837 = vld [vmem:[%s3826 + $0x50] sm:$0xff]
        %v3838 = vld [vmem:[%s3826 + $0x58] sm:$0xff]
        %v3839 = vld [vmem:[%s3826 + $0x60] sm:$0xff]
        %v3840 = vld [vmem:[%s3826 + $0x68] sm:$0xff]
        %v3841 = vld [vmem:[%s3826 + $0x70] sm:$0xff]
        %v3842 = vld [vmem:[%s3826 + $0x78] sm:$0xff]
        %3843 = vmatprep.subr.mxu0 0.0
        %3844 = vmatpush1.msra.mxu0 %v3827
        %3845 = vmatprep.subr.mxu0 0.0
        %3846 = vmatpush1.msra.mxu0 %v3828
        %3847 = vmatprep.subr.mxu0 0.0
        %3848 = vmatpush1.msra.mxu0 %v3829
        %3849 = vmatprep.subr.mxu0 0.0
        %3850 = vmatpush1.msra.mxu0 %v3830
        %3851 = vmatprep.subr.mxu0 0.0
        %3852 = vmatpush1.msra.mxu0 %v3831
        %3853 = vmatprep.subr.mxu0 0.0
        %3854 = vmatpush1.msra.mxu0 %v3832
        %3855 = vmatprep.subr.mxu0 0.0
        %3856 = vmatpush1.msra.mxu0 %v3833
        %3857 = vmatprep.subr.mxu0 0.0
        %3858 = vmatpush1.msra.mxu0 %v3834
        %3859 = vmatprep.subr.mxu0 0.0
        %3860 = vmatpush1.msra.mxu0 %v3835
        %3861 = vmatprep.subr.mxu0 0.0
        %3862 = vmatpush1.msra.mxu0 %v3836
        %3863 = vmatprep.subr.mxu0 0.0
        %3864 = vmatpush1.msra.mxu0 %v3837
        %3865 = vmatprep.subr.mxu0 0.0
        %3866 = vmatpush1.msra.mxu0 %v3838
        %3867 = vmatprep.subr.mxu0 0.0
        %3868 = vmatpush1.msra.mxu0 %v3839
        %3869 = vmatprep.subr.mxu0 0.0
        %3870 = vmatpush1.msra.mxu0 %v3840
        %3871 = vmatprep.subr.mxu0 0.0
        %3872 = vmatpush1.msra.mxu0 %v3841
        %3873 = vmatprep.subr.mxu0 0.0
        %3874 = vmatpush1.msra.mxu0 %v3842
        %3875 = vmatprep.subr.mxu0 0.0
        %3876 = vmatpush1.msra.mxu0 0.0
        %3877 = vmatprep.subr.mxu0 0.0
        %3878 = vmatpush1.msra.mxu0 0.0
        %3879 = vmatprep.subr.mxu0 0.0
        %3880 = vmatpush1.msra.mxu0 0.0
        %3881 = vmatprep.subr.mxu0 0.0
        %3882 = vmatpush1.msra.mxu0 0.0
        %3883 = vmatprep.subr.mxu0 0.0
        %3884 = vmatpush1.msra.mxu0 0.0
        %3885 = vmatprep.subr.mxu0 0.0
        %3886 = vmatpush1.msra.mxu0 0.0
        %3887 = vmatprep.subr.mxu0 0.0
        %3888 = vmatpush1.msra.mxu0 0.0
        %3889 = vmatprep.subr.mxu0 0.0
        %3890 = vmatpush1.msra.mxu0 0.0
        %3891 = vmatprep.subr.mxu0 0.0
        %3892 = vmatpush1.msra.mxu0 0.0
        %3893 = vmatprep.subr.mxu0 0.0
        %3894 = vmatpush1.msra.mxu0 0.0
        %3895 = vmatprep.subr.mxu0 0.0
        %3896 = vmatpush1.msra.mxu0 0.0
        %3897 = vmatprep.subr.mxu0 0.0
        %3898 = vmatpush1.msra.mxu0 0.0
        %3899 = vmatprep.subr.mxu0 0.0
        %3900 = vmatpush1.msra.mxu0 0.0
        %3901 = vmatprep.subr.mxu0 0.0
        %3902 = vmatpush1.msra.mxu0 0.0
        %3903 = vmatprep.subr.mxu0 0.0
        %3904 = vmatpush1.msra.mxu0 0.0
        %3905 = vmatprep.subr.mxu0 0.0
        %3906 = vmatpush1.msra.mxu0 0.0
        %3907 = vmatprep.mubr.f32.mxu0 0.0
        %3908 = vmatmul.mubr.f32.gmra.mrb[0].mxu0 %v3823
        %v3909 = vpop.f32.mrb[0].mxu0
        %v3910 = vadd.f32 0.0, %v3909
        %v3911 = vpop.f32.mrb[0].mxu0
        %3912 = vdwg.mxu0
        %v3913 = vadd.f32 %v3753, %v3910
        %v3914 = vmax.f32 %v3913, 0.0
        %3915 = vmatprep.subr.mxu0 0.0
        %3916 = vmatpush1.msra.mxu0 %v3914
        %3917 = vmatprep.subr.mxu0 0.0
        %3918 = vmatpush1.msra.mxu0 0.0
        %3919 = vmatprep.subr.mxu0 0.0
        %3920 = vmatpush1.msra.mxu0 0.0
        %3921 = vmatprep.subr.mxu0 0.0
        %3922 = vmatpush1.msra.mxu0 0.0
        %3923 = vmatprep.subr.mxu0 0.0
        %3924 = vmatpush1.msra.mxu0 0.0
        %3925 = vmatprep.subr.mxu0 0.0
        %3926 = vmatpush1.msra.mxu0 0.0
        %3927 = vmatprep.subr.mxu0 0.0
        %3928 = vmatpush1.msra.mxu0 0.0
        %3929 = vmatprep.subr.mxu0 0.0
        %3930 = vmatpush1.msra.mxu0 0.0
        %3931 = vmatprep.subr.mxu0 0.0
        %3932 = vmatpush1.msra.mxu0 0.0
        %3933 = vmatprep.subr.mxu0 0.0
        %3934 = vmatpush1.msra.mxu0 0.0
        %3935 = vmatprep.subr.mxu0 0.0
        %3936 = vmatpush1.msra.mxu0 0.0
        %3937 = vmatprep.subr.mxu0 0.0
        %3938 = vmatpush1.msra.mxu0 0.0
        %3939 = vmatprep.subr.mxu0 0.0
        %3940 = vmatpush1.msra.mxu0 0.0
        %3941 = vmatprep.subr.mxu0 0.0
        %3942 = vmatpush1.msra.mxu0 0.0
        %3943 = vmatprep.subr.mxu0 0.0
        %3944 = vmatpush1.msra.mxu0 0.0
        %3945 = vmatprep.subr.mxu0 0.0
        %3946 = vmatpush1.msra.mxu0 0.0
        %3947 = vmatprep.subr.mxu0 0.0
        %3948 = vmatpush1.msra.mxu0 0.0
        %3949 = vmatprep.subr.mxu0 0.0
        %3950 = vmatpush1.msra.mxu0 0.0
        %3951 = vmatprep.subr.mxu0 0.0
        %3952 = vmatpush1.msra.mxu0 0.0
        %3953 = vmatprep.subr.mxu0 0.0
        %3954 = vmatpush1.msra.mxu0 0.0
        %3955 = vmatprep.subr.mxu0 0.0
        %3956 = vmatpush1.msra.mxu0 0.0
        %3957 = vmatprep.subr.mxu0 0.0
        %3958 = vmatpush1.msra.mxu0 0.0
        %3959 = vmatprep.subr.mxu0 0.0
        %3960 = vmatpush1.msra.mxu0 0.0
        %3961 = vmatprep.subr.mxu0 0.0
        %3962 = vmatpush1.msra.mxu0 0.0
        %3963 = vmatprep.subr.mxu0 0.0
        %3964 = vmatpush1.msra.mxu0 0.0
        %3965 = vmatprep.subr.mxu0 0.0
        %3966 = vmatpush1.msra.mxu0 0.0
        %3967 = vmatprep.subr.mxu0 0.0
        %3968 = vmatpush1.msra.mxu0 0.0
        %3969 = vmatprep.subr.mxu0 0.0
        %3970 = vmatpush1.msra.mxu0 0.0
        %3971 = vmatprep.subr.mxu0 0.0
        %3972 = vmatpush1.msra.mxu0 0.0
        %3973 = vmatprep.subr.mxu0 0.0
        %3974 = vmatpush1.msra.mxu0 0.0
        %3975 = vmatprep.subr.mxu0 0.0
        %3976 = vmatpush1.msra.mxu0 0.0
        %3977 = vmatprep.subr.mxu0 0.0
        %3978 = vmatpush1.msra.mxu0 0.0
        %3979 = vmatprep.mubr.f32.mxu0 0.0
        %3980 = vmatmul.mubr.f32.gmra.mrb[0].mxu0 %v676
        %v3981 = vpop.f32.mrb[0].mxu0
        %v3982 = vadd.f32 0.0, %v3981
        %v3983 = vpop.f32.mrb[0].mxu0
        %3984 = vdwg.mxu0
        %s3985 = scalar_lea.vmem [#allocation7], 3200
        %v3986 = vld [vmem:[%s3985] sm:$0xff]
        %v3987 = vld [vmem:[%s3985 + $0x8] sm:$0xff]
        %v3988 = vld [vmem:[%s3985 + $0x10] sm:$0xff]
        %v3989 = vld [vmem:[%s3985 + $0x18] sm:$0xff]
        %v3990 = vld [vmem:[%s3985 + $0x20] sm:$0xff]
        %v3991 = vld [vmem:[%s3985 + $0x28] sm:$0xff]
        %v3992 = vld [vmem:[%s3985 + $0x30] sm:$0xff]
        %v3993 = vld [vmem:[%s3985 + $0x38] sm:$0xff]
        %v3994 = vld [vmem:[%s3985 + $0x40] sm:$0xff]
        %v3995 = vld [vmem:[%s3985 + $0x48] sm:$0xff]
        %v3996 = vld [vmem:[%s3985 + $0x50] sm:$0xff]
        %v3997 = vld [vmem:[%s3985 + $0x58] sm:$0xff]
        %v3998 = vld [vmem:[%s3985 + $0x60] sm:$0xff]
        %v3999 = vld [vmem:[%s3985 + $0x68] sm:$0xff]
        %v4000 = vld [vmem:[%s3985 + $0x70] sm:$0xff]
        %v4001 = vld [vmem:[%s3985 + $0x78] sm:$0xff]
        %s4002 = scalar_lea.vmem [#allocation7], 3328
        %v4003 = vld [vmem:[%s4002] sm:$0xff]
        %v4004 = vld [vmem:[%s4002 + $0x8] sm:$0xff]
        %v4005 = vld [vmem:[%s4002 + $0x10] sm:$0xff]
        %v4006 = vld [vmem:[%s4002 + $0x18] sm:$0xff]
        %v4007 = vld [vmem:[%s4002 + $0x20] sm:$0xff]
        %v4008 = vld [vmem:[%s4002 + $0x28] sm:$0xff]
        %v4009 = vld [vmem:[%s4002 + $0x30] sm:$0xff]
        %v4010 = vld [vmem:[%s4002 + $0x38] sm:$0xff]
        %v4011 = vld [vmem:[%s4002 + $0x40] sm:$0xff]
        %v4012 = vld [vmem:[%s4002 + $0x48] sm:$0xff]
        %v4013 = vld [vmem:[%s4002 + $0x50] sm:$0xff]
        %v4014 = vld [vmem:[%s4002 + $0x58] sm:$0xff]
        %v4015 = vld [vmem:[%s4002 + $0x60] sm:$0xff]
        %v4016 = vld [vmem:[%s4002 + $0x68] sm:$0xff]
        %v4017 = vld [vmem:[%s4002 + $0x70] sm:$0xff]
        %v4018 = vld [vmem:[%s4002 + $0x78] sm:$0xff]
        %4019 = vmatprep.subr.mxu0 0.0
        %4020 = vmatpush1.msra.mxu0 %v4003
        %4021 = vmatprep.subr.mxu0 0.0
        %4022 = vmatpush1.msra.mxu0 %v4004
        %4023 = vmatprep.subr.mxu0 0.0
        %4024 = vmatpush1.msra.mxu0 %v4005
        %4025 = vmatprep.subr.mxu0 0.0
        %4026 = vmatpush1.msra.mxu0 %v4006
        %4027 = vmatprep.subr.mxu0 0.0
        %4028 = vmatpush1.msra.mxu0 %v4007
        %4029 = vmatprep.subr.mxu0 0.0
        %4030 = vmatpush1.msra.mxu0 %v4008
        %4031 = vmatprep.subr.mxu0 0.0
        %4032 = vmatpush1.msra.mxu0 %v4009
        %4033 = vmatprep.subr.mxu0 0.0
        %4034 = vmatpush1.msra.mxu0 %v4010
        %4035 = vmatprep.subr.mxu0 0.0
        %4036 = vmatpush1.msra.mxu0 %v4011
        %4037 = vmatprep.subr.mxu0 0.0
        %4038 = vmatpush1.msra.mxu0 %v4012
        %4039 = vmatprep.subr.mxu0 0.0
        %4040 = vmatpush1.msra.mxu0 %v4013
        %4041 = vmatprep.subr.mxu0 0.0
        %4042 = vmatpush1.msra.mxu0 %v4014
        %4043 = vmatprep.subr.mxu0 0.0
        %4044 = vmatpush1.msra.mxu0 %v4015
        %4045 = vmatprep.subr.mxu0 0.0
        %4046 = vmatpush1.msra.mxu0 %v4016
        %4047 = vmatprep.subr.mxu0 0.0
        %4048 = vmatpush1.msra.mxu0 %v4017
        %4049 = vmatprep.subr.mxu0 0.0
        %4050 = vmatpush1.msra.mxu0 %v4018
        %4051 = vmatprep.subr.mxu0 0.0
        %4052 = vmatpush1.msra.mxu0 0.0
        %4053 = vmatprep.subr.mxu0 0.0
        %4054 = vmatpush1.msra.mxu0 0.0
        %4055 = vmatprep.subr.mxu0 0.0
        %4056 = vmatpush1.msra.mxu0 0.0
        %4057 = vmatprep.subr.mxu0 0.0
        %4058 = vmatpush1.msra.mxu0 0.0
        %4059 = vmatprep.subr.mxu0 0.0
        %4060 = vmatpush1.msra.mxu0 0.0
        %4061 = vmatprep.subr.mxu0 0.0
        %4062 = vmatpush1.msra.mxu0 0.0
        %4063 = vmatprep.subr.mxu0 0.0
        %4064 = vmatpush1.msra.mxu0 0.0
        %4065 = vmatprep.subr.mxu0 0.0
        %4066 = vmatpush1.msra.mxu0 0.0
        %4067 = vmatprep.subr.mxu0 0.0
        %4068 = vmatpush1.msra.mxu0 0.0
        %4069 = vmatprep.subr.mxu0 0.0
        %4070 = vmatpush1.msra.mxu0 0.0
        %4071 = vmatprep.subr.mxu0 0.0
        %4072 = vmatpush1.msra.mxu0 0.0
        %4073 = vmatprep.subr.mxu0 0.0
        %4074 = vmatpush1.msra.mxu0 0.0
        %4075 = vmatprep.subr.mxu0 0.0
        %4076 = vmatpush1.msra.mxu0 0.0
        %4077 = vmatprep.subr.mxu0 0.0
        %4078 = vmatpush1.msra.mxu0 0.0
        %4079 = vmatprep.subr.mxu0 0.0
        %4080 = vmatpush1.msra.mxu0 0.0
        %4081 = vmatprep.subr.mxu0 0.0
        %4082 = vmatpush1.msra.mxu0 0.0
        %4083 = vmatprep.mubr.f32.mxu0 0.0
        %4084 = vmatmul.mubr.f32.gmra.mrb[0].mxu0 %v3914
        %v4085 = vpop.f32.mrb[0].mxu0
        %v4086 = vadd.f32 0.0, %v4085
        %v4087 = vpop.f32.mrb[0].mxu0
        %4088 = vdwg.mxu0
        %4089 = vmatprep.subr.mxu0 0.0
        %4090 = vmatpush1.msra.mxu0 %v3986
        %4091 = vmatprep.subr.mxu0 0.0
        %4092 = vmatpush1.msra.mxu0 %v3987
        %4093 = vmatprep.subr.mxu0 0.0
        %4094 = vmatpush1.msra.mxu0 %v3988
        %4095 = vmatprep.subr.mxu0 0.0
        %4096 = vmatpush1.msra.mxu0 %v3989
        %4097 = vmatprep.subr.mxu0 0.0
        %4098 = vmatpush1.msra.mxu0 %v3990
        %4099 = vmatprep.subr.mxu0 0.0
        %4100 = vmatpush1.msra.mxu0 %v3991
        %4101 = vmatprep.subr.mxu0 0.0
        %4102 = vmatpush1.msra.mxu0 %v3992
        %4103 = vmatprep.subr.mxu0 0.0
        %4104 = vmatpush1.msra.mxu0 %v3993
        %4105 = vmatprep.subr.mxu0 0.0
        %4106 = vmatpush1.msra.mxu0 %v3994
        %4107 = vmatprep.subr.mxu0 0.0
        %4108 = vmatpush1.msra.mxu0 %v3995
        %4109 = vmatprep.subr.mxu0 0.0
        %4110 = vmatpush1.msra.mxu0 %v3996
        %4111 = vmatprep.subr.mxu0 0.0
        %4112 = vmatpush1.msra.mxu0 %v3997
        %4113 = vmatprep.subr.mxu0 0.0
        %4114 = vmatpush1.msra.mxu0 %v3998
        %4115 = vmatprep.subr.mxu0 0.0
        %4116 = vmatpush1.msra.mxu0 %v3999
        %4117 = vmatprep.subr.mxu0 0.0
        %4118 = vmatpush1.msra.mxu0 %v4000
        %4119 = vmatprep.subr.mxu0 0.0
        %4120 = vmatpush1.msra.mxu0 %v4001
        %4121 = vmatprep.subr.mxu0 0.0
        %4122 = vmatpush1.msra.mxu0 0.0
        %4123 = vmatprep.subr.mxu0 0.0
        %4124 = vmatpush1.msra.mxu0 0.0
        %4125 = vmatprep.subr.mxu0 0.0
        %4126 = vmatpush1.msra.mxu0 0.0
        %4127 = vmatprep.subr.mxu0 0.0
        %4128 = vmatpush1.msra.mxu0 0.0
        %4129 = vmatprep.subr.mxu0 0.0
        %4130 = vmatpush1.msra.mxu0 0.0
        %4131 = vmatprep.subr.mxu0 0.0
        %4132 = vmatpush1.msra.mxu0 0.0
        %4133 = vmatprep.subr.mxu0 0.0
        %4134 = vmatpush1.msra.mxu0 0.0
        %4135 = vmatprep.subr.mxu0 0.0
        %4136 = vmatpush1.msra.mxu0 0.0
        %4137 = vmatprep.subr.mxu0 0.0
        %4138 = vmatpush1.msra.mxu0 0.0
        %4139 = vmatprep.subr.mxu0 0.0
        %4140 = vmatpush1.msra.mxu0 0.0
        %4141 = vmatprep.subr.mxu0 0.0
        %4142 = vmatpush1.msra.mxu0 0.0
        %4143 = vmatprep.subr.mxu0 0.0
        %4144 = vmatpush1.msra.mxu0 0.0
        %4145 = vmatprep.subr.mxu0 0.0
        %4146 = vmatpush1.msra.mxu0 0.0
        %4147 = vmatprep.subr.mxu0 0.0
        %4148 = vmatpush1.msra.mxu0 0.0
        %4149 = vmatprep.subr.mxu0 0.0
        %4150 = vmatpush1.msra.mxu0 0.0
        %4151 = vmatprep.subr.mxu0 0.0
        %4152 = vmatpush1.msra.mxu0 0.0
        %4153 = vmatprep.mubr.f32.mxu0 0.0
        %4154 = vmatmul.mubr.f32.gmra.mrb[0].mxu0 %v3982
        %v4155 = vpop.f32.mrb[0].mxu0
        %v4156 = vadd.f32 %v4086, %v4155
        %v4157 = vpop.f32.mrb[0].mxu0
        %4158 = vdwg.mxu0
        %4159 = vmatprep.subr.mxu0 0.0
        %4160 = vmatpush1.msra.mxu0 %v3914
        %4161 = vmatprep.subr.mxu0 0.0
        %4162 = vmatpush1.msra.mxu0 0.0
        %4163 = vmatprep.subr.mxu0 0.0
        %4164 = vmatpush1.msra.mxu0 0.0
        %4165 = vmatprep.subr.mxu0 0.0
        %4166 = vmatpush1.msra.mxu0 0.0
        %4167 = vmatprep.subr.mxu0 0.0
        %4168 = vmatpush1.msra.mxu0 0.0
        %4169 = vmatprep.subr.mxu0 0.0
        %4170 = vmatpush1.msra.mxu0 0.0
        %4171 = vmatprep.subr.mxu0 0.0
        %4172 = vmatpush1.msra.mxu0 0.0
        %4173 = vmatprep.subr.mxu0 0.0
        %4174 = vmatpush1.msra.mxu0 0.0
        %4175 = vmatprep.subr.mxu0 0.0
        %4176 = vmatpush1.msra.mxu0 0.0
        %4177 = vmatprep.subr.mxu0 0.0
        %4178 = vmatpush1.msra.mxu0 0.0
        %4179 = vmatprep.subr.mxu0 0.0
        %4180 = vmatpush1.msra.mxu0 0.0
        %4181 = vmatprep.subr.mxu0 0.0
        %4182 = vmatpush1.msra.mxu0 0.0
        %4183 = vmatprep.subr.mxu0 0.0
        %4184 = vmatpush1.msra.mxu0 0.0
        %4185 = vmatprep.subr.mxu0 0.0
        %4186 = vmatpush1.msra.mxu0 0.0
        %4187 = vmatprep.subr.mxu0 0.0
        %4188 = vmatpush1.msra.mxu0 0.0
        %4189 = vmatprep.subr.mxu0 0.0
        %4190 = vmatpush1.msra.mxu0 0.0
        %4191 = vmatprep.subr.mxu0 0.0
        %4192 = vmatpush1.msra.mxu0 0.0
        %4193 = vmatprep.subr.mxu0 0.0
        %4194 = vmatpush1.msra.mxu0 0.0
        %4195 = vmatprep.subr.mxu0 0.0
        %4196 = vmatpush1.msra.mxu0 0.0
        %4197 = vmatprep.subr.mxu0 0.0
        %4198 = vmatpush1.msra.mxu0 0.0
        %4199 = vmatprep.subr.mxu0 0.0
        %4200 = vmatpush1.msra.mxu0 0.0
        %4201 = vmatprep.subr.mxu0 0.0
        %4202 = vmatpush1.msra.mxu0 0.0
        %4203 = vmatprep.subr.mxu0 0.0
        %4204 = vmatpush1.msra.mxu0 0.0
        %4205 = vmatprep.subr.mxu0 0.0
        %4206 = vmatpush1.msra.mxu0 0.0
        %4207 = vmatprep.subr.mxu0 0.0
        %4208 = vmatpush1.msra.mxu0 0.0
        %4209 = vmatprep.subr.mxu0 0.0
        %4210 = vmatpush1.msra.mxu0 0.0
        %4211 = vmatprep.subr.mxu0 0.0
        %4212 = vmatpush1.msra.mxu0 0.0
        %4213 = vmatprep.subr.mxu0 0.0
        %4214 = vmatpush1.msra.mxu0 0.0
        %4215 = vmatprep.subr.mxu0 0.0
        %4216 = vmatpush1.msra.mxu0 0.0
        %4217 = vmatprep.subr.mxu0 0.0
        %4218 = vmatpush1.msra.mxu0 0.0
        %4219 = vmatprep.subr.mxu0 0.0
        %4220 = vmatpush1.msra.mxu0 0.0
        %4221 = vmatprep.subr.mxu0 0.0
        %4222 = vmatpush1.msra.mxu0 0.0
        %4223 = vmatprep.mubr.f32.mxu0 0.0
        %4224 = vmatmul.mubr.f32.gmra.mrb[0].mxu0 %v996
        %v4225 = vpop.f32.mrb[0].mxu0
        %v4226 = vadd.f32 0.0, %v4225
        %v4227 = vpop.f32.mrb[0].mxu0
        %4228 = vdwg.mxu0
        %s4229 = scalar_lea.vmem [#allocation7], 3456
        %v4230 = vld [vmem:[%s4229] sm:$0xff]
        %v4231 = vld [vmem:[%s4229 + $0x8] sm:$0xff]
        %v4232 = vld [vmem:[%s4229 + $0x10] sm:$0xff]
        %v4233 = vld [vmem:[%s4229 + $0x18] sm:$0xff]
        %v4234 = vld [vmem:[%s4229 + $0x20] sm:$0xff]
        %v4235 = vld [vmem:[%s4229 + $0x28] sm:$0xff]
        %v4236 = vld [vmem:[%s4229 + $0x30] sm:$0xff]
        %v4237 = vld [vmem:[%s4229 + $0x38] sm:$0xff]
        %v4238 = vld [vmem:[%s4229 + $0x40] sm:$0xff]
        %v4239 = vld [vmem:[%s4229 + $0x48] sm:$0xff]
        %v4240 = vld [vmem:[%s4229 + $0x50] sm:$0xff]
        %v4241 = vld [vmem:[%s4229 + $0x58] sm:$0xff]
        %v4242 = vld [vmem:[%s4229 + $0x60] sm:$0xff]
        %v4243 = vld [vmem:[%s4229 + $0x68] sm:$0xff]
        %v4244 = vld [vmem:[%s4229 + $0x70] sm:$0xff]
        %v4245 = vld [vmem:[%s4229 + $0x78] sm:$0xff]
        %4246 = vmatprep.subr.mxu0 0.0
        %4247 = vmatpush1.msra.mxu0 %v4230
        %4248 = vmatprep.subr.mxu0 0.0
        %4249 = vmatpush1.msra.mxu0 %v4231
        %4250 = vmatprep.subr.mxu0 0.0
        %4251 = vmatpush1.msra.mxu0 %v4232
        %4252 = vmatprep.subr.mxu0 0.0
        %4253 = vmatpush1.msra.mxu0 %v4233
        %4254 = vmatprep.subr.mxu0 0.0
        %4255 = vmatpush1.msra.mxu0 %v4234
        %4256 = vmatprep.subr.mxu0 0.0
        %4257 = vmatpush1.msra.mxu0 %v4235
        %4258 = vmatprep.subr.mxu0 0.0
        %4259 = vmatpush1.msra.mxu0 %v4236
        %4260 = vmatprep.subr.mxu0 0.0
        %4261 = vmatpush1.msra.mxu0 %v4237
        %4262 = vmatprep.subr.mxu0 0.0
        %4263 = vmatpush1.msra.mxu0 %v4238
        %4264 = vmatprep.subr.mxu0 0.0
        %4265 = vmatpush1.msra.mxu0 %v4239
        %4266 = vmatprep.subr.mxu0 0.0
        %4267 = vmatpush1.msra.mxu0 %v4240
        %4268 = vmatprep.subr.mxu0 0.0
        %4269 = vmatpush1.msra.mxu0 %v4241
        %4270 = vmatprep.subr.mxu0 0.0
        %4271 = vmatpush1.msra.mxu0 %v4242
        %4272 = vmatprep.subr.mxu0 0.0
        %4273 = vmatpush1.msra.mxu0 %v4243
        %4274 = vmatprep.subr.mxu0 0.0
        %4275 = vmatpush1.msra.mxu0 %v4244
        %4276 = vmatprep.subr.mxu0 0.0
        %4277 = vmatpush1.msra.mxu0 %v4245
        %4278 = vmatprep.subr.mxu0 0.0
        %4279 = vmatpush1.msra.mxu0 0.0
        %4280 = vmatprep.subr.mxu0 0.0
        %4281 = vmatpush1.msra.mxu0 0.0
        %4282 = vmatprep.subr.mxu0 0.0
        %4283 = vmatpush1.msra.mxu0 0.0
        %4284 = vmatprep.subr.mxu0 0.0
        %4285 = vmatpush1.msra.mxu0 0.0
        %4286 = vmatprep.subr.mxu0 0.0
        %4287 = vmatpush1.msra.mxu0 0.0
        %4288 = vmatprep.subr.mxu0 0.0
        %4289 = vmatpush1.msra.mxu0 0.0
        %4290 = vmatprep.subr.mxu0 0.0
        %4291 = vmatpush1.msra.mxu0 0.0
        %4292 = vmatprep.subr.mxu0 0.0
        %4293 = vmatpush1.msra.mxu0 0.0
        %4294 = vmatprep.subr.mxu0 0.0
        %4295 = vmatpush1.msra.mxu0 0.0
        %4296 = vmatprep.subr.mxu0 0.0
        %4297 = vmatpush1.msra.mxu0 0.0
        %4298 = vmatprep.subr.mxu0 0.0
        %4299 = vmatpush1.msra.mxu0 0.0
        %4300 = vmatprep.subr.mxu0 0.0
        %4301 = vmatpush1.msra.mxu0 0.0
        %4302 = vmatprep.subr.mxu0 0.0
        %4303 = vmatpush1.msra.mxu0 0.0
        %4304 = vmatprep.subr.mxu0 0.0
        %4305 = vmatpush1.msra.mxu0 0.0
        %4306 = vmatprep.subr.mxu0 0.0
        %4307 = vmatpush1.msra.mxu0 0.0
        %4308 = vmatprep.subr.mxu0 0.0
        %4309 = vmatpush1.msra.mxu0 0.0
        %4310 = vmatprep.mubr.f32.mxu0 0.0
        %4311 = vmatmul.mubr.f32.gmra.mrb[0].mxu0 %v4226
        %v4312 = vpop.f32.mrb[0].mxu0
        %v4313 = vadd.f32 0.0, %v4312
        %v4314 = vpop.f32.mrb[0].mxu0
        %4315 = vdwg.mxu0
        %v4316 = vadd.f32 %v4156, %v4313
        %v4317 = vadd.f32 %v3510, %v4316
        %s4318 = scalar_lea.vmem [#allocation7], 3584
        %v4319 = vld [vmem:[%s4318] sm:$0xff]
        %v4320 = vld [vmem:[%s4318 + $0x8] sm:$0xff]
        %v4321 = vld [vmem:[%s4318 + $0x10] sm:$0xff]
        %v4322 = vld [vmem:[%s4318 + $0x18] sm:$0xff]
        %v4323 = vld [vmem:[%s4318 + $0x20] sm:$0xff]
        %v4324 = vld [vmem:[%s4318 + $0x28] sm:$0xff]
        %v4325 = vld [vmem:[%s4318 + $0x30] sm:$0xff]
        %v4326 = vld [vmem:[%s4318 + $0x38] sm:$0xff]
        %v4327 = vld [vmem:[%s4318 + $0x40] sm:$0xff]
        %v4328 = vld [vmem:[%s4318 + $0x48] sm:$0xff]
        %v4329 = vld [vmem:[%s4318 + $0x50] sm:$0xff]
        %v4330 = vld [vmem:[%s4318 + $0x58] sm:$0xff]
        %v4331 = vld [vmem:[%s4318 + $0x60] sm:$0xff]
        %v4332 = vld [vmem:[%s4318 + $0x68] sm:$0xff]
        %v4333 = vld [vmem:[%s4318 + $0x70] sm:$0xff]
        %v4334 = vld [vmem:[%s4318 + $0x78] sm:$0xff]
        %s4335 = scalar_lea.vmem [#allocation7], 3712
        %v4336 = vld [vmem:[%s4335] sm:$0xff]
        %v4337 = vld [vmem:[%s4335 + $0x8] sm:$0xff]
        %v4338 = vld [vmem:[%s4335 + $0x10] sm:$0xff]
        %v4339 = vld [vmem:[%s4335 + $0x18] sm:$0xff]
        %v4340 = vld [vmem:[%s4335 + $0x20] sm:$0xff]
        %v4341 = vld [vmem:[%s4335 + $0x28] sm:$0xff]
        %v4342 = vld [vmem:[%s4335 + $0x30] sm:$0xff]
        %v4343 = vld [vmem:[%s4335 + $0x38] sm:$0xff]
        %v4344 = vld [vmem:[%s4335 + $0x40] sm:$0xff]
        %v4345 = vld [vmem:[%s4335 + $0x48] sm:$0xff]
        %v4346 = vld [vmem:[%s4335 + $0x50] sm:$0xff]
        %v4347 = vld [vmem:[%s4335 + $0x58] sm:$0xff]
        %v4348 = vld [vmem:[%s4335 + $0x60] sm:$0xff]
        %v4349 = vld [vmem:[%s4335 + $0x68] sm:$0xff]
        %v4350 = vld [vmem:[%s4335 + $0x70] sm:$0xff]
        %v4351 = vld [vmem:[%s4335 + $0x78] sm:$0xff]
        %4352 = vmatprep.subr.mxu0 0.0
        %4353 = vmatpush1.msra.mxu0 %v4336
        %4354 = vmatprep.subr.mxu0 0.0
        %4355 = vmatpush1.msra.mxu0 %v4337
        %4356 = vmatprep.subr.mxu0 0.0
        %4357 = vmatpush1.msra.mxu0 %v4338
        %4358 = vmatprep.subr.mxu0 0.0
        %4359 = vmatpush1.msra.mxu0 %v4339
        %4360 = vmatprep.subr.mxu0 0.0
        %4361 = vmatpush1.msra.mxu0 %v4340
        %4362 = vmatprep.subr.mxu0 0.0
        %4363 = vmatpush1.msra.mxu0 %v4341
        %4364 = vmatprep.subr.mxu0 0.0
        %4365 = vmatpush1.msra.mxu0 %v4342
        %4366 = vmatprep.subr.mxu0 0.0
        %4367 = vmatpush1.msra.mxu0 %v4343
        %4368 = vmatprep.subr.mxu0 0.0
        %4369 = vmatpush1.msra.mxu0 %v4344
        %4370 = vmatprep.subr.mxu0 0.0
        %4371 = vmatpush1.msra.mxu0 %v4345
        %4372 = vmatprep.subr.mxu0 0.0
        %4373 = vmatpush1.msra.mxu0 %v4346
        %4374 = vmatprep.subr.mxu0 0.0
        %4375 = vmatpush1.msra.mxu0 %v4347
        %4376 = vmatprep.subr.mxu0 0.0
        %4377 = vmatpush1.msra.mxu0 %v4348
        %4378 = vmatprep.subr.mxu0 0.0
        %4379 = vmatpush1.msra.mxu0 %v4349
        %4380 = vmatprep.subr.mxu0 0.0
        %4381 = vmatpush1.msra.mxu0 %v4350
        %4382 = vmatprep.subr.mxu0 0.0
        %4383 = vmatpush1.msra.mxu0 %v4351
        %4384 = vmatprep.subr.mxu0 0.0
        %4385 = vmatpush1.msra.mxu0 0.0
        %4386 = vmatprep.subr.mxu0 0.0
        %4387 = vmatpush1.msra.mxu0 0.0
        %4388 = vmatprep.subr.mxu0 0.0
        %4389 = vmatpush1.msra.mxu0 0.0
        %4390 = vmatprep.subr.mxu0 0.0
        %4391 = vmatpush1.msra.mxu0 0.0
        %4392 = vmatprep.subr.mxu0 0.0
        %4393 = vmatpush1.msra.mxu0 0.0
        %4394 = vmatprep.subr.mxu0 0.0
        %4395 = vmatpush1.msra.mxu0 0.0
        %4396 = vmatprep.subr.mxu0 0.0
        %4397 = vmatpush1.msra.mxu0 0.0
        %4398 = vmatprep.subr.mxu0 0.0
        %4399 = vmatpush1.msra.mxu0 0.0
        %4400 = vmatprep.subr.mxu0 0.0
        %4401 = vmatpush1.msra.mxu0 0.0
        %4402 = vmatprep.subr.mxu0 0.0
        %4403 = vmatpush1.msra.mxu0 0.0
        %4404 = vmatprep.subr.mxu0 0.0
        %4405 = vmatpush1.msra.mxu0 0.0
        %4406 = vmatprep.subr.mxu0 0.0
        %4407 = vmatpush1.msra.mxu0 0.0
        %4408 = vmatprep.subr.mxu0 0.0
        %4409 = vmatpush1.msra.mxu0 0.0
        %4410 = vmatprep.subr.mxu0 0.0
        %4411 = vmatpush1.msra.mxu0 0.0
        %4412 = vmatprep.subr.mxu0 0.0
        %4413 = vmatpush1.msra.mxu0 0.0
        %4414 = vmatprep.subr.mxu0 0.0
        %4415 = vmatpush1.msra.mxu0 0.0
        %4416 = vmatprep.mubr.f32.mxu0 0.0
        %4417 = vmatmul.mubr.f32.gmra.mrb[0].mxu0 %v745
        %v4418 = vpop.f32.mrb[0].mxu0
        %v4419 = vadd.f32 0.0, %v4418
        %v4420 = vpop.f32.mrb[0].mxu0
        %4421 = vdwg.mxu0
        %4422 = vmatprep.subr.mxu0 0.0
        %4423 = vmatpush1.msra.mxu0 %v4319
        %4424 = vmatprep.subr.mxu0 0.0
        %4425 = vmatpush1.msra.mxu0 %v4320
        %4426 = vmatprep.subr.mxu0 0.0
        %4427 = vmatpush1.msra.mxu0 %v4321
        %4428 = vmatprep.subr.mxu0 0.0
        %4429 = vmatpush1.msra.mxu0 %v4322
        %4430 = vmatprep.subr.mxu0 0.0
        %4431 = vmatpush1.msra.mxu0 %v4323
        %4432 = vmatprep.subr.mxu0 0.0
        %4433 = vmatpush1.msra.mxu0 %v4324
        %4434 = vmatprep.subr.mxu0 0.0
        %4435 = vmatpush1.msra.mxu0 %v4325
        %4436 = vmatprep.subr.mxu0 0.0
        %4437 = vmatpush1.msra.mxu0 %v4326
        %4438 = vmatprep.subr.mxu0 0.0
        %4439 = vmatpush1.msra.mxu0 %v4327
        %4440 = vmatprep.subr.mxu0 0.0
        %4441 = vmatpush1.msra.mxu0 %v4328
        %4442 = vmatprep.subr.mxu0 0.0
        %4443 = vmatpush1.msra.mxu0 %v4329
        %4444 = vmatprep.subr.mxu0 0.0
        %4445 = vmatpush1.msra.mxu0 %v4330
        %4446 = vmatprep.subr.mxu0 0.0
        %4447 = vmatpush1.msra.mxu0 %v4331
        %4448 = vmatprep.subr.mxu0 0.0
        %4449 = vmatpush1.msra.mxu0 %v4332
        %4450 = vmatprep.subr.mxu0 0.0
        %4451 = vmatpush1.msra.mxu0 %v4333
        %4452 = vmatprep.subr.mxu0 0.0
        %4453 = vmatpush1.msra.mxu0 %v4334
        %4454 = vmatprep.subr.mxu0 0.0
        %4455 = vmatpush1.msra.mxu0 0.0
        %4456 = vmatprep.subr.mxu0 0.0
        %4457 = vmatpush1.msra.mxu0 0.0
        %4458 = vmatprep.subr.mxu0 0.0
        %4459 = vmatpush1.msra.mxu0 0.0
        %4460 = vmatprep.subr.mxu0 0.0
        %4461 = vmatpush1.msra.mxu0 0.0
        %4462 = vmatprep.subr.mxu0 0.0
        %4463 = vmatpush1.msra.mxu0 0.0
        %4464 = vmatprep.subr.mxu0 0.0
        %4465 = vmatpush1.msra.mxu0 0.0
        %4466 = vmatprep.subr.mxu0 0.0
        %4467 = vmatpush1.msra.mxu0 0.0
        %4468 = vmatprep.subr.mxu0 0.0
        %4469 = vmatpush1.msra.mxu0 0.0
        %4470 = vmatprep.subr.mxu0 0.0
        %4471 = vmatpush1.msra.mxu0 0.0
        %4472 = vmatprep.subr.mxu0 0.0
        %4473 = vmatpush1.msra.mxu0 0.0
        %4474 = vmatprep.subr.mxu0 0.0
        %4475 = vmatpush1.msra.mxu0 0.0
        %4476 = vmatprep.subr.mxu0 0.0
        %4477 = vmatpush1.msra.mxu0 0.0
        %4478 = vmatprep.subr.mxu0 0.0
        %4479 = vmatpush1.msra.mxu0 0.0
        %4480 = vmatprep.subr.mxu0 0.0
        %4481 = vmatpush1.msra.mxu0 0.0
        %4482 = vmatprep.subr.mxu0 0.0
        %4483 = vmatpush1.msra.mxu0 0.0
        %4484 = vmatprep.subr.mxu0 0.0
        %4485 = vmatpush1.msra.mxu0 0.0
        %4486 = vmatprep.mubr.f32.mxu0 0.0
        %4487 = vmatmul.mubr.f32.gmra.mrb[0].mxu0 %v654
        %v4488 = vpop.f32.mrb[0].mxu0
        %v4489 = vadd.f32 %v4419, %v4488
        %v4490 = vpop.f32.mrb[0].mxu0
        %4491 = vdwg.mxu0
        %s4492 = scalar_lea.vmem [#allocation7], 3840
        %v4493 = vld [vmem:[%s4492] sm:$0xff]
        %v4494 = vld [vmem:[%s4492 + $0x8] sm:$0xff]
        %v4495 = vld [vmem:[%s4492 + $0x10] sm:$0xff]
        %v4496 = vld [vmem:[%s4492 + $0x18] sm:$0xff]
        %v4497 = vld [vmem:[%s4492 + $0x20] sm:$0xff]
        %v4498 = vld [vmem:[%s4492 + $0x28] sm:$0xff]
        %v4499 = vld [vmem:[%s4492 + $0x30] sm:$0xff]
        %v4500 = vld [vmem:[%s4492 + $0x38] sm:$0xff]
        %v4501 = vld [vmem:[%s4492 + $0x40] sm:$0xff]
        %v4502 = vld [vmem:[%s4492 + $0x48] sm:$0xff]
        %v4503 = vld [vmem:[%s4492 + $0x50] sm:$0xff]
        %v4504 = vld [vmem:[%s4492 + $0x58] sm:$0xff]
        %v4505 = vld [vmem:[%s4492 + $0x60] sm:$0xff]
        %v4506 = vld [vmem:[%s4492 + $0x68] sm:$0xff]
        %v4507 = vld [vmem:[%s4492 + $0x70] sm:$0xff]
        %v4508 = vld [vmem:[%s4492 + $0x78] sm:$0xff]
        %4509 = vmatprep.subr.mxu0 0.0
        %4510 = vmatpush1.msra.mxu0 %v4493
        %4511 = vmatprep.subr.mxu0 0.0
        %4512 = vmatpush1.msra.mxu0 %v4494
        %4513 = vmatprep.subr.mxu0 0.0
        %4514 = vmatpush1.msra.mxu0 %v4495
        %4515 = vmatprep.subr.mxu0 0.0
        %4516 = vmatpush1.msra.mxu0 %v4496
        %4517 = vmatprep.subr.mxu0 0.0
        %4518 = vmatpush1.msra.mxu0 %v4497
        %4519 = vmatprep.subr.mxu0 0.0
        %4520 = vmatpush1.msra.mxu0 %v4498
        %4521 = vmatprep.subr.mxu0 0.0
        %4522 = vmatpush1.msra.mxu0 %v4499
        %4523 = vmatprep.subr.mxu0 0.0
        %4524 = vmatpush1.msra.mxu0 %v4500
        %4525 = vmatprep.subr.mxu0 0.0
        %4526 = vmatpush1.msra.mxu0 %v4501
        %4527 = vmatprep.subr.mxu0 0.0
        %4528 = vmatpush1.msra.mxu0 %v4502
        %4529 = vmatprep.subr.mxu0 0.0
        %4530 = vmatpush1.msra.mxu0 %v4503
        %4531 = vmatprep.subr.mxu0 0.0
        %4532 = vmatpush1.msra.mxu0 %v4504
        %4533 = vmatprep.subr.mxu0 0.0
        %4534 = vmatpush1.msra.mxu0 %v4505
        %4535 = vmatprep.subr.mxu0 0.0
        %4536 = vmatpush1.msra.mxu0 %v4506
        %4537 = vmatprep.subr.mxu0 0.0
        %4538 = vmatpush1.msra.mxu0 %v4507
        %4539 = vmatprep.subr.mxu0 0.0
        %4540 = vmatpush1.msra.mxu0 %v4508
        %4541 = vmatprep.subr.mxu0 0.0
        %4542 = vmatpush1.msra.mxu0 0.0
        %4543 = vmatprep.subr.mxu0 0.0
        %4544 = vmatpush1.msra.mxu0 0.0
        %4545 = vmatprep.subr.mxu0 0.0
        %4546 = vmatpush1.msra.mxu0 0.0
        %4547 = vmatprep.subr.mxu0 0.0
        %4548 = vmatpush1.msra.mxu0 0.0
        %4549 = vmatprep.subr.mxu0 0.0
        %4550 = vmatpush1.msra.mxu0 0.0
        %4551 = vmatprep.subr.mxu0 0.0
        %4552 = vmatpush1.msra.mxu0 0.0
        %4553 = vmatprep.subr.mxu0 0.0
        %4554 = vmatpush1.msra.mxu0 0.0
        %4555 = vmatprep.subr.mxu0 0.0
        %4556 = vmatpush1.msra.mxu0 0.0
        %4557 = vmatprep.subr.mxu0 0.0
        %4558 = vmatpush1.msra.mxu0 0.0
        %4559 = vmatprep.subr.mxu0 0.0
        %4560 = vmatpush1.msra.mxu0 0.0
        %4561 = vmatprep.subr.mxu0 0.0
        %4562 = vmatpush1.msra.mxu0 0.0
        %4563 = vmatprep.subr.mxu0 0.0
        %4564 = vmatpush1.msra.mxu0 0.0
        %4565 = vmatprep.subr.mxu0 0.0
        %4566 = vmatpush1.msra.mxu0 0.0
        %4567 = vmatprep.subr.mxu0 0.0
        %4568 = vmatpush1.msra.mxu0 0.0
        %4569 = vmatprep.subr.mxu0 0.0
        %4570 = vmatpush1.msra.mxu0 0.0
        %4571 = vmatprep.subr.mxu0 0.0
        %4572 = vmatpush1.msra.mxu0 0.0
        %4573 = vmatprep.mubr.f32.mxu0 0.0
        %4574 = vmatmul.mubr.f32.gmra.mrb[0].mxu0 %v580
        %v4575 = vpop.f32.mrb[0].mxu0
        %v4576 = vadd.f32 0.0, %v4575
        %v4577 = vpop.f32.mrb[0].mxu0
        %4578 = vdwg.mxu0
        %v4579 = vadd.f32 %v4489, %v4576
        %s4580 = scalar_lea.vmem [#allocation7], 3968
        %v4581 = vld [vmem:[%s4580] sm:$0xff]
        %v4582 = vld [vmem:[%s4580 + $0x8] sm:$0xff]
        %v4583 = vld [vmem:[%s4580 + $0x10] sm:$0xff]
        %v4584 = vld [vmem:[%s4580 + $0x18] sm:$0xff]
        %v4585 = vld [vmem:[%s4580 + $0x20] sm:$0xff]
        %v4586 = vld [vmem:[%s4580 + $0x28] sm:$0xff]
        %v4587 = vld [vmem:[%s4580 + $0x30] sm:$0xff]
        %v4588 = vld [vmem:[%s4580 + $0x38] sm:$0xff]
        %v4589 = vld [vmem:[%s4580 + $0x40] sm:$0xff]
        %v4590 = vld [vmem:[%s4580 + $0x48] sm:$0xff]
        %v4591 = vld [vmem:[%s4580 + $0x50] sm:$0xff]
        %v4592 = vld [vmem:[%s4580 + $0x58] sm:$0xff]
        %v4593 = vld [vmem:[%s4580 + $0x60] sm:$0xff]
        %v4594 = vld [vmem:[%s4580 + $0x68] sm:$0xff]
        %v4595 = vld [vmem:[%s4580 + $0x70] sm:$0xff]
        %v4596 = vld [vmem:[%s4580 + $0x78] sm:$0xff]
        %4597 = vmatprep.subr.mxu0 0.0
        %4598 = vmatpush1.msra.mxu0 %v4581
        %4599 = vmatprep.subr.mxu0 0.0
        %4600 = vmatpush1.msra.mxu0 %v4582
        %4601 = vmatprep.subr.mxu0 0.0
        %4602 = vmatpush1.msra.mxu0 %v4583
        %4603 = vmatprep.subr.mxu0 0.0
        %4604 = vmatpush1.msra.mxu0 %v4584
        %4605 = vmatprep.subr.mxu0 0.0
        %4606 = vmatpush1.msra.mxu0 %v4585
        %4607 = vmatprep.subr.mxu0 0.0
        %4608 = vmatpush1.msra.mxu0 %v4586
        %4609 = vmatprep.subr.mxu0 0.0
        %4610 = vmatpush1.msra.mxu0 %v4587
        %4611 = vmatprep.subr.mxu0 0.0
        %4612 = vmatpush1.msra.mxu0 %v4588
        %4613 = vmatprep.subr.mxu0 0.0
        %4614 = vmatpush1.msra.mxu0 %v4589
        %4615 = vmatprep.subr.mxu0 0.0
        %4616 = vmatpush1.msra.mxu0 %v4590
        %4617 = vmatprep.subr.mxu0 0.0
        %4618 = vmatpush1.msra.mxu0 %v4591
        %4619 = vmatprep.subr.mxu0 0.0
        %4620 = vmatpush1.msra.mxu0 %v4592
        %4621 = vmatprep.subr.mxu0 0.0
        %4622 = vmatpush1.msra.mxu0 %v4593
        %4623 = vmatprep.subr.mxu0 0.0
        %4624 = vmatpush1.msra.mxu0 %v4594
        %4625 = vmatprep.subr.mxu0 0.0
        %4626 = vmatpush1.msra.mxu0 %v4595
        %4627 = vmatprep.subr.mxu0 0.0
        %4628 = vmatpush1.msra.mxu0 %v4596
        %4629 = vmatprep.subr.mxu0 0.0
        %4630 = vmatpush1.msra.mxu0 0.0
        %4631 = vmatprep.subr.mxu0 0.0
        %4632 = vmatpush1.msra.mxu0 0.0
        %4633 = vmatprep.subr.mxu0 0.0
        %4634 = vmatpush1.msra.mxu0 0.0
        %4635 = vmatprep.subr.mxu0 0.0
        %4636 = vmatpush1.msra.mxu0 0.0
        %4637 = vmatprep.subr.mxu0 0.0
        %4638 = vmatpush1.msra.mxu0 0.0
        %4639 = vmatprep.subr.mxu0 0.0
        %4640 = vmatpush1.msra.mxu0 0.0
        %4641 = vmatprep.subr.mxu0 0.0
        %4642 = vmatpush1.msra.mxu0 0.0
        %4643 = vmatprep.subr.mxu0 0.0
        %4644 = vmatpush1.msra.mxu0 0.0
        %4645 = vmatprep.subr.mxu0 0.0
        %4646 = vmatpush1.msra.mxu0 0.0
        %4647 = vmatprep.subr.mxu0 0.0
        %4648 = vmatpush1.msra.mxu0 0.0
        %4649 = vmatprep.subr.mxu0 0.0
        %4650 = vmatpush1.msra.mxu0 0.0
        %4651 = vmatprep.subr.mxu0 0.0
        %4652 = vmatpush1.msra.mxu0 0.0
        %4653 = vmatprep.subr.mxu0 0.0
        %4654 = vmatpush1.msra.mxu0 0.0
        %4655 = vmatprep.subr.mxu0 0.0
        %4656 = vmatpush1.msra.mxu0 0.0
        %4657 = vmatprep.subr.mxu0 0.0
        %4658 = vmatpush1.msra.mxu0 0.0
        %4659 = vmatprep.subr.mxu0 0.0
        %4660 = vmatpush1.msra.mxu0 0.0
        %4661 = vmatprep.mubr.f32.mxu0 0.0
        %4662 = vmatmul.mubr.f32.gmra.mrb[0].mxu0 %v1065
        %v4663 = vpop.f32.mrb[0].mxu0
        %v4664 = vadd.f32 0.0, %v4663
        %v4665 = vpop.f32.mrb[0].mxu0
        %4666 = vdwg.mxu0
        %v4667 = vadd.f32 %v4579, %v4664
        %s4668 = scalar_lea.vmem [#allocation7], 4096
        %v4669 = vld [vmem:[%s4668] sm:$0xff]
        %v4670 = vld [vmem:[%s4668 + $0x8] sm:$0xff]
        %v4671 = vld [vmem:[%s4668 + $0x10] sm:$0xff]
        %v4672 = vld [vmem:[%s4668 + $0x18] sm:$0xff]
        %v4673 = vld [vmem:[%s4668 + $0x20] sm:$0xff]
        %v4674 = vld [vmem:[%s4668 + $0x28] sm:$0xff]
        %v4675 = vld [vmem:[%s4668 + $0x30] sm:$0xff]
        %v4676 = vld [vmem:[%s4668 + $0x38] sm:$0xff]
        %v4677 = vld [vmem:[%s4668 + $0x40] sm:$0xff]
        %v4678 = vld [vmem:[%s4668 + $0x48] sm:$0xff]
        %v4679 = vld [vmem:[%s4668 + $0x50] sm:$0xff]
        %v4680 = vld [vmem:[%s4668 + $0x58] sm:$0xff]
        %v4681 = vld [vmem:[%s4668 + $0x60] sm:$0xff]
        %v4682 = vld [vmem:[%s4668 + $0x68] sm:$0xff]
        %v4683 = vld [vmem:[%s4668 + $0x70] sm:$0xff]
        %v4684 = vld [vmem:[%s4668 + $0x78] sm:$0xff]
        %4685 = vmatprep.subr.mxu0 0.0
        %4686 = vmatpush1.msra.mxu0 %v4669
        %4687 = vmatprep.subr.mxu0 0.0
        %4688 = vmatpush1.msra.mxu0 %v4670
        %4689 = vmatprep.subr.mxu0 0.0
        %4690 = vmatpush1.msra.mxu0 %v4671
        %4691 = vmatprep.subr.mxu0 0.0
        %4692 = vmatpush1.msra.mxu0 %v4672
        %4693 = vmatprep.subr.mxu0 0.0
        %4694 = vmatpush1.msra.mxu0 %v4673
        %4695 = vmatprep.subr.mxu0 0.0
        %4696 = vmatpush1.msra.mxu0 %v4674
        %4697 = vmatprep.subr.mxu0 0.0
        %4698 = vmatpush1.msra.mxu0 %v4675
        %4699 = vmatprep.subr.mxu0 0.0
        %4700 = vmatpush1.msra.mxu0 %v4676
        %4701 = vmatprep.subr.mxu0 0.0
        %4702 = vmatpush1.msra.mxu0 %v4677
        %4703 = vmatprep.subr.mxu0 0.0
        %4704 = vmatpush1.msra.mxu0 %v4678
        %4705 = vmatprep.subr.mxu0 0.0
        %4706 = vmatpush1.msra.mxu0 %v4679
        %4707 = vmatprep.subr.mxu0 0.0
        %4708 = vmatpush1.msra.mxu0 %v4680
        %4709 = vmatprep.subr.mxu0 0.0
        %4710 = vmatpush1.msra.mxu0 %v4681
        %4711 = vmatprep.subr.mxu0 0.0
        %4712 = vmatpush1.msra.mxu0 %v4682
        %4713 = vmatprep.subr.mxu0 0.0
        %4714 = vmatpush1.msra.mxu0 %v4683
        %4715 = vmatprep.subr.mxu0 0.0
        %4716 = vmatpush1.msra.mxu0 %v4684
        %4717 = vmatprep.subr.mxu0 0.0
        %4718 = vmatpush1.msra.mxu0 0.0
        %4719 = vmatprep.subr.mxu0 0.0
        %4720 = vmatpush1.msra.mxu0 0.0
        %4721 = vmatprep.subr.mxu0 0.0
        %4722 = vmatpush1.msra.mxu0 0.0
        %4723 = vmatprep.subr.mxu0 0.0
        %4724 = vmatpush1.msra.mxu0 0.0
        %4725 = vmatprep.subr.mxu0 0.0
        %4726 = vmatpush1.msra.mxu0 0.0
        %4727 = vmatprep.subr.mxu0 0.0
        %4728 = vmatpush1.msra.mxu0 0.0
        %4729 = vmatprep.subr.mxu0 0.0
        %4730 = vmatpush1.msra.mxu0 0.0
        %4731 = vmatprep.subr.mxu0 0.0
        %4732 = vmatpush1.msra.mxu0 0.0
        %4733 = vmatprep.subr.mxu0 0.0
        %4734 = vmatpush1.msra.mxu0 0.0
        %4735 = vmatprep.subr.mxu0 0.0
        %4736 = vmatpush1.msra.mxu0 0.0
        %4737 = vmatprep.subr.mxu0 0.0
        %4738 = vmatpush1.msra.mxu0 0.0
        %4739 = vmatprep.subr.mxu0 0.0
        %4740 = vmatpush1.msra.mxu0 0.0
        %4741 = vmatprep.subr.mxu0 0.0
        %4742 = vmatpush1.msra.mxu0 0.0
        %4743 = vmatprep.subr.mxu0 0.0
        %4744 = vmatpush1.msra.mxu0 0.0
        %4745 = vmatprep.subr.mxu0 0.0
        %4746 = vmatpush1.msra.mxu0 0.0
        %4747 = vmatprep.subr.mxu0 0.0
        %4748 = vmatpush1.msra.mxu0 0.0
        %4749 = vmatprep.mubr.f32.mxu0 0.0
        %4750 = vmatmul.mubr.f32.gmra.mrb[0].mxu0 %v1228
        %v4751 = vpop.f32.mrb[0].mxu0
        %v4752 = vadd.f32 0.0, %v4751
        %v4753 = vpop.f32.mrb[0].mxu0
        %4754 = vdwg.mxu0
        %v4755 = vadd.f32 %v4667, %v4752
        %v4756 = vmax.f32 %v4755, 0.0
        %4757 = vmatprep.subr.mxu0 0.0
        %4758 = vmatpush1.msra.mxu0 %v4756
        %4759 = vmatprep.subr.mxu0 0.0
        %4760 = vmatpush1.msra.mxu0 0.0
        %4761 = vmatprep.subr.mxu0 0.0
        %4762 = vmatpush1.msra.mxu0 0.0
        %4763 = vmatprep.subr.mxu0 0.0
        %4764 = vmatpush1.msra.mxu0 0.0
        %4765 = vmatprep.subr.mxu0 0.0
        %4766 = vmatpush1.msra.mxu0 0.0
        %4767 = vmatprep.subr.mxu0 0.0
        %4768 = vmatpush1.msra.mxu0 0.0
        %4769 = vmatprep.subr.mxu0 0.0
        %4770 = vmatpush1.msra.mxu0 0.0
        %4771 = vmatprep.subr.mxu0 0.0
        %4772 = vmatpush1.msra.mxu0 0.0
        %4773 = vmatprep.subr.mxu0 0.0
        %4774 = vmatpush1.msra.mxu0 0.0
        %4775 = vmatprep.subr.mxu0 0.0
        %4776 = vmatpush1.msra.mxu0 0.0
        %4777 = vmatprep.subr.mxu0 0.0
        %4778 = vmatpush1.msra.mxu0 0.0
        %4779 = vmatprep.subr.mxu0 0.0
        %4780 = vmatpush1.msra.mxu0 0.0
        %4781 = vmatprep.subr.mxu0 0.0
        %4782 = vmatpush1.msra.mxu0 0.0
        %4783 = vmatprep.subr.mxu0 0.0
        %4784 = vmatpush1.msra.mxu0 0.0
        %4785 = vmatprep.subr.mxu0 0.0
        %4786 = vmatpush1.msra.mxu0 0.0
        %4787 = vmatprep.subr.mxu0 0.0
        %4788 = vmatpush1.msra.mxu0 0.0
        %4789 = vmatprep.subr.mxu0 0.0
        %4790 = vmatpush1.msra.mxu0 0.0
        %4791 = vmatprep.subr.mxu0 0.0
        %4792 = vmatpush1.msra.mxu0 0.0
        %4793 = vmatprep.subr.mxu0 0.0
        %4794 = vmatpush1.msra.mxu0 0.0
        %4795 = vmatprep.subr.mxu0 0.0
        %4796 = vmatpush1.msra.mxu0 0.0
        %4797 = vmatprep.subr.mxu0 0.0
        %4798 = vmatpush1.msra.mxu0 0.0
        %4799 = vmatprep.subr.mxu0 0.0
        %4800 = vmatpush1.msra.mxu0 0.0
        %4801 = vmatprep.subr.mxu0 0.0
        %4802 = vmatpush1.msra.mxu0 0.0
        %4803 = vmatprep.subr.mxu0 0.0
        %4804 = vmatpush1.msra.mxu0 0.0
        %4805 = vmatprep.subr.mxu0 0.0
        %4806 = vmatpush1.msra.mxu0 0.0
        %4807 = vmatprep.subr.mxu0 0.0
        %4808 = vmatpush1.msra.mxu0 0.0
        %4809 = vmatprep.subr.mxu0 0.0
        %4810 = vmatpush1.msra.mxu0 0.0
        %4811 = vmatprep.subr.mxu0 0.0
        %4812 = vmatpush1.msra.mxu0 0.0
        %4813 = vmatprep.subr.mxu0 0.0
        %4814 = vmatpush1.msra.mxu0 0.0
        %4815 = vmatprep.subr.mxu0 0.0
        %4816 = vmatpush1.msra.mxu0 0.0
        %4817 = vmatprep.subr.mxu0 0.0
        %4818 = vmatpush1.msra.mxu0 0.0
        %4819 = vmatprep.subr.mxu0 0.0
        %4820 = vmatpush1.msra.mxu0 0.0
        %4821 = vmatprep.mubr.f32.mxu0 0.0
        %4822 = vmatmul.mubr.f32.gmra.mrb[0].mxu0 %v585
        %v4823 = vpop.f32.mrb[0].mxu0
        %v4824 = vadd.f32 0.0, %v4823
        %v4825 = vpop.f32.mrb[0].mxu0
        %4826 = vdwg.mxu0
        %s4827 = scalar_lea.vmem [#allocation7], 4224
        %v4828 = vld [vmem:[%s4827] sm:$0xff]
        %v4829 = vld [vmem:[%s4827 + $0x8] sm:$0xff]
        %v4830 = vld [vmem:[%s4827 + $0x10] sm:$0xff]
        %v4831 = vld [vmem:[%s4827 + $0x18] sm:$0xff]
        %v4832 = vld [vmem:[%s4827 + $0x20] sm:$0xff]
        %v4833 = vld [vmem:[%s4827 + $0x28] sm:$0xff]
        %v4834 = vld [vmem:[%s4827 + $0x30] sm:$0xff]
        %v4835 = vld [vmem:[%s4827 + $0x38] sm:$0xff]
        %v4836 = vld [vmem:[%s4827 + $0x40] sm:$0xff]
        %v4837 = vld [vmem:[%s4827 + $0x48] sm:$0xff]
        %v4838 = vld [vmem:[%s4827 + $0x50] sm:$0xff]
        %v4839 = vld [vmem:[%s4827 + $0x58] sm:$0xff]
        %v4840 = vld [vmem:[%s4827 + $0x60] sm:$0xff]
        %v4841 = vld [vmem:[%s4827 + $0x68] sm:$0xff]
        %v4842 = vld [vmem:[%s4827 + $0x70] sm:$0xff]
        %v4843 = vld [vmem:[%s4827 + $0x78] sm:$0xff]
        %4844 = vmatprep.subr.mxu0 0.0
        %4845 = vmatpush1.msra.mxu0 %v4756
        %4846 = vmatprep.subr.mxu0 0.0
        %4847 = vmatpush1.msra.mxu0 0.0
        %4848 = vmatprep.subr.mxu0 0.0
        %4849 = vmatpush1.msra.mxu0 0.0
        %4850 = vmatprep.subr.mxu0 0.0
        %4851 = vmatpush1.msra.mxu0 0.0
        %4852 = vmatprep.subr.mxu0 0.0
        %4853 = vmatpush1.msra.mxu0 0.0
        %4854 = vmatprep.subr.mxu0 0.0
        %4855 = vmatpush1.msra.mxu0 0.0
        %4856 = vmatprep.subr.mxu0 0.0
        %4857 = vmatpush1.msra.mxu0 0.0
        %4858 = vmatprep.subr.mxu0 0.0
        %4859 = vmatpush1.msra.mxu0 0.0
        %4860 = vmatprep.subr.mxu0 0.0
        %4861 = vmatpush1.msra.mxu0 0.0
        %4862 = vmatprep.subr.mxu0 0.0
        %4863 = vmatpush1.msra.mxu0 0.0
        %4864 = vmatprep.subr.mxu0 0.0
        %4865 = vmatpush1.msra.mxu0 0.0
        %4866 = vmatprep.subr.mxu0 0.0
        %4867 = vmatpush1.msra.mxu0 0.0
        %4868 = vmatprep.subr.mxu0 0.0
        %4869 = vmatpush1.msra.mxu0 0.0
        %4870 = vmatprep.subr.mxu0 0.0
        %4871 = vmatpush1.msra.mxu0 0.0
        %4872 = vmatprep.subr.mxu0 0.0
        %4873 = vmatpush1.msra.mxu0 0.0
        %4874 = vmatprep.subr.mxu0 0.0
        %4875 = vmatpush1.msra.mxu0 0.0
        %4876 = vmatprep.subr.mxu0 0.0
        %4877 = vmatpush1.msra.mxu0 0.0
        %4878 = vmatprep.subr.mxu0 0.0
        %4879 = vmatpush1.msra.mxu0 0.0
        %4880 = vmatprep.subr.mxu0 0.0
        %4881 = vmatpush1.msra.mxu0 0.0
        %4882 = vmatprep.subr.mxu0 0.0
        %4883 = vmatpush1.msra.mxu0 0.0
        %4884 = vmatprep.subr.mxu0 0.0
        %4885 = vmatpush1.msra.mxu0 0.0
        %4886 = vmatprep.subr.mxu0 0.0
        %4887 = vmatpush1.msra.mxu0 0.0
        %4888 = vmatprep.subr.mxu0 0.0
        %4889 = vmatpush1.msra.mxu0 0.0
        %4890 = vmatprep.subr.mxu0 0.0
        %4891 = vmatpush1.msra.mxu0 0.0
        %4892 = vmatprep.subr.mxu0 0.0
        %4893 = vmatpush1.msra.mxu0 0.0
        %4894 = vmatprep.subr.mxu0 0.0
        %4895 = vmatpush1.msra.mxu0 0.0
        %4896 = vmatprep.subr.mxu0 0.0
        %4897 = vmatpush1.msra.mxu0 0.0
        %4898 = vmatprep.subr.mxu0 0.0
        %4899 = vmatpush1.msra.mxu0 0.0
        %4900 = vmatprep.subr.mxu0 0.0
        %4901 = vmatpush1.msra.mxu0 0.0
        %4902 = vmatprep.subr.mxu0 0.0
        %4903 = vmatpush1.msra.mxu0 0.0
        %4904 = vmatprep.subr.mxu0 0.0
        %4905 = vmatpush1.msra.mxu0 0.0
        %4906 = vmatprep.subr.mxu0 0.0
        %4907 = vmatpush1.msra.mxu0 0.0
        %4908 = vmatprep.mubr.f32.mxu0 0.0
        %4909 = vmatmul.mubr.f32.gmra.mrb[0].mxu0 %v676
        %v4910 = vpop.f32.mrb[0].mxu0
        %v4911 = vadd.f32 0.0, %v4910
        %v4912 = vpop.f32.mrb[0].mxu0
        %4913 = vdwg.mxu0
        %s4914 = scalar_lea.vmem [#allocation7], 4352
        %v4915 = vld [vmem:[%s4914] sm:$0xff]
        %v4916 = vld [vmem:[%s4914 + $0x8] sm:$0xff]
        %v4917 = vld [vmem:[%s4914 + $0x10] sm:$0xff]
        %v4918 = vld [vmem:[%s4914 + $0x18] sm:$0xff]
        %v4919 = vld [vmem:[%s4914 + $0x20] sm:$0xff]
        %v4920 = vld [vmem:[%s4914 + $0x28] sm:$0xff]
        %v4921 = vld [vmem:[%s4914 + $0x30] sm:$0xff]
        %v4922 = vld [vmem:[%s4914 + $0x38] sm:$0xff]
        %v4923 = vld [vmem:[%s4914 + $0x40] sm:$0xff]
        %v4924 = vld [vmem:[%s4914 + $0x48] sm:$0xff]
        %v4925 = vld [vmem:[%s4914 + $0x50] sm:$0xff]
        %v4926 = vld [vmem:[%s4914 + $0x58] sm:$0xff]
        %v4927 = vld [vmem:[%s4914 + $0x60] sm:$0xff]
        %v4928 = vld [vmem:[%s4914 + $0x68] sm:$0xff]
        %v4929 = vld [vmem:[%s4914 + $0x70] sm:$0xff]
        %v4930 = vld [vmem:[%s4914 + $0x78] sm:$0xff]
        %4931 = vmatprep.subr.mxu0 0.0
        %4932 = vmatpush1.msra.mxu0 %v4915
        %4933 = vmatprep.subr.mxu0 0.0
        %4934 = vmatpush1.msra.mxu0 %v4916
        %4935 = vmatprep.subr.mxu0 0.0
        %4936 = vmatpush1.msra.mxu0 %v4917
        %4937 = vmatprep.subr.mxu0 0.0
        %4938 = vmatpush1.msra.mxu0 %v4918
        %4939 = vmatprep.subr.mxu0 0.0
        %4940 = vmatpush1.msra.mxu0 %v4919
        %4941 = vmatprep.subr.mxu0 0.0
        %4942 = vmatpush1.msra.mxu0 %v4920
        %4943 = vmatprep.subr.mxu0 0.0
        %4944 = vmatpush1.msra.mxu0 %v4921
        %4945 = vmatprep.subr.mxu0 0.0
        %4946 = vmatpush1.msra.mxu0 %v4922
        %4947 = vmatprep.subr.mxu0 0.0
        %4948 = vmatpush1.msra.mxu0 %v4923
        %4949 = vmatprep.subr.mxu0 0.0
        %4950 = vmatpush1.msra.mxu0 %v4924
        %4951 = vmatprep.subr.mxu0 0.0
        %4952 = vmatpush1.msra.mxu0 %v4925
        %4953 = vmatprep.subr.mxu0 0.0
        %4954 = vmatpush1.msra.mxu0 %v4926
        %4955 = vmatprep.subr.mxu0 0.0
        %4956 = vmatpush1.msra.mxu0 %v4927
        %4957 = vmatprep.subr.mxu0 0.0
        %4958 = vmatpush1.msra.mxu0 %v4928
        %4959 = vmatprep.subr.mxu0 0.0
        %4960 = vmatpush1.msra.mxu0 %v4929
        %4961 = vmatprep.subr.mxu0 0.0
        %4962 = vmatpush1.msra.mxu0 %v4930
        %4963 = vmatprep.subr.mxu0 0.0
        %4964 = vmatpush1.msra.mxu0 0.0
        %4965 = vmatprep.subr.mxu0 0.0
        %4966 = vmatpush1.msra.mxu0 0.0
        %4967 = vmatprep.subr.mxu0 0.0
        %4968 = vmatpush1.msra.mxu0 0.0
        %4969 = vmatprep.subr.mxu0 0.0
        %4970 = vmatpush1.msra.mxu0 0.0
        %4971 = vmatprep.subr.mxu0 0.0
        %4972 = vmatpush1.msra.mxu0 0.0
        %4973 = vmatprep.subr.mxu0 0.0
        %4974 = vmatpush1.msra.mxu0 0.0
        %4975 = vmatprep.subr.mxu0 0.0
        %4976 = vmatpush1.msra.mxu0 0.0
        %4977 = vmatprep.subr.mxu0 0.0
        %4978 = vmatpush1.msra.mxu0 0.0
        %4979 = vmatprep.subr.mxu0 0.0
        %4980 = vmatpush1.msra.mxu0 0.0
        %4981 = vmatprep.subr.mxu0 0.0
        %4982 = vmatpush1.msra.mxu0 0.0
        %4983 = vmatprep.subr.mxu0 0.0
        %4984 = vmatpush1.msra.mxu0 0.0
        %4985 = vmatprep.subr.mxu0 0.0
        %4986 = vmatpush1.msra.mxu0 0.0
        %4987 = vmatprep.subr.mxu0 0.0
        %4988 = vmatpush1.msra.mxu0 0.0
        %4989 = vmatprep.subr.mxu0 0.0
        %4990 = vmatpush1.msra.mxu0 0.0
        %4991 = vmatprep.subr.mxu0 0.0
        %4992 = vmatpush1.msra.mxu0 0.0
        %4993 = vmatprep.subr.mxu0 0.0
        %4994 = vmatpush1.msra.mxu0 0.0
        %4995 = vmatprep.mubr.f32.mxu0 0.0
        %4996 = vmatmul.mubr.f32.gmra.mrb[0].mxu0 %v4911
        %v4997 = vpop.f32.mrb[0].mxu0
        %v4998 = vadd.f32 0.0, %v4997
        %v4999 = vpop.f32.mrb[0].mxu0
        %5000 = vdwg.mxu0
        %5001 = vmatprep.subr.mxu0 0.0
        %5002 = vmatpush1.msra.mxu0 %v4828
        %5003 = vmatprep.subr.mxu0 0.0
        %5004 = vmatpush1.msra.mxu0 %v4829
        %5005 = vmatprep.subr.mxu0 0.0
        %5006 = vmatpush1.msra.mxu0 %v4830
        %5007 = vmatprep.subr.mxu0 0.0
        %5008 = vmatpush1.msra.mxu0 %v4831
        %5009 = vmatprep.subr.mxu0 0.0
        %5010 = vmatpush1.msra.mxu0 %v4832
        %5011 = vmatprep.subr.mxu0 0.0
        %5012 = vmatpush1.msra.mxu0 %v4833
        %5013 = vmatprep.subr.mxu0 0.0
        %5014 = vmatpush1.msra.mxu0 %v4834
        %5015 = vmatprep.subr.mxu0 0.0
        %5016 = vmatpush1.msra.mxu0 %v4835
        %5017 = vmatprep.subr.mxu0 0.0
        %5018 = vmatpush1.msra.mxu0 %v4836
        %5019 = vmatprep.subr.mxu0 0.0
        %5020 = vmatpush1.msra.mxu0 %v4837
        %5021 = vmatprep.subr.mxu0 0.0
        %5022 = vmatpush1.msra.mxu0 %v4838
        %5023 = vmatprep.subr.mxu0 0.0
        %5024 = vmatpush1.msra.mxu0 %v4839
        %5025 = vmatprep.subr.mxu0 0.0
        %5026 = vmatpush1.msra.mxu0 %v4840
        %5027 = vmatprep.subr.mxu0 0.0
        %5028 = vmatpush1.msra.mxu0 %v4841
        %5029 = vmatprep.subr.mxu0 0.0
        %5030 = vmatpush1.msra.mxu0 %v4842
        %5031 = vmatprep.subr.mxu0 0.0
        %5032 = vmatpush1.msra.mxu0 %v4843
        %5033 = vmatprep.subr.mxu0 0.0
        %5034 = vmatpush1.msra.mxu0 0.0
        %5035 = vmatprep.subr.mxu0 0.0
        %5036 = vmatpush1.msra.mxu0 0.0
        %5037 = vmatprep.subr.mxu0 0.0
        %5038 = vmatpush1.msra.mxu0 0.0
        %5039 = vmatprep.subr.mxu0 0.0
        %5040 = vmatpush1.msra.mxu0 0.0
        %5041 = vmatprep.subr.mxu0 0.0
        %5042 = vmatpush1.msra.mxu0 0.0
        %5043 = vmatprep.subr.mxu0 0.0
        %5044 = vmatpush1.msra.mxu0 0.0
        %5045 = vmatprep.subr.mxu0 0.0
        %5046 = vmatpush1.msra.mxu0 0.0
        %5047 = vmatprep.subr.mxu0 0.0
        %5048 = vmatpush1.msra.mxu0 0.0
        %5049 = vmatprep.subr.mxu0 0.0
        %5050 = vmatpush1.msra.mxu0 0.0
        %5051 = vmatprep.subr.mxu0 0.0
        %5052 = vmatpush1.msra.mxu0 0.0
        %5053 = vmatprep.subr.mxu0 0.0
        %5054 = vmatpush1.msra.mxu0 0.0
        %5055 = vmatprep.subr.mxu0 0.0
        %5056 = vmatpush1.msra.mxu0 0.0
        %5057 = vmatprep.subr.mxu0 0.0
        %5058 = vmatpush1.msra.mxu0 0.0
        %5059 = vmatprep.subr.mxu0 0.0
        %5060 = vmatpush1.msra.mxu0 0.0
        %5061 = vmatprep.subr.mxu0 0.0
        %5062 = vmatpush1.msra.mxu0 0.0
        %5063 = vmatprep.subr.mxu0 0.0
        %5064 = vmatpush1.msra.mxu0 0.0
        %5065 = vmatprep.mubr.f32.mxu0 0.0
        %5066 = vmatmul.mubr.f32.gmra.mrb[0].mxu0 %v4824
        %v5067 = vpop.f32.mrb[0].mxu0
        %v5068 = vadd.f32 %v4998, %v5067
        %v5069 = vpop.f32.mrb[0].mxu0
        %5070 = vdwg.mxu0
        %s5071 = scalar_lea.vmem [#allocation7], 4480
        %v5072 = vld [vmem:[%s5071] sm:$0xff]
        %v5073 = vld [vmem:[%s5071 + $0x8] sm:$0xff]
        %v5074 = vld [vmem:[%s5071 + $0x10] sm:$0xff]
        %v5075 = vld [vmem:[%s5071 + $0x18] sm:$0xff]
        %v5076 = vld [vmem:[%s5071 + $0x20] sm:$0xff]
        %v5077 = vld [vmem:[%s5071 + $0x28] sm:$0xff]
        %v5078 = vld [vmem:[%s5071 + $0x30] sm:$0xff]
        %v5079 = vld [vmem:[%s5071 + $0x38] sm:$0xff]
        %v5080 = vld [vmem:[%s5071 + $0x40] sm:$0xff]
        %v5081 = vld [vmem:[%s5071 + $0x48] sm:$0xff]
        %v5082 = vld [vmem:[%s5071 + $0x50] sm:$0xff]
        %v5083 = vld [vmem:[%s5071 + $0x58] sm:$0xff]
        %v5084 = vld [vmem:[%s5071 + $0x60] sm:$0xff]
        %v5085 = vld [vmem:[%s5071 + $0x68] sm:$0xff]
        %v5086 = vld [vmem:[%s5071 + $0x70] sm:$0xff]
        %v5087 = vld [vmem:[%s5071 + $0x78] sm:$0xff]
        %5088 = vmatprep.subr.mxu0 0.0
        %5089 = vmatpush1.msra.mxu0 %v5072
        %5090 = vmatprep.subr.mxu0 0.0
        %5091 = vmatpush1.msra.mxu0 %v5073
        %5092 = vmatprep.subr.mxu0 0.0
        %5093 = vmatpush1.msra.mxu0 %v5074
        %5094 = vmatprep.subr.mxu0 0.0
        %5095 = vmatpush1.msra.mxu0 %v5075
        %5096 = vmatprep.subr.mxu0 0.0
        %5097 = vmatpush1.msra.mxu0 %v5076
        %5098 = vmatprep.subr.mxu0 0.0
        %5099 = vmatpush1.msra.mxu0 %v5077
        %5100 = vmatprep.subr.mxu0 0.0
        %5101 = vmatpush1.msra.mxu0 %v5078
        %5102 = vmatprep.subr.mxu0 0.0
        %5103 = vmatpush1.msra.mxu0 %v5079
        %5104 = vmatprep.subr.mxu0 0.0
        %5105 = vmatpush1.msra.mxu0 %v5080
        %5106 = vmatprep.subr.mxu0 0.0
        %5107 = vmatpush1.msra.mxu0 %v5081
        %5108 = vmatprep.subr.mxu0 0.0
        %5109 = vmatpush1.msra.mxu0 %v5082
        %5110 = vmatprep.subr.mxu0 0.0
        %5111 = vmatpush1.msra.mxu0 %v5083
        %5112 = vmatprep.subr.mxu0 0.0
        %5113 = vmatpush1.msra.mxu0 %v5084
        %5114 = vmatprep.subr.mxu0 0.0
        %5115 = vmatpush1.msra.mxu0 %v5085
        %5116 = vmatprep.subr.mxu0 0.0
        %5117 = vmatpush1.msra.mxu0 %v5086
        %5118 = vmatprep.subr.mxu0 0.0
        %5119 = vmatpush1.msra.mxu0 %v5087
        %5120 = vmatprep.subr.mxu0 0.0
        %5121 = vmatpush1.msra.mxu0 0.0
        %5122 = vmatprep.subr.mxu0 0.0
        %5123 = vmatpush1.msra.mxu0 0.0
        %5124 = vmatprep.subr.mxu0 0.0
        %5125 = vmatpush1.msra.mxu0 0.0
        %5126 = vmatprep.subr.mxu0 0.0
        %5127 = vmatpush1.msra.mxu0 0.0
        %5128 = vmatprep.subr.mxu0 0.0
        %5129 = vmatpush1.msra.mxu0 0.0
        %5130 = vmatprep.subr.mxu0 0.0
        %5131 = vmatpush1.msra.mxu0 0.0
        %5132 = vmatprep.subr.mxu0 0.0
        %5133 = vmatpush1.msra.mxu0 0.0
        %5134 = vmatprep.subr.mxu0 0.0
        %5135 = vmatpush1.msra.mxu0 0.0
        %5136 = vmatprep.subr.mxu0 0.0
        %5137 = vmatpush1.msra.mxu0 0.0
        %5138 = vmatprep.subr.mxu0 0.0
        %5139 = vmatpush1.msra.mxu0 0.0
        %5140 = vmatprep.subr.mxu0 0.0
        %5141 = vmatpush1.msra.mxu0 0.0
        %5142 = vmatprep.subr.mxu0 0.0
        %5143 = vmatpush1.msra.mxu0 0.0
        %5144 = vmatprep.subr.mxu0 0.0
        %5145 = vmatpush1.msra.mxu0 0.0
        %5146 = vmatprep.subr.mxu0 0.0
        %5147 = vmatpush1.msra.mxu0 0.0
        %5148 = vmatprep.subr.mxu0 0.0
        %5149 = vmatpush1.msra.mxu0 0.0
        %5150 = vmatprep.subr.mxu0 0.0
        %5151 = vmatpush1.msra.mxu0 0.0
        %5152 = vmatprep.mubr.f32.mxu0 0.0
        %5153 = vmatmul.mubr.f32.gmra.mrb[0].mxu0 %v4756
        %v5154 = vpop.f32.mrb[0].mxu0
        %v5155 = vadd.f32 0.0, %v5154
        %v5156 = vpop.f32.mrb[0].mxu0
        %5157 = vdwg.mxu0
        %v5158 = vadd.f32 %v5068, %v5155
        %5159 = vmatprep.subr.mxu0 0.0
        %5160 = vmatpush1.msra.mxu0 %v4756
        %5161 = vmatprep.subr.mxu0 0.0
        %5162 = vmatpush1.msra.mxu0 0.0
        %5163 = vmatprep.subr.mxu0 0.0
        %5164 = vmatpush1.msra.mxu0 0.0
        %5165 = vmatprep.subr.mxu0 0.0
        %5166 = vmatpush1.msra.mxu0 0.0
        %5167 = vmatprep.subr.mxu0 0.0
        %5168 = vmatpush1.msra.mxu0 0.0
        %5169 = vmatprep.subr.mxu0 0.0
        %5170 = vmatpush1.msra.mxu0 0.0
        %5171 = vmatprep.subr.mxu0 0.0
        %5172 = vmatpush1.msra.mxu0 0.0
        %5173 = vmatprep.subr.mxu0 0.0
        %5174 = vmatpush1.msra.mxu0 0.0
        %5175 = vmatprep.subr.mxu0 0.0
        %5176 = vmatpush1.msra.mxu0 0.0
        %5177 = vmatprep.subr.mxu0 0.0
        %5178 = vmatpush1.msra.mxu0 0.0
        %5179 = vmatprep.subr.mxu0 0.0
        %5180 = vmatpush1.msra.mxu0 0.0
        %5181 = vmatprep.subr.mxu0 0.0
        %5182 = vmatpush1.msra.mxu0 0.0
        %5183 = vmatprep.subr.mxu0 0.0
        %5184 = vmatpush1.msra.mxu0 0.0
        %5185 = vmatprep.subr.mxu0 0.0
        %5186 = vmatpush1.msra.mxu0 0.0
        %5187 = vmatprep.subr.mxu0 0.0
        %5188 = vmatpush1.msra.mxu0 0.0
        %5189 = vmatprep.subr.mxu0 0.0
        %5190 = vmatpush1.msra.mxu0 0.0
        %5191 = vmatprep.subr.mxu0 0.0
        %5192 = vmatpush1.msra.mxu0 0.0
        %5193 = vmatprep.subr.mxu0 0.0
        %5194 = vmatpush1.msra.mxu0 0.0
        %5195 = vmatprep.subr.mxu0 0.0
        %5196 = vmatpush1.msra.mxu0 0.0
        %5197 = vmatprep.subr.mxu0 0.0
        %5198 = vmatpush1.msra.mxu0 0.0
        %5199 = vmatprep.subr.mxu0 0.0
        %5200 = vmatpush1.msra.mxu0 0.0
        %5201 = vmatprep.subr.mxu0 0.0
        %5202 = vmatpush1.msra.mxu0 0.0
        %5203 = vmatprep.subr.mxu0 0.0
        %5204 = vmatpush1.msra.mxu0 0.0
        %5205 = vmatprep.subr.mxu0 0.0
        %5206 = vmatpush1.msra.mxu0 0.0
        %5207 = vmatprep.subr.mxu0 0.0
        %5208 = vmatpush1.msra.mxu0 0.0
        %5209 = vmatprep.subr.mxu0 0.0
        %5210 = vmatpush1.msra.mxu0 0.0
        %5211 = vmatprep.subr.mxu0 0.0
        %5212 = vmatpush1.msra.mxu0 0.0
        %5213 = vmatprep.subr.mxu0 0.0
        %5214 = vmatpush1.msra.mxu0 0.0
        %5215 = vmatprep.subr.mxu0 0.0
        %5216 = vmatpush1.msra.mxu0 0.0
        %5217 = vmatprep.subr.mxu0 0.0
        %5218 = vmatpush1.msra.mxu0 0.0
        %5219 = vmatprep.subr.mxu0 0.0
        %5220 = vmatpush1.msra.mxu0 0.0
        %5221 = vmatprep.subr.mxu0 0.0
        %5222 = vmatpush1.msra.mxu0 0.0
        %5223 = vmatprep.mubr.f32.mxu0 0.0
        %5224 = vmatmul.mubr.f32.gmra.mrb[0].mxu0 %v996
        %v5225 = vpop.f32.mrb[0].mxu0
        %v5226 = vadd.f32 0.0, %v5225
        %v5227 = vpop.f32.mrb[0].mxu0
        %5228 = vdwg.mxu0
        %s5229 = scalar_lea.vmem [#allocation7], 4608
        %v5230 = vld [vmem:[%s5229] sm:$0xff]
        %v5231 = vld [vmem:[%s5229 + $0x8] sm:$0xff]
        %v5232 = vld [vmem:[%s5229 + $0x10] sm:$0xff]
        %v5233 = vld [vmem:[%s5229 + $0x18] sm:$0xff]
        %v5234 = vld [vmem:[%s5229 + $0x20] sm:$0xff]
        %v5235 = vld [vmem:[%s5229 + $0x28] sm:$0xff]
        %v5236 = vld [vmem:[%s5229 + $0x30] sm:$0xff]
        %v5237 = vld [vmem:[%s5229 + $0x38] sm:$0xff]
        %v5238 = vld [vmem:[%s5229 + $0x40] sm:$0xff]
        %v5239 = vld [vmem:[%s5229 + $0x48] sm:$0xff]
        %v5240 = vld [vmem:[%s5229 + $0x50] sm:$0xff]
        %v5241 = vld [vmem:[%s5229 + $0x58] sm:$0xff]
        %v5242 = vld [vmem:[%s5229 + $0x60] sm:$0xff]
        %v5243 = vld [vmem:[%s5229 + $0x68] sm:$0xff]
        %v5244 = vld [vmem:[%s5229 + $0x70] sm:$0xff]
        %v5245 = vld [vmem:[%s5229 + $0x78] sm:$0xff]
        %5246 = vmatprep.subr.mxu0 0.0
        %5247 = vmatpush1.msra.mxu0 %v5230
        %5248 = vmatprep.subr.mxu0 0.0
        %5249 = vmatpush1.msra.mxu0 %v5231
        %5250 = vmatprep.subr.mxu0 0.0
        %5251 = vmatpush1.msra.mxu0 %v5232
        %5252 = vmatprep.subr.mxu0 0.0
        %5253 = vmatpush1.msra.mxu0 %v5233
        %5254 = vmatprep.subr.mxu0 0.0
        %5255 = vmatpush1.msra.mxu0 %v5234
        %5256 = vmatprep.subr.mxu0 0.0
        %5257 = vmatpush1.msra.mxu0 %v5235
        %5258 = vmatprep.subr.mxu0 0.0
        %5259 = vmatpush1.msra.mxu0 %v5236
        %5260 = vmatprep.subr.mxu0 0.0
        %5261 = vmatpush1.msra.mxu0 %v5237
        %5262 = vmatprep.subr.mxu0 0.0
        %5263 = vmatpush1.msra.mxu0 %v5238
        %5264 = vmatprep.subr.mxu0 0.0
        %5265 = vmatpush1.msra.mxu0 %v5239
        %5266 = vmatprep.subr.mxu0 0.0
        %5267 = vmatpush1.msra.mxu0 %v5240
        %5268 = vmatprep.subr.mxu0 0.0
        %5269 = vmatpush1.msra.mxu0 %v5241
        %5270 = vmatprep.subr.mxu0 0.0
        %5271 = vmatpush1.msra.mxu0 %v5242
        %5272 = vmatprep.subr.mxu0 0.0
        %5273 = vmatpush1.msra.mxu0 %v5243
        %5274 = vmatprep.subr.mxu0 0.0
        %5275 = vmatpush1.msra.mxu0 %v5244
        %5276 = vmatprep.subr.mxu0 0.0
        %5277 = vmatpush1.msra.mxu0 %v5245
        %5278 = vmatprep.subr.mxu0 0.0
        %5279 = vmatpush1.msra.mxu0 0.0
        %5280 = vmatprep.subr.mxu0 0.0
        %5281 = vmatpush1.msra.mxu0 0.0
        %5282 = vmatprep.subr.mxu0 0.0
        %5283 = vmatpush1.msra.mxu0 0.0
        %5284 = vmatprep.subr.mxu0 0.0
        %5285 = vmatpush1.msra.mxu0 0.0
        %5286 = vmatprep.subr.mxu0 0.0
        %5287 = vmatpush1.msra.mxu0 0.0
        %5288 = vmatprep.subr.mxu0 0.0
        %5289 = vmatpush1.msra.mxu0 0.0
        %5290 = vmatprep.subr.mxu0 0.0
        %5291 = vmatpush1.msra.mxu0 0.0
        %5292 = vmatprep.subr.mxu0 0.0
        %5293 = vmatpush1.msra.mxu0 0.0
        %5294 = vmatprep.subr.mxu0 0.0
        %5295 = vmatpush1.msra.mxu0 0.0
        %5296 = vmatprep.subr.mxu0 0.0
        %5297 = vmatpush1.msra.mxu0 0.0
        %5298 = vmatprep.subr.mxu0 0.0
        %5299 = vmatpush1.msra.mxu0 0.0
        %5300 = vmatprep.subr.mxu0 0.0
        %5301 = vmatpush1.msra.mxu0 0.0
        %5302 = vmatprep.subr.mxu0 0.0
        %5303 = vmatpush1.msra.mxu0 0.0
        %5304 = vmatprep.subr.mxu0 0.0
        %5305 = vmatpush1.msra.mxu0 0.0
        %5306 = vmatprep.subr.mxu0 0.0
        %5307 = vmatpush1.msra.mxu0 0.0
        %5308 = vmatprep.subr.mxu0 0.0
        %5309 = vmatpush1.msra.mxu0 0.0
        %5310 = vmatprep.mubr.f32.mxu0 0.0
        %5311 = vmatmul.mubr.f32.gmra.mrb[0].mxu0 %v5226
        %v5312 = vpop.f32.mrb[0].mxu0
        %v5313 = vadd.f32 0.0, %v5312
        %v5314 = vpop.f32.mrb[0].mxu0
        %5315 = vdwg.mxu0
        %v5316 = vadd.f32 %v5158, %v5313
        %5317 = vmatprep.subr.mxu0 0.0
        %5318 = vmatpush1.msra.mxu0 %v4756
        %5319 = vmatprep.subr.mxu0 0.0
        %5320 = vmatpush1.msra.mxu0 0.0
        %5321 = vmatprep.subr.mxu0 0.0
        %5322 = vmatpush1.msra.mxu0 0.0
        %5323 = vmatprep.subr.mxu0 0.0
        %5324 = vmatpush1.msra.mxu0 0.0
        %5325 = vmatprep.subr.mxu0 0.0
        %5326 = vmatpush1.msra.mxu0 0.0
        %5327 = vmatprep.subr.mxu0 0.0
        %5328 = vmatpush1.msra.mxu0 0.0
        %5329 = vmatprep.subr.mxu0 0.0
        %5330 = vmatpush1.msra.mxu0 0.0
        %5331 = vmatprep.subr.mxu0 0.0
        %5332 = vmatpush1.msra.mxu0 0.0
        %5333 = vmatprep.subr.mxu0 0.0
        %5334 = vmatpush1.msra.mxu0 0.0
        %5335 = vmatprep.subr.mxu0 0.0
        %5336 = vmatpush1.msra.mxu0 0.0
        %5337 = vmatprep.subr.mxu0 0.0
        %5338 = vmatpush1.msra.mxu0 0.0
        %5339 = vmatprep.subr.mxu0 0.0
        %5340 = vmatpush1.msra.mxu0 0.0
        %5341 = vmatprep.subr.mxu0 0.0
        %5342 = vmatpush1.msra.mxu0 0.0
        %5343 = vmatprep.subr.mxu0 0.0
        %5344 = vmatpush1.msra.mxu0 0.0
        %5345 = vmatprep.subr.mxu0 0.0
        %5346 = vmatpush1.msra.mxu0 0.0
        %5347 = vmatprep.subr.mxu0 0.0
        %5348 = vmatpush1.msra.mxu0 0.0
        %5349 = vmatprep.subr.mxu0 0.0
        %5350 = vmatpush1.msra.mxu0 0.0
        %5351 = vmatprep.subr.mxu0 0.0
        %5352 = vmatpush1.msra.mxu0 0.0
        %5353 = vmatprep.subr.mxu0 0.0
        %5354 = vmatpush1.msra.mxu0 0.0
        %5355 = vmatprep.subr.mxu0 0.0
        %5356 = vmatpush1.msra.mxu0 0.0
        %5357 = vmatprep.subr.mxu0 0.0
        %5358 = vmatpush1.msra.mxu0 0.0
        %5359 = vmatprep.subr.mxu0 0.0
        %5360 = vmatpush1.msra.mxu0 0.0
        %5361 = vmatprep.subr.mxu0 0.0
        %5362 = vmatpush1.msra.mxu0 0.0
        %5363 = vmatprep.subr.mxu0 0.0
        %5364 = vmatpush1.msra.mxu0 0.0
        %5365 = vmatprep.subr.mxu0 0.0
        %5366 = vmatpush1.msra.mxu0 0.0
        %5367 = vmatprep.subr.mxu0 0.0
        %5368 = vmatpush1.msra.mxu0 0.0
        %5369 = vmatprep.subr.mxu0 0.0
        %5370 = vmatpush1.msra.mxu0 0.0
        %5371 = vmatprep.subr.mxu0 0.0
        %5372 = vmatpush1.msra.mxu0 0.0
        %5373 = vmatprep.subr.mxu0 0.0
        %5374 = vmatpush1.msra.mxu0 0.0
        %5375 = vmatprep.subr.mxu0 0.0
        %5376 = vmatpush1.msra.mxu0 0.0
        %5377 = vmatprep.subr.mxu0 0.0
        %5378 = vmatpush1.msra.mxu0 0.0
        %5379 = vmatprep.subr.mxu0 0.0
        %5380 = vmatpush1.msra.mxu0 0.0
        %5381 = vmatprep.mubr.f32.mxu0 0.0
        %5382 = vmatmul.mubr.f32.gmra.mrb[0].mxu0 %v1159
        %v5383 = vpop.f32.mrb[0].mxu0
        %v5384 = vadd.f32 0.0, %v5383
        %v5385 = vpop.f32.mrb[0].mxu0
        %5386 = vdwg.mxu0
        %s5387 = scalar_lea.vmem [#allocation7], 4736
        %v5388 = vld [vmem:[%s5387] sm:$0xff]
        %v5389 = vld [vmem:[%s5387 + $0x8] sm:$0xff]
        %v5390 = vld [vmem:[%s5387 + $0x10] sm:$0xff]
        %v5391 = vld [vmem:[%s5387 + $0x18] sm:$0xff]
        %v5392 = vld [vmem:[%s5387 + $0x20] sm:$0xff]
        %v5393 = vld [vmem:[%s5387 + $0x28] sm:$0xff]
        %v5394 = vld [vmem:[%s5387 + $0x30] sm:$0xff]
        %v5395 = vld [vmem:[%s5387 + $0x38] sm:$0xff]
        %v5396 = vld [vmem:[%s5387 + $0x40] sm:$0xff]
        %v5397 = vld [vmem:[%s5387 + $0x48] sm:$0xff]
        %v5398 = vld [vmem:[%s5387 + $0x50] sm:$0xff]
        %v5399 = vld [vmem:[%s5387 + $0x58] sm:$0xff]
        %v5400 = vld [vmem:[%s5387 + $0x60] sm:$0xff]
        %v5401 = vld [vmem:[%s5387 + $0x68] sm:$0xff]
        %v5402 = vld [vmem:[%s5387 + $0x70] sm:$0xff]
        %v5403 = vld [vmem:[%s5387 + $0x78] sm:$0xff]
        %5404 = vmatprep.subr.mxu0 0.0
        %5405 = vmatpush1.msra.mxu0 %v5388
        %5406 = vmatprep.subr.mxu0 0.0
        %5407 = vmatpush1.msra.mxu0 %v5389
        %5408 = vmatprep.subr.mxu0 0.0
        %5409 = vmatpush1.msra.mxu0 %v5390
        %5410 = vmatprep.subr.mxu0 0.0
        %5411 = vmatpush1.msra.mxu0 %v5391
        %5412 = vmatprep.subr.mxu0 0.0
        %5413 = vmatpush1.msra.mxu0 %v5392
        %5414 = vmatprep.subr.mxu0 0.0
        %5415 = vmatpush1.msra.mxu0 %v5393
        %5416 = vmatprep.subr.mxu0 0.0
        %5417 = vmatpush1.msra.mxu0 %v5394
        %5418 = vmatprep.subr.mxu0 0.0
        %5419 = vmatpush1.msra.mxu0 %v5395
        %5420 = vmatprep.subr.mxu0 0.0
        %5421 = vmatpush1.msra.mxu0 %v5396
        %5422 = vmatprep.subr.mxu0 0.0
        %5423 = vmatpush1.msra.mxu0 %v5397
        %5424 = vmatprep.subr.mxu0 0.0
        %5425 = vmatpush1.msra.mxu0 %v5398
        %5426 = vmatprep.subr.mxu0 0.0
        %5427 = vmatpush1.msra.mxu0 %v5399
        %5428 = vmatprep.subr.mxu0 0.0
        %5429 = vmatpush1.msra.mxu0 %v5400
        %5430 = vmatprep.subr.mxu0 0.0
        %5431 = vmatpush1.msra.mxu0 %v5401
        %5432 = vmatprep.subr.mxu0 0.0
        %5433 = vmatpush1.msra.mxu0 %v5402
        %5434 = vmatprep.subr.mxu0 0.0
        %5435 = vmatpush1.msra.mxu0 %v5403
        %5436 = vmatprep.subr.mxu0 0.0
        %5437 = vmatpush1.msra.mxu0 0.0
        %5438 = vmatprep.subr.mxu0 0.0
        %5439 = vmatpush1.msra.mxu0 0.0
        %5440 = vmatprep.subr.mxu0 0.0
        %5441 = vmatpush1.msra.mxu0 0.0
        %5442 = vmatprep.subr.mxu0 0.0
        %5443 = vmatpush1.msra.mxu0 0.0
        %5444 = vmatprep.subr.mxu0 0.0
        %5445 = vmatpush1.msra.mxu0 0.0
        %5446 = vmatprep.subr.mxu0 0.0
        %5447 = vmatpush1.msra.mxu0 0.0
        %5448 = vmatprep.subr.mxu0 0.0
        %5449 = vmatpush1.msra.mxu0 0.0
        %5450 = vmatprep.subr.mxu0 0.0
        %5451 = vmatpush1.msra.mxu0 0.0
        %5452 = vmatprep.subr.mxu0 0.0
        %5453 = vmatpush1.msra.mxu0 0.0
        %5454 = vmatprep.subr.mxu0 0.0
        %5455 = vmatpush1.msra.mxu0 0.0
        %5456 = vmatprep.subr.mxu0 0.0
        %5457 = vmatpush1.msra.mxu0 0.0
        %5458 = vmatprep.subr.mxu0 0.0
        %5459 = vmatpush1.msra.mxu0 0.0
        %5460 = vmatprep.subr.mxu0 0.0
        %5461 = vmatpush1.msra.mxu0 0.0
        %5462 = vmatprep.subr.mxu0 0.0
        %5463 = vmatpush1.msra.mxu0 0.0
        %5464 = vmatprep.subr.mxu0 0.0
        %5465 = vmatpush1.msra.mxu0 0.0
        %5466 = vmatprep.subr.mxu0 0.0
        %5467 = vmatpush1.msra.mxu0 0.0
        %5468 = vmatprep.mubr.f32.mxu0 0.0
        %5469 = vmatmul.mubr.f32.gmra.mrb[0].mxu0 %v5384
        %v5470 = vpop.f32.mrb[0].mxu0
        %v5471 = vadd.f32 0.0, %v5470
        %v5472 = vpop.f32.mrb[0].mxu0
        %5473 = vdwg.mxu0
        %v5474 = vadd.f32 %v5316, %v5471
        %5475 = vmatprep.subr.mxu0 0.0
        %5476 = vmatpush1.msra.mxu0 %v2038
        %5477 = vmatprep.subr.mxu0 0.0
        %5478 = vmatpush1.msra.mxu0 0.0
        %5479 = vmatprep.subr.mxu0 0.0
        %5480 = vmatpush1.msra.mxu0 0.0
        %5481 = vmatprep.subr.mxu0 0.0
        %5482 = vmatpush1.msra.mxu0 0.0
        %5483 = vmatprep.subr.mxu0 0.0
        %5484 = vmatpush1.msra.mxu0 0.0
        %5485 = vmatprep.subr.mxu0 0.0
        %5486 = vmatpush1.msra.mxu0 0.0
        %5487 = vmatprep.subr.mxu0 0.0
        %5488 = vmatpush1.msra.mxu0 0.0
        %5489 = vmatprep.subr.mxu0 0.0
        %5490 = vmatpush1.msra.mxu0 0.0
        %5491 = vmatprep.subr.mxu0 0.0
        %5492 = vmatpush1.msra.mxu0 0.0
        %5493 = vmatprep.subr.mxu0 0.0
        %5494 = vmatpush1.msra.mxu0 0.0
        %5495 = vmatprep.subr.mxu0 0.0
        %5496 = vmatpush1.msra.mxu0 0.0
        %5497 = vmatprep.subr.mxu0 0.0
        %5498 = vmatpush1.msra.mxu0 0.0
        %5499 = vmatprep.subr.mxu0 0.0
        %5500 = vmatpush1.msra.mxu0 0.0
        %5501 = vmatprep.subr.mxu0 0.0
        %5502 = vmatpush1.msra.mxu0 0.0
        %5503 = vmatprep.subr.mxu0 0.0
        %5504 = vmatpush1.msra.mxu0 0.0
        %5505 = vmatprep.subr.mxu0 0.0
        %5506 = vmatpush1.msra.mxu0 0.0
        %5507 = vmatprep.subr.mxu0 0.0
        %5508 = vmatpush1.msra.mxu0 0.0
        %5509 = vmatprep.subr.mxu0 0.0
        %5510 = vmatpush1.msra.mxu0 0.0
        %5511 = vmatprep.subr.mxu0 0.0
        %5512 = vmatpush1.msra.mxu0 0.0
        %5513 = vmatprep.subr.mxu0 0.0
        %5514 = vmatpush1.msra.mxu0 0.0
        %5515 = vmatprep.subr.mxu0 0.0
        %5516 = vmatpush1.msra.mxu0 0.0
        %5517 = vmatprep.subr.mxu0 0.0
        %5518 = vmatpush1.msra.mxu0 0.0
        %5519 = vmatprep.subr.mxu0 0.0
        %5520 = vmatpush1.msra.mxu0 0.0
        %5521 = vmatprep.subr.mxu0 0.0
        %5522 = vmatpush1.msra.mxu0 0.0
        %5523 = vmatprep.subr.mxu0 0.0
        %5524 = vmatpush1.msra.mxu0 0.0
        %5525 = vmatprep.subr.mxu0 0.0
        %5526 = vmatpush1.msra.mxu0 0.0
        %5527 = vmatprep.subr.mxu0 0.0
        %5528 = vmatpush1.msra.mxu0 0.0
        %5529 = vmatprep.subr.mxu0 0.0
        %5530 = vmatpush1.msra.mxu0 0.0
        %5531 = vmatprep.subr.mxu0 0.0
        %5532 = vmatpush1.msra.mxu0 0.0
        %5533 = vmatprep.subr.mxu0 0.0
        %5534 = vmatpush1.msra.mxu0 0.0
        %5535 = vmatprep.subr.mxu0 0.0
        %5536 = vmatpush1.msra.mxu0 0.0
        %5537 = vmatprep.subr.mxu0 0.0
        %5538 = vmatpush1.msra.mxu0 0.0
        %5539 = vmatprep.mubr.f32.mxu0 0.0
        %5540 = vmatmul.mubr.f32.gmra.mrb[0].mxu0 %v585
        %v5541 = vpop.f32.mrb[0].mxu0
        %v5542 = vadd.f32 0.0, %v5541
        %v5543 = vpop.f32.mrb[0].mxu0
        %5544 = vdwg.mxu0
        %s5545 = scalar_lea.vmem [#allocation7], 4864
        %v5546 = vld [vmem:[%s5545] sm:$0xff]
        %v5547 = vld [vmem:[%s5545 + $0x8] sm:$0xff]
        %v5548 = vld [vmem:[%s5545 + $0x10] sm:$0xff]
        %v5549 = vld [vmem:[%s5545 + $0x18] sm:$0xff]
        %v5550 = vld [vmem:[%s5545 + $0x20] sm:$0xff]
        %v5551 = vld [vmem:[%s5545 + $0x28] sm:$0xff]
        %v5552 = vld [vmem:[%s5545 + $0x30] sm:$0xff]
        %v5553 = vld [vmem:[%s5545 + $0x38] sm:$0xff]
        %v5554 = vld [vmem:[%s5545 + $0x40] sm:$0xff]
        %v5555 = vld [vmem:[%s5545 + $0x48] sm:$0xff]
        %v5556 = vld [vmem:[%s5545 + $0x50] sm:$0xff]
        %v5557 = vld [vmem:[%s5545 + $0x58] sm:$0xff]
        %v5558 = vld [vmem:[%s5545 + $0x60] sm:$0xff]
        %v5559 = vld [vmem:[%s5545 + $0x68] sm:$0xff]
        %v5560 = vld [vmem:[%s5545 + $0x70] sm:$0xff]
        %v5561 = vld [vmem:[%s5545 + $0x78] sm:$0xff]
        %s5562 = scalar_lea.vmem [#allocation7], 4992
        %v5563 = vld [vmem:[%s5562] sm:$0xff]
        %v5564 = vld [vmem:[%s5562 + $0x8] sm:$0xff]
        %v5565 = vld [vmem:[%s5562 + $0x10] sm:$0xff]
        %v5566 = vld [vmem:[%s5562 + $0x18] sm:$0xff]
        %v5567 = vld [vmem:[%s5562 + $0x20] sm:$0xff]
        %v5568 = vld [vmem:[%s5562 + $0x28] sm:$0xff]
        %v5569 = vld [vmem:[%s5562 + $0x30] sm:$0xff]
        %v5570 = vld [vmem:[%s5562 + $0x38] sm:$0xff]
        %v5571 = vld [vmem:[%s5562 + $0x40] sm:$0xff]
        %v5572 = vld [vmem:[%s5562 + $0x48] sm:$0xff]
        %v5573 = vld [vmem:[%s5562 + $0x50] sm:$0xff]
        %v5574 = vld [vmem:[%s5562 + $0x58] sm:$0xff]
        %v5575 = vld [vmem:[%s5562 + $0x60] sm:$0xff]
        %v5576 = vld [vmem:[%s5562 + $0x68] sm:$0xff]
        %v5577 = vld [vmem:[%s5562 + $0x70] sm:$0xff]
        %v5578 = vld [vmem:[%s5562 + $0x78] sm:$0xff]
        %5579 = vmatprep.subr.mxu0 0.0
        %5580 = vmatpush1.msra.mxu0 %v5563
        %5581 = vmatprep.subr.mxu0 0.0
        %5582 = vmatpush1.msra.mxu0 %v5564
        %5583 = vmatprep.subr.mxu0 0.0
        %5584 = vmatpush1.msra.mxu0 %v5565
        %5585 = vmatprep.subr.mxu0 0.0
        %5586 = vmatpush1.msra.mxu0 %v5566
        %5587 = vmatprep.subr.mxu0 0.0
        %5588 = vmatpush1.msra.mxu0 %v5567
        %5589 = vmatprep.subr.mxu0 0.0
        %5590 = vmatpush1.msra.mxu0 %v5568
        %5591 = vmatprep.subr.mxu0 0.0
        %5592 = vmatpush1.msra.mxu0 %v5569
        %5593 = vmatprep.subr.mxu0 0.0
        %5594 = vmatpush1.msra.mxu0 %v5570
        %5595 = vmatprep.subr.mxu0 0.0
        %5596 = vmatpush1.msra.mxu0 %v5571
        %5597 = vmatprep.subr.mxu0 0.0
        %5598 = vmatpush1.msra.mxu0 %v5572
        %5599 = vmatprep.subr.mxu0 0.0
        %5600 = vmatpush1.msra.mxu0 %v5573
        %5601 = vmatprep.subr.mxu0 0.0
        %5602 = vmatpush1.msra.mxu0 %v5574
        %5603 = vmatprep.subr.mxu0 0.0
        %5604 = vmatpush1.msra.mxu0 %v5575
        %5605 = vmatprep.subr.mxu0 0.0
        %5606 = vmatpush1.msra.mxu0 %v5576
        %5607 = vmatprep.subr.mxu0 0.0
        %5608 = vmatpush1.msra.mxu0 %v5577
        %5609 = vmatprep.subr.mxu0 0.0
        %5610 = vmatpush1.msra.mxu0 %v5578
        %5611 = vmatprep.subr.mxu0 0.0
        %5612 = vmatpush1.msra.mxu0 0.0
        %5613 = vmatprep.subr.mxu0 0.0
        %5614 = vmatpush1.msra.mxu0 0.0
        %5615 = vmatprep.subr.mxu0 0.0
        %5616 = vmatpush1.msra.mxu0 0.0
        %5617 = vmatprep.subr.mxu0 0.0
        %5618 = vmatpush1.msra.mxu0 0.0
        %5619 = vmatprep.subr.mxu0 0.0
        %5620 = vmatpush1.msra.mxu0 0.0
        %5621 = vmatprep.subr.mxu0 0.0
        %5622 = vmatpush1.msra.mxu0 0.0
        %5623 = vmatprep.subr.mxu0 0.0
        %5624 = vmatpush1.msra.mxu0 0.0
        %5625 = vmatprep.subr.mxu0 0.0
        %5626 = vmatpush1.msra.mxu0 0.0
        %5627 = vmatprep.subr.mxu0 0.0
        %5628 = vmatpush1.msra.mxu0 0.0
        %5629 = vmatprep.subr.mxu0 0.0
        %5630 = vmatpush1.msra.mxu0 0.0
        %5631 = vmatprep.subr.mxu0 0.0
        %5632 = vmatpush1.msra.mxu0 0.0
        %5633 = vmatprep.subr.mxu0 0.0
        %5634 = vmatpush1.msra.mxu0 0.0
        %5635 = vmatprep.subr.mxu0 0.0
        %5636 = vmatpush1.msra.mxu0 0.0
        %5637 = vmatprep.subr.mxu0 0.0
        %5638 = vmatpush1.msra.mxu0 0.0
        %5639 = vmatprep.subr.mxu0 0.0
        %5640 = vmatpush1.msra.mxu0 0.0
        %5641 = vmatprep.subr.mxu0 0.0
        %5642 = vmatpush1.msra.mxu0 0.0
        %5643 = vmatprep.mubr.f32.mxu0 0.0
        %5644 = vmatmul.mubr.f32.gmra.mrb[0].mxu0 %v2106
        %v5645 = vpop.f32.mrb[0].mxu0
        %v5646 = vadd.f32 0.0, %v5645
        %v5647 = vpop.f32.mrb[0].mxu0
        %5648 = vdwg.mxu0
        %5649 = vmatprep.subr.mxu0 0.0
        %5650 = vmatpush1.msra.mxu0 %v5546
        %5651 = vmatprep.subr.mxu0 0.0
        %5652 = vmatpush1.msra.mxu0 %v5547
        %5653 = vmatprep.subr.mxu0 0.0
        %5654 = vmatpush1.msra.mxu0 %v5548
        %5655 = vmatprep.subr.mxu0 0.0
        %5656 = vmatpush1.msra.mxu0 %v5549
        %5657 = vmatprep.subr.mxu0 0.0
        %5658 = vmatpush1.msra.mxu0 %v5550
        %5659 = vmatprep.subr.mxu0 0.0
        %5660 = vmatpush1.msra.mxu0 %v5551
        %5661 = vmatprep.subr.mxu0 0.0
        %5662 = vmatpush1.msra.mxu0 %v5552
        %5663 = vmatprep.subr.mxu0 0.0
        %5664 = vmatpush1.msra.mxu0 %v5553
        %5665 = vmatprep.subr.mxu0 0.0
        %5666 = vmatpush1.msra.mxu0 %v5554
        %5667 = vmatprep.subr.mxu0 0.0
        %5668 = vmatpush1.msra.mxu0 %v5555
        %5669 = vmatprep.subr.mxu0 0.0
        %5670 = vmatpush1.msra.mxu0 %v5556
        %5671 = vmatprep.subr.mxu0 0.0
        %5672 = vmatpush1.msra.mxu0 %v5557
        %5673 = vmatprep.subr.mxu0 0.0
        %5674 = vmatpush1.msra.mxu0 %v5558
        %5675 = vmatprep.subr.mxu0 0.0
        %5676 = vmatpush1.msra.mxu0 %v5559
        %5677 = vmatprep.subr.mxu0 0.0
        %5678 = vmatpush1.msra.mxu0 %v5560
        %5679 = vmatprep.subr.mxu0 0.0
        %5680 = vmatpush1.msra.mxu0 %v5561
        %5681 = vmatprep.subr.mxu0 0.0
        %5682 = vmatpush1.msra.mxu0 0.0
        %5683 = vmatprep.subr.mxu0 0.0
        %5684 = vmatpush1.msra.mxu0 0.0
        %5685 = vmatprep.subr.mxu0 0.0
        %5686 = vmatpush1.msra.mxu0 0.0
        %5687 = vmatprep.subr.mxu0 0.0
        %5688 = vmatpush1.msra.mxu0 0.0
        %5689 = vmatprep.subr.mxu0 0.0
        %5690 = vmatpush1.msra.mxu0 0.0
        %5691 = vmatprep.subr.mxu0 0.0
        %5692 = vmatpush1.msra.mxu0 0.0
        %5693 = vmatprep.subr.mxu0 0.0
        %5694 = vmatpush1.msra.mxu0 0.0
        %5695 = vmatprep.subr.mxu0 0.0
        %5696 = vmatpush1.msra.mxu0 0.0
        %5697 = vmatprep.subr.mxu0 0.0
        %5698 = vmatpush1.msra.mxu0 0.0
        %5699 = vmatprep.subr.mxu0 0.0
        %5700 = vmatpush1.msra.mxu0 0.0
        %5701 = vmatprep.subr.mxu0 0.0
        %5702 = vmatpush1.msra.mxu0 0.0
        %5703 = vmatprep.subr.mxu0 0.0
        %5704 = vmatpush1.msra.mxu0 0.0
        %5705 = vmatprep.subr.mxu0 0.0
        %5706 = vmatpush1.msra.mxu0 0.0
        %5707 = vmatprep.subr.mxu0 0.0
        %5708 = vmatpush1.msra.mxu0 0.0
        %5709 = vmatprep.subr.mxu0 0.0
        %5710 = vmatpush1.msra.mxu0 0.0
        %5711 = vmatprep.subr.mxu0 0.0
        %5712 = vmatpush1.msra.mxu0 0.0
        %5713 = vmatprep.mubr.f32.mxu0 0.0
        %5714 = vmatmul.mubr.f32.gmra.mrb[0].mxu0 %v5542
        %v5715 = vpop.f32.mrb[0].mxu0
        %v5716 = vadd.f32 %v5646, %v5715
        %v5717 = vpop.f32.mrb[0].mxu0
        %5718 = vdwg.mxu0
        %s5719 = scalar_lea.vmem [#allocation7], 5120
        %v5720 = vld [vmem:[%s5719] sm:$0xff]
        %v5721 = vld [vmem:[%s5719 + $0x8] sm:$0xff]
        %v5722 = vld [vmem:[%s5719 + $0x10] sm:$0xff]
        %v5723 = vld [vmem:[%s5719 + $0x18] sm:$0xff]
        %v5724 = vld [vmem:[%s5719 + $0x20] sm:$0xff]
        %v5725 = vld [vmem:[%s5719 + $0x28] sm:$0xff]
        %v5726 = vld [vmem:[%s5719 + $0x30] sm:$0xff]
        %v5727 = vld [vmem:[%s5719 + $0x38] sm:$0xff]
        %v5728 = vld [vmem:[%s5719 + $0x40] sm:$0xff]
        %v5729 = vld [vmem:[%s5719 + $0x48] sm:$0xff]
        %v5730 = vld [vmem:[%s5719 + $0x50] sm:$0xff]
        %v5731 = vld [vmem:[%s5719 + $0x58] sm:$0xff]
        %v5732 = vld [vmem:[%s5719 + $0x60] sm:$0xff]
        %v5733 = vld [vmem:[%s5719 + $0x68] sm:$0xff]
        %v5734 = vld [vmem:[%s5719 + $0x70] sm:$0xff]
        %v5735 = vld [vmem:[%s5719 + $0x78] sm:$0xff]
        %5736 = vmatprep.subr.mxu0 0.0
        %5737 = vmatpush1.msra.mxu0 %v5720
        %5738 = vmatprep.subr.mxu0 0.0
        %5739 = vmatpush1.msra.mxu0 %v5721
        %5740 = vmatprep.subr.mxu0 0.0
        %5741 = vmatpush1.msra.mxu0 %v5722
        %5742 = vmatprep.subr.mxu0 0.0
        %5743 = vmatpush1.msra.mxu0 %v5723
        %5744 = vmatprep.subr.mxu0 0.0
        %5745 = vmatpush1.msra.mxu0 %v5724
        %5746 = vmatprep.subr.mxu0 0.0
        %5747 = vmatpush1.msra.mxu0 %v5725
        %5748 = vmatprep.subr.mxu0 0.0
        %5749 = vmatpush1.msra.mxu0 %v5726
        %5750 = vmatprep.subr.mxu0 0.0
        %5751 = vmatpush1.msra.mxu0 %v5727
        %5752 = vmatprep.subr.mxu0 0.0
        %5753 = vmatpush1.msra.mxu0 %v5728
        %5754 = vmatprep.subr.mxu0 0.0
        %5755 = vmatpush1.msra.mxu0 %v5729
        %5756 = vmatprep.subr.mxu0 0.0
        %5757 = vmatpush1.msra.mxu0 %v5730
        %5758 = vmatprep.subr.mxu0 0.0
        %5759 = vmatpush1.msra.mxu0 %v5731
        %5760 = vmatprep.subr.mxu0 0.0
        %5761 = vmatpush1.msra.mxu0 %v5732
        %5762 = vmatprep.subr.mxu0 0.0
        %5763 = vmatpush1.msra.mxu0 %v5733
        %5764 = vmatprep.subr.mxu0 0.0
        %5765 = vmatpush1.msra.mxu0 %v5734
        %5766 = vmatprep.subr.mxu0 0.0
        %5767 = vmatpush1.msra.mxu0 %v5735
        %5768 = vmatprep.subr.mxu0 0.0
        %5769 = vmatpush1.msra.mxu0 0.0
        %5770 = vmatprep.subr.mxu0 0.0
        %5771 = vmatpush1.msra.mxu0 0.0
        %5772 = vmatprep.subr.mxu0 0.0
        %5773 = vmatpush1.msra.mxu0 0.0
        %5774 = vmatprep.subr.mxu0 0.0
        %5775 = vmatpush1.msra.mxu0 0.0
        %5776 = vmatprep.subr.mxu0 0.0
        %5777 = vmatpush1.msra.mxu0 0.0
        %5778 = vmatprep.subr.mxu0 0.0
        %5779 = vmatpush1.msra.mxu0 0.0
        %5780 = vmatprep.subr.mxu0 0.0
        %5781 = vmatpush1.msra.mxu0 0.0
        %5782 = vmatprep.subr.mxu0 0.0
        %5783 = vmatpush1.msra.mxu0 0.0
        %5784 = vmatprep.subr.mxu0 0.0
        %5785 = vmatpush1.msra.mxu0 0.0
        %5786 = vmatprep.subr.mxu0 0.0
        %5787 = vmatpush1.msra.mxu0 0.0
        %5788 = vmatprep.subr.mxu0 0.0
        %5789 = vmatpush1.msra.mxu0 0.0
        %5790 = vmatprep.subr.mxu0 0.0
        %5791 = vmatpush1.msra.mxu0 0.0
        %5792 = vmatprep.subr.mxu0 0.0
        %5793 = vmatpush1.msra.mxu0 0.0
        %5794 = vmatprep.subr.mxu0 0.0
        %5795 = vmatpush1.msra.mxu0 0.0
        %5796 = vmatprep.subr.mxu0 0.0
        %5797 = vmatpush1.msra.mxu0 0.0
        %5798 = vmatprep.subr.mxu0 0.0
        %5799 = vmatpush1.msra.mxu0 0.0
        %5800 = vmatprep.mubr.f32.mxu0 0.0
        %5801 = vmatmul.mubr.f32.gmra.mrb[0].mxu0 %v2038
        %v5802 = vpop.f32.mrb[0].mxu0
        %v5803 = vadd.f32 0.0, %v5802
        %v5804 = vpop.f32.mrb[0].mxu0
        %5805 = vdwg.mxu0
        %v5806 = vadd.f32 %v5716, %v5803
        %s5807 = scalar_lea.vmem [#allocation7], 5248
        %v5808 = vld [vmem:[%s5807] sm:$0xff]
        %v5809 = vld [vmem:[%s5807 + $0x8] sm:$0xff]
        %v5810 = vld [vmem:[%s5807 + $0x10] sm:$0xff]
        %v5811 = vld [vmem:[%s5807 + $0x18] sm:$0xff]
        %v5812 = vld [vmem:[%s5807 + $0x20] sm:$0xff]
        %v5813 = vld [vmem:[%s5807 + $0x28] sm:$0xff]
        %v5814 = vld [vmem:[%s5807 + $0x30] sm:$0xff]
        %v5815 = vld [vmem:[%s5807 + $0x38] sm:$0xff]
        %v5816 = vld [vmem:[%s5807 + $0x40] sm:$0xff]
        %v5817 = vld [vmem:[%s5807 + $0x48] sm:$0xff]
        %v5818 = vld [vmem:[%s5807 + $0x50] sm:$0xff]
        %v5819 = vld [vmem:[%s5807 + $0x58] sm:$0xff]
        %v5820 = vld [vmem:[%s5807 + $0x60] sm:$0xff]
        %v5821 = vld [vmem:[%s5807 + $0x68] sm:$0xff]
        %v5822 = vld [vmem:[%s5807 + $0x70] sm:$0xff]
        %v5823 = vld [vmem:[%s5807 + $0x78] sm:$0xff]
        %5824 = vmatprep.subr.mxu0 0.0
        %5825 = vmatpush1.msra.mxu0 %v5808
        %5826 = vmatprep.subr.mxu0 0.0
        %5827 = vmatpush1.msra.mxu0 %v5809
        %5828 = vmatprep.subr.mxu0 0.0
        %5829 = vmatpush1.msra.mxu0 %v5810
        %5830 = vmatprep.subr.mxu0 0.0
        %5831 = vmatpush1.msra.mxu0 %v5811
        %5832 = vmatprep.subr.mxu0 0.0
        %5833 = vmatpush1.msra.mxu0 %v5812
        %5834 = vmatprep.subr.mxu0 0.0
        %5835 = vmatpush1.msra.mxu0 %v5813
        %5836 = vmatprep.subr.mxu0 0.0
        %5837 = vmatpush1.msra.mxu0 %v5814
        %5838 = vmatprep.subr.mxu0 0.0
        %5839 = vmatpush1.msra.mxu0 %v5815
        %5840 = vmatprep.subr.mxu0 0.0
        %5841 = vmatpush1.msra.mxu0 %v5816
        %5842 = vmatprep.subr.mxu0 0.0
        %5843 = vmatpush1.msra.mxu0 %v5817
        %5844 = vmatprep.subr.mxu0 0.0
        %5845 = vmatpush1.msra.mxu0 %v5818
        %5846 = vmatprep.subr.mxu0 0.0
        %5847 = vmatpush1.msra.mxu0 %v5819
        %5848 = vmatprep.subr.mxu0 0.0
        %5849 = vmatpush1.msra.mxu0 %v5820
        %5850 = vmatprep.subr.mxu0 0.0
        %5851 = vmatpush1.msra.mxu0 %v5821
        %5852 = vmatprep.subr.mxu0 0.0
        %5853 = vmatpush1.msra.mxu0 %v5822
        %5854 = vmatprep.subr.mxu0 0.0
        %5855 = vmatpush1.msra.mxu0 %v5823
        %5856 = vmatprep.subr.mxu0 0.0
        %5857 = vmatpush1.msra.mxu0 0.0
        %5858 = vmatprep.subr.mxu0 0.0
        %5859 = vmatpush1.msra.mxu0 0.0
        %5860 = vmatprep.subr.mxu0 0.0
        %5861 = vmatpush1.msra.mxu0 0.0
        %5862 = vmatprep.subr.mxu0 0.0
        %5863 = vmatpush1.msra.mxu0 0.0
        %5864 = vmatprep.subr.mxu0 0.0
        %5865 = vmatpush1.msra.mxu0 0.0
        %5866 = vmatprep.subr.mxu0 0.0
        %5867 = vmatpush1.msra.mxu0 0.0
        %5868 = vmatprep.subr.mxu0 0.0
        %5869 = vmatpush1.msra.mxu0 0.0
        %5870 = vmatprep.subr.mxu0 0.0
        %5871 = vmatpush1.msra.mxu0 0.0
        %5872 = vmatprep.subr.mxu0 0.0
        %5873 = vmatpush1.msra.mxu0 0.0
        %5874 = vmatprep.subr.mxu0 0.0
        %5875 = vmatpush1.msra.mxu0 0.0
        %5876 = vmatprep.subr.mxu0 0.0
        %5877 = vmatpush1.msra.mxu0 0.0
        %5878 = vmatprep.subr.mxu0 0.0
        %5879 = vmatpush1.msra.mxu0 0.0
        %5880 = vmatprep.subr.mxu0 0.0
        %5881 = vmatpush1.msra.mxu0 0.0
        %5882 = vmatprep.subr.mxu0 0.0
        %5883 = vmatpush1.msra.mxu0 0.0
        %5884 = vmatprep.subr.mxu0 0.0
        %5885 = vmatpush1.msra.mxu0 0.0
        %5886 = vmatprep.subr.mxu0 0.0
        %5887 = vmatpush1.msra.mxu0 0.0
        %5888 = vmatprep.mubr.f32.mxu0 0.0
        %5889 = vmatmul.mubr.f32.gmra.mrb[0].mxu0 %v2350
        %v5890 = vpop.f32.mrb[0].mxu0
        %v5891 = vadd.f32 0.0, %v5890
        %v5892 = vpop.f32.mrb[0].mxu0
        %5893 = vdwg.mxu0
        %v5894 = vadd.f32 %v5806, %v5891
        %5895 = vmatprep.subr.mxu0 0.0
        %5896 = vmatpush1.msra.mxu0 %v2038
        %5897 = vmatprep.subr.mxu0 0.0
        %5898 = vmatpush1.msra.mxu0 0.0
        %5899 = vmatprep.subr.mxu0 0.0
        %5900 = vmatpush1.msra.mxu0 0.0
        %5901 = vmatprep.subr.mxu0 0.0
        %5902 = vmatpush1.msra.mxu0 0.0
        %5903 = vmatprep.subr.mxu0 0.0
        %5904 = vmatpush1.msra.mxu0 0.0
        %5905 = vmatprep.subr.mxu0 0.0
        %5906 = vmatpush1.msra.mxu0 0.0
        %5907 = vmatprep.subr.mxu0 0.0
        %5908 = vmatpush1.msra.mxu0 0.0
        %5909 = vmatprep.subr.mxu0 0.0
        %5910 = vmatpush1.msra.mxu0 0.0
        %5911 = vmatprep.subr.mxu0 0.0
        %5912 = vmatpush1.msra.mxu0 0.0
        %5913 = vmatprep.subr.mxu0 0.0
        %5914 = vmatpush1.msra.mxu0 0.0
        %5915 = vmatprep.subr.mxu0 0.0
        %5916 = vmatpush1.msra.mxu0 0.0
        %5917 = vmatprep.subr.mxu0 0.0
        %5918 = vmatpush1.msra.mxu0 0.0
        %5919 = vmatprep.subr.mxu0 0.0
        %5920 = vmatpush1.msra.mxu0 0.0
        %5921 = vmatprep.subr.mxu0 0.0
        %5922 = vmatpush1.msra.mxu0 0.0
        %5923 = vmatprep.subr.mxu0 0.0
        %5924 = vmatpush1.msra.mxu0 0.0
        %5925 = vmatprep.subr.mxu0 0.0
        %5926 = vmatpush1.msra.mxu0 0.0
        %5927 = vmatprep.subr.mxu0 0.0
        %5928 = vmatpush1.msra.mxu0 0.0
        %5929 = vmatprep.subr.mxu0 0.0
        %5930 = vmatpush1.msra.mxu0 0.0
        %5931 = vmatprep.subr.mxu0 0.0
        %5932 = vmatpush1.msra.mxu0 0.0
        %5933 = vmatprep.subr.mxu0 0.0
        %5934 = vmatpush1.msra.mxu0 0.0
        %5935 = vmatprep.subr.mxu0 0.0
        %5936 = vmatpush1.msra.mxu0 0.0
        %5937 = vmatprep.subr.mxu0 0.0
        %5938 = vmatpush1.msra.mxu0 0.0
        %5939 = vmatprep.subr.mxu0 0.0
        %5940 = vmatpush1.msra.mxu0 0.0
        %5941 = vmatprep.subr.mxu0 0.0
        %5942 = vmatpush1.msra.mxu0 0.0
        %5943 = vmatprep.subr.mxu0 0.0
        %5944 = vmatpush1.msra.mxu0 0.0
        %5945 = vmatprep.subr.mxu0 0.0
        %5946 = vmatpush1.msra.mxu0 0.0
        %5947 = vmatprep.subr.mxu0 0.0
        %5948 = vmatpush1.msra.mxu0 0.0
        %5949 = vmatprep.subr.mxu0 0.0
        %5950 = vmatpush1.msra.mxu0 0.0
        %5951 = vmatprep.subr.mxu0 0.0
        %5952 = vmatpush1.msra.mxu0 0.0
        %5953 = vmatprep.subr.mxu0 0.0
        %5954 = vmatpush1.msra.mxu0 0.0
        %5955 = vmatprep.subr.mxu0 0.0
        %5956 = vmatpush1.msra.mxu0 0.0
        %5957 = vmatprep.subr.mxu0 0.0
        %5958 = vmatpush1.msra.mxu0 0.0
        %5959 = vmatprep.mubr.f32.mxu0 0.0
        %5960 = vmatmul.mubr.f32.gmra.mrb[0].mxu0 %v1159
        %v5961 = vpop.f32.mrb[0].mxu0
        %v5962 = vadd.f32 0.0, %v5961
        %v5963 = vpop.f32.mrb[0].mxu0
        %5964 = vdwg.mxu0
        %s5965 = scalar_lea.vmem [#allocation7], 5376
        %v5966 = vld [vmem:[%s5965] sm:$0xff]
        %v5967 = vld [vmem:[%s5965 + $0x8] sm:$0xff]
        %v5968 = vld [vmem:[%s5965 + $0x10] sm:$0xff]
        %v5969 = vld [vmem:[%s5965 + $0x18] sm:$0xff]
        %v5970 = vld [vmem:[%s5965 + $0x20] sm:$0xff]
        %v5971 = vld [vmem:[%s5965 + $0x28] sm:$0xff]
        %v5972 = vld [vmem:[%s5965 + $0x30] sm:$0xff]
        %v5973 = vld [vmem:[%s5965 + $0x38] sm:$0xff]
        %v5974 = vld [vmem:[%s5965 + $0x40] sm:$0xff]
        %v5975 = vld [vmem:[%s5965 + $0x48] sm:$0xff]
        %v5976 = vld [vmem:[%s5965 + $0x50] sm:$0xff]
        %v5977 = vld [vmem:[%s5965 + $0x58] sm:$0xff]
        %v5978 = vld [vmem:[%s5965 + $0x60] sm:$0xff]
        %v5979 = vld [vmem:[%s5965 + $0x68] sm:$0xff]
        %v5980 = vld [vmem:[%s5965 + $0x70] sm:$0xff]
        %v5981 = vld [vmem:[%s5965 + $0x78] sm:$0xff]
        %5982 = vmatprep.subr.mxu0 0.0
        %5983 = vmatpush1.msra.mxu0 %v5966
        %5984 = vmatprep.subr.mxu0 0.0
        %5985 = vmatpush1.msra.mxu0 %v5967
        %5986 = vmatprep.subr.mxu0 0.0
        %5987 = vmatpush1.msra.mxu0 %v5968
        %5988 = vmatprep.subr.mxu0 0.0
        %5989 = vmatpush1.msra.mxu0 %v5969
        %5990 = vmatprep.subr.mxu0 0.0
        %5991 = vmatpush1.msra.mxu0 %v5970
        %5992 = vmatprep.subr.mxu0 0.0
        %5993 = vmatpush1.msra.mxu0 %v5971
        %5994 = vmatprep.subr.mxu0 0.0
        %5995 = vmatpush1.msra.mxu0 %v5972
        %5996 = vmatprep.subr.mxu0 0.0
        %5997 = vmatpush1.msra.mxu0 %v5973
        %5998 = vmatprep.subr.mxu0 0.0
        %5999 = vmatpush1.msra.mxu0 %v5974
        %6000 = vmatprep.subr.mxu0 0.0
        %6001 = vmatpush1.msra.mxu0 %v5975
        %6002 = vmatprep.subr.mxu0 0.0
        %6003 = vmatpush1.msra.mxu0 %v5976
        %6004 = vmatprep.subr.mxu0 0.0
        %6005 = vmatpush1.msra.mxu0 %v5977
        %6006 = vmatprep.subr.mxu0 0.0
        %6007 = vmatpush1.msra.mxu0 %v5978
        %6008 = vmatprep.subr.mxu0 0.0
        %6009 = vmatpush1.msra.mxu0 %v5979
        %6010 = vmatprep.subr.mxu0 0.0
        %6011 = vmatpush1.msra.mxu0 %v5980
        %6012 = vmatprep.subr.mxu0 0.0
        %6013 = vmatpush1.msra.mxu0 %v5981
        %6014 = vmatprep.subr.mxu0 0.0
        %6015 = vmatpush1.msra.mxu0 0.0
        %6016 = vmatprep.subr.mxu0 0.0
        %6017 = vmatpush1.msra.mxu0 0.0
        %6018 = vmatprep.subr.mxu0 0.0
        %6019 = vmatpush1.msra.mxu0 0.0
        %6020 = vmatprep.subr.mxu0 0.0
        %6021 = vmatpush1.msra.mxu0 0.0
        %6022 = vmatprep.subr.mxu0 0.0
        %6023 = vmatpush1.msra.mxu0 0.0
        %6024 = vmatprep.subr.mxu0 0.0
        %6025 = vmatpush1.msra.mxu0 0.0
        %6026 = vmatprep.subr.mxu0 0.0
        %6027 = vmatpush1.msra.mxu0 0.0
        %6028 = vmatprep.subr.mxu0 0.0
        %6029 = vmatpush1.msra.mxu0 0.0
        %6030 = vmatprep.subr.mxu0 0.0
        %6031 = vmatpush1.msra.mxu0 0.0
        %6032 = vmatprep.subr.mxu0 0.0
        %6033 = vmatpush1.msra.mxu0 0.0
        %6034 = vmatprep.subr.mxu0 0.0
        %6035 = vmatpush1.msra.mxu0 0.0
        %6036 = vmatprep.subr.mxu0 0.0
        %6037 = vmatpush1.msra.mxu0 0.0
        %6038 = vmatprep.subr.mxu0 0.0
        %6039 = vmatpush1.msra.mxu0 0.0
        %6040 = vmatprep.subr.mxu0 0.0
        %6041 = vmatpush1.msra.mxu0 0.0
        %6042 = vmatprep.subr.mxu0 0.0
        %6043 = vmatpush1.msra.mxu0 0.0
        %6044 = vmatprep.subr.mxu0 0.0
        %6045 = vmatpush1.msra.mxu0 0.0
        %6046 = vmatprep.mubr.f32.mxu0 0.0
        %6047 = vmatmul.mubr.f32.gmra.mrb[0].mxu0 %v5962
        %v6048 = vpop.f32.mrb[0].mxu0
        %v6049 = vadd.f32 0.0, %v6048
        %v6050 = vpop.f32.mrb[0].mxu0
        %6051 = vdwg.mxu0
        %v6052 = vadd.f32 %v5894, %v6049
        %v6053 = vmax.f32 %v6052, 0.0
        %6054 = vmatprep.subr.mxu0 0.0
        %6055 = vmatpush1.msra.mxu0 %v6053
        %6056 = vmatprep.subr.mxu0 0.0
        %6057 = vmatpush1.msra.mxu0 0.0
        %6058 = vmatprep.subr.mxu0 0.0
        %6059 = vmatpush1.msra.mxu0 0.0
        %6060 = vmatprep.subr.mxu0 0.0
        %6061 = vmatpush1.msra.mxu0 0.0
        %6062 = vmatprep.subr.mxu0 0.0
        %6063 = vmatpush1.msra.mxu0 0.0
        %6064 = vmatprep.subr.mxu0 0.0
        %6065 = vmatpush1.msra.mxu0 0.0
        %6066 = vmatprep.subr.mxu0 0.0
        %6067 = vmatpush1.msra.mxu0 0.0
        %6068 = vmatprep.subr.mxu0 0.0
        %6069 = vmatpush1.msra.mxu0 0.0
        %6070 = vmatprep.subr.mxu0 0.0
        %6071 = vmatpush1.msra.mxu0 0.0
        %6072 = vmatprep.subr.mxu0 0.0
        %6073 = vmatpush1.msra.mxu0 0.0
        %6074 = vmatprep.subr.mxu0 0.0
        %6075 = vmatpush1.msra.mxu0 0.0
        %6076 = vmatprep.subr.mxu0 0.0
        %6077 = vmatpush1.msra.mxu0 0.0
        %6078 = vmatprep.subr.mxu0 0.0
        %6079 = vmatpush1.msra.mxu0 0.0
        %6080 = vmatprep.subr.mxu0 0.0
        %6081 = vmatpush1.msra.mxu0 0.0
        %6082 = vmatprep.subr.mxu0 0.0
        %6083 = vmatpush1.msra.mxu0 0.0
        %6084 = vmatprep.subr.mxu0 0.0
        %6085 = vmatpush1.msra.mxu0 0.0
        %6086 = vmatprep.subr.mxu0 0.0
        %6087 = vmatpush1.msra.mxu0 0.0
        %6088 = vmatprep.subr.mxu0 0.0
        %6089 = vmatpush1.msra.mxu0 0.0
        %6090 = vmatprep.subr.mxu0 0.0
        %6091 = vmatpush1.msra.mxu0 0.0
        %6092 = vmatprep.subr.mxu0 0.0
        %6093 = vmatpush1.msra.mxu0 0.0
        %6094 = vmatprep.subr.mxu0 0.0
        %6095 = vmatpush1.msra.mxu0 0.0
        %6096 = vmatprep.subr.mxu0 0.0
        %6097 = vmatpush1.msra.mxu0 0.0
        %6098 = vmatprep.subr.mxu0 0.0
        %6099 = vmatpush1.msra.mxu0 0.0
        %6100 = vmatprep.subr.mxu0 0.0
        %6101 = vmatpush1.msra.mxu0 0.0
        %6102 = vmatprep.subr.mxu0 0.0
        %6103 = vmatpush1.msra.mxu0 0.0
        %6104 = vmatprep.subr.mxu0 0.0
        %6105 = vmatpush1.msra.mxu0 0.0
        %6106 = vmatprep.subr.mxu0 0.0
        %6107 = vmatpush1.msra.mxu0 0.0
        %6108 = vmatprep.subr.mxu0 0.0
        %6109 = vmatpush1.msra.mxu0 0.0
        %6110 = vmatprep.subr.mxu0 0.0
        %6111 = vmatpush1.msra.mxu0 0.0
        %6112 = vmatprep.subr.mxu0 0.0
        %6113 = vmatpush1.msra.mxu0 0.0
        %6114 = vmatprep.subr.mxu0 0.0
        %6115 = vmatpush1.msra.mxu0 0.0
        %6116 = vmatprep.subr.mxu0 0.0
        %6117 = vmatpush1.msra.mxu0 0.0
        %6118 = vmatprep.mubr.f32.mxu0 0.0
        %6119 = vmatmul.mubr.f32.gmra.mrb[0].mxu0 %v585
        %v6120 = vpop.f32.mrb[0].mxu0
        %v6121 = vadd.f32 0.0, %v6120
        %v6122 = vpop.f32.mrb[0].mxu0
        %6123 = vdwg.mxu0
        %s6124 = scalar_lea.vmem [#allocation7], 5504
        %v6125 = vld [vmem:[%s6124] sm:$0xff]
        %v6126 = vld [vmem:[%s6124 + $0x8] sm:$0xff]
        %v6127 = vld [vmem:[%s6124 + $0x10] sm:$0xff]
        %v6128 = vld [vmem:[%s6124 + $0x18] sm:$0xff]
        %v6129 = vld [vmem:[%s6124 + $0x20] sm:$0xff]
        %v6130 = vld [vmem:[%s6124 + $0x28] sm:$0xff]
        %v6131 = vld [vmem:[%s6124 + $0x30] sm:$0xff]
        %v6132 = vld [vmem:[%s6124 + $0x38] sm:$0xff]
        %v6133 = vld [vmem:[%s6124 + $0x40] sm:$0xff]
        %v6134 = vld [vmem:[%s6124 + $0x48] sm:$0xff]
        %v6135 = vld [vmem:[%s6124 + $0x50] sm:$0xff]
        %v6136 = vld [vmem:[%s6124 + $0x58] sm:$0xff]
        %v6137 = vld [vmem:[%s6124 + $0x60] sm:$0xff]
        %v6138 = vld [vmem:[%s6124 + $0x68] sm:$0xff]
        %v6139 = vld [vmem:[%s6124 + $0x70] sm:$0xff]
        %v6140 = vld [vmem:[%s6124 + $0x78] sm:$0xff]
        %6141 = vmatprep.subr.mxu0 0.0
        %6142 = vmatpush1.msra.mxu0 %v6053
        %6143 = vmatprep.subr.mxu0 0.0
        %6144 = vmatpush1.msra.mxu0 0.0
        %6145 = vmatprep.subr.mxu0 0.0
        %6146 = vmatpush1.msra.mxu0 0.0
        %6147 = vmatprep.subr.mxu0 0.0
        %6148 = vmatpush1.msra.mxu0 0.0
        %6149 = vmatprep.subr.mxu0 0.0
        %6150 = vmatpush1.msra.mxu0 0.0
        %6151 = vmatprep.subr.mxu0 0.0
        %6152 = vmatpush1.msra.mxu0 0.0
        %6153 = vmatprep.subr.mxu0 0.0
        %6154 = vmatpush1.msra.mxu0 0.0
        %6155 = vmatprep.subr.mxu0 0.0
        %6156 = vmatpush1.msra.mxu0 0.0
        %6157 = vmatprep.subr.mxu0 0.0
        %6158 = vmatpush1.msra.mxu0 0.0
        %6159 = vmatprep.subr.mxu0 0.0
        %6160 = vmatpush1.msra.mxu0 0.0
        %6161 = vmatprep.subr.mxu0 0.0
        %6162 = vmatpush1.msra.mxu0 0.0
        %6163 = vmatprep.subr.mxu0 0.0
        %6164 = vmatpush1.msra.mxu0 0.0
        %6165 = vmatprep.subr.mxu0 0.0
        %6166 = vmatpush1.msra.mxu0 0.0
        %6167 = vmatprep.subr.mxu0 0.0
        %6168 = vmatpush1.msra.mxu0 0.0
        %6169 = vmatprep.subr.mxu0 0.0
        %6170 = vmatpush1.msra.mxu0 0.0
        %6171 = vmatprep.subr.mxu0 0.0
        %6172 = vmatpush1.msra.mxu0 0.0
        %6173 = vmatprep.subr.mxu0 0.0
        %6174 = vmatpush1.msra.mxu0 0.0
        %6175 = vmatprep.subr.mxu0 0.0
        %6176 = vmatpush1.msra.mxu0 0.0
        %6177 = vmatprep.subr.mxu0 0.0
        %6178 = vmatpush1.msra.mxu0 0.0
        %6179 = vmatprep.subr.mxu0 0.0
        %6180 = vmatpush1.msra.mxu0 0.0
        %6181 = vmatprep.subr.mxu0 0.0
        %6182 = vmatpush1.msra.mxu0 0.0
        %6183 = vmatprep.subr.mxu0 0.0
        %6184 = vmatpush1.msra.mxu0 0.0
        %6185 = vmatprep.subr.mxu0 0.0
        %6186 = vmatpush1.msra.mxu0 0.0
        %6187 = vmatprep.subr.mxu0 0.0
        %6188 = vmatpush1.msra.mxu0 0.0
        %6189 = vmatprep.subr.mxu0 0.0
        %6190 = vmatpush1.msra.mxu0 0.0
        %6191 = vmatprep.subr.mxu0 0.0
        %6192 = vmatpush1.msra.mxu0 0.0
        %6193 = vmatprep.subr.mxu0 0.0
        %6194 = vmatpush1.msra.mxu0 0.0
        %6195 = vmatprep.subr.mxu0 0.0
        %6196 = vmatpush1.msra.mxu0 0.0
        %6197 = vmatprep.subr.mxu0 0.0
        %6198 = vmatpush1.msra.mxu0 0.0
        %6199 = vmatprep.subr.mxu0 0.0
        %6200 = vmatpush1.msra.mxu0 0.0
        %6201 = vmatprep.subr.mxu0 0.0
        %6202 = vmatpush1.msra.mxu0 0.0
        %6203 = vmatprep.subr.mxu0 0.0
        %6204 = vmatpush1.msra.mxu0 0.0
        %6205 = vmatprep.mubr.f32.mxu0 0.0
        %6206 = vmatmul.mubr.f32.gmra.mrb[0].mxu0 %v676
        %v6207 = vpop.f32.mrb[0].mxu0
        %v6208 = vadd.f32 0.0, %v6207
        %v6209 = vpop.f32.mrb[0].mxu0
        %6210 = vdwg.mxu0
        %s6211 = scalar_lea.vmem [#allocation7], 5632
        %v6212 = vld [vmem:[%s6211] sm:$0xff]
        %v6213 = vld [vmem:[%s6211 + $0x8] sm:$0xff]
        %v6214 = vld [vmem:[%s6211 + $0x10] sm:$0xff]
        %v6215 = vld [vmem:[%s6211 + $0x18] sm:$0xff]
        %v6216 = vld [vmem:[%s6211 + $0x20] sm:$0xff]
        %v6217 = vld [vmem:[%s6211 + $0x28] sm:$0xff]
        %v6218 = vld [vmem:[%s6211 + $0x30] sm:$0xff]
        %v6219 = vld [vmem:[%s6211 + $0x38] sm:$0xff]
        %v6220 = vld [vmem:[%s6211 + $0x40] sm:$0xff]
        %v6221 = vld [vmem:[%s6211 + $0x48] sm:$0xff]
        %v6222 = vld [vmem:[%s6211 + $0x50] sm:$0xff]
        %v6223 = vld [vmem:[%s6211 + $0x58] sm:$0xff]
        %v6224 = vld [vmem:[%s6211 + $0x60] sm:$0xff]
        %v6225 = vld [vmem:[%s6211 + $0x68] sm:$0xff]
        %v6226 = vld [vmem:[%s6211 + $0x70] sm:$0xff]
        %v6227 = vld [vmem:[%s6211 + $0x78] sm:$0xff]
        %6228 = vmatprep.subr.mxu0 0.0
        %6229 = vmatpush1.msra.mxu0 %v6212
        %6230 = vmatprep.subr.mxu0 0.0
        %6231 = vmatpush1.msra.mxu0 %v6213
        %6232 = vmatprep.subr.mxu0 0.0
        %6233 = vmatpush1.msra.mxu0 %v6214
        %6234 = vmatprep.subr.mxu0 0.0
        %6235 = vmatpush1.msra.mxu0 %v6215
        %6236 = vmatprep.subr.mxu0 0.0
        %6237 = vmatpush1.msra.mxu0 %v6216
        %6238 = vmatprep.subr.mxu0 0.0
        %6239 = vmatpush1.msra.mxu0 %v6217
        %6240 = vmatprep.subr.mxu0 0.0
        %6241 = vmatpush1.msra.mxu0 %v6218
        %6242 = vmatprep.subr.mxu0 0.0
        %6243 = vmatpush1.msra.mxu0 %v6219
        %6244 = vmatprep.subr.mxu0 0.0
        %6245 = vmatpush1.msra.mxu0 %v6220
        %6246 = vmatprep.subr.mxu0 0.0
        %6247 = vmatpush1.msra.mxu0 %v6221
        %6248 = vmatprep.subr.mxu0 0.0
        %6249 = vmatpush1.msra.mxu0 %v6222
        %6250 = vmatprep.subr.mxu0 0.0
        %6251 = vmatpush1.msra.mxu0 %v6223
        %6252 = vmatprep.subr.mxu0 0.0
        %6253 = vmatpush1.msra.mxu0 %v6224
        %6254 = vmatprep.subr.mxu0 0.0
        %6255 = vmatpush1.msra.mxu0 %v6225
        %6256 = vmatprep.subr.mxu0 0.0
        %6257 = vmatpush1.msra.mxu0 %v6226
        %6258 = vmatprep.subr.mxu0 0.0
        %6259 = vmatpush1.msra.mxu0 %v6227
        %6260 = vmatprep.subr.mxu0 0.0
        %6261 = vmatpush1.msra.mxu0 0.0
        %6262 = vmatprep.subr.mxu0 0.0
        %6263 = vmatpush1.msra.mxu0 0.0
        %6264 = vmatprep.subr.mxu0 0.0
        %6265 = vmatpush1.msra.mxu0 0.0
        %6266 = vmatprep.subr.mxu0 0.0
        %6267 = vmatpush1.msra.mxu0 0.0
        %6268 = vmatprep.subr.mxu0 0.0
        %6269 = vmatpush1.msra.mxu0 0.0
        %6270 = vmatprep.subr.mxu0 0.0
        %6271 = vmatpush1.msra.mxu0 0.0
        %6272 = vmatprep.subr.mxu0 0.0
        %6273 = vmatpush1.msra.mxu0 0.0
        %6274 = vmatprep.subr.mxu0 0.0
        %6275 = vmatpush1.msra.mxu0 0.0
        %6276 = vmatprep.subr.mxu0 0.0
        %6277 = vmatpush1.msra.mxu0 0.0
        %6278 = vmatprep.subr.mxu0 0.0
        %6279 = vmatpush1.msra.mxu0 0.0
        %6280 = vmatprep.subr.mxu0 0.0
        %6281 = vmatpush1.msra.mxu0 0.0
        %6282 = vmatprep.subr.mxu0 0.0
        %6283 = vmatpush1.msra.mxu0 0.0
        %6284 = vmatprep.subr.mxu0 0.0
        %6285 = vmatpush1.msra.mxu0 0.0
        %6286 = vmatprep.subr.mxu0 0.0
        %6287 = vmatpush1.msra.mxu0 0.0
        %6288 = vmatprep.subr.mxu0 0.0
        %6289 = vmatpush1.msra.mxu0 0.0
        %6290 = vmatprep.subr.mxu0 0.0
        %6291 = vmatpush1.msra.mxu0 0.0
        %6292 = vmatprep.mubr.f32.mxu0 0.0
        %6293 = vmatmul.mubr.f32.gmra.mrb[0].mxu0 %v6208
        %v6294 = vpop.f32.mrb[0].mxu0
        %v6295 = vadd.f32 0.0, %v6294
        %v6296 = vpop.f32.mrb[0].mxu0
        %6297 = vdwg.mxu0
        %6298 = vmatprep.subr.mxu0 0.0
        %6299 = vmatpush1.msra.mxu0 %v6125
        %6300 = vmatprep.subr.mxu0 0.0
        %6301 = vmatpush1.msra.mxu0 %v6126
        %6302 = vmatprep.subr.mxu0 0.0
        %6303 = vmatpush1.msra.mxu0 %v6127
        %6304 = vmatprep.subr.mxu0 0.0
        %6305 = vmatpush1.msra.mxu0 %v6128
        %6306 = vmatprep.subr.mxu0 0.0
        %6307 = vmatpush1.msra.mxu0 %v6129
        %6308 = vmatprep.subr.mxu0 0.0
        %6309 = vmatpush1.msra.mxu0 %v6130
        %6310 = vmatprep.subr.mxu0 0.0
        %6311 = vmatpush1.msra.mxu0 %v6131
        %6312 = vmatprep.subr.mxu0 0.0
        %6313 = vmatpush1.msra.mxu0 %v6132
        %6314 = vmatprep.subr.mxu0 0.0
        %6315 = vmatpush1.msra.mxu0 %v6133
        %6316 = vmatprep.subr.mxu0 0.0
        %6317 = vmatpush1.msra.mxu0 %v6134
        %6318 = vmatprep.subr.mxu0 0.0
        %6319 = vmatpush1.msra.mxu0 %v6135
        %6320 = vmatprep.subr.mxu0 0.0
        %6321 = vmatpush1.msra.mxu0 %v6136
        %6322 = vmatprep.subr.mxu0 0.0
        %6323 = vmatpush1.msra.mxu0 %v6137
        %6324 = vmatprep.subr.mxu0 0.0
        %6325 = vmatpush1.msra.mxu0 %v6138
        %6326 = vmatprep.subr.mxu0 0.0
        %6327 = vmatpush1.msra.mxu0 %v6139
        %6328 = vmatprep.subr.mxu0 0.0
        %6329 = vmatpush1.msra.mxu0 %v6140
        %6330 = vmatprep.subr.mxu0 0.0
        %6331 = vmatpush1.msra.mxu0 0.0
        %6332 = vmatprep.subr.mxu0 0.0
        %6333 = vmatpush1.msra.mxu0 0.0
        %6334 = vmatprep.subr.mxu0 0.0
        %6335 = vmatpush1.msra.mxu0 0.0
        %6336 = vmatprep.subr.mxu0 0.0
        %6337 = vmatpush1.msra.mxu0 0.0
        %6338 = vmatprep.subr.mxu0 0.0
        %6339 = vmatpush1.msra.mxu0 0.0
        %6340 = vmatprep.subr.mxu0 0.0
        %6341 = vmatpush1.msra.mxu0 0.0
        %6342 = vmatprep.subr.mxu0 0.0
        %6343 = vmatpush1.msra.mxu0 0.0
        %6344 = vmatprep.subr.mxu0 0.0
        %6345 = vmatpush1.msra.mxu0 0.0
        %6346 = vmatprep.subr.mxu0 0.0
        %6347 = vmatpush1.msra.mxu0 0.0
        %6348 = vmatprep.subr.mxu0 0.0
        %6349 = vmatpush1.msra.mxu0 0.0
        %6350 = vmatprep.subr.mxu0 0.0
        %6351 = vmatpush1.msra.mxu0 0.0
        %6352 = vmatprep.subr.mxu0 0.0
        %6353 = vmatpush1.msra.mxu0 0.0
        %6354 = vmatprep.subr.mxu0 0.0
        %6355 = vmatpush1.msra.mxu0 0.0
        %6356 = vmatprep.subr.mxu0 0.0
        %6357 = vmatpush1.msra.mxu0 0.0
        %6358 = vmatprep.subr.mxu0 0.0
        %6359 = vmatpush1.msra.mxu0 0.0
        %6360 = vmatprep.subr.mxu0 0.0
        %6361 = vmatpush1.msra.mxu0 0.0
        %6362 = vmatprep.mubr.f32.mxu0 0.0
        %6363 = vmatmul.mubr.f32.gmra.mrb[0].mxu0 %v6121
        %v6364 = vpop.f32.mrb[0].mxu0
        %v6365 = vadd.f32 %v6295, %v6364
        %v6366 = vpop.f32.mrb[0].mxu0
        %6367 = vdwg.mxu0
        %s6368 = scalar_lea.vmem [#allocation7], 5760
        %v6369 = vld [vmem:[%s6368] sm:$0xff]
        %v6370 = vld [vmem:[%s6368 + $0x8] sm:$0xff]
        %v6371 = vld [vmem:[%s6368 + $0x10] sm:$0xff]
        %v6372 = vld [vmem:[%s6368 + $0x18] sm:$0xff]
        %v6373 = vld [vmem:[%s6368 + $0x20] sm:$0xff]
        %v6374 = vld [vmem:[%s6368 + $0x28] sm:$0xff]
        %v6375 = vld [vmem:[%s6368 + $0x30] sm:$0xff]
        %v6376 = vld [vmem:[%s6368 + $0x38] sm:$0xff]
        %v6377 = vld [vmem:[%s6368 + $0x40] sm:$0xff]
        %v6378 = vld [vmem:[%s6368 + $0x48] sm:$0xff]
        %v6379 = vld [vmem:[%s6368 + $0x50] sm:$0xff]
        %v6380 = vld [vmem:[%s6368 + $0x58] sm:$0xff]
        %v6381 = vld [vmem:[%s6368 + $0x60] sm:$0xff]
        %v6382 = vld [vmem:[%s6368 + $0x68] sm:$0xff]
        %v6383 = vld [vmem:[%s6368 + $0x70] sm:$0xff]
        %v6384 = vld [vmem:[%s6368 + $0x78] sm:$0xff]
        %6385 = vmatprep.subr.mxu0 0.0
        %6386 = vmatpush1.msra.mxu0 %v6369
        %6387 = vmatprep.subr.mxu0 0.0
        %6388 = vmatpush1.msra.mxu0 %v6370
        %6389 = vmatprep.subr.mxu0 0.0
        %6390 = vmatpush1.msra.mxu0 %v6371
        %6391 = vmatprep.subr.mxu0 0.0
        %6392 = vmatpush1.msra.mxu0 %v6372
        %6393 = vmatprep.subr.mxu0 0.0
        %6394 = vmatpush1.msra.mxu0 %v6373
        %6395 = vmatprep.subr.mxu0 0.0
        %6396 = vmatpush1.msra.mxu0 %v6374
        %6397 = vmatprep.subr.mxu0 0.0
        %6398 = vmatpush1.msra.mxu0 %v6375
        %6399 = vmatprep.subr.mxu0 0.0
        %6400 = vmatpush1.msra.mxu0 %v6376
        %6401 = vmatprep.subr.mxu0 0.0
        %6402 = vmatpush1.msra.mxu0 %v6377
        %6403 = vmatprep.subr.mxu0 0.0
        %6404 = vmatpush1.msra.mxu0 %v6378
        %6405 = vmatprep.subr.mxu0 0.0
        %6406 = vmatpush1.msra.mxu0 %v6379
        %6407 = vmatprep.subr.mxu0 0.0
        %6408 = vmatpush1.msra.mxu0 %v6380
        %6409 = vmatprep.subr.mxu0 0.0
        %6410 = vmatpush1.msra.mxu0 %v6381
        %6411 = vmatprep.subr.mxu0 0.0
        %6412 = vmatpush1.msra.mxu0 %v6382
        %6413 = vmatprep.subr.mxu0 0.0
        %6414 = vmatpush1.msra.mxu0 %v6383
        %6415 = vmatprep.subr.mxu0 0.0
        %6416 = vmatpush1.msra.mxu0 %v6384
        %6417 = vmatprep.subr.mxu0 0.0
        %6418 = vmatpush1.msra.mxu0 0.0
        %6419 = vmatprep.subr.mxu0 0.0
        %6420 = vmatpush1.msra.mxu0 0.0
        %6421 = vmatprep.subr.mxu0 0.0
        %6422 = vmatpush1.msra.mxu0 0.0
        %6423 = vmatprep.subr.mxu0 0.0
        %6424 = vmatpush1.msra.mxu0 0.0
        %6425 = vmatprep.subr.mxu0 0.0
        %6426 = vmatpush1.msra.mxu0 0.0
        %6427 = vmatprep.subr.mxu0 0.0
        %6428 = vmatpush1.msra.mxu0 0.0
        %6429 = vmatprep.subr.mxu0 0.0
        %6430 = vmatpush1.msra.mxu0 0.0
        %6431 = vmatprep.subr.mxu0 0.0
        %6432 = vmatpush1.msra.mxu0 0.0
        %6433 = vmatprep.subr.mxu0 0.0
        %6434 = vmatpush1.msra.mxu0 0.0
        %6435 = vmatprep.subr.mxu0 0.0
        %6436 = vmatpush1.msra.mxu0 0.0
        %6437 = vmatprep.subr.mxu0 0.0
        %6438 = vmatpush1.msra.mxu0 0.0
        %6439 = vmatprep.subr.mxu0 0.0
        %6440 = vmatpush1.msra.mxu0 0.0
        %6441 = vmatprep.subr.mxu0 0.0
        %6442 = vmatpush1.msra.mxu0 0.0
        %6443 = vmatprep.subr.mxu0 0.0
        %6444 = vmatpush1.msra.mxu0 0.0
        %6445 = vmatprep.subr.mxu0 0.0
        %6446 = vmatpush1.msra.mxu0 0.0
        %6447 = vmatprep.subr.mxu0 0.0
        %6448 = vmatpush1.msra.mxu0 0.0
        %6449 = vmatprep.mubr.f32.mxu0 0.0
        %6450 = vmatmul.mubr.f32.gmra.mrb[0].mxu0 %v6053
        %v6451 = vpop.f32.mrb[0].mxu0
        %v6452 = vadd.f32 0.0, %v6451
        %v6453 = vpop.f32.mrb[0].mxu0
        %6454 = vdwg.mxu0
        %v6455 = vadd.f32 %v6365, %v6452
        %6456 = vmatprep.subr.mxu0 0.0
        %6457 = vmatpush1.msra.mxu0 %v6053
        %6458 = vmatprep.subr.mxu0 0.0
        %6459 = vmatpush1.msra.mxu0 0.0
        %6460 = vmatprep.subr.mxu0 0.0
        %6461 = vmatpush1.msra.mxu0 0.0
        %6462 = vmatprep.subr.mxu0 0.0
        %6463 = vmatpush1.msra.mxu0 0.0
        %6464 = vmatprep.subr.mxu0 0.0
        %6465 = vmatpush1.msra.mxu0 0.0
        %6466 = vmatprep.subr.mxu0 0.0
        %6467 = vmatpush1.msra.mxu0 0.0
        %6468 = vmatprep.subr.mxu0 0.0
        %6469 = vmatpush1.msra.mxu0 0.0
        %6470 = vmatprep.subr.mxu0 0.0
        %6471 = vmatpush1.msra.mxu0 0.0
        %6472 = vmatprep.subr.mxu0 0.0
        %6473 = vmatpush1.msra.mxu0 0.0
        %6474 = vmatprep.subr.mxu0 0.0
        %6475 = vmatpush1.msra.mxu0 0.0
        %6476 = vmatprep.subr.mxu0 0.0
        %6477 = vmatpush1.msra.mxu0 0.0
        %6478 = vmatprep.subr.mxu0 0.0
        %6479 = vmatpush1.msra.mxu0 0.0
        %6480 = vmatprep.subr.mxu0 0.0
        %6481 = vmatpush1.msra.mxu0 0.0
        %6482 = vmatprep.subr.mxu0 0.0
        %6483 = vmatpush1.msra.mxu0 0.0
        %6484 = vmatprep.subr.mxu0 0.0
        %6485 = vmatpush1.msra.mxu0 0.0
        %6486 = vmatprep.subr.mxu0 0.0
        %6487 = vmatpush1.msra.mxu0 0.0
        %6488 = vmatprep.subr.mxu0 0.0
        %6489 = vmatpush1.msra.mxu0 0.0
        %6490 = vmatprep.subr.mxu0 0.0
        %6491 = vmatpush1.msra.mxu0 0.0
        %6492 = vmatprep.subr.mxu0 0.0
        %6493 = vmatpush1.msra.mxu0 0.0
        %6494 = vmatprep.subr.mxu0 0.0
        %6495 = vmatpush1.msra.mxu0 0.0
        %6496 = vmatprep.subr.mxu0 0.0
        %6497 = vmatpush1.msra.mxu0 0.0
        %6498 = vmatprep.subr.mxu0 0.0
        %6499 = vmatpush1.msra.mxu0 0.0
        %6500 = vmatprep.subr.mxu0 0.0
        %6501 = vmatpush1.msra.mxu0 0.0
        %6502 = vmatprep.subr.mxu0 0.0
        %6503 = vmatpush1.msra.mxu0 0.0
        %6504 = vmatprep.subr.mxu0 0.0
        %6505 = vmatpush1.msra.mxu0 0.0
        %6506 = vmatprep.subr.mxu0 0.0
        %6507 = vmatpush1.msra.mxu0 0.0
        %6508 = vmatprep.subr.mxu0 0.0
        %6509 = vmatpush1.msra.mxu0 0.0
        %6510 = vmatprep.subr.mxu0 0.0
        %6511 = vmatpush1.msra.mxu0 0.0
        %6512 = vmatprep.subr.mxu0 0.0
        %6513 = vmatpush1.msra.mxu0 0.0
        %6514 = vmatprep.subr.mxu0 0.0
        %6515 = vmatpush1.msra.mxu0 0.0
        %6516 = vmatprep.subr.mxu0 0.0
        %6517 = vmatpush1.msra.mxu0 0.0
        %6518 = vmatprep.subr.mxu0 0.0
        %6519 = vmatpush1.msra.mxu0 0.0
        %6520 = vmatprep.mubr.f32.mxu0 0.0
        %6521 = vmatmul.mubr.f32.gmra.mrb[0].mxu0 %v996
        %v6522 = vpop.f32.mrb[0].mxu0
        %v6523 = vadd.f32 0.0, %v6522
        %v6524 = vpop.f32.mrb[0].mxu0
        %6525 = vdwg.mxu0
        %s6526 = scalar_lea.vmem [#allocation7], 5888
        %v6527 = vld [vmem:[%s6526] sm:$0xff]
        %v6528 = vld [vmem:[%s6526 + $0x8] sm:$0xff]
        %v6529 = vld [vmem:[%s6526 + $0x10] sm:$0xff]
        %v6530 = vld [vmem:[%s6526 + $0x18] sm:$0xff]
        %v6531 = vld [vmem:[%s6526 + $0x20] sm:$0xff]
        %v6532 = vld [vmem:[%s6526 + $0x28] sm:$0xff]
        %v6533 = vld [vmem:[%s6526 + $0x30] sm:$0xff]
        %v6534 = vld [vmem:[%s6526 + $0x38] sm:$0xff]
        %v6535 = vld [vmem:[%s6526 + $0x40] sm:$0xff]
        %v6536 = vld [vmem:[%s6526 + $0x48] sm:$0xff]
        %v6537 = vld [vmem:[%s6526 + $0x50] sm:$0xff]
        %v6538 = vld [vmem:[%s6526 + $0x58] sm:$0xff]
        %v6539 = vld [vmem:[%s6526 + $0x60] sm:$0xff]
        %v6540 = vld [vmem:[%s6526 + $0x68] sm:$0xff]
        %v6541 = vld [vmem:[%s6526 + $0x70] sm:$0xff]
        %v6542 = vld [vmem:[%s6526 + $0x78] sm:$0xff]
        %6543 = vmatprep.subr.mxu0 0.0
        %6544 = vmatpush1.msra.mxu0 %v6527
        %6545 = vmatprep.subr.mxu0 0.0
        %6546 = vmatpush1.msra.mxu0 %v6528
        %6547 = vmatprep.subr.mxu0 0.0
        %6548 = vmatpush1.msra.mxu0 %v6529
        %6549 = vmatprep.subr.mxu0 0.0
        %6550 = vmatpush1.msra.mxu0 %v6530
        %6551 = vmatprep.subr.mxu0 0.0
        %6552 = vmatpush1.msra.mxu0 %v6531
        %6553 = vmatprep.subr.mxu0 0.0
        %6554 = vmatpush1.msra.mxu0 %v6532
        %6555 = vmatprep.subr.mxu0 0.0
        %6556 = vmatpush1.msra.mxu0 %v6533
        %6557 = vmatprep.subr.mxu0 0.0
        %6558 = vmatpush1.msra.mxu0 %v6534
        %6559 = vmatprep.subr.mxu0 0.0
        %6560 = vmatpush1.msra.mxu0 %v6535
        %6561 = vmatprep.subr.mxu0 0.0
        %6562 = vmatpush1.msra.mxu0 %v6536
        %6563 = vmatprep.subr.mxu0 0.0
        %6564 = vmatpush1.msra.mxu0 %v6537
        %6565 = vmatprep.subr.mxu0 0.0
        %6566 = vmatpush1.msra.mxu0 %v6538
        %6567 = vmatprep.subr.mxu0 0.0
        %6568 = vmatpush1.msra.mxu0 %v6539
        %6569 = vmatprep.subr.mxu0 0.0
        %6570 = vmatpush1.msra.mxu0 %v6540
        %6571 = vmatprep.subr.mxu0 0.0
        %6572 = vmatpush1.msra.mxu0 %v6541
        %6573 = vmatprep.subr.mxu0 0.0
        %6574 = vmatpush1.msra.mxu0 %v6542
        %6575 = vmatprep.subr.mxu0 0.0
        %6576 = vmatpush1.msra.mxu0 0.0
        %6577 = vmatprep.subr.mxu0 0.0
        %6578 = vmatpush1.msra.mxu0 0.0
        %6579 = vmatprep.subr.mxu0 0.0
        %6580 = vmatpush1.msra.mxu0 0.0
        %6581 = vmatprep.subr.mxu0 0.0
        %6582 = vmatpush1.msra.mxu0 0.0
        %6583 = vmatprep.subr.mxu0 0.0
        %6584 = vmatpush1.msra.mxu0 0.0
        %6585 = vmatprep.subr.mxu0 0.0
        %6586 = vmatpush1.msra.mxu0 0.0
        %6587 = vmatprep.subr.mxu0 0.0
        %6588 = vmatpush1.msra.mxu0 0.0
        %6589 = vmatprep.subr.mxu0 0.0
        %6590 = vmatpush1.msra.mxu0 0.0
        %6591 = vmatprep.subr.mxu0 0.0
        %6592 = vmatpush1.msra.mxu0 0.0
        %6593 = vmatprep.subr.mxu0 0.0
        %6594 = vmatpush1.msra.mxu0 0.0
        %6595 = vmatprep.subr.mxu0 0.0
        %6596 = vmatpush1.msra.mxu0 0.0
        %6597 = vmatprep.subr.mxu0 0.0
        %6598 = vmatpush1.msra.mxu0 0.0
        %6599 = vmatprep.subr.mxu0 0.0
        %6600 = vmatpush1.msra.mxu0 0.0
        %6601 = vmatprep.subr.mxu0 0.0
        %6602 = vmatpush1.msra.mxu0 0.0
        %6603 = vmatprep.subr.mxu0 0.0
        %6604 = vmatpush1.msra.mxu0 0.0
        %6605 = vmatprep.subr.mxu0 0.0
        %6606 = vmatpush1.msra.mxu0 0.0
        %6607 = vmatprep.mubr.f32.mxu0 0.0
        %6608 = vmatmul.mubr.f32.gmra.mrb[0].mxu0 %v6523
        %v6609 = vpop.f32.mrb[0].mxu0
        %v6610 = vadd.f32 0.0, %v6609
        %v6611 = vpop.f32.mrb[0].mxu0
        %6612 = vdwg.mxu0
        %v6613 = vadd.f32 %v6455, %v6610
        %6614 = vmatprep.subr.mxu0 0.0
        %6615 = vmatpush1.msra.mxu0 %v6053
        %6616 = vmatprep.subr.mxu0 0.0
        %6617 = vmatpush1.msra.mxu0 0.0
        %6618 = vmatprep.subr.mxu0 0.0
        %6619 = vmatpush1.msra.mxu0 0.0
        %6620 = vmatprep.subr.mxu0 0.0
        %6621 = vmatpush1.msra.mxu0 0.0
        %6622 = vmatprep.subr.mxu0 0.0
        %6623 = vmatpush1.msra.mxu0 0.0
        %6624 = vmatprep.subr.mxu0 0.0
        %6625 = vmatpush1.msra.mxu0 0.0
        %6626 = vmatprep.subr.mxu0 0.0
        %6627 = vmatpush1.msra.mxu0 0.0
        %6628 = vmatprep.subr.mxu0 0.0
        %6629 = vmatpush1.msra.mxu0 0.0
        %6630 = vmatprep.subr.mxu0 0.0
        %6631 = vmatpush1.msra.mxu0 0.0
        %6632 = vmatprep.subr.mxu0 0.0
        %6633 = vmatpush1.msra.mxu0 0.0
        %6634 = vmatprep.subr.mxu0 0.0
        %6635 = vmatpush1.msra.mxu0 0.0
        %6636 = vmatprep.subr.mxu0 0.0
        %6637 = vmatpush1.msra.mxu0 0.0
        %6638 = vmatprep.subr.mxu0 0.0
        %6639 = vmatpush1.msra.mxu0 0.0
        %6640 = vmatprep.subr.mxu0 0.0
        %6641 = vmatpush1.msra.mxu0 0.0
        %6642 = vmatprep.subr.mxu0 0.0
        %6643 = vmatpush1.msra.mxu0 0.0
        %6644 = vmatprep.subr.mxu0 0.0
        %6645 = vmatpush1.msra.mxu0 0.0
        %6646 = vmatprep.subr.mxu0 0.0
        %6647 = vmatpush1.msra.mxu0 0.0
        %6648 = vmatprep.subr.mxu0 0.0
        %6649 = vmatpush1.msra.mxu0 0.0
        %6650 = vmatprep.subr.mxu0 0.0
        %6651 = vmatpush1.msra.mxu0 0.0
        %6652 = vmatprep.subr.mxu0 0.0
        %6653 = vmatpush1.msra.mxu0 0.0
        %6654 = vmatprep.subr.mxu0 0.0
        %6655 = vmatpush1.msra.mxu0 0.0
        %6656 = vmatprep.subr.mxu0 0.0
        %6657 = vmatpush1.msra.mxu0 0.0
        %6658 = vmatprep.subr.mxu0 0.0
        %6659 = vmatpush1.msra.mxu0 0.0
        %6660 = vmatprep.subr.mxu0 0.0
        %6661 = vmatpush1.msra.mxu0 0.0
        %6662 = vmatprep.subr.mxu0 0.0
        %6663 = vmatpush1.msra.mxu0 0.0
        %6664 = vmatprep.subr.mxu0 0.0
        %6665 = vmatpush1.msra.mxu0 0.0
        %6666 = vmatprep.subr.mxu0 0.0
        %6667 = vmatpush1.msra.mxu0 0.0
        %6668 = vmatprep.subr.mxu0 0.0
        %6669 = vmatpush1.msra.mxu0 0.0
        %6670 = vmatprep.subr.mxu0 0.0
        %6671 = vmatpush1.msra.mxu0 0.0
        %6672 = vmatprep.subr.mxu0 0.0
        %6673 = vmatpush1.msra.mxu0 0.0
        %6674 = vmatprep.subr.mxu0 0.0
        %6675 = vmatpush1.msra.mxu0 0.0
        %6676 = vmatprep.subr.mxu0 0.0
        %6677 = vmatpush1.msra.mxu0 0.0
        %6678 = vmatprep.mubr.f32.mxu0 0.0
        %6679 = vmatmul.mubr.f32.gmra.mrb[0].mxu0 %v1159
        %v6680 = vpop.f32.mrb[0].mxu0
        %v6681 = vadd.f32 0.0, %v6680
        %v6682 = vpop.f32.mrb[0].mxu0
        %6683 = vdwg.mxu0
        %s6684 = scalar_lea.vmem [#allocation7], 6016
        %v6685 = vld [vmem:[%s6684] sm:$0xff]
        %v6686 = vld [vmem:[%s6684 + $0x8] sm:$0xff]
        %v6687 = vld [vmem:[%s6684 + $0x10] sm:$0xff]
        %v6688 = vld [vmem:[%s6684 + $0x18] sm:$0xff]
        %v6689 = vld [vmem:[%s6684 + $0x20] sm:$0xff]
        %v6690 = vld [vmem:[%s6684 + $0x28] sm:$0xff]
        %v6691 = vld [vmem:[%s6684 + $0x30] sm:$0xff]
        %v6692 = vld [vmem:[%s6684 + $0x38] sm:$0xff]
        %v6693 = vld [vmem:[%s6684 + $0x40] sm:$0xff]
        %v6694 = vld [vmem:[%s6684 + $0x48] sm:$0xff]
        %v6695 = vld [vmem:[%s6684 + $0x50] sm:$0xff]
        %v6696 = vld [vmem:[%s6684 + $0x58] sm:$0xff]
        %v6697 = vld [vmem:[%s6684 + $0x60] sm:$0xff]
        %v6698 = vld [vmem:[%s6684 + $0x68] sm:$0xff]
        %v6699 = vld [vmem:[%s6684 + $0x70] sm:$0xff]
        %v6700 = vld [vmem:[%s6684 + $0x78] sm:$0xff]
        %6701 = vmatprep.subr.mxu0 0.0
        %6702 = vmatpush1.msra.mxu0 %v6685
        %6703 = vmatprep.subr.mxu0 0.0
        %6704 = vmatpush1.msra.mxu0 %v6686
        %6705 = vmatprep.subr.mxu0 0.0
        %6706 = vmatpush1.msra.mxu0 %v6687
        %6707 = vmatprep.subr.mxu0 0.0
        %6708 = vmatpush1.msra.mxu0 %v6688
        %6709 = vmatprep.subr.mxu0 0.0
        %6710 = vmatpush1.msra.mxu0 %v6689
        %6711 = vmatprep.subr.mxu0 0.0
        %6712 = vmatpush1.msra.mxu0 %v6690
        %6713 = vmatprep.subr.mxu0 0.0
        %6714 = vmatpush1.msra.mxu0 %v6691
        %6715 = vmatprep.subr.mxu0 0.0
        %6716 = vmatpush1.msra.mxu0 %v6692
        %6717 = vmatprep.subr.mxu0 0.0
        %6718 = vmatpush1.msra.mxu0 %v6693
        %6719 = vmatprep.subr.mxu0 0.0
        %6720 = vmatpush1.msra.mxu0 %v6694
        %6721 = vmatprep.subr.mxu0 0.0
        %6722 = vmatpush1.msra.mxu0 %v6695
        %6723 = vmatprep.subr.mxu0 0.0
        %6724 = vmatpush1.msra.mxu0 %v6696
        %6725 = vmatprep.subr.mxu0 0.0
        %6726 = vmatpush1.msra.mxu0 %v6697
        %6727 = vmatprep.subr.mxu0 0.0
        %6728 = vmatpush1.msra.mxu0 %v6698
        %6729 = vmatprep.subr.mxu0 0.0
        %6730 = vmatpush1.msra.mxu0 %v6699
        %6731 = vmatprep.subr.mxu0 0.0
        %6732 = vmatpush1.msra.mxu0 %v6700
        %6733 = vmatprep.subr.mxu0 0.0
        %6734 = vmatpush1.msra.mxu0 0.0
        %6735 = vmatprep.subr.mxu0 0.0
        %6736 = vmatpush1.msra.mxu0 0.0
        %6737 = vmatprep.subr.mxu0 0.0
        %6738 = vmatpush1.msra.mxu0 0.0
        %6739 = vmatprep.subr.mxu0 0.0
        %6740 = vmatpush1.msra.mxu0 0.0
        %6741 = vmatprep.subr.mxu0 0.0
        %6742 = vmatpush1.msra.mxu0 0.0
        %6743 = vmatprep.subr.mxu0 0.0
        %6744 = vmatpush1.msra.mxu0 0.0
        %6745 = vmatprep.subr.mxu0 0.0
        %6746 = vmatpush1.msra.mxu0 0.0
        %6747 = vmatprep.subr.mxu0 0.0
        %6748 = vmatpush1.msra.mxu0 0.0
        %6749 = vmatprep.subr.mxu0 0.0
        %6750 = vmatpush1.msra.mxu0 0.0
        %6751 = vmatprep.subr.mxu0 0.0
        %6752 = vmatpush1.msra.mxu0 0.0
        %6753 = vmatprep.subr.mxu0 0.0
        %6754 = vmatpush1.msra.mxu0 0.0
        %6755 = vmatprep.subr.mxu0 0.0
        %6756 = vmatpush1.msra.mxu0 0.0
        %6757 = vmatprep.subr.mxu0 0.0
        %6758 = vmatpush1.msra.mxu0 0.0
        %6759 = vmatprep.subr.mxu0 0.0
        %6760 = vmatpush1.msra.mxu0 0.0
        %6761 = vmatprep.subr.mxu0 0.0
        %6762 = vmatpush1.msra.mxu0 0.0
        %6763 = vmatprep.subr.mxu0 0.0
        %6764 = vmatpush1.msra.mxu0 0.0
        %6765 = vmatprep.mubr.f32.mxu0 0.0
        %6766 = vmatmul.mubr.f32.gmra.mrb[0].mxu0 %v6681
        %v6767 = vpop.f32.mrb[0].mxu0
        %v6768 = vadd.f32 0.0, %v6767
        %v6769 = vpop.f32.mrb[0].mxu0
        %6770 = vdwg.mxu0
        %v6771 = vadd.f32 %v6613, %v6768
        %v6772 = vadd.f32 %v5474, %v6771
        %v6773 = vmax.f32 %v4317, 0.0
        %6774 = vmatprep.subr.mxu0 0.0
        %6775 = vmatpush1.msra.mxu0 %v6773
        %6776 = vmatprep.subr.mxu0 0.0
        %6777 = vmatpush1.msra.mxu0 0.0
        %6778 = vmatprep.subr.mxu0 0.0
        %6779 = vmatpush1.msra.mxu0 0.0
        %6780 = vmatprep.subr.mxu0 0.0
        %6781 = vmatpush1.msra.mxu0 0.0
        %6782 = vmatprep.subr.mxu0 0.0
        %6783 = vmatpush1.msra.mxu0 0.0
        %6784 = vmatprep.subr.mxu0 0.0
        %6785 = vmatpush1.msra.mxu0 0.0
        %6786 = vmatprep.subr.mxu0 0.0
        %6787 = vmatpush1.msra.mxu0 0.0
        %6788 = vmatprep.subr.mxu0 0.0
        %6789 = vmatpush1.msra.mxu0 0.0
        %6790 = vmatprep.subr.mxu0 0.0
        %6791 = vmatpush1.msra.mxu0 0.0
        %6792 = vmatprep.subr.mxu0 0.0
        %6793 = vmatpush1.msra.mxu0 0.0
        %6794 = vmatprep.subr.mxu0 0.0
        %6795 = vmatpush1.msra.mxu0 0.0
        %6796 = vmatprep.subr.mxu0 0.0
        %6797 = vmatpush1.msra.mxu0 0.0
        %6798 = vmatprep.subr.mxu0 0.0
        %6799 = vmatpush1.msra.mxu0 0.0
        %6800 = vmatprep.subr.mxu0 0.0
        %6801 = vmatpush1.msra.mxu0 0.0
        %6802 = vmatprep.subr.mxu0 0.0
        %6803 = vmatpush1.msra.mxu0 0.0
        %6804 = vmatprep.subr.mxu0 0.0
        %6805 = vmatpush1.msra.mxu0 0.0
        %6806 = vmatprep.subr.mxu0 0.0
        %6807 = vmatpush1.msra.mxu0 0.0
        %6808 = vmatprep.subr.mxu0 0.0
        %6809 = vmatpush1.msra.mxu0 0.0
        %6810 = vmatprep.subr.mxu0 0.0
        %6811 = vmatpush1.msra.mxu0 0.0
        %6812 = vmatprep.subr.mxu0 0.0
        %6813 = vmatpush1.msra.mxu0 0.0
        %6814 = vmatprep.subr.mxu0 0.0
        %6815 = vmatpush1.msra.mxu0 0.0
        %6816 = vmatprep.subr.mxu0 0.0
        %6817 = vmatpush1.msra.mxu0 0.0
        %6818 = vmatprep.subr.mxu0 0.0
        %6819 = vmatpush1.msra.mxu0 0.0
        %6820 = vmatprep.subr.mxu0 0.0
        %6821 = vmatpush1.msra.mxu0 0.0
        %6822 = vmatprep.subr.mxu0 0.0
        %6823 = vmatpush1.msra.mxu0 0.0
        %6824 = vmatprep.subr.mxu0 0.0
        %6825 = vmatpush1.msra.mxu0 0.0
        %6826 = vmatprep.subr.mxu0 0.0
        %6827 = vmatpush1.msra.mxu0 0.0
        %6828 = vmatprep.subr.mxu0 0.0
        %6829 = vmatpush1.msra.mxu0 0.0
        %6830 = vmatprep.subr.mxu0 0.0
        %6831 = vmatpush1.msra.mxu0 0.0
        %6832 = vmatprep.subr.mxu0 0.0
        %6833 = vmatpush1.msra.mxu0 0.0
        %6834 = vmatprep.subr.mxu0 0.0
        %6835 = vmatpush1.msra.mxu0 0.0
        %6836 = vmatprep.subr.mxu0 0.0
        %6837 = vmatpush1.msra.mxu0 0.0
        %6838 = vmatprep.mubr.f32.mxu0 0.0
        %6839 = vmatmul.mubr.f32.gmra.mrb[0].mxu0 %v585
        %v6840 = vpop.f32.mrb[0].mxu0
        %v6841 = vadd.f32 0.0, %v6840
        %v6842 = vpop.f32.mrb[0].mxu0
        %6843 = vdwg.mxu0
        %s6844 = scalar_lea.vmem [#allocation7], 6144
        %v6845 = vld [vmem:[%s6844] sm:$0xff]
        %v6846 = vld [vmem:[%s6844 + $0x8] sm:$0xff]
        %v6847 = vld [vmem:[%s6844 + $0x10] sm:$0xff]
        %v6848 = vld [vmem:[%s6844 + $0x18] sm:$0xff]
        %v6849 = vld [vmem:[%s6844 + $0x20] sm:$0xff]
        %v6850 = vld [vmem:[%s6844 + $0x28] sm:$0xff]
        %v6851 = vld [vmem:[%s6844 + $0x30] sm:$0xff]
        %v6852 = vld [vmem:[%s6844 + $0x38] sm:$0xff]
        %v6853 = vld [vmem:[%s6844 + $0x40] sm:$0xff]
        %v6854 = vld [vmem:[%s6844 + $0x48] sm:$0xff]
        %v6855 = vld [vmem:[%s6844 + $0x50] sm:$0xff]
        %v6856 = vld [vmem:[%s6844 + $0x58] sm:$0xff]
        %v6857 = vld [vmem:[%s6844 + $0x60] sm:$0xff]
        %v6858 = vld [vmem:[%s6844 + $0x68] sm:$0xff]
        %v6859 = vld [vmem:[%s6844 + $0x70] sm:$0xff]
        %v6860 = vld [vmem:[%s6844 + $0x78] sm:$0xff]
        %6861 = vmatprep.subr.mxu0 0.0
        %6862 = vmatpush1.msra.mxu0 %v6773
        %6863 = vmatprep.subr.mxu0 0.0
        %6864 = vmatpush1.msra.mxu0 0.0
        %6865 = vmatprep.subr.mxu0 0.0
        %6866 = vmatpush1.msra.mxu0 0.0
        %6867 = vmatprep.subr.mxu0 0.0
        %6868 = vmatpush1.msra.mxu0 0.0
        %6869 = vmatprep.subr.mxu0 0.0
        %6870 = vmatpush1.msra.mxu0 0.0
        %6871 = vmatprep.subr.mxu0 0.0
        %6872 = vmatpush1.msra.mxu0 0.0
        %6873 = vmatprep.subr.mxu0 0.0
        %6874 = vmatpush1.msra.mxu0 0.0
        %6875 = vmatprep.subr.mxu0 0.0
        %6876 = vmatpush1.msra.mxu0 0.0
        %6877 = vmatprep.subr.mxu0 0.0
        %6878 = vmatpush1.msra.mxu0 0.0
        %6879 = vmatprep.subr.mxu0 0.0
        %6880 = vmatpush1.msra.mxu0 0.0
        %6881 = vmatprep.subr.mxu0 0.0
        %6882 = vmatpush1.msra.mxu0 0.0
        %6883 = vmatprep.subr.mxu0 0.0
        %6884 = vmatpush1.msra.mxu0 0.0
        %6885 = vmatprep.subr.mxu0 0.0
        %6886 = vmatpush1.msra.mxu0 0.0
        %6887 = vmatprep.subr.mxu0 0.0
        %6888 = vmatpush1.msra.mxu0 0.0
        %6889 = vmatprep.subr.mxu0 0.0
        %6890 = vmatpush1.msra.mxu0 0.0
        %6891 = vmatprep.subr.mxu0 0.0
        %6892 = vmatpush1.msra.mxu0 0.0
        %6893 = vmatprep.subr.mxu0 0.0
        %6894 = vmatpush1.msra.mxu0 0.0
        %6895 = vmatprep.subr.mxu0 0.0
        %6896 = vmatpush1.msra.mxu0 0.0
        %6897 = vmatprep.subr.mxu0 0.0
        %6898 = vmatpush1.msra.mxu0 0.0
        %6899 = vmatprep.subr.mxu0 0.0
        %6900 = vmatpush1.msra.mxu0 0.0
        %6901 = vmatprep.subr.mxu0 0.0
        %6902 = vmatpush1.msra.mxu0 0.0
        %6903 = vmatprep.subr.mxu0 0.0
        %6904 = vmatpush1.msra.mxu0 0.0
        %6905 = vmatprep.subr.mxu0 0.0
        %6906 = vmatpush1.msra.mxu0 0.0
        %6907 = vmatprep.subr.mxu0 0.0
        %6908 = vmatpush1.msra.mxu0 0.0
        %6909 = vmatprep.subr.mxu0 0.0
        %6910 = vmatpush1.msra.mxu0 0.0
        %6911 = vmatprep.subr.mxu0 0.0
        %6912 = vmatpush1.msra.mxu0 0.0
        %6913 = vmatprep.subr.mxu0 0.0
        %6914 = vmatpush1.msra.mxu0 0.0
        %6915 = vmatprep.subr.mxu0 0.0
        %6916 = vmatpush1.msra.mxu0 0.0
        %6917 = vmatprep.subr.mxu0 0.0
        %6918 = vmatpush1.msra.mxu0 0.0
        %6919 = vmatprep.subr.mxu0 0.0
        %6920 = vmatpush1.msra.mxu0 0.0
        %6921 = vmatprep.subr.mxu0 0.0
        %6922 = vmatpush1.msra.mxu0 0.0
        %6923 = vmatprep.subr.mxu0 0.0
        %6924 = vmatpush1.msra.mxu0 0.0
        %6925 = vmatprep.mubr.f32.mxu0 0.0
        %6926 = vmatmul.mubr.f32.gmra.mrb[0].mxu0 %v676
        %v6927 = vpop.f32.mrb[0].mxu0
        %v6928 = vadd.f32 0.0, %v6927
        %v6929 = vpop.f32.mrb[0].mxu0
        %6930 = vdwg.mxu0
        %s6931 = scalar_lea.vmem [#allocation7], 6272
        %v6932 = vld [vmem:[%s6931] sm:$0xff]
        %v6933 = vld [vmem:[%s6931 + $0x8] sm:$0xff]
        %v6934 = vld [vmem:[%s6931 + $0x10] sm:$0xff]
        %v6935 = vld [vmem:[%s6931 + $0x18] sm:$0xff]
        %v6936 = vld [vmem:[%s6931 + $0x20] sm:$0xff]
        %v6937 = vld [vmem:[%s6931 + $0x28] sm:$0xff]
        %v6938 = vld [vmem:[%s6931 + $0x30] sm:$0xff]
        %v6939 = vld [vmem:[%s6931 + $0x38] sm:$0xff]
        %v6940 = vld [vmem:[%s6931 + $0x40] sm:$0xff]
        %v6941 = vld [vmem:[%s6931 + $0x48] sm:$0xff]
        %v6942 = vld [vmem:[%s6931 + $0x50] sm:$0xff]
        %v6943 = vld [vmem:[%s6931 + $0x58] sm:$0xff]
        %v6944 = vld [vmem:[%s6931 + $0x60] sm:$0xff]
        %v6945 = vld [vmem:[%s6931 + $0x68] sm:$0xff]
        %v6946 = vld [vmem:[%s6931 + $0x70] sm:$0xff]
        %v6947 = vld [vmem:[%s6931 + $0x78] sm:$0xff]
        %6948 = vmatprep.subr.mxu0 0.0
        %6949 = vmatpush1.msra.mxu0 %v6932
        %6950 = vmatprep.subr.mxu0 0.0
        %6951 = vmatpush1.msra.mxu0 %v6933
        %6952 = vmatprep.subr.mxu0 0.0
        %6953 = vmatpush1.msra.mxu0 %v6934
        %6954 = vmatprep.subr.mxu0 0.0
        %6955 = vmatpush1.msra.mxu0 %v6935
        %6956 = vmatprep.subr.mxu0 0.0
        %6957 = vmatpush1.msra.mxu0 %v6936
        %6958 = vmatprep.subr.mxu0 0.0
        %6959 = vmatpush1.msra.mxu0 %v6937
        %6960 = vmatprep.subr.mxu0 0.0
        %6961 = vmatpush1.msra.mxu0 %v6938
        %6962 = vmatprep.subr.mxu0 0.0
        %6963 = vmatpush1.msra.mxu0 %v6939
        %6964 = vmatprep.subr.mxu0 0.0
        %6965 = vmatpush1.msra.mxu0 %v6940
        %6966 = vmatprep.subr.mxu0 0.0
        %6967 = vmatpush1.msra.mxu0 %v6941
        %6968 = vmatprep.subr.mxu0 0.0
        %6969 = vmatpush1.msra.mxu0 %v6942
        %6970 = vmatprep.subr.mxu0 0.0
        %6971 = vmatpush1.msra.mxu0 %v6943
        %6972 = vmatprep.subr.mxu0 0.0
        %6973 = vmatpush1.msra.mxu0 %v6944
        %6974 = vmatprep.subr.mxu0 0.0
        %6975 = vmatpush1.msra.mxu0 %v6945
        %6976 = vmatprep.subr.mxu0 0.0
        %6977 = vmatpush1.msra.mxu0 %v6946
        %6978 = vmatprep.subr.mxu0 0.0
        %6979 = vmatpush1.msra.mxu0 %v6947
        %6980 = vmatprep.subr.mxu0 0.0
        %6981 = vmatpush1.msra.mxu0 0.0
        %6982 = vmatprep.subr.mxu0 0.0
        %6983 = vmatpush1.msra.mxu0 0.0
        %6984 = vmatprep.subr.mxu0 0.0
        %6985 = vmatpush1.msra.mxu0 0.0
        %6986 = vmatprep.subr.mxu0 0.0
        %6987 = vmatpush1.msra.mxu0 0.0
        %6988 = vmatprep.subr.mxu0 0.0
        %6989 = vmatpush1.msra.mxu0 0.0
        %6990 = vmatprep.subr.mxu0 0.0
        %6991 = vmatpush1.msra.mxu0 0.0
        %6992 = vmatprep.subr.mxu0 0.0
        %6993 = vmatpush1.msra.mxu0 0.0
        %6994 = vmatprep.subr.mxu0 0.0
        %6995 = vmatpush1.msra.mxu0 0.0
        %6996 = vmatprep.subr.mxu0 0.0
        %6997 = vmatpush1.msra.mxu0 0.0
        %6998 = vmatprep.subr.mxu0 0.0
        %6999 = vmatpush1.msra.mxu0 0.0
        %7000 = vmatprep.subr.mxu0 0.0
        %7001 = vmatpush1.msra.mxu0 0.0
        %7002 = vmatprep.subr.mxu0 0.0
        %7003 = vmatpush1.msra.mxu0 0.0
        %7004 = vmatprep.subr.mxu0 0.0
        %7005 = vmatpush1.msra.mxu0 0.0
        %7006 = vmatprep.subr.mxu0 0.0
        %7007 = vmatpush1.msra.mxu0 0.0
        %7008 = vmatprep.subr.mxu0 0.0
        %7009 = vmatpush1.msra.mxu0 0.0
        %7010 = vmatprep.subr.mxu0 0.0
        %7011 = vmatpush1.msra.mxu0 0.0
        %7012 = vmatprep.mubr.f32.mxu0 0.0
        %7013 = vmatmul.mubr.f32.gmra.mrb[0].mxu0 %v6928
        %v7014 = vpop.f32.mrb[0].mxu0
        %v7015 = vadd.f32 0.0, %v7014
        %v7016 = vpop.f32.mrb[0].mxu0
        %7017 = vdwg.mxu0
        %7018 = vmatprep.subr.mxu0 0.0
        %7019 = vmatpush1.msra.mxu0 %v6845
        %7020 = vmatprep.subr.mxu0 0.0
        %7021 = vmatpush1.msra.mxu0 %v6846
        %7022 = vmatprep.subr.mxu0 0.0
        %7023 = vmatpush1.msra.mxu0 %v6847
        %7024 = vmatprep.subr.mxu0 0.0
        %7025 = vmatpush1.msra.mxu0 %v6848
        %7026 = vmatprep.subr.mxu0 0.0
        %7027 = vmatpush1.msra.mxu0 %v6849
        %7028 = vmatprep.subr.mxu0 0.0
        %7029 = vmatpush1.msra.mxu0 %v6850
        %7030 = vmatprep.subr.mxu0 0.0
        %7031 = vmatpush1.msra.mxu0 %v6851
        %7032 = vmatprep.subr.mxu0 0.0
        %7033 = vmatpush1.msra.mxu0 %v6852
        %7034 = vmatprep.subr.mxu0 0.0
        %7035 = vmatpush1.msra.mxu0 %v6853
        %7036 = vmatprep.subr.mxu0 0.0
        %7037 = vmatpush1.msra.mxu0 %v6854
        %7038 = vmatprep.subr.mxu0 0.0
        %7039 = vmatpush1.msra.mxu0 %v6855
        %7040 = vmatprep.subr.mxu0 0.0
        %7041 = vmatpush1.msra.mxu0 %v6856
        %7042 = vmatprep.subr.mxu0 0.0
        %7043 = vmatpush1.msra.mxu0 %v6857
        %7044 = vmatprep.subr.mxu0 0.0
        %7045 = vmatpush1.msra.mxu0 %v6858
        %7046 = vmatprep.subr.mxu0 0.0
        %7047 = vmatpush1.msra.mxu0 %v6859
        %7048 = vmatprep.subr.mxu0 0.0
        %7049 = vmatpush1.msra.mxu0 %v6860
        %7050 = vmatprep.subr.mxu0 0.0
        %7051 = vmatpush1.msra.mxu0 0.0
        %7052 = vmatprep.subr.mxu0 0.0
        %7053 = vmatpush1.msra.mxu0 0.0
        %7054 = vmatprep.subr.mxu0 0.0
        %7055 = vmatpush1.msra.mxu0 0.0
        %7056 = vmatprep.subr.mxu0 0.0
        %7057 = vmatpush1.msra.mxu0 0.0
        %7058 = vmatprep.subr.mxu0 0.0
        %7059 = vmatpush1.msra.mxu0 0.0
        %7060 = vmatprep.subr.mxu0 0.0
        %7061 = vmatpush1.msra.mxu0 0.0
        %7062 = vmatprep.subr.mxu0 0.0
        %7063 = vmatpush1.msra.mxu0 0.0
        %7064 = vmatprep.subr.mxu0 0.0
        %7065 = vmatpush1.msra.mxu0 0.0
        %7066 = vmatprep.subr.mxu0 0.0
        %7067 = vmatpush1.msra.mxu0 0.0
        %7068 = vmatprep.subr.mxu0 0.0
        %7069 = vmatpush1.msra.mxu0 0.0
        %7070 = vmatprep.subr.mxu0 0.0
        %7071 = vmatpush1.msra.mxu0 0.0
        %7072 = vmatprep.subr.mxu0 0.0
        %7073 = vmatpush1.msra.mxu0 0.0
        %7074 = vmatprep.subr.mxu0 0.0
        %7075 = vmatpush1.msra.mxu0 0.0
        %7076 = vmatprep.subr.mxu0 0.0
        %7077 = vmatpush1.msra.mxu0 0.0
        %7078 = vmatprep.subr.mxu0 0.0
        %7079 = vmatpush1.msra.mxu0 0.0
        %7080 = vmatprep.subr.mxu0 0.0
        %7081 = vmatpush1.msra.mxu0 0.0
        %7082 = vmatprep.mubr.f32.mxu0 0.0
        %7083 = vmatmul.mubr.f32.gmra.mrb[0].mxu0 %v6841
        %v7084 = vpop.f32.mrb[0].mxu0
        %v7085 = vadd.f32 %v7015, %v7084
        %v7086 = vpop.f32.mrb[0].mxu0
        %7087 = vdwg.mxu0
        %s7088 = scalar_lea.vmem [#allocation7], 6400
        %v7089 = vld [vmem:[%s7088] sm:$0xff]
        %v7090 = vld [vmem:[%s7088 + $0x8] sm:$0xff]
        %v7091 = vld [vmem:[%s7088 + $0x10] sm:$0xff]
        %v7092 = vld [vmem:[%s7088 + $0x18] sm:$0xff]
        %v7093 = vld [vmem:[%s7088 + $0x20] sm:$0xff]
        %v7094 = vld [vmem:[%s7088 + $0x28] sm:$0xff]
        %v7095 = vld [vmem:[%s7088 + $0x30] sm:$0xff]
        %v7096 = vld [vmem:[%s7088 + $0x38] sm:$0xff]
        %v7097 = vld [vmem:[%s7088 + $0x40] sm:$0xff]
        %v7098 = vld [vmem:[%s7088 + $0x48] sm:$0xff]
        %v7099 = vld [vmem:[%s7088 + $0x50] sm:$0xff]
        %v7100 = vld [vmem:[%s7088 + $0x58] sm:$0xff]
        %v7101 = vld [vmem:[%s7088 + $0x60] sm:$0xff]
        %v7102 = vld [vmem:[%s7088 + $0x68] sm:$0xff]
        %v7103 = vld [vmem:[%s7088 + $0x70] sm:$0xff]
        %v7104 = vld [vmem:[%s7088 + $0x78] sm:$0xff]
        %7105 = vmatprep.subr.mxu0 0.0
        %7106 = vmatpush1.msra.mxu0 %v7089
        %7107 = vmatprep.subr.mxu0 0.0
        %7108 = vmatpush1.msra.mxu0 %v7090
        %7109 = vmatprep.subr.mxu0 0.0
        %7110 = vmatpush1.msra.mxu0 %v7091
        %7111 = vmatprep.subr.mxu0 0.0
        %7112 = vmatpush1.msra.mxu0 %v7092
        %7113 = vmatprep.subr.mxu0 0.0
        %7114 = vmatpush1.msra.mxu0 %v7093
        %7115 = vmatprep.subr.mxu0 0.0
        %7116 = vmatpush1.msra.mxu0 %v7094
        %7117 = vmatprep.subr.mxu0 0.0
        %7118 = vmatpush1.msra.mxu0 %v7095
        %7119 = vmatprep.subr.mxu0 0.0
        %7120 = vmatpush1.msra.mxu0 %v7096
        %7121 = vmatprep.subr.mxu0 0.0
        %7122 = vmatpush1.msra.mxu0 %v7097
        %7123 = vmatprep.subr.mxu0 0.0
        %7124 = vmatpush1.msra.mxu0 %v7098
        %7125 = vmatprep.subr.mxu0 0.0
        %7126 = vmatpush1.msra.mxu0 %v7099
        %7127 = vmatprep.subr.mxu0 0.0
        %7128 = vmatpush1.msra.mxu0 %v7100
        %7129 = vmatprep.subr.mxu0 0.0
        %7130 = vmatpush1.msra.mxu0 %v7101
        %7131 = vmatprep.subr.mxu0 0.0
        %7132 = vmatpush1.msra.mxu0 %v7102
        %7133 = vmatprep.subr.mxu0 0.0
        %7134 = vmatpush1.msra.mxu0 %v7103
        %7135 = vmatprep.subr.mxu0 0.0
        %7136 = vmatpush1.msra.mxu0 %v7104
        %7137 = vmatprep.subr.mxu0 0.0
        %7138 = vmatpush1.msra.mxu0 0.0
        %7139 = vmatprep.subr.mxu0 0.0
        %7140 = vmatpush1.msra.mxu0 0.0
        %7141 = vmatprep.subr.mxu0 0.0
        %7142 = vmatpush1.msra.mxu0 0.0
        %7143 = vmatprep.subr.mxu0 0.0
        %7144 = vmatpush1.msra.mxu0 0.0
        %7145 = vmatprep.subr.mxu0 0.0
        %7146 = vmatpush1.msra.mxu0 0.0
        %7147 = vmatprep.subr.mxu0 0.0
        %7148 = vmatpush1.msra.mxu0 0.0
        %7149 = vmatprep.subr.mxu0 0.0
        %7150 = vmatpush1.msra.mxu0 0.0
        %7151 = vmatprep.subr.mxu0 0.0
        %7152 = vmatpush1.msra.mxu0 0.0
        %7153 = vmatprep.subr.mxu0 0.0
        %7154 = vmatpush1.msra.mxu0 0.0
        %7155 = vmatprep.subr.mxu0 0.0
        %7156 = vmatpush1.msra.mxu0 0.0
        %7157 = vmatprep.subr.mxu0 0.0
        %7158 = vmatpush1.msra.mxu0 0.0
        %7159 = vmatprep.subr.mxu0 0.0
        %7160 = vmatpush1.msra.mxu0 0.0
        %7161 = vmatprep.subr.mxu0 0.0
        %7162 = vmatpush1.msra.mxu0 0.0
        %7163 = vmatprep.subr.mxu0 0.0
        %7164 = vmatpush1.msra.mxu0 0.0
        %7165 = vmatprep.subr.mxu0 0.0
        %7166 = vmatpush1.msra.mxu0 0.0
        %7167 = vmatprep.subr.mxu0 0.0
        %7168 = vmatpush1.msra.mxu0 0.0
        %7169 = vmatprep.mubr.f32.mxu0 0.0
        %7170 = vmatmul.mubr.f32.gmra.mrb[0].mxu0 %v6773
        %v7171 = vpop.f32.mrb[0].mxu0
        %v7172 = vadd.f32 0.0, %v7171
        %v7173 = vpop.f32.mrb[0].mxu0
        %7174 = vdwg.mxu0
        %v7175 = vadd.f32 %v7085, %v7172
        %7176 = vmatprep.subr.mxu0 0.0
        %7177 = vmatpush1.msra.mxu0 %v6773
        %7178 = vmatprep.subr.mxu0 0.0
        %7179 = vmatpush1.msra.mxu0 0.0
        %7180 = vmatprep.subr.mxu0 0.0
        %7181 = vmatpush1.msra.mxu0 0.0
        %7182 = vmatprep.subr.mxu0 0.0
        %7183 = vmatpush1.msra.mxu0 0.0
        %7184 = vmatprep.subr.mxu0 0.0
        %7185 = vmatpush1.msra.mxu0 0.0
        %7186 = vmatprep.subr.mxu0 0.0
        %7187 = vmatpush1.msra.mxu0 0.0
        %7188 = vmatprep.subr.mxu0 0.0
        %7189 = vmatpush1.msra.mxu0 0.0
        %7190 = vmatprep.subr.mxu0 0.0
        %7191 = vmatpush1.msra.mxu0 0.0
        %7192 = vmatprep.subr.mxu0 0.0
        %7193 = vmatpush1.msra.mxu0 0.0
        %7194 = vmatprep.subr.mxu0 0.0
        %7195 = vmatpush1.msra.mxu0 0.0
        %7196 = vmatprep.subr.mxu0 0.0
        %7197 = vmatpush1.msra.mxu0 0.0
        %7198 = vmatprep.subr.mxu0 0.0
        %7199 = vmatpush1.msra.mxu0 0.0
        %7200 = vmatprep.subr.mxu0 0.0
        %7201 = vmatpush1.msra.mxu0 0.0
        %7202 = vmatprep.subr.mxu0 0.0
        %7203 = vmatpush1.msra.mxu0 0.0
        %7204 = vmatprep.subr.mxu0 0.0
        %7205 = vmatpush1.msra.mxu0 0.0
        %7206 = vmatprep.subr.mxu0 0.0
        %7207 = vmatpush1.msra.mxu0 0.0
        %7208 = vmatprep.subr.mxu0 0.0
        %7209 = vmatpush1.msra.mxu0 0.0
        %7210 = vmatprep.subr.mxu0 0.0
        %7211 = vmatpush1.msra.mxu0 0.0
        %7212 = vmatprep.subr.mxu0 0.0
        %7213 = vmatpush1.msra.mxu0 0.0
        %7214 = vmatprep.subr.mxu0 0.0
        %7215 = vmatpush1.msra.mxu0 0.0
        %7216 = vmatprep.subr.mxu0 0.0
        %7217 = vmatpush1.msra.mxu0 0.0
        %7218 = vmatprep.subr.mxu0 0.0
        %7219 = vmatpush1.msra.mxu0 0.0
        %7220 = vmatprep.subr.mxu0 0.0
        %7221 = vmatpush1.msra.mxu0 0.0
        %7222 = vmatprep.subr.mxu0 0.0
        %7223 = vmatpush1.msra.mxu0 0.0
        %7224 = vmatprep.subr.mxu0 0.0
        %7225 = vmatpush1.msra.mxu0 0.0
        %7226 = vmatprep.subr.mxu0 0.0
        %7227 = vmatpush1.msra.mxu0 0.0
        %7228 = vmatprep.subr.mxu0 0.0
        %7229 = vmatpush1.msra.mxu0 0.0
        %7230 = vmatprep.subr.mxu0 0.0
        %7231 = vmatpush1.msra.mxu0 0.0
        %7232 = vmatprep.subr.mxu0 0.0
        %7233 = vmatpush1.msra.mxu0 0.0
        %7234 = vmatprep.subr.mxu0 0.0
        %7235 = vmatpush1.msra.mxu0 0.0
        %7236 = vmatprep.subr.mxu0 0.0
        %7237 = vmatpush1.msra.mxu0 0.0
        %7238 = vmatprep.subr.mxu0 0.0
        %7239 = vmatpush1.msra.mxu0 0.0
        %7240 = vmatprep.mubr.f32.mxu0 0.0
        %7241 = vmatmul.mubr.f32.gmra.mrb[0].mxu0 %v996
        %v7242 = vpop.f32.mrb[0].mxu0
        %v7243 = vadd.f32 0.0, %v7242
        %v7244 = vpop.f32.mrb[0].mxu0
        %7245 = vdwg.mxu0
        %s7246 = scalar_lea.vmem [#allocation7], 6528
        %v7247 = vld [vmem:[%s7246] sm:$0xff]
        %v7248 = vld [vmem:[%s7246 + $0x8] sm:$0xff]
        %v7249 = vld [vmem:[%s7246 + $0x10] sm:$0xff]
        %v7250 = vld [vmem:[%s7246 + $0x18] sm:$0xff]
        %v7251 = vld [vmem:[%s7246 + $0x20] sm:$0xff]
        %v7252 = vld [vmem:[%s7246 + $0x28] sm:$0xff]
        %v7253 = vld [vmem:[%s7246 + $0x30] sm:$0xff]
        %v7254 = vld [vmem:[%s7246 + $0x38] sm:$0xff]
        %v7255 = vld [vmem:[%s7246 + $0x40] sm:$0xff]
        %v7256 = vld [vmem:[%s7246 + $0x48] sm:$0xff]
        %v7257 = vld [vmem:[%s7246 + $0x50] sm:$0xff]
        %v7258 = vld [vmem:[%s7246 + $0x58] sm:$0xff]
        %v7259 = vld [vmem:[%s7246 + $0x60] sm:$0xff]
        %v7260 = vld [vmem:[%s7246 + $0x68] sm:$0xff]
        %v7261 = vld [vmem:[%s7246 + $0x70] sm:$0xff]
        %v7262 = vld [vmem:[%s7246 + $0x78] sm:$0xff]
        %7263 = vmatprep.subr.mxu0 0.0
        %7264 = vmatpush1.msra.mxu0 %v7247
        %7265 = vmatprep.subr.mxu0 0.0
        %7266 = vmatpush1.msra.mxu0 %v7248
        %7267 = vmatprep.subr.mxu0 0.0
        %7268 = vmatpush1.msra.mxu0 %v7249
        %7269 = vmatprep.subr.mxu0 0.0
        %7270 = vmatpush1.msra.mxu0 %v7250
        %7271 = vmatprep.subr.mxu0 0.0
        %7272 = vmatpush1.msra.mxu0 %v7251
        %7273 = vmatprep.subr.mxu0 0.0
        %7274 = vmatpush1.msra.mxu0 %v7252
        %7275 = vmatprep.subr.mxu0 0.0
        %7276 = vmatpush1.msra.mxu0 %v7253
        %7277 = vmatprep.subr.mxu0 0.0
        %7278 = vmatpush1.msra.mxu0 %v7254
        %7279 = vmatprep.subr.mxu0 0.0
        %7280 = vmatpush1.msra.mxu0 %v7255
        %7281 = vmatprep.subr.mxu0 0.0
        %7282 = vmatpush1.msra.mxu0 %v7256
        %7283 = vmatprep.subr.mxu0 0.0
        %7284 = vmatpush1.msra.mxu0 %v7257
        %7285 = vmatprep.subr.mxu0 0.0
        %7286 = vmatpush1.msra.mxu0 %v7258
        %7287 = vmatprep.subr.mxu0 0.0
        %7288 = vmatpush1.msra.mxu0 %v7259
        %7289 = vmatprep.subr.mxu0 0.0
        %7290 = vmatpush1.msra.mxu0 %v7260
        %7291 = vmatprep.subr.mxu0 0.0
        %7292 = vmatpush1.msra.mxu0 %v7261
        %7293 = vmatprep.subr.mxu0 0.0
        %7294 = vmatpush1.msra.mxu0 %v7262
        %7295 = vmatprep.subr.mxu0 0.0
        %7296 = vmatpush1.msra.mxu0 0.0
        %7297 = vmatprep.subr.mxu0 0.0
        %7298 = vmatpush1.msra.mxu0 0.0
        %7299 = vmatprep.subr.mxu0 0.0
        %7300 = vmatpush1.msra.mxu0 0.0
        %7301 = vmatprep.subr.mxu0 0.0
        %7302 = vmatpush1.msra.mxu0 0.0
        %7303 = vmatprep.subr.mxu0 0.0
        %7304 = vmatpush1.msra.mxu0 0.0
        %7305 = vmatprep.subr.mxu0 0.0
        %7306 = vmatpush1.msra.mxu0 0.0
        %7307 = vmatprep.subr.mxu0 0.0
        %7308 = vmatpush1.msra.mxu0 0.0
        %7309 = vmatprep.subr.mxu0 0.0
        %7310 = vmatpush1.msra.mxu0 0.0
        %7311 = vmatprep.subr.mxu0 0.0
        %7312 = vmatpush1.msra.mxu0 0.0
        %7313 = vmatprep.subr.mxu0 0.0
        %7314 = vmatpush1.msra.mxu0 0.0
        %7315 = vmatprep.subr.mxu0 0.0
        %7316 = vmatpush1.msra.mxu0 0.0
        %7317 = vmatprep.subr.mxu0 0.0
        %7318 = vmatpush1.msra.mxu0 0.0
        %7319 = vmatprep.subr.mxu0 0.0
        %7320 = vmatpush1.msra.mxu0 0.0
        %7321 = vmatprep.subr.mxu0 0.0
        %7322 = vmatpush1.msra.mxu0 0.0
        %7323 = vmatprep.subr.mxu0 0.0
        %7324 = vmatpush1.msra.mxu0 0.0
        %7325 = vmatprep.subr.mxu0 0.0
        %7326 = vmatpush1.msra.mxu0 0.0
        %7327 = vmatprep.mubr.f32.mxu0 0.0
        %7328 = vmatmul.mubr.f32.gmra.mrb[0].mxu0 %v7243
        %v7329 = vpop.f32.mrb[0].mxu0
        %v7330 = vadd.f32 0.0, %v7329
        %v7331 = vpop.f32.mrb[0].mxu0
        %7332 = vdwg.mxu0
        %v7333 = vadd.f32 %v7175, %v7330
        %7334 = vmatprep.subr.mxu0 0.0
        %7335 = vmatpush1.msra.mxu0 %v6773
        %7336 = vmatprep.subr.mxu0 0.0
        %7337 = vmatpush1.msra.mxu0 0.0
        %7338 = vmatprep.subr.mxu0 0.0
        %7339 = vmatpush1.msra.mxu0 0.0
        %7340 = vmatprep.subr.mxu0 0.0
        %7341 = vmatpush1.msra.mxu0 0.0
        %7342 = vmatprep.subr.mxu0 0.0
        %7343 = vmatpush1.msra.mxu0 0.0
        %7344 = vmatprep.subr.mxu0 0.0
        %7345 = vmatpush1.msra.mxu0 0.0
        %7346 = vmatprep.subr.mxu0 0.0
        %7347 = vmatpush1.msra.mxu0 0.0
        %7348 = vmatprep.subr.mxu0 0.0
        %7349 = vmatpush1.msra.mxu0 0.0
        %7350 = vmatprep.subr.mxu0 0.0
        %7351 = vmatpush1.msra.mxu0 0.0
        %7352 = vmatprep.subr.mxu0 0.0
        %7353 = vmatpush1.msra.mxu0 0.0
        %7354 = vmatprep.subr.mxu0 0.0
        %7355 = vmatpush1.msra.mxu0 0.0
        %7356 = vmatprep.subr.mxu0 0.0
        %7357 = vmatpush1.msra.mxu0 0.0
        %7358 = vmatprep.subr.mxu0 0.0
        %7359 = vmatpush1.msra.mxu0 0.0
        %7360 = vmatprep.subr.mxu0 0.0
        %7361 = vmatpush1.msra.mxu0 0.0
        %7362 = vmatprep.subr.mxu0 0.0
        %7363 = vmatpush1.msra.mxu0 0.0
        %7364 = vmatprep.subr.mxu0 0.0
        %7365 = vmatpush1.msra.mxu0 0.0
        %7366 = vmatprep.subr.mxu0 0.0
        %7367 = vmatpush1.msra.mxu0 0.0
        %7368 = vmatprep.subr.mxu0 0.0
        %7369 = vmatpush1.msra.mxu0 0.0
        %7370 = vmatprep.subr.mxu0 0.0
        %7371 = vmatpush1.msra.mxu0 0.0
        %7372 = vmatprep.subr.mxu0 0.0
        %7373 = vmatpush1.msra.mxu0 0.0
        %7374 = vmatprep.subr.mxu0 0.0
        %7375 = vmatpush1.msra.mxu0 0.0
        %7376 = vmatprep.subr.mxu0 0.0
        %7377 = vmatpush1.msra.mxu0 0.0
        %7378 = vmatprep.subr.mxu0 0.0
        %7379 = vmatpush1.msra.mxu0 0.0
        %7380 = vmatprep.subr.mxu0 0.0
        %7381 = vmatpush1.msra.mxu0 0.0
        %7382 = vmatprep.subr.mxu0 0.0
        %7383 = vmatpush1.msra.mxu0 0.0
        %7384 = vmatprep.subr.mxu0 0.0
        %7385 = vmatpush1.msra.mxu0 0.0
        %7386 = vmatprep.subr.mxu0 0.0
        %7387 = vmatpush1.msra.mxu0 0.0
        %7388 = vmatprep.subr.mxu0 0.0
        %7389 = vmatpush1.msra.mxu0 0.0
        %7390 = vmatprep.subr.mxu0 0.0
        %7391 = vmatpush1.msra.mxu0 0.0
        %7392 = vmatprep.subr.mxu0 0.0
        %7393 = vmatpush1.msra.mxu0 0.0
        %7394 = vmatprep.subr.mxu0 0.0
        %7395 = vmatpush1.msra.mxu0 0.0
        %7396 = vmatprep.subr.mxu0 0.0
        %7397 = vmatpush1.msra.mxu0 0.0
        %7398 = vmatprep.mubr.f32.mxu0 0.0
        %7399 = vmatmul.mubr.f32.gmra.mrb[0].mxu0 %v1159
        %v7400 = vpop.f32.mrb[0].mxu0
        %v7401 = vadd.f32 0.0, %v7400
        %v7402 = vpop.f32.mrb[0].mxu0
        %7403 = vdwg.mxu0
        %s7404 = scalar_lea.vmem [#allocation7], 6656
        %v7405 = vld [vmem:[%s7404] sm:$0xff]
        %v7406 = vld [vmem:[%s7404 + $0x8] sm:$0xff]
        %v7407 = vld [vmem:[%s7404 + $0x10] sm:$0xff]
        %v7408 = vld [vmem:[%s7404 + $0x18] sm:$0xff]
        %v7409 = vld [vmem:[%s7404 + $0x20] sm:$0xff]
        %v7410 = vld [vmem:[%s7404 + $0x28] sm:$0xff]
        %v7411 = vld [vmem:[%s7404 + $0x30] sm:$0xff]
        %v7412 = vld [vmem:[%s7404 + $0x38] sm:$0xff]
        %v7413 = vld [vmem:[%s7404 + $0x40] sm:$0xff]
        %v7414 = vld [vmem:[%s7404 + $0x48] sm:$0xff]
        %v7415 = vld [vmem:[%s7404 + $0x50] sm:$0xff]
        %v7416 = vld [vmem:[%s7404 + $0x58] sm:$0xff]
        %v7417 = vld [vmem:[%s7404 + $0x60] sm:$0xff]
        %v7418 = vld [vmem:[%s7404 + $0x68] sm:$0xff]
        %v7419 = vld [vmem:[%s7404 + $0x70] sm:$0xff]
        %v7420 = vld [vmem:[%s7404 + $0x78] sm:$0xff]
        %7421 = vmatprep.subr.mxu0 0.0
        %7422 = vmatpush1.msra.mxu0 %v7405
        %7423 = vmatprep.subr.mxu0 0.0
        %7424 = vmatpush1.msra.mxu0 %v7406
        %7425 = vmatprep.subr.mxu0 0.0
        %7426 = vmatpush1.msra.mxu0 %v7407
        %7427 = vmatprep.subr.mxu0 0.0
        %7428 = vmatpush1.msra.mxu0 %v7408
        %7429 = vmatprep.subr.mxu0 0.0
        %7430 = vmatpush1.msra.mxu0 %v7409
        %7431 = vmatprep.subr.mxu0 0.0
        %7432 = vmatpush1.msra.mxu0 %v7410
        %7433 = vmatprep.subr.mxu0 0.0
        %7434 = vmatpush1.msra.mxu0 %v7411
        %7435 = vmatprep.subr.mxu0 0.0
        %7436 = vmatpush1.msra.mxu0 %v7412
        %7437 = vmatprep.subr.mxu0 0.0
        %7438 = vmatpush1.msra.mxu0 %v7413
        %7439 = vmatprep.subr.mxu0 0.0
        %7440 = vmatpush1.msra.mxu0 %v7414
        %7441 = vmatprep.subr.mxu0 0.0
        %7442 = vmatpush1.msra.mxu0 %v7415
        %7443 = vmatprep.subr.mxu0 0.0
        %7444 = vmatpush1.msra.mxu0 %v7416
        %7445 = vmatprep.subr.mxu0 0.0
        %7446 = vmatpush1.msra.mxu0 %v7417
        %7447 = vmatprep.subr.mxu0 0.0
        %7448 = vmatpush1.msra.mxu0 %v7418
        %7449 = vmatprep.subr.mxu0 0.0
        %7450 = vmatpush1.msra.mxu0 %v7419
        %7451 = vmatprep.subr.mxu0 0.0
        %7452 = vmatpush1.msra.mxu0 %v7420
        %7453 = vmatprep.subr.mxu0 0.0
        %7454 = vmatpush1.msra.mxu0 0.0
        %7455 = vmatprep.subr.mxu0 0.0
        %7456 = vmatpush1.msra.mxu0 0.0
        %7457 = vmatprep.subr.mxu0 0.0
        %7458 = vmatpush1.msra.mxu0 0.0
        %7459 = vmatprep.subr.mxu0 0.0
        %7460 = vmatpush1.msra.mxu0 0.0
        %7461 = vmatprep.subr.mxu0 0.0
        %7462 = vmatpush1.msra.mxu0 0.0
        %7463 = vmatprep.subr.mxu0 0.0
        %7464 = vmatpush1.msra.mxu0 0.0
        %7465 = vmatprep.subr.mxu0 0.0
        %7466 = vmatpush1.msra.mxu0 0.0
        %7467 = vmatprep.subr.mxu0 0.0
        %7468 = vmatpush1.msra.mxu0 0.0
        %7469 = vmatprep.subr.mxu0 0.0
        %7470 = vmatpush1.msra.mxu0 0.0
        %7471 = vmatprep.subr.mxu0 0.0
        %7472 = vmatpush1.msra.mxu0 0.0
        %7473 = vmatprep.subr.mxu0 0.0
        %7474 = vmatpush1.msra.mxu0 0.0
        %7475 = vmatprep.subr.mxu0 0.0
        %7476 = vmatpush1.msra.mxu0 0.0
        %7477 = vmatprep.subr.mxu0 0.0
        %7478 = vmatpush1.msra.mxu0 0.0
        %7479 = vmatprep.subr.mxu0 0.0
        %7480 = vmatpush1.msra.mxu0 0.0
        %7481 = vmatprep.subr.mxu0 0.0
        %7482 = vmatpush1.msra.mxu0 0.0
        %7483 = vmatprep.subr.mxu0 0.0
        %7484 = vmatpush1.msra.mxu0 0.0
        %7485 = vmatprep.mubr.f32.mxu0 0.0
        %7486 = vmatmul.mubr.f32.gmra.mrb[0].mxu0 %v7401
        %v7487 = vpop.f32.mrb[0].mxu0
        %v7488 = vadd.f32 0.0, %v7487
        %v7489 = vpop.f32.mrb[0].mxu0
        %7490 = vdwg.mxu0
        %v7491 = vadd.f32 %v7333, %v7488
        %v7492 = vmax.f32 %v7491, 0.0
        %7493 = vmatprep.subr.mxu0 0.0
        %7494 = vmatpush1.msra.mxu0 %v7492
        %7495 = vmatprep.subr.mxu0 0.0
        %7496 = vmatpush1.msra.mxu0 0.0
        %7497 = vmatprep.subr.mxu0 0.0
        %7498 = vmatpush1.msra.mxu0 0.0
        %7499 = vmatprep.subr.mxu0 0.0
        %7500 = vmatpush1.msra.mxu0 0.0
        %7501 = vmatprep.subr.mxu0 0.0
        %7502 = vmatpush1.msra.mxu0 0.0
        %7503 = vmatprep.subr.mxu0 0.0
        %7504 = vmatpush1.msra.mxu0 0.0
        %7505 = vmatprep.subr.mxu0 0.0
        %7506 = vmatpush1.msra.mxu0 0.0
        %7507 = vmatprep.subr.mxu0 0.0
        %7508 = vmatpush1.msra.mxu0 0.0
        %7509 = vmatprep.subr.mxu0 0.0
        %7510 = vmatpush1.msra.mxu0 0.0
        %7511 = vmatprep.subr.mxu0 0.0
        %7512 = vmatpush1.msra.mxu0 0.0
        %7513 = vmatprep.subr.mxu0 0.0
        %7514 = vmatpush1.msra.mxu0 0.0
        %7515 = vmatprep.subr.mxu0 0.0
        %7516 = vmatpush1.msra.mxu0 0.0
        %7517 = vmatprep.subr.mxu0 0.0
        %7518 = vmatpush1.msra.mxu0 0.0
        %7519 = vmatprep.subr.mxu0 0.0
        %7520 = vmatpush1.msra.mxu0 0.0
        %7521 = vmatprep.subr.mxu0 0.0
        %7522 = vmatpush1.msra.mxu0 0.0
        %7523 = vmatprep.subr.mxu0 0.0
        %7524 = vmatpush1.msra.mxu0 0.0
        %7525 = vmatprep.subr.mxu0 0.0
        %7526 = vmatpush1.msra.mxu0 0.0
        %7527 = vmatprep.subr.mxu0 0.0
        %7528 = vmatpush1.msra.mxu0 0.0
        %7529 = vmatprep.subr.mxu0 0.0
        %7530 = vmatpush1.msra.mxu0 0.0
        %7531 = vmatprep.subr.mxu0 0.0
        %7532 = vmatpush1.msra.mxu0 0.0
        %7533 = vmatprep.subr.mxu0 0.0
        %7534 = vmatpush1.msra.mxu0 0.0
        %7535 = vmatprep.subr.mxu0 0.0
        %7536 = vmatpush1.msra.mxu0 0.0
        %7537 = vmatprep.subr.mxu0 0.0
        %7538 = vmatpush1.msra.mxu0 0.0
        %7539 = vmatprep.subr.mxu0 0.0
        %7540 = vmatpush1.msra.mxu0 0.0
        %7541 = vmatprep.subr.mxu0 0.0
        %7542 = vmatpush1.msra.mxu0 0.0
        %7543 = vmatprep.subr.mxu0 0.0
        %7544 = vmatpush1.msra.mxu0 0.0
        %7545 = vmatprep.subr.mxu0 0.0
        %7546 = vmatpush1.msra.mxu0 0.0
        %7547 = vmatprep.subr.mxu0 0.0
        %7548 = vmatpush1.msra.mxu0 0.0
        %7549 = vmatprep.subr.mxu0 0.0
        %7550 = vmatpush1.msra.mxu0 0.0
        %7551 = vmatprep.subr.mxu0 0.0
        %7552 = vmatpush1.msra.mxu0 0.0
        %7553 = vmatprep.subr.mxu0 0.0
        %7554 = vmatpush1.msra.mxu0 0.0
        %7555 = vmatprep.subr.mxu0 0.0
        %7556 = vmatpush1.msra.mxu0 0.0
        %7557 = vmatprep.mubr.f32.mxu0 0.0
        %7558 = vmatmul.mubr.f32.gmra.mrb[0].mxu0 %v585
        %v7559 = vpop.f32.mrb[0].mxu0
        %v7560 = vadd.f32 0.0, %v7559
        %v7561 = vpop.f32.mrb[0].mxu0
        %7562 = vdwg.mxu0
        %s7563 = scalar_lea.vmem [#allocation7], 6784
        %v7564 = vld [vmem:[%s7563] sm:$0xff]
        %v7565 = vld [vmem:[%s7563 + $0x8] sm:$0xff]
        %v7566 = vld [vmem:[%s7563 + $0x10] sm:$0xff]
        %v7567 = vld [vmem:[%s7563 + $0x18] sm:$0xff]
        %v7568 = vld [vmem:[%s7563 + $0x20] sm:$0xff]
        %v7569 = vld [vmem:[%s7563 + $0x28] sm:$0xff]
        %v7570 = vld [vmem:[%s7563 + $0x30] sm:$0xff]
        %v7571 = vld [vmem:[%s7563 + $0x38] sm:$0xff]
        %v7572 = vld [vmem:[%s7563 + $0x40] sm:$0xff]
        %v7573 = vld [vmem:[%s7563 + $0x48] sm:$0xff]
        %v7574 = vld [vmem:[%s7563 + $0x50] sm:$0xff]
        %v7575 = vld [vmem:[%s7563 + $0x58] sm:$0xff]
        %v7576 = vld [vmem:[%s7563 + $0x60] sm:$0xff]
        %v7577 = vld [vmem:[%s7563 + $0x68] sm:$0xff]
        %v7578 = vld [vmem:[%s7563 + $0x70] sm:$0xff]
        %v7579 = vld [vmem:[%s7563 + $0x78] sm:$0xff]
        %7580 = vmatprep.subr.mxu0 0.0
        %7581 = vmatpush1.msra.mxu0 %v7492
        %7582 = vmatprep.subr.mxu0 0.0
        %7583 = vmatpush1.msra.mxu0 0.0
        %7584 = vmatprep.subr.mxu0 0.0
        %7585 = vmatpush1.msra.mxu0 0.0
        %7586 = vmatprep.subr.mxu0 0.0
        %7587 = vmatpush1.msra.mxu0 0.0
        %7588 = vmatprep.subr.mxu0 0.0
        %7589 = vmatpush1.msra.mxu0 0.0
        %7590 = vmatprep.subr.mxu0 0.0
        %7591 = vmatpush1.msra.mxu0 0.0
        %7592 = vmatprep.subr.mxu0 0.0
        %7593 = vmatpush1.msra.mxu0 0.0
        %7594 = vmatprep.subr.mxu0 0.0
        %7595 = vmatpush1.msra.mxu0 0.0
        %7596 = vmatprep.subr.mxu0 0.0
        %7597 = vmatpush1.msra.mxu0 0.0
        %7598 = vmatprep.subr.mxu0 0.0
        %7599 = vmatpush1.msra.mxu0 0.0
        %7600 = vmatprep.subr.mxu0 0.0
        %7601 = vmatpush1.msra.mxu0 0.0
        %7602 = vmatprep.subr.mxu0 0.0
        %7603 = vmatpush1.msra.mxu0 0.0
        %7604 = vmatprep.subr.mxu0 0.0
        %7605 = vmatpush1.msra.mxu0 0.0
        %7606 = vmatprep.subr.mxu0 0.0
        %7607 = vmatpush1.msra.mxu0 0.0
        %7608 = vmatprep.subr.mxu0 0.0
        %7609 = vmatpush1.msra.mxu0 0.0
        %7610 = vmatprep.subr.mxu0 0.0
        %7611 = vmatpush1.msra.mxu0 0.0
        %7612 = vmatprep.subr.mxu0 0.0
        %7613 = vmatpush1.msra.mxu0 0.0
        %7614 = vmatprep.subr.mxu0 0.0
        %7615 = vmatpush1.msra.mxu0 0.0
        %7616 = vmatprep.subr.mxu0 0.0
        %7617 = vmatpush1.msra.mxu0 0.0
        %7618 = vmatprep.subr.mxu0 0.0
        %7619 = vmatpush1.msra.mxu0 0.0
        %7620 = vmatprep.subr.mxu0 0.0
        %7621 = vmatpush1.msra.mxu0 0.0
        %7622 = vmatprep.subr.mxu0 0.0
        %7623 = vmatpush1.msra.mxu0 0.0
        %7624 = vmatprep.subr.mxu0 0.0
        %7625 = vmatpush1.msra.mxu0 0.0
        %7626 = vmatprep.subr.mxu0 0.0
        %7627 = vmatpush1.msra.mxu0 0.0
        %7628 = vmatprep.subr.mxu0 0.0
        %7629 = vmatpush1.msra.mxu0 0.0
        %7630 = vmatprep.subr.mxu0 0.0
        %7631 = vmatpush1.msra.mxu0 0.0
        %7632 = vmatprep.subr.mxu0 0.0
        %7633 = vmatpush1.msra.mxu0 0.0
        %7634 = vmatprep.subr.mxu0 0.0
        %7635 = vmatpush1.msra.mxu0 0.0
        %7636 = vmatprep.subr.mxu0 0.0
        %7637 = vmatpush1.msra.mxu0 0.0
        %7638 = vmatprep.subr.mxu0 0.0
        %7639 = vmatpush1.msra.mxu0 0.0
        %7640 = vmatprep.subr.mxu0 0.0
        %7641 = vmatpush1.msra.mxu0 0.0
        %7642 = vmatprep.subr.mxu0 0.0
        %7643 = vmatpush1.msra.mxu0 0.0
        %7644 = vmatprep.mubr.f32.mxu0 0.0
        %7645 = vmatmul.mubr.f32.gmra.mrb[0].mxu0 %v676
        %v7646 = vpop.f32.mrb[0].mxu0
        %v7647 = vadd.f32 0.0, %v7646
        %v7648 = vpop.f32.mrb[0].mxu0
        %7649 = vdwg.mxu0
        %s7650 = scalar_lea.vmem [#allocation7], 6912
        %v7651 = vld [vmem:[%s7650] sm:$0xff]
        %v7652 = vld [vmem:[%s7650 + $0x8] sm:$0xff]
        %v7653 = vld [vmem:[%s7650 + $0x10] sm:$0xff]
        %v7654 = vld [vmem:[%s7650 + $0x18] sm:$0xff]
        %v7655 = vld [vmem:[%s7650 + $0x20] sm:$0xff]
        %v7656 = vld [vmem:[%s7650 + $0x28] sm:$0xff]
        %v7657 = vld [vmem:[%s7650 + $0x30] sm:$0xff]
        %v7658 = vld [vmem:[%s7650 + $0x38] sm:$0xff]
        %v7659 = vld [vmem:[%s7650 + $0x40] sm:$0xff]
        %v7660 = vld [vmem:[%s7650 + $0x48] sm:$0xff]
        %v7661 = vld [vmem:[%s7650 + $0x50] sm:$0xff]
        %v7662 = vld [vmem:[%s7650 + $0x58] sm:$0xff]
        %v7663 = vld [vmem:[%s7650 + $0x60] sm:$0xff]
        %v7664 = vld [vmem:[%s7650 + $0x68] sm:$0xff]
        %v7665 = vld [vmem:[%s7650 + $0x70] sm:$0xff]
        %v7666 = vld [vmem:[%s7650 + $0x78] sm:$0xff]
        %7667 = vmatprep.subr.mxu0 0.0
        %7668 = vmatpush1.msra.mxu0 %v7651
        %7669 = vmatprep.subr.mxu0 0.0
        %7670 = vmatpush1.msra.mxu0 %v7652
        %7671 = vmatprep.subr.mxu0 0.0
        %7672 = vmatpush1.msra.mxu0 %v7653
        %7673 = vmatprep.subr.mxu0 0.0
        %7674 = vmatpush1.msra.mxu0 %v7654
        %7675 = vmatprep.subr.mxu0 0.0
        %7676 = vmatpush1.msra.mxu0 %v7655
        %7677 = vmatprep.subr.mxu0 0.0
        %7678 = vmatpush1.msra.mxu0 %v7656
        %7679 = vmatprep.subr.mxu0 0.0
        %7680 = vmatpush1.msra.mxu0 %v7657
        %7681 = vmatprep.subr.mxu0 0.0
        %7682 = vmatpush1.msra.mxu0 %v7658
        %7683 = vmatprep.subr.mxu0 0.0
        %7684 = vmatpush1.msra.mxu0 %v7659
        %7685 = vmatprep.subr.mxu0 0.0
        %7686 = vmatpush1.msra.mxu0 %v7660
        %7687 = vmatprep.subr.mxu0 0.0
        %7688 = vmatpush1.msra.mxu0 %v7661
        %7689 = vmatprep.subr.mxu0 0.0
        %7690 = vmatpush1.msra.mxu0 %v7662
        %7691 = vmatprep.subr.mxu0 0.0
        %7692 = vmatpush1.msra.mxu0 %v7663
        %7693 = vmatprep.subr.mxu0 0.0
        %7694 = vmatpush1.msra.mxu0 %v7664
        %7695 = vmatprep.subr.mxu0 0.0
        %7696 = vmatpush1.msra.mxu0 %v7665
        %7697 = vmatprep.subr.mxu0 0.0
        %7698 = vmatpush1.msra.mxu0 %v7666
        %7699 = vmatprep.subr.mxu0 0.0
        %7700 = vmatpush1.msra.mxu0 0.0
        %7701 = vmatprep.subr.mxu0 0.0
        %7702 = vmatpush1.msra.mxu0 0.0
        %7703 = vmatprep.subr.mxu0 0.0
        %7704 = vmatpush1.msra.mxu0 0.0
        %7705 = vmatprep.subr.mxu0 0.0
        %7706 = vmatpush1.msra.mxu0 0.0
        %7707 = vmatprep.subr.mxu0 0.0
        %7708 = vmatpush1.msra.mxu0 0.0
        %7709 = vmatprep.subr.mxu0 0.0
        %7710 = vmatpush1.msra.mxu0 0.0
        %7711 = vmatprep.subr.mxu0 0.0
        %7712 = vmatpush1.msra.mxu0 0.0
        %7713 = vmatprep.subr.mxu0 0.0
        %7714 = vmatpush1.msra.mxu0 0.0
        %7715 = vmatprep.subr.mxu0 0.0
        %7716 = vmatpush1.msra.mxu0 0.0
        %7717 = vmatprep.subr.mxu0 0.0
        %7718 = vmatpush1.msra.mxu0 0.0
        %7719 = vmatprep.subr.mxu0 0.0
        %7720 = vmatpush1.msra.mxu0 0.0
        %7721 = vmatprep.subr.mxu0 0.0
        %7722 = vmatpush1.msra.mxu0 0.0
        %7723 = vmatprep.subr.mxu0 0.0
        %7724 = vmatpush1.msra.mxu0 0.0
        %7725 = vmatprep.subr.mxu0 0.0
        %7726 = vmatpush1.msra.mxu0 0.0
        %7727 = vmatprep.subr.mxu0 0.0
        %7728 = vmatpush1.msra.mxu0 0.0
        %7729 = vmatprep.subr.mxu0 0.0
        %7730 = vmatpush1.msra.mxu0 0.0
        %7731 = vmatprep.mubr.f32.mxu0 0.0
        %7732 = vmatmul.mubr.f32.gmra.mrb[0].mxu0 %v7647
        %v7733 = vpop.f32.mrb[0].mxu0
        %v7734 = vadd.f32 0.0, %v7733
        %v7735 = vpop.f32.mrb[0].mxu0
        %7736 = vdwg.mxu0
        %7737 = vmatprep.subr.mxu0 0.0
        %7738 = vmatpush1.msra.mxu0 %v7564
        %7739 = vmatprep.subr.mxu0 0.0
        %7740 = vmatpush1.msra.mxu0 %v7565
        %7741 = vmatprep.subr.mxu0 0.0
        %7742 = vmatpush1.msra.mxu0 %v7566
        %7743 = vmatprep.subr.mxu0 0.0
        %7744 = vmatpush1.msra.mxu0 %v7567
        %7745 = vmatprep.subr.mxu0 0.0
        %7746 = vmatpush1.msra.mxu0 %v7568
        %7747 = vmatprep.subr.mxu0 0.0
        %7748 = vmatpush1.msra.mxu0 %v7569
        %7749 = vmatprep.subr.mxu0 0.0
        %7750 = vmatpush1.msra.mxu0 %v7570
        %7751 = vmatprep.subr.mxu0 0.0
        %7752 = vmatpush1.msra.mxu0 %v7571
        %7753 = vmatprep.subr.mxu0 0.0
        %7754 = vmatpush1.msra.mxu0 %v7572
        %7755 = vmatprep.subr.mxu0 0.0
        %7756 = vmatpush1.msra.mxu0 %v7573
        %7757 = vmatprep.subr.mxu0 0.0
        %7758 = vmatpush1.msra.mxu0 %v7574
        %7759 = vmatprep.subr.mxu0 0.0
        %7760 = vmatpush1.msra.mxu0 %v7575
        %7761 = vmatprep.subr.mxu0 0.0
        %7762 = vmatpush1.msra.mxu0 %v7576
        %7763 = vmatprep.subr.mxu0 0.0
        %7764 = vmatpush1.msra.mxu0 %v7577
        %7765 = vmatprep.subr.mxu0 0.0
        %7766 = vmatpush1.msra.mxu0 %v7578
        %7767 = vmatprep.subr.mxu0 0.0
        %7768 = vmatpush1.msra.mxu0 %v7579
        %7769 = vmatprep.subr.mxu0 0.0
        %7770 = vmatpush1.msra.mxu0 0.0
        %7771 = vmatprep.subr.mxu0 0.0
        %7772 = vmatpush1.msra.mxu0 0.0
        %7773 = vmatprep.subr.mxu0 0.0
        %7774 = vmatpush1.msra.mxu0 0.0
        %7775 = vmatprep.subr.mxu0 0.0
        %7776 = vmatpush1.msra.mxu0 0.0
        %7777 = vmatprep.subr.mxu0 0.0
        %7778 = vmatpush1.msra.mxu0 0.0
        %7779 = vmatprep.subr.mxu0 0.0
        %7780 = vmatpush1.msra.mxu0 0.0
        %7781 = vmatprep.subr.mxu0 0.0
        %7782 = vmatpush1.msra.mxu0 0.0
        %7783 = vmatprep.subr.mxu0 0.0
        %7784 = vmatpush1.msra.mxu0 0.0
        %7785 = vmatprep.subr.mxu0 0.0
        %7786 = vmatpush1.msra.mxu0 0.0
        %7787 = vmatprep.subr.mxu0 0.0
        %7788 = vmatpush1.msra.mxu0 0.0
        %7789 = vmatprep.subr.mxu0 0.0
        %7790 = vmatpush1.msra.mxu0 0.0
        %7791 = vmatprep.subr.mxu0 0.0
        %7792 = vmatpush1.msra.mxu0 0.0
        %7793 = vmatprep.subr.mxu0 0.0
        %7794 = vmatpush1.msra.mxu0 0.0
        %7795 = vmatprep.subr.mxu0 0.0
        %7796 = vmatpush1.msra.mxu0 0.0
        %7797 = vmatprep.subr.mxu0 0.0
        %7798 = vmatpush1.msra.mxu0 0.0
        %7799 = vmatprep.subr.mxu0 0.0
        %7800 = vmatpush1.msra.mxu0 0.0
        %7801 = vmatprep.mubr.f32.mxu0 0.0
        %7802 = vmatmul.mubr.f32.gmra.mrb[0].mxu0 %v7560
        %v7803 = vpop.f32.mrb[0].mxu0
        %v7804 = vadd.f32 %v7734, %v7803
        %v7805 = vpop.f32.mrb[0].mxu0
        %7806 = vdwg.mxu0
        %s7807 = scalar_lea.vmem [#allocation7], 7040
        %v7808 = vld [vmem:[%s7807] sm:$0xff]
        %v7809 = vld [vmem:[%s7807 + $0x8] sm:$0xff]
        %v7810 = vld [vmem:[%s7807 + $0x10] sm:$0xff]
        %v7811 = vld [vmem:[%s7807 + $0x18] sm:$0xff]
        %v7812 = vld [vmem:[%s7807 + $0x20] sm:$0xff]
        %v7813 = vld [vmem:[%s7807 + $0x28] sm:$0xff]
        %v7814 = vld [vmem:[%s7807 + $0x30] sm:$0xff]
        %v7815 = vld [vmem:[%s7807 + $0x38] sm:$0xff]
        %v7816 = vld [vmem:[%s7807 + $0x40] sm:$0xff]
        %v7817 = vld [vmem:[%s7807 + $0x48] sm:$0xff]
        %v7818 = vld [vmem:[%s7807 + $0x50] sm:$0xff]
        %v7819 = vld [vmem:[%s7807 + $0x58] sm:$0xff]
        %v7820 = vld [vmem:[%s7807 + $0x60] sm:$0xff]
        %v7821 = vld [vmem:[%s7807 + $0x68] sm:$0xff]
        %v7822 = vld [vmem:[%s7807 + $0x70] sm:$0xff]
        %v7823 = vld [vmem:[%s7807 + $0x78] sm:$0xff]
        %7824 = vmatprep.subr.mxu0 0.0
        %7825 = vmatpush1.msra.mxu0 %v7808
        %7826 = vmatprep.subr.mxu0 0.0
        %7827 = vmatpush1.msra.mxu0 %v7809
        %7828 = vmatprep.subr.mxu0 0.0
        %7829 = vmatpush1.msra.mxu0 %v7810
        %7830 = vmatprep.subr.mxu0 0.0
        %7831 = vmatpush1.msra.mxu0 %v7811
        %7832 = vmatprep.subr.mxu0 0.0
        %7833 = vmatpush1.msra.mxu0 %v7812
        %7834 = vmatprep.subr.mxu0 0.0
        %7835 = vmatpush1.msra.mxu0 %v7813
        %7836 = vmatprep.subr.mxu0 0.0
        %7837 = vmatpush1.msra.mxu0 %v7814
        %7838 = vmatprep.subr.mxu0 0.0
        %7839 = vmatpush1.msra.mxu0 %v7815
        %7840 = vmatprep.subr.mxu0 0.0
        %7841 = vmatpush1.msra.mxu0 %v7816
        %7842 = vmatprep.subr.mxu0 0.0
        %7843 = vmatpush1.msra.mxu0 %v7817
        %7844 = vmatprep.subr.mxu0 0.0
        %7845 = vmatpush1.msra.mxu0 %v7818
        %7846 = vmatprep.subr.mxu0 0.0
        %7847 = vmatpush1.msra.mxu0 %v7819
        %7848 = vmatprep.subr.mxu0 0.0
        %7849 = vmatpush1.msra.mxu0 %v7820
        %7850 = vmatprep.subr.mxu0 0.0
        %7851 = vmatpush1.msra.mxu0 %v7821
        %7852 = vmatprep.subr.mxu0 0.0
        %7853 = vmatpush1.msra.mxu0 %v7822
        %7854 = vmatprep.subr.mxu0 0.0
        %7855 = vmatpush1.msra.mxu0 %v7823
        %7856 = vmatprep.subr.mxu0 0.0
        %7857 = vmatpush1.msra.mxu0 0.0
        %7858 = vmatprep.subr.mxu0 0.0
        %7859 = vmatpush1.msra.mxu0 0.0
        %7860 = vmatprep.subr.mxu0 0.0
        %7861 = vmatpush1.msra.mxu0 0.0
        %7862 = vmatprep.subr.mxu0 0.0
        %7863 = vmatpush1.msra.mxu0 0.0
        %7864 = vmatprep.subr.mxu0 0.0
        %7865 = vmatpush1.msra.mxu0 0.0
        %7866 = vmatprep.subr.mxu0 0.0
        %7867 = vmatpush1.msra.mxu0 0.0
        %7868 = vmatprep.subr.mxu0 0.0
        %7869 = vmatpush1.msra.mxu0 0.0
        %7870 = vmatprep.subr.mxu0 0.0
        %7871 = vmatpush1.msra.mxu0 0.0
        %7872 = vmatprep.subr.mxu0 0.0
        %7873 = vmatpush1.msra.mxu0 0.0
        %7874 = vmatprep.subr.mxu0 0.0
        %7875 = vmatpush1.msra.mxu0 0.0
        %7876 = vmatprep.subr.mxu0 0.0
        %7877 = vmatpush1.msra.mxu0 0.0
        %7878 = vmatprep.subr.mxu0 0.0
        %7879 = vmatpush1.msra.mxu0 0.0
        %7880 = vmatprep.subr.mxu0 0.0
        %7881 = vmatpush1.msra.mxu0 0.0
        %7882 = vmatprep.subr.mxu0 0.0
        %7883 = vmatpush1.msra.mxu0 0.0
        %7884 = vmatprep.subr.mxu0 0.0
        %7885 = vmatpush1.msra.mxu0 0.0
        %7886 = vmatprep.subr.mxu0 0.0
        %7887 = vmatpush1.msra.mxu0 0.0
        %7888 = vmatprep.mubr.f32.mxu0 0.0
        %7889 = vmatmul.mubr.f32.gmra.mrb[0].mxu0 %v7492
        %v7890 = vpop.f32.mrb[0].mxu0
        %v7891 = vadd.f32 0.0, %v7890
        %v7892 = vpop.f32.mrb[0].mxu0
        %7893 = vdwg.mxu0
        %v7894 = vadd.f32 %v7804, %v7891
        %7895 = vmatprep.subr.mxu0 0.0
        %7896 = vmatpush1.msra.mxu0 %v7492
        %7897 = vmatprep.subr.mxu0 0.0
        %7898 = vmatpush1.msra.mxu0 0.0
        %7899 = vmatprep.subr.mxu0 0.0
        %7900 = vmatpush1.msra.mxu0 0.0
        %7901 = vmatprep.subr.mxu0 0.0
        %7902 = vmatpush1.msra.mxu0 0.0
        %7903 = vmatprep.subr.mxu0 0.0
        %7904 = vmatpush1.msra.mxu0 0.0
        %7905 = vmatprep.subr.mxu0 0.0
        %7906 = vmatpush1.msra.mxu0 0.0
        %7907 = vmatprep.subr.mxu0 0.0
        %7908 = vmatpush1.msra.mxu0 0.0
        %7909 = vmatprep.subr.mxu0 0.0
        %7910 = vmatpush1.msra.mxu0 0.0
        %7911 = vmatprep.subr.mxu0 0.0
        %7912 = vmatpush1.msra.mxu0 0.0
        %7913 = vmatprep.subr.mxu0 0.0
        %7914 = vmatpush1.msra.mxu0 0.0
        %7915 = vmatprep.subr.mxu0 0.0
        %7916 = vmatpush1.msra.mxu0 0.0
        %7917 = vmatprep.subr.mxu0 0.0
        %7918 = vmatpush1.msra.mxu0 0.0
        %7919 = vmatprep.subr.mxu0 0.0
        %7920 = vmatpush1.msra.mxu0 0.0
        %7921 = vmatprep.subr.mxu0 0.0
        %7922 = vmatpush1.msra.mxu0 0.0
        %7923 = vmatprep.subr.mxu0 0.0
        %7924 = vmatpush1.msra.mxu0 0.0
        %7925 = vmatprep.subr.mxu0 0.0
        %7926 = vmatpush1.msra.mxu0 0.0
        %7927 = vmatprep.subr.mxu0 0.0
        %7928 = vmatpush1.msra.mxu0 0.0
        %7929 = vmatprep.subr.mxu0 0.0
        %7930 = vmatpush1.msra.mxu0 0.0
        %7931 = vmatprep.subr.mxu0 0.0
        %7932 = vmatpush1.msra.mxu0 0.0
        %7933 = vmatprep.subr.mxu0 0.0
        %7934 = vmatpush1.msra.mxu0 0.0
        %7935 = vmatprep.subr.mxu0 0.0
        %7936 = vmatpush1.msra.mxu0 0.0
        %7937 = vmatprep.subr.mxu0 0.0
        %7938 = vmatpush1.msra.mxu0 0.0
        %7939 = vmatprep.subr.mxu0 0.0
        %7940 = vmatpush1.msra.mxu0 0.0
        %7941 = vmatprep.subr.mxu0 0.0
        %7942 = vmatpush1.msra.mxu0 0.0
        %7943 = vmatprep.subr.mxu0 0.0
        %7944 = vmatpush1.msra.mxu0 0.0
        %7945 = vmatprep.subr.mxu0 0.0
        %7946 = vmatpush1.msra.mxu0 0.0
        %7947 = vmatprep.subr.mxu0 0.0
        %7948 = vmatpush1.msra.mxu0 0.0
        %7949 = vmatprep.subr.mxu0 0.0
        %7950 = vmatpush1.msra.mxu0 0.0
        %7951 = vmatprep.subr.mxu0 0.0
        %7952 = vmatpush1.msra.mxu0 0.0
        %7953 = vmatprep.subr.mxu0 0.0
        %7954 = vmatpush1.msra.mxu0 0.0
        %7955 = vmatprep.subr.mxu0 0.0
        %7956 = vmatpush1.msra.mxu0 0.0
        %7957 = vmatprep.subr.mxu0 0.0
        %7958 = vmatpush1.msra.mxu0 0.0
        %7959 = vmatprep.mubr.f32.mxu0 0.0
        %7960 = vmatmul.mubr.f32.gmra.mrb[0].mxu0 %v996
        %v7961 = vpop.f32.mrb[0].mxu0
        %v7962 = vadd.f32 0.0, %v7961
        %v7963 = vpop.f32.mrb[0].mxu0
        %7964 = vdwg.mxu0
        %s7965 = scalar_lea.vmem [#allocation7], 7168
        %v7966 = vld [vmem:[%s7965] sm:$0xff]
        %v7967 = vld [vmem:[%s7965 + $0x8] sm:$0xff]
        %v7968 = vld [vmem:[%s7965 + $0x10] sm:$0xff]
        %v7969 = vld [vmem:[%s7965 + $0x18] sm:$0xff]
        %v7970 = vld [vmem:[%s7965 + $0x20] sm:$0xff]
        %v7971 = vld [vmem:[%s7965 + $0x28] sm:$0xff]
        %v7972 = vld [vmem:[%s7965 + $0x30] sm:$0xff]
        %v7973 = vld [vmem:[%s7965 + $0x38] sm:$0xff]
        %v7974 = vld [vmem:[%s7965 + $0x40] sm:$0xff]
        %v7975 = vld [vmem:[%s7965 + $0x48] sm:$0xff]
        %v7976 = vld [vmem:[%s7965 + $0x50] sm:$0xff]
        %v7977 = vld [vmem:[%s7965 + $0x58] sm:$0xff]
        %v7978 = vld [vmem:[%s7965 + $0x60] sm:$0xff]
        %v7979 = vld [vmem:[%s7965 + $0x68] sm:$0xff]
        %v7980 = vld [vmem:[%s7965 + $0x70] sm:$0xff]
        %v7981 = vld [vmem:[%s7965 + $0x78] sm:$0xff]
        %7982 = vmatprep.subr.mxu0 0.0
        %7983 = vmatpush1.msra.mxu0 %v7966
        %7984 = vmatprep.subr.mxu0 0.0
        %7985 = vmatpush1.msra.mxu0 %v7967
        %7986 = vmatprep.subr.mxu0 0.0
        %7987 = vmatpush1.msra.mxu0 %v7968
        %7988 = vmatprep.subr.mxu0 0.0
        %7989 = vmatpush1.msra.mxu0 %v7969
        %7990 = vmatprep.subr.mxu0 0.0
        %7991 = vmatpush1.msra.mxu0 %v7970
        %7992 = vmatprep.subr.mxu0 0.0
        %7993 = vmatpush1.msra.mxu0 %v7971
        %7994 = vmatprep.subr.mxu0 0.0
        %7995 = vmatpush1.msra.mxu0 %v7972
        %7996 = vmatprep.subr.mxu0 0.0
        %7997 = vmatpush1.msra.mxu0 %v7973
        %7998 = vmatprep.subr.mxu0 0.0
        %7999 = vmatpush1.msra.mxu0 %v7974
        %8000 = vmatprep.subr.mxu0 0.0
        %8001 = vmatpush1.msra.mxu0 %v7975
        %8002 = vmatprep.subr.mxu0 0.0
        %8003 = vmatpush1.msra.mxu0 %v7976
        %8004 = vmatprep.subr.mxu0 0.0
        %8005 = vmatpush1.msra.mxu0 %v7977
        %8006 = vmatprep.subr.mxu0 0.0
        %8007 = vmatpush1.msra.mxu0 %v7978
        %8008 = vmatprep.subr.mxu0 0.0
        %8009 = vmatpush1.msra.mxu0 %v7979
        %8010 = vmatprep.subr.mxu0 0.0
        %8011 = vmatpush1.msra.mxu0 %v7980
        %8012 = vmatprep.subr.mxu0 0.0
        %8013 = vmatpush1.msra.mxu0 %v7981
        %8014 = vmatprep.subr.mxu0 0.0
        %8015 = vmatpush1.msra.mxu0 0.0
        %8016 = vmatprep.subr.mxu0 0.0
        %8017 = vmatpush1.msra.mxu0 0.0
        %8018 = vmatprep.subr.mxu0 0.0
        %8019 = vmatpush1.msra.mxu0 0.0
        %8020 = vmatprep.subr.mxu0 0.0
        %8021 = vmatpush1.msra.mxu0 0.0
        %8022 = vmatprep.subr.mxu0 0.0
        %8023 = vmatpush1.msra.mxu0 0.0
        %8024 = vmatprep.subr.mxu0 0.0
        %8025 = vmatpush1.msra.mxu0 0.0
        %8026 = vmatprep.subr.mxu0 0.0
        %8027 = vmatpush1.msra.mxu0 0.0
        %8028 = vmatprep.subr.mxu0 0.0
        %8029 = vmatpush1.msra.mxu0 0.0
        %8030 = vmatprep.subr.mxu0 0.0
        %8031 = vmatpush1.msra.mxu0 0.0
        %8032 = vmatprep.subr.mxu0 0.0
        %8033 = vmatpush1.msra.mxu0 0.0
        %8034 = vmatprep.subr.mxu0 0.0
        %8035 = vmatpush1.msra.mxu0 0.0
        %8036 = vmatprep.subr.mxu0 0.0
        %8037 = vmatpush1.msra.mxu0 0.0
        %8038 = vmatprep.subr.mxu0 0.0
        %8039 = vmatpush1.msra.mxu0 0.0
        %8040 = vmatprep.subr.mxu0 0.0
        %8041 = vmatpush1.msra.mxu0 0.0
        %8042 = vmatprep.subr.mxu0 0.0
        %8043 = vmatpush1.msra.mxu0 0.0
        %8044 = vmatprep.subr.mxu0 0.0
        %8045 = vmatpush1.msra.mxu0 0.0
        %8046 = vmatprep.mubr.f32.mxu0 0.0
        %8047 = vmatmul.mubr.f32.gmra.mrb[0].mxu0 %v7962
        %v8048 = vpop.f32.mrb[0].mxu0
        %v8049 = vadd.f32 0.0, %v8048
        %v8050 = vpop.f32.mrb[0].mxu0
        %8051 = vdwg.mxu0
        %v8052 = vadd.f32 %v7894, %v8049
        %8053 = vmatprep.subr.mxu0 0.0
        %8054 = vmatpush1.msra.mxu0 %v7492
        %8055 = vmatprep.subr.mxu0 0.0
        %8056 = vmatpush1.msra.mxu0 0.0
        %8057 = vmatprep.subr.mxu0 0.0
        %8058 = vmatpush1.msra.mxu0 0.0
        %8059 = vmatprep.subr.mxu0 0.0
        %8060 = vmatpush1.msra.mxu0 0.0
        %8061 = vmatprep.subr.mxu0 0.0
        %8062 = vmatpush1.msra.mxu0 0.0
        %8063 = vmatprep.subr.mxu0 0.0
        %8064 = vmatpush1.msra.mxu0 0.0
        %8065 = vmatprep.subr.mxu0 0.0
        %8066 = vmatpush1.msra.mxu0 0.0
        %8067 = vmatprep.subr.mxu0 0.0
        %8068 = vmatpush1.msra.mxu0 0.0
        %8069 = vmatprep.subr.mxu0 0.0
        %8070 = vmatpush1.msra.mxu0 0.0
        %8071 = vmatprep.subr.mxu0 0.0
        %8072 = vmatpush1.msra.mxu0 0.0
        %8073 = vmatprep.subr.mxu0 0.0
        %8074 = vmatpush1.msra.mxu0 0.0
        %8075 = vmatprep.subr.mxu0 0.0
        %8076 = vmatpush1.msra.mxu0 0.0
        %8077 = vmatprep.subr.mxu0 0.0
        %8078 = vmatpush1.msra.mxu0 0.0
        %8079 = vmatprep.subr.mxu0 0.0
        %8080 = vmatpush1.msra.mxu0 0.0
        %8081 = vmatprep.subr.mxu0 0.0
        %8082 = vmatpush1.msra.mxu0 0.0
        %8083 = vmatprep.subr.mxu0 0.0
        %8084 = vmatpush1.msra.mxu0 0.0
        %8085 = vmatprep.subr.mxu0 0.0
        %8086 = vmatpush1.msra.mxu0 0.0
        %8087 = vmatprep.subr.mxu0 0.0
        %8088 = vmatpush1.msra.mxu0 0.0
        %8089 = vmatprep.subr.mxu0 0.0
        %8090 = vmatpush1.msra.mxu0 0.0
        %8091 = vmatprep.subr.mxu0 0.0
        %8092 = vmatpush1.msra.mxu0 0.0
        %8093 = vmatprep.subr.mxu0 0.0
        %8094 = vmatpush1.msra.mxu0 0.0
        %8095 = vmatprep.subr.mxu0 0.0
        %8096 = vmatpush1.msra.mxu0 0.0
        %8097 = vmatprep.subr.mxu0 0.0
        %8098 = vmatpush1.msra.mxu0 0.0
        %8099 = vmatprep.subr.mxu0 0.0
        %8100 = vmatpush1.msra.mxu0 0.0
        %8101 = vmatprep.subr.mxu0 0.0
        %8102 = vmatpush1.msra.mxu0 0.0
        %8103 = vmatprep.subr.mxu0 0.0
        %8104 = vmatpush1.msra.mxu0 0.0
        %8105 = vmatprep.subr.mxu0 0.0
        %8106 = vmatpush1.msra.mxu0 0.0
        %8107 = vmatprep.subr.mxu0 0.0
        %8108 = vmatpush1.msra.mxu0 0.0
        %8109 = vmatprep.subr.mxu0 0.0
        %8110 = vmatpush1.msra.mxu0 0.0
        %8111 = vmatprep.subr.mxu0 0.0
        %8112 = vmatpush1.msra.mxu0 0.0
        %8113 = vmatprep.subr.mxu0 0.0
        %8114 = vmatpush1.msra.mxu0 0.0
        %8115 = vmatprep.subr.mxu0 0.0
        %8116 = vmatpush1.msra.mxu0 0.0
        %8117 = vmatprep.mubr.f32.mxu0 0.0
        %8118 = vmatmul.mubr.f32.gmra.mrb[0].mxu0 %v1159
        %v8119 = vpop.f32.mrb[0].mxu0
        %v8120 = vadd.f32 0.0, %v8119
        %v8121 = vpop.f32.mrb[0].mxu0
        %8122 = vdwg.mxu0
        %s8123 = scalar_lea.vmem [#allocation7], 7296
        %v8124 = vld [vmem:[%s8123] sm:$0xff]
        %v8125 = vld [vmem:[%s8123 + $0x8] sm:$0xff]
        %v8126 = vld [vmem:[%s8123 + $0x10] sm:$0xff]
        %v8127 = vld [vmem:[%s8123 + $0x18] sm:$0xff]
        %v8128 = vld [vmem:[%s8123 + $0x20] sm:$0xff]
        %v8129 = vld [vmem:[%s8123 + $0x28] sm:$0xff]
        %v8130 = vld [vmem:[%s8123 + $0x30] sm:$0xff]
        %v8131 = vld [vmem:[%s8123 + $0x38] sm:$0xff]
        %v8132 = vld [vmem:[%s8123 + $0x40] sm:$0xff]
        %v8133 = vld [vmem:[%s8123 + $0x48] sm:$0xff]
        %v8134 = vld [vmem:[%s8123 + $0x50] sm:$0xff]
        %v8135 = vld [vmem:[%s8123 + $0x58] sm:$0xff]
        %v8136 = vld [vmem:[%s8123 + $0x60] sm:$0xff]
        %v8137 = vld [vmem:[%s8123 + $0x68] sm:$0xff]
        %v8138 = vld [vmem:[%s8123 + $0x70] sm:$0xff]
        %v8139 = vld [vmem:[%s8123 + $0x78] sm:$0xff]
        %8140 = vmatprep.subr.mxu0 0.0
        %8141 = vmatpush1.msra.mxu0 %v8124
        %8142 = vmatprep.subr.mxu0 0.0
        %8143 = vmatpush1.msra.mxu0 %v8125
        %8144 = vmatprep.subr.mxu0 0.0
        %8145 = vmatpush1.msra.mxu0 %v8126
        %8146 = vmatprep.subr.mxu0 0.0
        %8147 = vmatpush1.msra.mxu0 %v8127
        %8148 = vmatprep.subr.mxu0 0.0
        %8149 = vmatpush1.msra.mxu0 %v8128
        %8150 = vmatprep.subr.mxu0 0.0
        %8151 = vmatpush1.msra.mxu0 %v8129
        %8152 = vmatprep.subr.mxu0 0.0
        %8153 = vmatpush1.msra.mxu0 %v8130
        %8154 = vmatprep.subr.mxu0 0.0
        %8155 = vmatpush1.msra.mxu0 %v8131
        %8156 = vmatprep.subr.mxu0 0.0
        %8157 = vmatpush1.msra.mxu0 %v8132
        %8158 = vmatprep.subr.mxu0 0.0
        %8159 = vmatpush1.msra.mxu0 %v8133
        %8160 = vmatprep.subr.mxu0 0.0
        %8161 = vmatpush1.msra.mxu0 %v8134
        %8162 = vmatprep.subr.mxu0 0.0
        %8163 = vmatpush1.msra.mxu0 %v8135
        %8164 = vmatprep.subr.mxu0 0.0
        %8165 = vmatpush1.msra.mxu0 %v8136
        %8166 = vmatprep.subr.mxu0 0.0
        %8167 = vmatpush1.msra.mxu0 %v8137
        %8168 = vmatprep.subr.mxu0 0.0
        %8169 = vmatpush1.msra.mxu0 %v8138
        %8170 = vmatprep.subr.mxu0 0.0
        %8171 = vmatpush1.msra.mxu0 %v8139
        %8172 = vmatprep.subr.mxu0 0.0
        %8173 = vmatpush1.msra.mxu0 0.0
        %8174 = vmatprep.subr.mxu0 0.0
        %8175 = vmatpush1.msra.mxu0 0.0
        %8176 = vmatprep.subr.mxu0 0.0
        %8177 = vmatpush1.msra.mxu0 0.0
        %8178 = vmatprep.subr.mxu0 0.0
        %8179 = vmatpush1.msra.mxu0 0.0
        %8180 = vmatprep.subr.mxu0 0.0
        %8181 = vmatpush1.msra.mxu0 0.0
        %8182 = vmatprep.subr.mxu0 0.0
        %8183 = vmatpush1.msra.mxu0 0.0
        %8184 = vmatprep.subr.mxu0 0.0
        %8185 = vmatpush1.msra.mxu0 0.0
        %8186 = vmatprep.subr.mxu0 0.0
        %8187 = vmatpush1.msra.mxu0 0.0
        %8188 = vmatprep.subr.mxu0 0.0
        %8189 = vmatpush1.msra.mxu0 0.0
        %8190 = vmatprep.subr.mxu0 0.0
        %8191 = vmatpush1.msra.mxu0 0.0
        %8192 = vmatprep.subr.mxu0 0.0
        %8193 = vmatpush1.msra.mxu0 0.0
        %8194 = vmatprep.subr.mxu0 0.0
        %8195 = vmatpush1.msra.mxu0 0.0
        %8196 = vmatprep.subr.mxu0 0.0
        %8197 = vmatpush1.msra.mxu0 0.0
        %8198 = vmatprep.subr.mxu0 0.0
        %8199 = vmatpush1.msra.mxu0 0.0
        %8200 = vmatprep.subr.mxu0 0.0
        %8201 = vmatpush1.msra.mxu0 0.0
        %8202 = vmatprep.subr.mxu0 0.0
        %8203 = vmatpush1.msra.mxu0 0.0
        %8204 = vmatprep.mubr.f32.mxu0 0.0
        %8205 = vmatmul.mubr.f32.gmra.mrb[0].mxu0 %v8120
        %v8206 = vpop.f32.mrb[0].mxu0
        %v8207 = vadd.f32 0.0, %v8206
        %v8208 = vpop.f32.mrb[0].mxu0
        %8209 = vdwg.mxu0
        %v8210 = vadd.f32 %v8052, %v8207
        %v8211 = vadd.f32 %v6772, %v8210
        %v8212 = vld [vmem:[#allocation6] sm:$0xff]
        %v8214 = vsel %vm583, %v8212, 0
        %8216 = vmatprep.subr.mxu0 0.0
        %8217 = vmatpush1.msra.mxu0 %v2038
        %8218 = vmatprep.subr.mxu0 0.0
        %8219 = vmatpush1.msra.mxu0 0.0
        %8220 = vmatprep.subr.mxu0 0.0
        %8221 = vmatpush1.msra.mxu0 0.0
        %8222 = vmatprep.subr.mxu0 0.0
        %8223 = vmatpush1.msra.mxu0 0.0
        %8224 = vmatprep.subr.mxu0 0.0
        %8225 = vmatpush1.msra.mxu0 0.0
        %8226 = vmatprep.subr.mxu0 0.0
        %8227 = vmatpush1.msra.mxu0 0.0
        %8228 = vmatprep.subr.mxu0 0.0
        %8229 = vmatpush1.msra.mxu0 0.0
        %8230 = vmatprep.subr.mxu0 0.0
        %8231 = vmatpush1.msra.mxu0 0.0
        %8232 = vmatprep.subr.mxu0 0.0
        %8233 = vmatpush1.msra.mxu0 0.0
        %8234 = vmatprep.subr.mxu0 0.0
        %8235 = vmatpush1.msra.mxu0 0.0
        %8236 = vmatprep.subr.mxu0 0.0
        %8237 = vmatpush1.msra.mxu0 0.0
        %8238 = vmatprep.subr.mxu0 0.0
        %8239 = vmatpush1.msra.mxu0 0.0
        %8240 = vmatprep.subr.mxu0 0.0
        %8241 = vmatpush1.msra.mxu0 0.0
        %8242 = vmatprep.subr.mxu0 0.0
        %8243 = vmatpush1.msra.mxu0 0.0
        %8244 = vmatprep.subr.mxu0 0.0
        %8245 = vmatpush1.msra.mxu0 0.0
        %8246 = vmatprep.subr.mxu0 0.0
        %8247 = vmatpush1.msra.mxu0 0.0
        %8248 = vmatprep.subr.mxu0 0.0
        %8249 = vmatpush1.msra.mxu0 0.0
        %8250 = vmatprep.subr.mxu0 0.0
        %8251 = vmatpush1.msra.mxu0 0.0
        %8252 = vmatprep.subr.mxu0 0.0
        %8253 = vmatpush1.msra.mxu0 0.0
        %8254 = vmatprep.subr.mxu0 0.0
        %8255 = vmatpush1.msra.mxu0 0.0
        %8256 = vmatprep.subr.mxu0 0.0
        %8257 = vmatpush1.msra.mxu0 0.0
        %8258 = vmatprep.subr.mxu0 0.0
        %8259 = vmatpush1.msra.mxu0 0.0
        %8260 = vmatprep.subr.mxu0 0.0
        %8261 = vmatpush1.msra.mxu0 0.0
        %8262 = vmatprep.subr.mxu0 0.0
        %8263 = vmatpush1.msra.mxu0 0.0
        %8264 = vmatprep.subr.mxu0 0.0
        %8265 = vmatpush1.msra.mxu0 0.0
        %8266 = vmatprep.subr.mxu0 0.0
        %8267 = vmatpush1.msra.mxu0 0.0
        %8268 = vmatprep.subr.mxu0 0.0
        %8269 = vmatpush1.msra.mxu0 0.0
        %8270 = vmatprep.subr.mxu0 0.0
        %8271 = vmatpush1.msra.mxu0 0.0
        %8272 = vmatprep.subr.mxu0 0.0
        %8273 = vmatpush1.msra.mxu0 0.0
        %8274 = vmatprep.subr.mxu0 0.0
        %8275 = vmatpush1.msra.mxu0 0.0
        %8276 = vmatprep.subr.mxu0 0.0
        %8277 = vmatpush1.msra.mxu0 0.0
        %8278 = vmatprep.subr.mxu0 0.0
        %8279 = vmatpush1.msra.mxu0 0.0
        %8280 = vmatprep.mubr.f32.mxu0 0.0
        %8281 = vmatmul.mubr.f32.gmra.mrb[0].mxu0 %v8214
        %v8282 = vpop.f32.mrb[0].mxu0
        %v8283 = vadd.f32 0.0, %v8282
        %v8284 = vpop.f32.mrb[0].mxu0
        %8285 = vdwg.mxu0
        %s8286 = scalar_lea.vmem [#allocation7], 7424
        %v8287 = vld [vmem:[%s8286] sm:$0xff]
        %v8288 = vld [vmem:[%s8286 + $0x8] sm:$0xff]
        %v8289 = vld [vmem:[%s8286 + $0x10] sm:$0xff]
        %v8290 = vld [vmem:[%s8286 + $0x18] sm:$0xff]
        %v8291 = vld [vmem:[%s8286 + $0x20] sm:$0xff]
        %v8292 = vld [vmem:[%s8286 + $0x28] sm:$0xff]
        %v8293 = vld [vmem:[%s8286 + $0x30] sm:$0xff]
        %v8294 = vld [vmem:[%s8286 + $0x38] sm:$0xff]
        %v8295 = vld [vmem:[%s8286 + $0x40] sm:$0xff]
        %v8296 = vld [vmem:[%s8286 + $0x48] sm:$0xff]
        %v8297 = vld [vmem:[%s8286 + $0x50] sm:$0xff]
        %v8298 = vld [vmem:[%s8286 + $0x58] sm:$0xff]
        %v8299 = vld [vmem:[%s8286 + $0x60] sm:$0xff]
        %v8300 = vld [vmem:[%s8286 + $0x68] sm:$0xff]
        %v8301 = vld [vmem:[%s8286 + $0x70] sm:$0xff]
        %v8302 = vld [vmem:[%s8286 + $0x78] sm:$0xff]
        %s8303 = scalar_lea.vmem [#allocation7], 7552
        %v8304 = vld [vmem:[%s8303] sm:$0xff]
        %v8305 = vld [vmem:[%s8303 + $0x8] sm:$0xff]
        %v8306 = vld [vmem:[%s8303 + $0x10] sm:$0xff]
        %v8307 = vld [vmem:[%s8303 + $0x18] sm:$0xff]
        %v8308 = vld [vmem:[%s8303 + $0x20] sm:$0xff]
        %v8309 = vld [vmem:[%s8303 + $0x28] sm:$0xff]
        %v8310 = vld [vmem:[%s8303 + $0x30] sm:$0xff]
        %v8311 = vld [vmem:[%s8303 + $0x38] sm:$0xff]
        %v8312 = vld [vmem:[%s8303 + $0x40] sm:$0xff]
        %v8313 = vld [vmem:[%s8303 + $0x48] sm:$0xff]
        %v8314 = vld [vmem:[%s8303 + $0x50] sm:$0xff]
        %v8315 = vld [vmem:[%s8303 + $0x58] sm:$0xff]
        %v8316 = vld [vmem:[%s8303 + $0x60] sm:$0xff]
        %v8317 = vld [vmem:[%s8303 + $0x68] sm:$0xff]
        %v8318 = vld [vmem:[%s8303 + $0x70] sm:$0xff]
        %v8319 = vld [vmem:[%s8303 + $0x78] sm:$0xff]
        %8320 = vmatprep.subr.mxu0 0.0
        %8321 = vmatpush1.msra.mxu0 %v8304
        %8322 = vmatprep.subr.mxu0 0.0
        %8323 = vmatpush1.msra.mxu0 %v8305
        %8324 = vmatprep.subr.mxu0 0.0
        %8325 = vmatpush1.msra.mxu0 %v8306
        %8326 = vmatprep.subr.mxu0 0.0
        %8327 = vmatpush1.msra.mxu0 %v8307
        %8328 = vmatprep.subr.mxu0 0.0
        %8329 = vmatpush1.msra.mxu0 %v8308
        %8330 = vmatprep.subr.mxu0 0.0
        %8331 = vmatpush1.msra.mxu0 %v8309
        %8332 = vmatprep.subr.mxu0 0.0
        %8333 = vmatpush1.msra.mxu0 %v8310
        %8334 = vmatprep.subr.mxu0 0.0
        %8335 = vmatpush1.msra.mxu0 %v8311
        %8336 = vmatprep.subr.mxu0 0.0
        %8337 = vmatpush1.msra.mxu0 %v8312
        %8338 = vmatprep.subr.mxu0 0.0
        %8339 = vmatpush1.msra.mxu0 %v8313
        %8340 = vmatprep.subr.mxu0 0.0
        %8341 = vmatpush1.msra.mxu0 %v8314
        %8342 = vmatprep.subr.mxu0 0.0
        %8343 = vmatpush1.msra.mxu0 %v8315
        %8344 = vmatprep.subr.mxu0 0.0
        %8345 = vmatpush1.msra.mxu0 %v8316
        %8346 = vmatprep.subr.mxu0 0.0
        %8347 = vmatpush1.msra.mxu0 %v8317
        %8348 = vmatprep.subr.mxu0 0.0
        %8349 = vmatpush1.msra.mxu0 %v8318
        %8350 = vmatprep.subr.mxu0 0.0
        %8351 = vmatpush1.msra.mxu0 %v8319
        %8352 = vmatprep.subr.mxu0 0.0
        %8353 = vmatpush1.msra.mxu0 0.0
        %8354 = vmatprep.subr.mxu0 0.0
        %8355 = vmatpush1.msra.mxu0 0.0
        %8356 = vmatprep.subr.mxu0 0.0
        %8357 = vmatpush1.msra.mxu0 0.0
        %8358 = vmatprep.subr.mxu0 0.0
        %8359 = vmatpush1.msra.mxu0 0.0
        %8360 = vmatprep.subr.mxu0 0.0
        %8361 = vmatpush1.msra.mxu0 0.0
        %8362 = vmatprep.subr.mxu0 0.0
        %8363 = vmatpush1.msra.mxu0 0.0
        %8364 = vmatprep.subr.mxu0 0.0
        %8365 = vmatpush1.msra.mxu0 0.0
        %8366 = vmatprep.subr.mxu0 0.0
        %8367 = vmatpush1.msra.mxu0 0.0
        %8368 = vmatprep.subr.mxu0 0.0
        %8369 = vmatpush1.msra.mxu0 0.0
        %8370 = vmatprep.subr.mxu0 0.0
        %8371 = vmatpush1.msra.mxu0 0.0
        %8372 = vmatprep.subr.mxu0 0.0
        %8373 = vmatpush1.msra.mxu0 0.0
        %8374 = vmatprep.subr.mxu0 0.0
        %8375 = vmatpush1.msra.mxu0 0.0
        %8376 = vmatprep.subr.mxu0 0.0
        %8377 = vmatpush1.msra.mxu0 0.0
        %8378 = vmatprep.subr.mxu0 0.0
        %8379 = vmatpush1.msra.mxu0 0.0
        %8380 = vmatprep.subr.mxu0 0.0
        %8381 = vmatpush1.msra.mxu0 0.0
        %8382 = vmatprep.subr.mxu0 0.0
        %8383 = vmatpush1.msra.mxu0 0.0
        %8384 = vmatprep.mubr.f32.mxu0 0.0
        %8385 = vmatmul.mubr.f32.gmra.mrb[0].mxu0 %v5542
        %v8386 = vpop.f32.mrb[0].mxu0
        %v8387 = vadd.f32 0.0, %v8386
        %v8388 = vpop.f32.mrb[0].mxu0
        %8389 = vdwg.mxu0
        %8390 = vmatprep.subr.mxu0 0.0
        %8391 = vmatpush1.msra.mxu0 %v8287
        %8392 = vmatprep.subr.mxu0 0.0
        %8393 = vmatpush1.msra.mxu0 %v8288
        %8394 = vmatprep.subr.mxu0 0.0
        %8395 = vmatpush1.msra.mxu0 %v8289
        %8396 = vmatprep.subr.mxu0 0.0
        %8397 = vmatpush1.msra.mxu0 %v8290
        %8398 = vmatprep.subr.mxu0 0.0
        %8399 = vmatpush1.msra.mxu0 %v8291
        %8400 = vmatprep.subr.mxu0 0.0
        %8401 = vmatpush1.msra.mxu0 %v8292
        %8402 = vmatprep.subr.mxu0 0.0
        %8403 = vmatpush1.msra.mxu0 %v8293
        %8404 = vmatprep.subr.mxu0 0.0
        %8405 = vmatpush1.msra.mxu0 %v8294
        %8406 = vmatprep.subr.mxu0 0.0
        %8407 = vmatpush1.msra.mxu0 %v8295
        %8408 = vmatprep.subr.mxu0 0.0
        %8409 = vmatpush1.msra.mxu0 %v8296
        %8410 = vmatprep.subr.mxu0 0.0
        %8411 = vmatpush1.msra.mxu0 %v8297
        %8412 = vmatprep.subr.mxu0 0.0
        %8413 = vmatpush1.msra.mxu0 %v8298
        %8414 = vmatprep.subr.mxu0 0.0
        %8415 = vmatpush1.msra.mxu0 %v8299
        %8416 = vmatprep.subr.mxu0 0.0
        %8417 = vmatpush1.msra.mxu0 %v8300
        %8418 = vmatprep.subr.mxu0 0.0
        %8419 = vmatpush1.msra.mxu0 %v8301
        %8420 = vmatprep.subr.mxu0 0.0
        %8421 = vmatpush1.msra.mxu0 %v8302
        %8422 = vmatprep.subr.mxu0 0.0
        %8423 = vmatpush1.msra.mxu0 0.0
        %8424 = vmatprep.subr.mxu0 0.0
        %8425 = vmatpush1.msra.mxu0 0.0
        %8426 = vmatprep.subr.mxu0 0.0
        %8427 = vmatpush1.msra.mxu0 0.0
        %8428 = vmatprep.subr.mxu0 0.0
        %8429 = vmatpush1.msra.mxu0 0.0
        %8430 = vmatprep.subr.mxu0 0.0
        %8431 = vmatpush1.msra.mxu0 0.0
        %8432 = vmatprep.subr.mxu0 0.0
        %8433 = vmatpush1.msra.mxu0 0.0
        %8434 = vmatprep.subr.mxu0 0.0
        %8435 = vmatpush1.msra.mxu0 0.0
        %8436 = vmatprep.subr.mxu0 0.0
        %8437 = vmatpush1.msra.mxu0 0.0
        %8438 = vmatprep.subr.mxu0 0.0
        %8439 = vmatpush1.msra.mxu0 0.0
        %8440 = vmatprep.subr.mxu0 0.0
        %8441 = vmatpush1.msra.mxu0 0.0
        %8442 = vmatprep.subr.mxu0 0.0
        %8443 = vmatpush1.msra.mxu0 0.0
        %8444 = vmatprep.subr.mxu0 0.0
        %8445 = vmatpush1.msra.mxu0 0.0
        %8446 = vmatprep.subr.mxu0 0.0
        %8447 = vmatpush1.msra.mxu0 0.0
        %8448 = vmatprep.subr.mxu0 0.0
        %8449 = vmatpush1.msra.mxu0 0.0
        %8450 = vmatprep.subr.mxu0 0.0
        %8451 = vmatpush1.msra.mxu0 0.0
        %8452 = vmatprep.subr.mxu0 0.0
        %8453 = vmatpush1.msra.mxu0 0.0
        %8454 = vmatprep.mubr.f32.mxu0 0.0
        %8455 = vmatmul.mubr.f32.gmra.mrb[0].mxu0 %v8283
        %v8456 = vpop.f32.mrb[0].mxu0
        %v8457 = vadd.f32 %v8387, %v8456
        %v8458 = vpop.f32.mrb[0].mxu0
        %8459 = vdwg.mxu0
        %s8460 = scalar_lea.vmem [#allocation7], 7680
        %v8461 = vld [vmem:[%s8460] sm:$0xff]
        %v8462 = vld [vmem:[%s8460 + $0x8] sm:$0xff]
        %v8463 = vld [vmem:[%s8460 + $0x10] sm:$0xff]
        %v8464 = vld [vmem:[%s8460 + $0x18] sm:$0xff]
        %v8465 = vld [vmem:[%s8460 + $0x20] sm:$0xff]
        %v8466 = vld [vmem:[%s8460 + $0x28] sm:$0xff]
        %v8467 = vld [vmem:[%s8460 + $0x30] sm:$0xff]
        %v8468 = vld [vmem:[%s8460 + $0x38] sm:$0xff]
        %v8469 = vld [vmem:[%s8460 + $0x40] sm:$0xff]
        %v8470 = vld [vmem:[%s8460 + $0x48] sm:$0xff]
        %v8471 = vld [vmem:[%s8460 + $0x50] sm:$0xff]
        %v8472 = vld [vmem:[%s8460 + $0x58] sm:$0xff]
        %v8473 = vld [vmem:[%s8460 + $0x60] sm:$0xff]
        %v8474 = vld [vmem:[%s8460 + $0x68] sm:$0xff]
        %v8475 = vld [vmem:[%s8460 + $0x70] sm:$0xff]
        %v8476 = vld [vmem:[%s8460 + $0x78] sm:$0xff]
        %8477 = vmatprep.subr.mxu0 0.0
        %8478 = vmatpush1.msra.mxu0 %v8461
        %8479 = vmatprep.subr.mxu0 0.0
        %8480 = vmatpush1.msra.mxu0 %v8462
        %8481 = vmatprep.subr.mxu0 0.0
        %8482 = vmatpush1.msra.mxu0 %v8463
        %8483 = vmatprep.subr.mxu0 0.0
        %8484 = vmatpush1.msra.mxu0 %v8464
        %8485 = vmatprep.subr.mxu0 0.0
        %8486 = vmatpush1.msra.mxu0 %v8465
        %8487 = vmatprep.subr.mxu0 0.0
        %8488 = vmatpush1.msra.mxu0 %v8466
        %8489 = vmatprep.subr.mxu0 0.0
        %8490 = vmatpush1.msra.mxu0 %v8467
        %8491 = vmatprep.subr.mxu0 0.0
        %8492 = vmatpush1.msra.mxu0 %v8468
        %8493 = vmatprep.subr.mxu0 0.0
        %8494 = vmatpush1.msra.mxu0 %v8469
        %8495 = vmatprep.subr.mxu0 0.0
        %8496 = vmatpush1.msra.mxu0 %v8470
        %8497 = vmatprep.subr.mxu0 0.0
        %8498 = vmatpush1.msra.mxu0 %v8471
        %8499 = vmatprep.subr.mxu0 0.0
        %8500 = vmatpush1.msra.mxu0 %v8472
        %8501 = vmatprep.subr.mxu0 0.0
        %8502 = vmatpush1.msra.mxu0 %v8473
        %8503 = vmatprep.subr.mxu0 0.0
        %8504 = vmatpush1.msra.mxu0 %v8474
        %8505 = vmatprep.subr.mxu0 0.0
        %8506 = vmatpush1.msra.mxu0 %v8475
        %8507 = vmatprep.subr.mxu0 0.0
        %8508 = vmatpush1.msra.mxu0 %v8476
        %8509 = vmatprep.subr.mxu0 0.0
        %8510 = vmatpush1.msra.mxu0 0.0
        %8511 = vmatprep.subr.mxu0 0.0
        %8512 = vmatpush1.msra.mxu0 0.0
        %8513 = vmatprep.subr.mxu0 0.0
        %8514 = vmatpush1.msra.mxu0 0.0
        %8515 = vmatprep.subr.mxu0 0.0
        %8516 = vmatpush1.msra.mxu0 0.0
        %8517 = vmatprep.subr.mxu0 0.0
        %8518 = vmatpush1.msra.mxu0 0.0
        %8519 = vmatprep.subr.mxu0 0.0
        %8520 = vmatpush1.msra.mxu0 0.0
        %8521 = vmatprep.subr.mxu0 0.0
        %8522 = vmatpush1.msra.mxu0 0.0
        %8523 = vmatprep.subr.mxu0 0.0
        %8524 = vmatpush1.msra.mxu0 0.0
        %8525 = vmatprep.subr.mxu0 0.0
        %8526 = vmatpush1.msra.mxu0 0.0
        %8527 = vmatprep.subr.mxu0 0.0
        %8528 = vmatpush1.msra.mxu0 0.0
        %8529 = vmatprep.subr.mxu0 0.0
        %8530 = vmatpush1.msra.mxu0 0.0
        %8531 = vmatprep.subr.mxu0 0.0
        %8532 = vmatpush1.msra.mxu0 0.0
        %8533 = vmatprep.subr.mxu0 0.0
        %8534 = vmatpush1.msra.mxu0 0.0
        %8535 = vmatprep.subr.mxu0 0.0
        %8536 = vmatpush1.msra.mxu0 0.0
        %8537 = vmatprep.subr.mxu0 0.0
        %8538 = vmatpush1.msra.mxu0 0.0
        %8539 = vmatprep.subr.mxu0 0.0
        %8540 = vmatpush1.msra.mxu0 0.0
        %8541 = vmatprep.mubr.f32.mxu0 0.0
        %8542 = vmatmul.mubr.f32.gmra.mrb[0].mxu0 %v2038
        %v8543 = vpop.f32.mrb[0].mxu0
        %v8544 = vadd.f32 0.0, %v8543
        %v8545 = vpop.f32.mrb[0].mxu0
        %8546 = vdwg.mxu0
        %v8547 = vadd.f32 %v8457, %v8544
        %s8548 = scalar_lea.vmem [#allocation7], 7808
        %v8549 = vld [vmem:[%s8548] sm:$0xff]
        %v8550 = vld [vmem:[%s8548 + $0x8] sm:$0xff]
        %v8551 = vld [vmem:[%s8548 + $0x10] sm:$0xff]
        %v8552 = vld [vmem:[%s8548 + $0x18] sm:$0xff]
        %v8553 = vld [vmem:[%s8548 + $0x20] sm:$0xff]
        %v8554 = vld [vmem:[%s8548 + $0x28] sm:$0xff]
        %v8555 = vld [vmem:[%s8548 + $0x30] sm:$0xff]
        %v8556 = vld [vmem:[%s8548 + $0x38] sm:$0xff]
        %v8557 = vld [vmem:[%s8548 + $0x40] sm:$0xff]
        %v8558 = vld [vmem:[%s8548 + $0x48] sm:$0xff]
        %v8559 = vld [vmem:[%s8548 + $0x50] sm:$0xff]
        %v8560 = vld [vmem:[%s8548 + $0x58] sm:$0xff]
        %v8561 = vld [vmem:[%s8548 + $0x60] sm:$0xff]
        %v8562 = vld [vmem:[%s8548 + $0x68] sm:$0xff]
        %v8563 = vld [vmem:[%s8548 + $0x70] sm:$0xff]
        %v8564 = vld [vmem:[%s8548 + $0x78] sm:$0xff]
        %8565 = vmatprep.subr.mxu0 0.0
        %8566 = vmatpush1.msra.mxu0 %v8549
        %8567 = vmatprep.subr.mxu0 0.0
        %8568 = vmatpush1.msra.mxu0 %v8550
        %8569 = vmatprep.subr.mxu0 0.0
        %8570 = vmatpush1.msra.mxu0 %v8551
        %8571 = vmatprep.subr.mxu0 0.0
        %8572 = vmatpush1.msra.mxu0 %v8552
        %8573 = vmatprep.subr.mxu0 0.0
        %8574 = vmatpush1.msra.mxu0 %v8553
        %8575 = vmatprep.subr.mxu0 0.0
        %8576 = vmatpush1.msra.mxu0 %v8554
        %8577 = vmatprep.subr.mxu0 0.0
        %8578 = vmatpush1.msra.mxu0 %v8555
        %8579 = vmatprep.subr.mxu0 0.0
        %8580 = vmatpush1.msra.mxu0 %v8556
        %8581 = vmatprep.subr.mxu0 0.0
        %8582 = vmatpush1.msra.mxu0 %v8557
        %8583 = vmatprep.subr.mxu0 0.0
        %8584 = vmatpush1.msra.mxu0 %v8558
        %8585 = vmatprep.subr.mxu0 0.0
        %8586 = vmatpush1.msra.mxu0 %v8559
        %8587 = vmatprep.subr.mxu0 0.0
        %8588 = vmatpush1.msra.mxu0 %v8560
        %8589 = vmatprep.subr.mxu0 0.0
        %8590 = vmatpush1.msra.mxu0 %v8561
        %8591 = vmatprep.subr.mxu0 0.0
        %8592 = vmatpush1.msra.mxu0 %v8562
        %8593 = vmatprep.subr.mxu0 0.0
        %8594 = vmatpush1.msra.mxu0 %v8563
        %8595 = vmatprep.subr.mxu0 0.0
        %8596 = vmatpush1.msra.mxu0 %v8564
        %8597 = vmatprep.subr.mxu0 0.0
        %8598 = vmatpush1.msra.mxu0 0.0
        %8599 = vmatprep.subr.mxu0 0.0
        %8600 = vmatpush1.msra.mxu0 0.0
        %8601 = vmatprep.subr.mxu0 0.0
        %8602 = vmatpush1.msra.mxu0 0.0
        %8603 = vmatprep.subr.mxu0 0.0
        %8604 = vmatpush1.msra.mxu0 0.0
        %8605 = vmatprep.subr.mxu0 0.0
        %8606 = vmatpush1.msra.mxu0 0.0
        %8607 = vmatprep.subr.mxu0 0.0
        %8608 = vmatpush1.msra.mxu0 0.0
        %8609 = vmatprep.subr.mxu0 0.0
        %8610 = vmatpush1.msra.mxu0 0.0
        %8611 = vmatprep.subr.mxu0 0.0
        %8612 = vmatpush1.msra.mxu0 0.0
        %8613 = vmatprep.subr.mxu0 0.0
        %8614 = vmatpush1.msra.mxu0 0.0
        %8615 = vmatprep.subr.mxu0 0.0
        %8616 = vmatpush1.msra.mxu0 0.0
        %8617 = vmatprep.subr.mxu0 0.0
        %8618 = vmatpush1.msra.mxu0 0.0
        %8619 = vmatprep.subr.mxu0 0.0
        %8620 = vmatpush1.msra.mxu0 0.0
        %8621 = vmatprep.subr.mxu0 0.0
        %8622 = vmatpush1.msra.mxu0 0.0
        %8623 = vmatprep.subr.mxu0 0.0
        %8624 = vmatpush1.msra.mxu0 0.0
        %8625 = vmatprep.subr.mxu0 0.0
        %8626 = vmatpush1.msra.mxu0 0.0
        %8627 = vmatprep.subr.mxu0 0.0
        %8628 = vmatpush1.msra.mxu0 0.0
        %8629 = vmatprep.mubr.f32.mxu0 0.0
        %8630 = vmatmul.mubr.f32.gmra.mrb[0].mxu0 %v5962
        %v8631 = vpop.f32.mrb[0].mxu0
        %v8632 = vadd.f32 0.0, %v8631
        %v8633 = vpop.f32.mrb[0].mxu0
        %8634 = vdwg.mxu0
        %v8635 = vadd.f32 %v8547, %v8632
        %s8636 = scalar_lea.vmem [#allocation6], 64
        %v8637 = vld [vmem:[%s8636] sm:$0xff]
        %v8639 = vsel %vm583, %v8637, 0
        %8641 = vmatprep.subr.mxu0 0.0
        %8642 = vmatpush1.msra.mxu0 %v2038
        %8643 = vmatprep.subr.mxu0 0.0
        %8644 = vmatpush1.msra.mxu0 0.0
        %8645 = vmatprep.subr.mxu0 0.0
        %8646 = vmatpush1.msra.mxu0 0.0
        %8647 = vmatprep.subr.mxu0 0.0
        %8648 = vmatpush1.msra.mxu0 0.0
        %8649 = vmatprep.subr.mxu0 0.0
        %8650 = vmatpush1.msra.mxu0 0.0
        %8651 = vmatprep.subr.mxu0 0.0
        %8652 = vmatpush1.msra.mxu0 0.0
        %8653 = vmatprep.subr.mxu0 0.0
        %8654 = vmatpush1.msra.mxu0 0.0
        %8655 = vmatprep.subr.mxu0 0.0
        %8656 = vmatpush1.msra.mxu0 0.0
        %8657 = vmatprep.subr.mxu0 0.0
        %8658 = vmatpush1.msra.mxu0 0.0
        %8659 = vmatprep.subr.mxu0 0.0
        %8660 = vmatpush1.msra.mxu0 0.0
        %8661 = vmatprep.subr.mxu0 0.0
        %8662 = vmatpush1.msra.mxu0 0.0
        %8663 = vmatprep.subr.mxu0 0.0
        %8664 = vmatpush1.msra.mxu0 0.0
        %8665 = vmatprep.subr.mxu0 0.0
        %8666 = vmatpush1.msra.mxu0 0.0
        %8667 = vmatprep.subr.mxu0 0.0
        %8668 = vmatpush1.msra.mxu0 0.0
        %8669 = vmatprep.subr.mxu0 0.0
        %8670 = vmatpush1.msra.mxu0 0.0
        %8671 = vmatprep.subr.mxu0 0.0
        %8672 = vmatpush1.msra.mxu0 0.0
        %8673 = vmatprep.subr.mxu0 0.0
        %8674 = vmatpush1.msra.mxu0 0.0
        %8675 = vmatprep.subr.mxu0 0.0
        %8676 = vmatpush1.msra.mxu0 0.0
        %8677 = vmatprep.subr.mxu0 0.0
        %8678 = vmatpush1.msra.mxu0 0.0
        %8679 = vmatprep.subr.mxu0 0.0
        %8680 = vmatpush1.msra.mxu0 0.0
        %8681 = vmatprep.subr.mxu0 0.0
        %8682 = vmatpush1.msra.mxu0 0.0
        %8683 = vmatprep.subr.mxu0 0.0
        %8684 = vmatpush1.msra.mxu0 0.0
        %8685 = vmatprep.subr.mxu0 0.0
        %8686 = vmatpush1.msra.mxu0 0.0
        %8687 = vmatprep.subr.mxu0 0.0
        %8688 = vmatpush1.msra.mxu0 0.0
        %8689 = vmatprep.subr.mxu0 0.0
        %8690 = vmatpush1.msra.mxu0 0.0
        %8691 = vmatprep.subr.mxu0 0.0
        %8692 = vmatpush1.msra.mxu0 0.0
        %8693 = vmatprep.subr.mxu0 0.0
        %8694 = vmatpush1.msra.mxu0 0.0
        %8695 = vmatprep.subr.mxu0 0.0
        %8696 = vmatpush1.msra.mxu0 0.0
        %8697 = vmatprep.subr.mxu0 0.0
        %8698 = vmatpush1.msra.mxu0 0.0
        %8699 = vmatprep.subr.mxu0 0.0
        %8700 = vmatpush1.msra.mxu0 0.0
        %8701 = vmatprep.subr.mxu0 0.0
        %8702 = vmatpush1.msra.mxu0 0.0
        %8703 = vmatprep.subr.mxu0 0.0
        %8704 = vmatpush1.msra.mxu0 0.0
        %8705 = vmatprep.mubr.f32.mxu0 0.0
        %8706 = vmatmul.mubr.f32.gmra.mrb[0].mxu0 %v8639
        %v8707 = vpop.f32.mrb[0].mxu0
        %v8708 = vadd.f32 0.0, %v8707
        %v8709 = vpop.f32.mrb[0].mxu0
        %8710 = vdwg.mxu0
        %s8711 = scalar_lea.vmem [#allocation7], 7936
        %v8712 = vld [vmem:[%s8711] sm:$0xff]
        %v8713 = vld [vmem:[%s8711 + $0x8] sm:$0xff]
        %v8714 = vld [vmem:[%s8711 + $0x10] sm:$0xff]
        %v8715 = vld [vmem:[%s8711 + $0x18] sm:$0xff]
        %v8716 = vld [vmem:[%s8711 + $0x20] sm:$0xff]
        %v8717 = vld [vmem:[%s8711 + $0x28] sm:$0xff]
        %v8718 = vld [vmem:[%s8711 + $0x30] sm:$0xff]
        %v8719 = vld [vmem:[%s8711 + $0x38] sm:$0xff]
        %v8720 = vld [vmem:[%s8711 + $0x40] sm:$0xff]
        %v8721 = vld [vmem:[%s8711 + $0x48] sm:$0xff]
        %v8722 = vld [vmem:[%s8711 + $0x50] sm:$0xff]
        %v8723 = vld [vmem:[%s8711 + $0x58] sm:$0xff]
        %v8724 = vld [vmem:[%s8711 + $0x60] sm:$0xff]
        %v8725 = vld [vmem:[%s8711 + $0x68] sm:$0xff]
        %v8726 = vld [vmem:[%s8711 + $0x70] sm:$0xff]
        %v8727 = vld [vmem:[%s8711 + $0x78] sm:$0xff]
        %8728 = vmatprep.subr.mxu0 0.0
        %8729 = vmatpush1.msra.mxu0 %v8712
        %8730 = vmatprep.subr.mxu0 0.0
        %8731 = vmatpush1.msra.mxu0 %v8713
        %8732 = vmatprep.subr.mxu0 0.0
        %8733 = vmatpush1.msra.mxu0 %v8714
        %8734 = vmatprep.subr.mxu0 0.0
        %8735 = vmatpush1.msra.mxu0 %v8715
        %8736 = vmatprep.subr.mxu0 0.0
        %8737 = vmatpush1.msra.mxu0 %v8716
        %8738 = vmatprep.subr.mxu0 0.0
        %8739 = vmatpush1.msra.mxu0 %v8717
        %8740 = vmatprep.subr.mxu0 0.0
        %8741 = vmatpush1.msra.mxu0 %v8718
        %8742 = vmatprep.subr.mxu0 0.0
        %8743 = vmatpush1.msra.mxu0 %v8719
        %8744 = vmatprep.subr.mxu0 0.0
        %8745 = vmatpush1.msra.mxu0 %v8720
        %8746 = vmatprep.subr.mxu0 0.0
        %8747 = vmatpush1.msra.mxu0 %v8721
        %8748 = vmatprep.subr.mxu0 0.0
        %8749 = vmatpush1.msra.mxu0 %v8722
        %8750 = vmatprep.subr.mxu0 0.0
        %8751 = vmatpush1.msra.mxu0 %v8723
        %8752 = vmatprep.subr.mxu0 0.0
        %8753 = vmatpush1.msra.mxu0 %v8724
        %8754 = vmatprep.subr.mxu0 0.0
        %8755 = vmatpush1.msra.mxu0 %v8725
        %8756 = vmatprep.subr.mxu0 0.0
        %8757 = vmatpush1.msra.mxu0 %v8726
        %8758 = vmatprep.subr.mxu0 0.0
        %8759 = vmatpush1.msra.mxu0 %v8727
        %8760 = vmatprep.subr.mxu0 0.0
        %8761 = vmatpush1.msra.mxu0 0.0
        %8762 = vmatprep.subr.mxu0 0.0
        %8763 = vmatpush1.msra.mxu0 0.0
        %8764 = vmatprep.subr.mxu0 0.0
        %8765 = vmatpush1.msra.mxu0 0.0
        %8766 = vmatprep.subr.mxu0 0.0
        %8767 = vmatpush1.msra.mxu0 0.0
        %8768 = vmatprep.subr.mxu0 0.0
        %8769 = vmatpush1.msra.mxu0 0.0
        %8770 = vmatprep.subr.mxu0 0.0
        %8771 = vmatpush1.msra.mxu0 0.0
        %8772 = vmatprep.subr.mxu0 0.0
        %8773 = vmatpush1.msra.mxu0 0.0
        %8774 = vmatprep.subr.mxu0 0.0
        %8775 = vmatpush1.msra.mxu0 0.0
        %8776 = vmatprep.subr.mxu0 0.0
        %8777 = vmatpush1.msra.mxu0 0.0
        %8778 = vmatprep.subr.mxu0 0.0
        %8779 = vmatpush1.msra.mxu0 0.0
        %8780 = vmatprep.subr.mxu0 0.0
        %8781 = vmatpush1.msra.mxu0 0.0
        %8782 = vmatprep.subr.mxu0 0.0
        %8783 = vmatpush1.msra.mxu0 0.0
        %8784 = vmatprep.subr.mxu0 0.0
        %8785 = vmatpush1.msra.mxu0 0.0
        %8786 = vmatprep.subr.mxu0 0.0
        %8787 = vmatpush1.msra.mxu0 0.0
        %8788 = vmatprep.subr.mxu0 0.0
        %8789 = vmatpush1.msra.mxu0 0.0
        %8790 = vmatprep.subr.mxu0 0.0
        %8791 = vmatpush1.msra.mxu0 0.0
        %8792 = vmatprep.mubr.f32.mxu0 0.0
        %8793 = vmatmul.mubr.f32.gmra.mrb[0].mxu0 %v8708
        %v8794 = vpop.f32.mrb[0].mxu0
        %v8795 = vadd.f32 0.0, %v8794
        %v8796 = vpop.f32.mrb[0].mxu0
        %8797 = vdwg.mxu0
        %v8798 = vadd.f32 %v8635, %v8795
        %v8799 = vadd.f32 %v488, %v8798
        %8800 = vmatprep.subr.mxu0 0.0
        %8801 = vmatpush1.msra.mxu0 %v2844
        %8802 = vmatprep.subr.mxu0 0.0
        %8803 = vmatpush1.msra.mxu0 0.0
        %8804 = vmatprep.subr.mxu0 0.0
        %8805 = vmatpush1.msra.mxu0 0.0
        %8806 = vmatprep.subr.mxu0 0.0
        %8807 = vmatpush1.msra.mxu0 0.0
        %8808 = vmatprep.subr.mxu0 0.0
        %8809 = vmatpush1.msra.mxu0 0.0
        %8810 = vmatprep.subr.mxu0 0.0
        %8811 = vmatpush1.msra.mxu0 0.0
        %8812 = vmatprep.subr.mxu0 0.0
        %8813 = vmatpush1.msra.mxu0 0.0
        %8814 = vmatprep.subr.mxu0 0.0
        %8815 = vmatpush1.msra.mxu0 0.0
        %8816 = vmatprep.subr.mxu0 0.0
        %8817 = vmatpush1.msra.mxu0 0.0
        %8818 = vmatprep.subr.mxu0 0.0
        %8819 = vmatpush1.msra.mxu0 0.0
        %8820 = vmatprep.subr.mxu0 0.0
        %8821 = vmatpush1.msra.mxu0 0.0
        %8822 = vmatprep.subr.mxu0 0.0
        %8823 = vmatpush1.msra.mxu0 0.0
        %8824 = vmatprep.subr.mxu0 0.0
        %8825 = vmatpush1.msra.mxu0 0.0
        %8826 = vmatprep.subr.mxu0 0.0
        %8827 = vmatpush1.msra.mxu0 0.0
        %8828 = vmatprep.subr.mxu0 0.0
        %8829 = vmatpush1.msra.mxu0 0.0
        %8830 = vmatprep.subr.mxu0 0.0
        %8831 = vmatpush1.msra.mxu0 0.0
        %8832 = vmatprep.subr.mxu0 0.0
        %8833 = vmatpush1.msra.mxu0 0.0
        %8834 = vmatprep.subr.mxu0 0.0
        %8835 = vmatpush1.msra.mxu0 0.0
        %8836 = vmatprep.subr.mxu0 0.0
        %8837 = vmatpush1.msra.mxu0 0.0
        %8838 = vmatprep.subr.mxu0 0.0
        %8839 = vmatpush1.msra.mxu0 0.0
        %8840 = vmatprep.subr.mxu0 0.0
        %8841 = vmatpush1.msra.mxu0 0.0
        %8842 = vmatprep.subr.mxu0 0.0
        %8843 = vmatpush1.msra.mxu0 0.0
        %8844 = vmatprep.subr.mxu0 0.0
        %8845 = vmatpush1.msra.mxu0 0.0
        %8846 = vmatprep.subr.mxu0 0.0
        %8847 = vmatpush1.msra.mxu0 0.0
        %8848 = vmatprep.subr.mxu0 0.0
        %8849 = vmatpush1.msra.mxu0 0.0
        %8850 = vmatprep.subr.mxu0 0.0
        %8851 = vmatpush1.msra.mxu0 0.0
        %8852 = vmatprep.subr.mxu0 0.0
        %8853 = vmatpush1.msra.mxu0 0.0
        %8854 = vmatprep.subr.mxu0 0.0
        %8855 = vmatpush1.msra.mxu0 0.0
        %8856 = vmatprep.subr.mxu0 0.0
        %8857 = vmatpush1.msra.mxu0 0.0
        %8858 = vmatprep.subr.mxu0 0.0
        %8859 = vmatpush1.msra.mxu0 0.0
        %8860 = vmatprep.subr.mxu0 0.0
        %8861 = vmatpush1.msra.mxu0 0.0
        %8862 = vmatprep.subr.mxu0 0.0
        %8863 = vmatpush1.msra.mxu0 0.0
        %8864 = vmatprep.mubr.f32.mxu0 0.0
        %8865 = vmatmul.mubr.f32.gmra.mrb[0].mxu0 %v996
        %v8866 = vpop.f32.mrb[0].mxu0
        %v8867 = vadd.f32 0.0, %v8866
        %v8868 = vpop.f32.mrb[0].mxu0
        %8869 = vdwg.mxu0
        %v8870 = vadd.f32 %v2844, %v8867
        %8871 = vmatprep.subr.mxu0 0.0
        %8872 = vmatpush1.msra.mxu0 %v2844
        %8873 = vmatprep.subr.mxu0 0.0
        %8874 = vmatpush1.msra.mxu0 0.0
        %8875 = vmatprep.subr.mxu0 0.0
        %8876 = vmatpush1.msra.mxu0 0.0
        %8877 = vmatprep.subr.mxu0 0.0
        %8878 = vmatpush1.msra.mxu0 0.0
        %8879 = vmatprep.subr.mxu0 0.0
        %8880 = vmatpush1.msra.mxu0 0.0
        %8881 = vmatprep.subr.mxu0 0.0
        %8882 = vmatpush1.msra.mxu0 0.0
        %8883 = vmatprep.subr.mxu0 0.0
        %8884 = vmatpush1.msra.mxu0 0.0
        %8885 = vmatprep.subr.mxu0 0.0
        %8886 = vmatpush1.msra.mxu0 0.0
        %8887 = vmatprep.subr.mxu0 0.0
        %8888 = vmatpush1.msra.mxu0 0.0
        %8889 = vmatprep.subr.mxu0 0.0
        %8890 = vmatpush1.msra.mxu0 0.0
        %8891 = vmatprep.subr.mxu0 0.0
        %8892 = vmatpush1.msra.mxu0 0.0
        %8893 = vmatprep.subr.mxu0 0.0
        %8894 = vmatpush1.msra.mxu0 0.0
        %8895 = vmatprep.subr.mxu0 0.0
        %8896 = vmatpush1.msra.mxu0 0.0
        %8897 = vmatprep.subr.mxu0 0.0
        %8898 = vmatpush1.msra.mxu0 0.0
        %8899 = vmatprep.subr.mxu0 0.0
        %8900 = vmatpush1.msra.mxu0 0.0
        %8901 = vmatprep.subr.mxu0 0.0
        %8902 = vmatpush1.msra.mxu0 0.0
        %8903 = vmatprep.subr.mxu0 0.0
        %8904 = vmatpush1.msra.mxu0 0.0
        %8905 = vmatprep.subr.mxu0 0.0
        %8906 = vmatpush1.msra.mxu0 0.0
        %8907 = vmatprep.subr.mxu0 0.0
        %8908 = vmatpush1.msra.mxu0 0.0
        %8909 = vmatprep.subr.mxu0 0.0
        %8910 = vmatpush1.msra.mxu0 0.0
        %8911 = vmatprep.subr.mxu0 0.0
        %8912 = vmatpush1.msra.mxu0 0.0
        %8913 = vmatprep.subr.mxu0 0.0
        %8914 = vmatpush1.msra.mxu0 0.0
        %8915 = vmatprep.subr.mxu0 0.0
        %8916 = vmatpush1.msra.mxu0 0.0
        %8917 = vmatprep.subr.mxu0 0.0
        %8918 = vmatpush1.msra.mxu0 0.0
        %8919 = vmatprep.subr.mxu0 0.0
        %8920 = vmatpush1.msra.mxu0 0.0
        %8921 = vmatprep.subr.mxu0 0.0
        %8922 = vmatpush1.msra.mxu0 0.0
        %8923 = vmatprep.subr.mxu0 0.0
        %8924 = vmatpush1.msra.mxu0 0.0
        %8925 = vmatprep.subr.mxu0 0.0
        %8926 = vmatpush1.msra.mxu0 0.0
        %8927 = vmatprep.subr.mxu0 0.0
        %8928 = vmatpush1.msra.mxu0 0.0
        %8929 = vmatprep.subr.mxu0 0.0
        %8930 = vmatpush1.msra.mxu0 0.0
        %8931 = vmatprep.subr.mxu0 0.0
        %8932 = vmatpush1.msra.mxu0 0.0
        %8933 = vmatprep.subr.mxu0 0.0
        %8934 = vmatpush1.msra.mxu0 0.0
        %8935 = vmatprep.mubr.f32.mxu0 0.0
        %8936 = vmatmul.mubr.f32.gmra.mrb[0].mxu0 %v676
        %v8937 = vpop.f32.mrb[0].mxu0
        %v8938 = vadd.f32 0.0, %v8937
        %v8939 = vpop.f32.mrb[0].mxu0
        %8940 = vdwg.mxu0
        %v8941 = vadd.f32 %v8870, %v8938
        %s8942 = scalar_lea.vmem [#allocation7], 8064
        %v8943 = vld [vmem:[%s8942] sm:$0xff]
        %v8944 = vld [vmem:[%s8942 + $0x8] sm:$0xff]
        %v8945 = vld [vmem:[%s8942 + $0x10] sm:$0xff]
        %v8946 = vld [vmem:[%s8942 + $0x18] sm:$0xff]
        %v8947 = vld [vmem:[%s8942 + $0x20] sm:$0xff]
        %v8948 = vld [vmem:[%s8942 + $0x28] sm:$0xff]
        %v8949 = vld [vmem:[%s8942 + $0x30] sm:$0xff]
        %v8950 = vld [vmem:[%s8942 + $0x38] sm:$0xff]
        %v8951 = vld [vmem:[%s8942 + $0x40] sm:$0xff]
        %v8952 = vld [vmem:[%s8942 + $0x48] sm:$0xff]
        %v8953 = vld [vmem:[%s8942 + $0x50] sm:$0xff]
        %v8954 = vld [vmem:[%s8942 + $0x58] sm:$0xff]
        %v8955 = vld [vmem:[%s8942 + $0x60] sm:$0xff]
        %v8956 = vld [vmem:[%s8942 + $0x68] sm:$0xff]
        %v8957 = vld [vmem:[%s8942 + $0x70] sm:$0xff]
        %v8958 = vld [vmem:[%s8942 + $0x78] sm:$0xff]
        %8959 = vmatprep.subr.mxu0 0.0
        %8960 = vmatpush1.msra.mxu0 %v8943
        %8961 = vmatprep.subr.mxu0 0.0
        %8962 = vmatpush1.msra.mxu0 %v8944
        %8963 = vmatprep.subr.mxu0 0.0
        %8964 = vmatpush1.msra.mxu0 %v8945
        %8965 = vmatprep.subr.mxu0 0.0
        %8966 = vmatpush1.msra.mxu0 %v8946
        %8967 = vmatprep.subr.mxu0 0.0
        %8968 = vmatpush1.msra.mxu0 %v8947
        %8969 = vmatprep.subr.mxu0 0.0
        %8970 = vmatpush1.msra.mxu0 %v8948
        %8971 = vmatprep.subr.mxu0 0.0
        %8972 = vmatpush1.msra.mxu0 %v8949
        %8973 = vmatprep.subr.mxu0 0.0
        %8974 = vmatpush1.msra.mxu0 %v8950
        %8975 = vmatprep.subr.mxu0 0.0
        %8976 = vmatpush1.msra.mxu0 %v8951
        %8977 = vmatprep.subr.mxu0 0.0
        %8978 = vmatpush1.msra.mxu0 %v8952
        %8979 = vmatprep.subr.mxu0 0.0
        %8980 = vmatpush1.msra.mxu0 %v8953
        %8981 = vmatprep.subr.mxu0 0.0
        %8982 = vmatpush1.msra.mxu0 %v8954
        %8983 = vmatprep.subr.mxu0 0.0
        %8984 = vmatpush1.msra.mxu0 %v8955
        %8985 = vmatprep.subr.mxu0 0.0
        %8986 = vmatpush1.msra.mxu0 %v8956
        %8987 = vmatprep.subr.mxu0 0.0
        %8988 = vmatpush1.msra.mxu0 %v8957
        %8989 = vmatprep.subr.mxu0 0.0
        %8990 = vmatpush1.msra.mxu0 %v8958
        %8991 = vmatprep.subr.mxu0 0.0
        %8992 = vmatpush1.msra.mxu0 0.0
        %8993 = vmatprep.subr.mxu0 0.0
        %8994 = vmatpush1.msra.mxu0 0.0
        %8995 = vmatprep.subr.mxu0 0.0
        %8996 = vmatpush1.msra.mxu0 0.0
        %8997 = vmatprep.subr.mxu0 0.0
        %8998 = vmatpush1.msra.mxu0 0.0
        %8999 = vmatprep.subr.mxu0 0.0
        %9000 = vmatpush1.msra.mxu0 0.0
        %9001 = vmatprep.subr.mxu0 0.0
        %9002 = vmatpush1.msra.mxu0 0.0
        %9003 = vmatprep.subr.mxu0 0.0
        %9004 = vmatpush1.msra.mxu0 0.0
        %9005 = vmatprep.subr.mxu0 0.0
        %9006 = vmatpush1.msra.mxu0 0.0
        %9007 = vmatprep.subr.mxu0 0.0
        %9008 = vmatpush1.msra.mxu0 0.0
        %9009 = vmatprep.subr.mxu0 0.0
        %9010 = vmatpush1.msra.mxu0 0.0
        %9011 = vmatprep.subr.mxu0 0.0
        %9012 = vmatpush1.msra.mxu0 0.0
        %9013 = vmatprep.subr.mxu0 0.0
        %9014 = vmatpush1.msra.mxu0 0.0
        %9015 = vmatprep.subr.mxu0 0.0
        %9016 = vmatpush1.msra.mxu0 0.0
        %9017 = vmatprep.subr.mxu0 0.0
        %9018 = vmatpush1.msra.mxu0 0.0
        %9019 = vmatprep.subr.mxu0 0.0
        %9020 = vmatpush1.msra.mxu0 0.0
        %9021 = vmatprep.subr.mxu0 0.0
        %9022 = vmatpush1.msra.mxu0 0.0
        %9023 = vmatprep.mubr.f32.mxu0 0.0
        %9024 = vmatmul.mubr.f32.gmra.mrb[0].mxu0 %v8941
        %v9025 = vpop.f32.mrb[0].mxu0
        %v9026 = vadd.f32 0.0, %v9025
        %v9027 = vpop.f32.mrb[0].mxu0
        %9028 = vdwg.mxu0
        %v9029 = vld [vmem:[#allocation9] sm:$0xff]
        %v9030 = vmul.f32 %v9026, %v9029
        %v9031 = vadd.f32 %v8799, %v9030
        %v9032 = vadd.f32 %v9031, %v4317
        %v9033 = vadd.f32 %v9032, %v8211
        %v9034 = vld [vmem:[#allocation10] sm:$0xff]
        %v9035 = vld [vmem:[#allocation10 + $0x8] sm:$0xff]
        %v9036 = vld [vmem:[#allocation10 + $0x10] sm:$0xff]
        %v9037 = vld [vmem:[#allocation10 + $0x18] sm:$0xff]
        %v9038 = vld [vmem:[#allocation10 + $0x20] sm:$0xff]
        %v9039 = vld [vmem:[#allocation10 + $0x28] sm:$0xff]
        %v9040 = vld [vmem:[#allocation10 + $0x30] sm:$0xff]
        %v9041 = vld [vmem:[#allocation10 + $0x38] sm:$0xff]
        %v9042 = vld [vmem:[#allocation10 + $0x40] sm:$0xff]
        %v9043 = vld [vmem:[#allocation10 + $0x48] sm:$0xff]
        %v9044 = vld [vmem:[#allocation10 + $0x50] sm:$0xff]
        %v9045 = vld [vmem:[#allocation10 + $0x58] sm:$0xff]
        %v9046 = vld [vmem:[#allocation10 + $0x60] sm:$0xff]
        %v9047 = vld [vmem:[#allocation10 + $0x68] sm:$0xff]
        %v9048 = vld [vmem:[#allocation10 + $0x70] sm:$0xff]
        %v9049 = vld [vmem:[#allocation10 + $0x78] sm:$0xff]
        %v9050 = vld [vmem:[#allocation10 + $0x80] sm:$0xff]
        %v9051 = vld [vmem:[#allocation10 + $0x88] sm:$0xff]
        %v9052 = vld [vmem:[#allocation10 + $0x90] sm:$0xff]
        %v9053 = vld [vmem:[#allocation10 + $0x98] sm:$0xff]
        %v9054 = vld [vmem:[#allocation10 + $0xa0] sm:$0xff]
        %v9055 = vld [vmem:[#allocation10 + $0xa8] sm:$0xff]
        %v9056 = vld [vmem:[#allocation10 + $0xb0] sm:$0xff]
        %v9057 = vld [vmem:[#allocation10 + $0xb8] sm:$0xff]
        %v9058 = vld [vmem:[#allocation10 + $0xc0] sm:$0xff]
        %v9059 = vld [vmem:[#allocation10 + $0xc8] sm:$0xff]
        %v9060 = vld [vmem:[#allocation10 + $0xd0] sm:$0xff]
        %v9061 = vld [vmem:[#allocation10 + $0xd8] sm:$0xff]
        %v9062 = vld [vmem:[#allocation10 + $0xe0] sm:$0xff]
        %v9063 = vld [vmem:[#allocation10 + $0xe8] sm:$0xff]
        %v9064 = vld [vmem:[#allocation10 + $0xf0] sm:$0xff]
        %v9065 = vld [vmem:[#allocation10 + $0xf8] sm:$0xff]
        %v9066 = vld [vmem:[#allocation10 + $0x100] sm:$0xff]
        %v9067 = vld [vmem:[#allocation10 + $0x108] sm:$0xff]
        %v9068 = vld [vmem:[#allocation10 + $0x110] sm:$0xff]
        %v9069 = vld [vmem:[#allocation10 + $0x118] sm:$0xff]
        %v9070 = vld [vmem:[#allocation10 + $0x120] sm:$0xff]
        %v9071 = vld [vmem:[#allocation10 + $0x128] sm:$0xff]
        %v9072 = vld [vmem:[#allocation10 + $0x130] sm:$0xff]
        %v9073 = vld [vmem:[#allocation10 + $0x138] sm:$0xff]
        %v9074 = vld [vmem:[#allocation10 + $0x140] sm:$0xff]
        %v9075 = vld [vmem:[#allocation10 + $0x148] sm:$0xff]
        %v9076 = vld [vmem:[#allocation10 + $0x150] sm:$0xff]
        %v9077 = vld [vmem:[#allocation10 + $0x158] sm:$0xff]
        %v9078 = vld [vmem:[#allocation10 + $0x160] sm:$0xff]
        %v9079 = vld [vmem:[#allocation10 + $0x168] sm:$0xff]
        %v9080 = vld [vmem:[#allocation10 + $0x170] sm:$0xff]
        %v9081 = vld [vmem:[#allocation10 + $0x178] sm:$0xff]
        %v9082 = vld [vmem:[#allocation10 + $0x180] sm:$0xff]
        %v9083 = vld [vmem:[#allocation10 + $0x188] sm:$0xff]
        %v9084 = vld [vmem:[#allocation10 + $0x190] sm:$0xff]
        %v9085 = vld [vmem:[#allocation10 + $0x198] sm:$0xff]
        %v9086 = vld [vmem:[#allocation10 + $0x1a0] sm:$0xff]
        %v9087 = vld [vmem:[#allocation10 + $0x1a8] sm:$0xff]
        %v9088 = vld [vmem:[#allocation10 + $0x1b0] sm:$0xff]
        %v9089 = vld [vmem:[#allocation10 + $0x1b8] sm:$0xff]
        %v9090 = vld [vmem:[#allocation10 + $0x1c0] sm:$0xff]
        %v9091 = vld [vmem:[#allocation10 + $0x1c8] sm:$0xff]
        %v9092 = vld [vmem:[#allocation10 + $0x1d0] sm:$0xff]
        %v9093 = vld [vmem:[#allocation10 + $0x1d8] sm:$0xff]
        %v9094 = vld [vmem:[#allocation10 + $0x1e0] sm:$0xff]
        %v9095 = vld [vmem:[#allocation10 + $0x1e8] sm:$0xff]
        %v9096 = vld [vmem:[#allocation10 + $0x1f0] sm:$0xff]
        %v9097 = vld [vmem:[#allocation10 + $0x1f8] sm:$0xff]
        %v9098 = vld [vmem:[#allocation4 + $0x2] sm:$0x1]
        %v9099 = vlaneseq
        %v9100 = vshrl.u32 %v9099, 7
        %v9101 = vsub.s32 0, %v9100
        %v9102 = vrot.slane %v9098, %v9101
        %9103 = vmatprep.subr.mxu0 0.0
        %9104 = vmatpush1.msra.mxu0 %v9034
        %9105 = vmatprep.subr.mxu0 0.0
        %9106 = vmatpush1.msra.mxu0 %v9035
        %9107 = vmatprep.subr.mxu0 0.0
        %9108 = vmatpush1.msra.mxu0 %v9036
        %9109 = vmatprep.subr.mxu0 0.0
        %9110 = vmatpush1.msra.mxu0 %v9037
        %9111 = vmatprep.subr.mxu0 0.0
        %9112 = vmatpush1.msra.mxu0 %v9038
        %9113 = vmatprep.subr.mxu0 0.0
        %9114 = vmatpush1.msra.mxu0 %v9039
        %9115 = vmatprep.subr.mxu0 0.0
        %9116 = vmatpush1.msra.mxu0 %v9040
        %9117 = vmatprep.subr.mxu0 0.0
        %9118 = vmatpush1.msra.mxu0 %v9041
        %9119 = vmatprep.subr.mxu0 0.0
        %9120 = vmatpush1.msra.mxu0 %v9042
        %9121 = vmatprep.subr.mxu0 0.0
        %9122 = vmatpush1.msra.mxu0 %v9043
        %9123 = vmatprep.subr.mxu0 0.0
        %9124 = vmatpush1.msra.mxu0 %v9044
        %9125 = vmatprep.subr.mxu0 0.0
        %9126 = vmatpush1.msra.mxu0 %v9045
        %9127 = vmatprep.subr.mxu0 0.0
        %9128 = vmatpush1.msra.mxu0 %v9046
        %9129 = vmatprep.subr.mxu0 0.0
        %9130 = vmatpush1.msra.mxu0 %v9047
        %9131 = vmatprep.subr.mxu0 0.0
        %9132 = vmatpush1.msra.mxu0 %v9048
        %9133 = vmatprep.subr.mxu0 0.0
        %9134 = vmatpush1.msra.mxu0 %v9049
        %9135 = vmatprep.subr.mxu0 0.0
        %9136 = vmatpush1.msra.mxu0 %v9050
        %9137 = vmatprep.subr.mxu0 0.0
        %9138 = vmatpush1.msra.mxu0 %v9051
        %9139 = vmatprep.subr.mxu0 0.0
        %9140 = vmatpush1.msra.mxu0 %v9052
        %9141 = vmatprep.subr.mxu0 0.0
        %9142 = vmatpush1.msra.mxu0 %v9053
        %9143 = vmatprep.subr.mxu0 0.0
        %9144 = vmatpush1.msra.mxu0 %v9054
        %9145 = vmatprep.subr.mxu0 0.0
        %9146 = vmatpush1.msra.mxu0 %v9055
        %9147 = vmatprep.subr.mxu0 0.0
        %9148 = vmatpush1.msra.mxu0 %v9056
        %9149 = vmatprep.subr.mxu0 0.0
        %9150 = vmatpush1.msra.mxu0 %v9057
        %9151 = vmatprep.subr.mxu0 0.0
        %9152 = vmatpush1.msra.mxu0 %v9058
        %9153 = vmatprep.subr.mxu0 0.0
        %9154 = vmatpush1.msra.mxu0 %v9059
        %9155 = vmatprep.subr.mxu0 0.0
        %9156 = vmatpush1.msra.mxu0 %v9060
        %9157 = vmatprep.subr.mxu0 0.0
        %9158 = vmatpush1.msra.mxu0 %v9061
        %9159 = vmatprep.subr.mxu0 0.0
        %9160 = vmatpush1.msra.mxu0 %v9062
        %9161 = vmatprep.subr.mxu0 0.0
        %9162 = vmatpush1.msra.mxu0 %v9063
        %9163 = vmatprep.subr.mxu0 0.0
        %9164 = vmatpush1.msra.mxu0 %v9064
        %9165 = vmatprep.subr.mxu0 0.0
        %9166 = vmatpush1.msra.mxu0 %v9065
        %9167 = vmatprep.mubr.f32.mxu0 %v4317
        %9168 = vmatmul.mubr.f32.gmra.mrb[0].mxu0 %v2844
        %v9169 = vpop.f32.mrb[0].mxu0
        %v9170 = vadd.f32 %v9102, %v9169
        %v9171 = vpop.f32.mrb[0].mxu0
        %9172 = vdwg.mxu0
        %9173 = vmatprep.subr.mxu0 0.0
        %9174 = vmatpush1.msra.mxu0 %v9066
        %9175 = vmatprep.subr.mxu0 0.0
        %9176 = vmatpush1.msra.mxu0 %v9067
        %9177 = vmatprep.subr.mxu0 0.0
        %9178 = vmatpush1.msra.mxu0 %v9068
        %9179 = vmatprep.subr.mxu0 0.0
        %9180 = vmatpush1.msra.mxu0 %v9069
        %9181 = vmatprep.subr.mxu0 0.0
        %9182 = vmatpush1.msra.mxu0 %v9070
        %9183 = vmatprep.subr.mxu0 0.0
        %9184 = vmatpush1.msra.mxu0 %v9071
        %9185 = vmatprep.subr.mxu0 0.0
        %9186 = vmatpush1.msra.mxu0 %v9072
        %9187 = vmatprep.subr.mxu0 0.0
        %9188 = vmatpush1.msra.mxu0 %v9073
        %9189 = vmatprep.subr.mxu0 0.0
        %9190 = vmatpush1.msra.mxu0 %v9074
        %9191 = vmatprep.subr.mxu0 0.0
        %9192 = vmatpush1.msra.mxu0 %v9075
        %9193 = vmatprep.subr.mxu0 0.0
        %9194 = vmatpush1.msra.mxu0 %v9076
        %9195 = vmatprep.subr.mxu0 0.0
        %9196 = vmatpush1.msra.mxu0 %v9077
        %9197 = vmatprep.subr.mxu0 0.0
        %9198 = vmatpush1.msra.mxu0 %v9078
        %9199 = vmatprep.subr.mxu0 0.0
        %9200 = vmatpush1.msra.mxu0 %v9079
        %9201 = vmatprep.subr.mxu0 0.0
        %9202 = vmatpush1.msra.mxu0 %v9080
        %9203 = vmatprep.subr.mxu0 0.0
        %9204 = vmatpush1.msra.mxu0 %v9081
        %9205 = vmatprep.subr.mxu0 0.0
        %9206 = vmatpush1.msra.mxu0 %v9082
        %9207 = vmatprep.subr.mxu0 0.0
        %9208 = vmatpush1.msra.mxu0 %v9083
        %9209 = vmatprep.subr.mxu0 0.0
        %9210 = vmatpush1.msra.mxu0 %v9084
        %9211 = vmatprep.subr.mxu0 0.0
        %9212 = vmatpush1.msra.mxu0 %v9085
        %9213 = vmatprep.subr.mxu0 0.0
        %9214 = vmatpush1.msra.mxu0 %v9086
        %9215 = vmatprep.subr.mxu0 0.0
        %9216 = vmatpush1.msra.mxu0 %v9087
        %9217 = vmatprep.subr.mxu0 0.0
        %9218 = vmatpush1.msra.mxu0 %v9088
        %9219 = vmatprep.subr.mxu0 0.0
        %9220 = vmatpush1.msra.mxu0 %v9089
        %9221 = vmatprep.subr.mxu0 0.0
        %9222 = vmatpush1.msra.mxu0 %v9090
        %9223 = vmatprep.subr.mxu0 0.0
        %9224 = vmatpush1.msra.mxu0 %v9091
        %9225 = vmatprep.subr.mxu0 0.0
        %9226 = vmatpush1.msra.mxu0 %v9092
        %9227 = vmatprep.subr.mxu0 0.0
        %9228 = vmatpush1.msra.mxu0 %v9093
        %9229 = vmatprep.subr.mxu0 0.0
        %9230 = vmatpush1.msra.mxu0 %v9094
        %9231 = vmatprep.subr.mxu0 0.0
        %9232 = vmatpush1.msra.mxu0 %v9095
        %9233 = vmatprep.subr.mxu0 0.0
        %9234 = vmatpush1.msra.mxu0 %v9096
        %9235 = vmatprep.subr.mxu0 0.0
        %9236 = vmatpush1.msra.mxu0 %v9097
        %9237 = vmatprep.mubr.f32.mxu0 %v9033
        %9238 = vmatmul.mubr.f32.gmra.mrb[0].mxu0 %v8211
        %v9239 = vpop.f32.mrb[0].mxu0
        %v9240 = vadd.f32 %v9170, %v9239
        %v9241 = vpop.f32.mrb[0].mxu0
        %9242 = vdwg.mxu0
        %9243 = vst [vmem:[%s401] sm:$0xff] %v9240
        %p9244 = scmp.lt.s32.totalorder %s23, 1
        %s9245 = scalar_select %p9244, %s23, 1
        %s9246 = smul.addr %s9245, 8
        %s9247 = scalar_lea.vmem %s8, %s9246
        // Predicated region
        $region77: #{_lambda_.1} parent=51 // pred_check
          %p9248 = pneg %p219
        $region78: #{_lambda_.1} parent=51 // pred_check_branch
          %9250 = sbr.rel (%p9248) target = $region80
        $region79: #{_lambda_.1} parent=51 // pred_region
          _
        $region80: #{_lambda_.1} parent=51 // pred_fallthru
          _
      $region52: #{_lambda_.1} parent=5 // pred_fallthru
        _
      %p9251 = scmp.le.s32.totalorder 2, %s18
      // Predicated region
      $region81: #{_lambda_.1} parent=5 // pred_check
        %p9252 = pneg %p9251
      $region82: #{_lambda_.1} parent=5 // pred_check_branch
        %9254 = sbr.rel (%p9252) target = $region84
      $region83: #{_lambda_.1} parent=5 // pred_region
        %s9255 = ssub.s32 %s18, 2
        // Predicated region
        $region85: #{_lambda_.1} parent=83 // pred_check
          %p9256 = pneg %p225
        $region86: #{_lambda_.1} parent=83 // pred_check_branch
          %9258 = sbr.rel (%p9256) target = $region88
        $region87: #{_lambda_.1} parent=83 // pred_region
          %p9259 = scmp.lt.s32.totalorder %s24, 1
          %s9260 = scalar_select %p9259, %s24, 1
          %s9261 = smul.addr %s9260, 8
          %s9262 = scalar_lea.vmem %s8, %s9261
        $region88: #{_lambda_.1} parent=83 // pred_fallthru
          _
      $region84: #{_lambda_.1} parent=5 // pred_fallthru
        _
    $region6: #{_lambda_.1} parent=1 // loop_footer
      %s22 = sadd.s32 1, %s18
    $region7: #{_lambda_.1} parent=1 // loop_footer_branch
      %17 = sbr.rel target = $region3
    $region8: #{_lambda_.1} parent=1 // loop_exit
      _
    %9263 = vsyncpa [#allocation3], 1
    %s9264 = scalar_lea.sflag [#allocation3], 1
    %9265 = vsyncpa %s9264, 1
    %9266 = vsyncpa [#allocation5], 1
    %9267 = vsyncpa [#allocation8], 1
    %9268 = vsyncpa [#allocation11], 1

</llo_original>
